<compile_context>
chip_gen: v5e
topology: v5e:2x2
jax: 0.10.0
libtpu: 0.0.40
codegen_flags: <defaults>
</compile_context>

<pallas_src>
import functools

import jax
import jax.numpy as jnp
from jax import lax
from jax.experimental import pallas as pl
from jax.experimental.pallas import tpu as pltpu


KSIZE = 5
PAD = 2                       # Conv1d(kernel=5, padding=2) keeps the length
HALO = 8                      # sublane-aligned offset of the payload inside scratch
CHANNELS = [(1, 8), (8, 16), (16, 32), (32, 64),
            (64, 64), (64, 128), (128, 256), (256, 512)]
N_BLOCKS = len(CHANNELS)
N_CLASSES = 2
FEAT = 512


def _layer_lengths(n_peaks):
    lens = []
    L = n_peaks
    for i in range(N_BLOCKS):
        lens.append(L)
        if i < N_BLOCKS - 1:
            L = L // 2            # MaxPool1d(2) floors, same as PyTorch
    return tuple(lens)


# --------------------------- the single fused kernel ------------------------------
def _classifier_kernel(lens, *refs):
    # refs = x, (w0,b0 .. w7,b7), w_fc, b_fc, out, xp_scratch[0..7]
    it = iter(refs)
    x_ref = next(it)
    conv_refs = [(next(it), next(it)) for _ in range(N_BLOCKS)]
    wfc_ref = next(it)
    bfc_ref = next(it)
    o_ref = next(it)
    xp_refs = [next(it) for _ in range(N_BLOCKS)]

    f32 = jnp.float32

    # ---- preprocessing: per-sample masked log10 normalisation (channels-last) ----
    xin = x_ref[0]                                   # (N, 1)
    v = jnp.where(xin < 1e-4, 0.0, xin)
    pos = v != 0.0
    lg = jnp.log10(jnp.where(pos, v, 1.0))
    mn = jnp.min(jnp.where(pos, lg, jnp.inf))        # min over surviving peaks
    sh = lg - mn
    mx = jnp.max(jnp.where(pos, sh, -jnp.inf))       # max over surviving peaks
    # NOTE: mx == 0 (single surviving peak) gives NaN, exactly like the PyTorch ref.
    h = jnp.where(pos, sh / mx, 0.0)                 # (N, 1) float32

    # ---- 8 x [Conv1d(k=5,pad=2) + ReLU], MaxPool1d(2) fused between blocks -------
    for i, (w_ref, b_ref) in enumerate(conv_refs):
        L = lens[i]
        c_in = w_ref.shape[1]
        c_out = w_ref.shape[2]

        # Stage the zero-padded input in VMEM scratch: payload rows [HALO, HALO+L).
        xp_ref = xp_refs[i]
        xp_ref[...] = jnp.zeros(xp_ref.shape, f32)
        xp_ref[pl.ds(HALO, L), :] = h                # aligned store, halo stays 0

        acc = jnp.zeros((L, c_out), f32)
        for t in range(KSIZE):                       # 5 taps, statically unrolled
            xs = xp_ref[pl.ds(HALO - PAD + t, L), :]   # rows x[l + t - 2], (L, c_in)
            if c_in == 1:
                acc = acc + xs * w_ref[t]            # (L,1)*(1,c_out): VPU, no MXU pass
            else:
                acc = acc + lax.dot_general(         # (L,c_in)@(c_in,c_out) on MXU
                    xs, w_ref[t], (((1,), (0,)), ((), ())),
                    preferred_element_type=f32)
        h = jnp.maximum(acc + b_ref[...], 0.0)       # bias (1,c_out) + ReLU -> (L,c_out)

        if i < N_BLOCKS - 1:
            # Fused MaxPool1d(2) along L (sublane dim): pick even / odd rows with
            # 0/1 selection matrices (exact in f32) and take the elementwise max.
            half = L // 2
            r2 = 2 * lax.broadcasted_iota(jnp.int32, (half, L), 0)
            cc = lax.broadcasted_iota(jnp.int32, (half, L), 1)
            p_even = jnp.where(cc == r2, 1.0, 0.0).astype(f32)
            p_odd = jnp.where(cc == r2 + 1, 1.0, 0.0).astype(f32)
            h = jnp.maximum(
                jnp.dot(p_even, h, preferred_element_type=f32),
                jnp.dot(p_odd, h, preferred_element_type=f32))   # (L//2, c_out)

    # ---- head: global max over length + Linear(512, 2) ---------------------------
    # nn.Dropout(p=0.5) is the identity at inference time.
    feat = jnp.max(h, axis=0, keepdims=True)          # (1, 512)
    logits = jnp.dot(feat, wfc_ref[...], preferred_element_type=f32) + bfc_ref[...]
    o_ref[0] = logits                                 # (1, 2)


# --------------------------- wrapper / pallas_call ---------------------------------
def classifier_forward(x, conv_params, fc_params):
    B, _, n_peaks = x.shape
    lens = _layer_lengths(n_peaks)
    x_cl = x.reshape(B, n_peaks, 1)                   # (B,1,N) -> (B,N,1), free

    inputs = [x_cl]
    in_specs = [pl.BlockSpec((1, n_peaks, 1), lambda b: (b, 0, 0))]
    for w, bias in conv_params:                       # weights resident across grid
        inputs += [w, bias]
        in_specs += [pl.BlockSpec(w.shape, lambda b: (0, 0, 0)),
                     pl.BlockSpec(bias.shape, lambda b: (0, 0))]
    w_fc, b_fc = fc_params
    inputs += [w_fc, b_fc]
    in_specs += [pl.BlockSpec(w_fc.shape, lambda b: (0, 0)),
                 pl.BlockSpec(b_fc.shape, lambda b: (0, 0))]

    # per-layer halo buffers (L + 16, C_in) - a few hundred KB total
    scratch_shapes = [
        pltpu.VMEM((lens[i] + 2 * HALO, CHANNELS[i][0]), jnp.float32)
        for i in range(N_BLOCKS)
    ]

    out = pl.pallas_call(
        functools.partial(_classifier_kernel, lens),
        out_shape=jax.ShapeDtypeStruct((B, 1, N_CLASSES), jnp.float32),
        grid=(B,),
        in_specs=in_specs,
        out_specs=pl.BlockSpec((1, 1, N_CLASSES), lambda b: (b, 0, 0)),
        scratch_shapes=scratch_shapes,
        compiler_params=pltpu.CompilerParams(
            dimension_semantics=("parallel",),        # v7x: one sample per TensorCore
            vmem_limit_bytes=32 * 1024 * 1024),
    )(*inputs)
    return out.reshape(B, N_CLASSES)


# --------------------------- parameters (PyTorch-like uniform init) ----------------
def init_params(key):
    conv_params = []
    for c_in, c_out in CHANNELS:
        key, kw, kb = jax.random.split(key, 3)
        bound = 1.0 / (c_in * KSIZE) ** 0.5
        w = jax.random.uniform(kw, (c_out, c_in, KSIZE), jnp.float32, -bound, bound)
        b = jax.random.uniform(kb, (c_out,), jnp.float32, -bound, bound)
        # stored as (K, C_in, C_out): kernel indexes taps on dim 0, channels-last dot
        conv_params.append((jnp.transpose(w, (2, 1, 0)), b.reshape(1, c_out)))
    key, kw, kb = jax.random.split(key, 3)
    bound = 1.0 / FEAT ** 0.5
    w_fc = jax.random.uniform(kw, (N_CLASSES, FEAT), jnp.float32, -bound, bound)
    b_fc = jax.random.uniform(kb, (N_CLASSES,), jnp.float32, -bound, bound)
    fc_params = (jnp.transpose(w_fc), b_fc.reshape(1, N_CLASSES))  # (512,2), (1,2)
    return conv_params, fc_params


if __name__ == "__main__":
    key = jax.random.PRNGKey(0)
    kx, kp = jax.random.split(key)
    B, n_peaks = 2, 256
    # strictly positive spectra-like input; a few entries fall below the 1e-4 clamp
    x = jax.random.uniform(kx, (B, 1, n_peaks), jnp.float32, 1e-5, 1.0)
    conv_params, fc_params = init_params(kp)

    out = jax.jit(classifier_forward)(x, conv_params, fc_params)
    out = jax.block_until_ready(out)
    assert out.shape == (B, N_CLASSES) and out.dtype == jnp.float32
    print("KERNEL_OK")
</pallas_src>

<mosaic_0001>
module attributes {stable_mosaic.version = 11 : i64} {
  func.func @_classifier_kernel(%arg0: i32, %arg1: memref<1x256x1xf32, #tpu.memory_space<vmem>>, %arg2: memref<5x1x8xf32, #tpu.memory_space<vmem>>, %arg3: memref<1x8xf32, #tpu.memory_space<vmem>>, %arg4: memref<5x8x16xf32, #tpu.memory_space<vmem>>, %arg5: memref<1x16xf32, #tpu.memory_space<vmem>>, %arg6: memref<5x16x32xf32, #tpu.memory_space<vmem>>, %arg7: memref<1x32xf32, #tpu.memory_space<vmem>>, %arg8: memref<5x32x64xf32, #tpu.memory_space<vmem>>, %arg9: memref<1x64xf32, #tpu.memory_space<vmem>>, %arg10: memref<5x64x64xf32, #tpu.memory_space<vmem>>, %arg11: memref<1x64xf32, #tpu.memory_space<vmem>>, %arg12: memref<5x64x128xf32, #tpu.memory_space<vmem>>, %arg13: memref<1x128xf32, #tpu.memory_space<vmem>>, %arg14: memref<5x128x256xf32, #tpu.memory_space<vmem>>, %arg15: memref<1x256xf32, #tpu.memory_space<vmem>>, %arg16: memref<5x256x512xf32, #tpu.memory_space<vmem>>, %arg17: memref<1x512xf32, #tpu.memory_space<vmem>>, %arg18: memref<512x2xf32, #tpu.memory_space<vmem>>, %arg19: memref<1x2xf32, #tpu.memory_space<vmem>>, %arg20: memref<1x1x2xf32, #tpu.memory_space<vmem>>, %arg21: memref<272x1xf32, #tpu.memory_space<vmem>>, %arg22: memref<144x8xf32, #tpu.memory_space<vmem>>, %arg23: memref<80x16xf32, #tpu.memory_space<vmem>>, %arg24: memref<48x32xf32, #tpu.memory_space<vmem>>, %arg25: memref<32x64xf32, #tpu.memory_space<vmem>>, %arg26: memref<24x64xf32, #tpu.memory_space<vmem>>, %arg27: memref<20x128xf32, #tpu.memory_space<vmem>>, %arg28: memref<18x256xf32, #tpu.memory_space<vmem>>) attributes {dimension_semantics = [#tpu.dimension_semantics<parallel>], iteration_bounds = array<i64: 2>, scalar_prefetch = 0 : i64, scratch_operands = 8 : i64, tpu.core_type = #tpu.core_type<tc>, window_params = [{transform_indices = @transform_0, window_bounds = array<i64: 1, 256, 1>}, {pipeline_mode = #tpu.pipeline_mode<synchronous>, transform_indices = @transform_1, window_bounds = array<i64: 5, 1, 8>}, {pipeline_mode = #tpu.pipeline_mode<synchronous>, transform_indices = @transform_2, window_bounds = array<i64: 1, 8>}, {pipeline_mode = #tpu.pipeline_mode<synchronous>, transform_indices = @transform_3, window_bounds = array<i64: 5, 8, 16>}, {pipeline_mode = #tpu.pipeline_mode<synchronous>, transform_indices = @transform_4, window_bounds = array<i64: 1, 16>}, {pipeline_mode = #tpu.pipeline_mode<synchronous>, transform_indices = @transform_5, window_bounds = array<i64: 5, 16, 32>}, {pipeline_mode = #tpu.pipeline_mode<synchronous>, transform_indices = @transform_6, window_bounds = array<i64: 1, 32>}, {pipeline_mode = #tpu.pipeline_mode<synchronous>, transform_indices = @transform_7, window_bounds = array<i64: 5, 32, 64>}, {pipeline_mode = #tpu.pipeline_mode<synchronous>, transform_indices = @transform_8, window_bounds = array<i64: 1, 64>}, {pipeline_mode = #tpu.pipeline_mode<synchronous>, transform_indices = @transform_9, window_bounds = array<i64: 5, 64, 64>}, {pipeline_mode = #tpu.pipeline_mode<synchronous>, transform_indices = @transform_10, window_bounds = array<i64: 1, 64>}, {pipeline_mode = #tpu.pipeline_mode<synchronous>, transform_indices = @transform_11, window_bounds = array<i64: 5, 64, 128>}, {pipeline_mode = #tpu.pipeline_mode<synchronous>, transform_indices = @transform_12, window_bounds = array<i64: 1, 128>}, {pipeline_mode = #tpu.pipeline_mode<synchronous>, transform_indices = @transform_13, window_bounds = array<i64: 5, 128, 256>}, {pipeline_mode = #tpu.pipeline_mode<synchronous>, transform_indices = @transform_14, window_bounds = array<i64: 1, 256>}, {pipeline_mode = #tpu.pipeline_mode<synchronous>, transform_indices = @transform_15, window_bounds = array<i64: 5, 256, 512>}, {pipeline_mode = #tpu.pipeline_mode<synchronous>, transform_indices = @transform_16, window_bounds = array<i64: 1, 512>}, {pipeline_mode = #tpu.pipeline_mode<synchronous>, transform_indices = @transform_17, window_bounds = array<i64: 512, 2>}, {pipeline_mode = #tpu.pipeline_mode<synchronous>, transform_indices = @transform_18, window_bounds = array<i64: 1, 2>}, {transform_indices = @transform_19, window_bounds = array<i64: 1, 1, 2>}]} {
    %c0 = arith.constant 0 : index
    %c0_0 = arith.constant 0 : index
    %c0_1 = arith.constant 0 : index
    %0 = vector.load %arg1[%c0, %c0_0, %c0_1] : memref<1x256x1xf32, #tpu.memory_space<vmem>>, vector<1x256x1xf32>
    %1 = vector.shape_cast %0 : vector<1x256x1xf32> to vector<256x1xf32>
    %cst = arith.constant 9.99999974E-5 : f32
    %2 = vector.broadcast %cst : f32 to vector<256x1xf32>
    %3 = arith.cmpf olt, %1, %2 : vector<256x1xf32>
    %cst_2 = arith.constant 0.000000e+00 : f32
    %4 = vector.broadcast %cst_2 : f32 to vector<256x1xf32>
    %5 = arith.select %3, %4, %1 : vector<256x1xi1>, vector<256x1xf32>
    %cst_3 = arith.constant 0.000000e+00 : f32
    %6 = vector.broadcast %cst_3 : f32 to vector<256x1xf32>
    %7 = arith.cmpf one, %5, %6 : vector<256x1xf32>
    %cst_4 = arith.constant 1.000000e+00 : f32
    %8 = vector.broadcast %cst_4 : f32 to vector<256x1xf32>
    %9 = arith.select %7, %5, %8 : vector<256x1xi1>, vector<256x1xf32>
    %10 = math.log %9 : vector<256x1xf32>
    %cst_5 = arith.constant 0.434294492 : f32
    %11 = vector.broadcast %cst_5 : f32 to vector<256x1xf32>
    %12 = arith.mulf %10, %11 : vector<256x1xf32>
    %cst_6 = arith.constant 0x7F800000 : f32
    %13 = vector.broadcast %cst_6 : f32 to vector<256x1xf32>
    %14 = arith.select %7, %12, %13 : vector<256x1xi1>, vector<256x1xf32>
    %15 = vector.shape_cast %14 : vector<256x1xf32> to vector<1x256x1xf32>
    %cst_7 = arith.constant dense<0x7F800000> : vector<1xf32>
    %16 = vector.multi_reduction <minimumf>, %15, %cst_7 [1, 2] : vector<1x256x1xf32> to vector<1xf32>
    %17 = vector.shape_cast %16 : vector<1xf32> to vector<1x1x1xf32>
    %18 = vector.extract %17[0, 0, 0] : f32 from vector<1x1x1xf32>
    %19 = vector.broadcast %18 : f32 to vector<256x1xf32>
    %20 = arith.subf %12, %19 : vector<256x1xf32>
    %cst_8 = arith.constant 0xFF800000 : f32
    %21 = vector.broadcast %cst_8 : f32 to vector<256x1xf32>
    %22 = arith.select %7, %20, %21 : vector<256x1xi1>, vector<256x1xf32>
    %23 = vector.shape_cast %22 : vector<256x1xf32> to vector<1x256x1xf32>
    %cst_9 = arith.constant dense<0xFF800000> : vector<1xf32>
    %24 = vector.multi_reduction <maximumf>, %23, %cst_9 [1, 2] : vector<1x256x1xf32> to vector<1xf32>
    %25 = vector.shape_cast %24 : vector<1xf32> to vector<1x1x1xf32>
    %26 = vector.extract %25[0, 0, 0] : f32 from vector<1x1x1xf32>
    %27 = vector.broadcast %26 : f32 to vector<256x1xf32>
    %28 = arith.divf %20, %27 : vector<256x1xf32>
    %cst_10 = arith.constant 0.000000e+00 : f32
    %29 = vector.broadcast %cst_10 : f32 to vector<256x1xf32>
    %30 = arith.select %7, %28, %29 : vector<256x1xi1>, vector<256x1xf32>
    %cst_11 = arith.constant 0.000000e+00 : f32
    %31 = vector.broadcast %cst_11 : f32 to vector<272x1xf32>
    %c0_12 = arith.constant 0 : index
    %c0_13 = arith.constant 0 : index
    %32 = vector.load %arg21[%c0_12, %c0_13] : memref<272x1xf32, #tpu.memory_space<vmem>>, vector<272x1xf32>
    tpu.vector_store %arg21[%c0_12, %c0_13], %31 {strides = array<i32>} : memref<272x1xf32, #tpu.memory_space<vmem>>, vector<272x1xf32>,
    %c8 = arith.constant 8 : index
    %c0_14 = arith.constant 0 : index
    %33 = vector.load %arg21[%c8, %c0_14] : memref<272x1xf32, #tpu.memory_space<vmem>>, vector<256x1xf32>
    tpu.vector_store %arg21[%c8, %c0_14], %30 {strides = array<i32>} : memref<272x1xf32, #tpu.memory_space<vmem>>, vector<256x1xf32>,
    %cst_15 = arith.constant 0.000000e+00 : f32
    %34 = vector.broadcast %cst_15 : f32 to vector<256x8xf32>
    %c6 = arith.constant 6 : index
    %c0_16 = arith.constant 0 : index
    %35 = vector.load %arg21[%c6, %c0_16] : memref<272x1xf32, #tpu.memory_space<vmem>>, vector<256x1xf32>
    %c0_17 = arith.constant 0 : index
    %c0_18 = arith.constant 0 : index
    %c0_19 = arith.constant 0 : index
    %36 = vector.load %arg2[%c0_17, %c0_18, %c0_19] : memref<5x1x8xf32, #tpu.memory_space<vmem>>, vector<1x1x8xf32>
    %37 = vector.shape_cast %36 : vector<1x1x8xf32> to vector<1x8xf32>
    %38 = vector.broadcast %35 : vector<256x1xf32> to vector<256x8xf32>
    %39 = vector.broadcast %37 : vector<1x8xf32> to vector<256x8xf32>
    %40 = arith.mulf %38, %39 : vector<256x8xf32>
    %41 = arith.addf %34, %40 : vector<256x8xf32>
    %c7 = arith.constant 7 : index
    %c0_20 = arith.constant 0 : index
    %42 = vector.load %arg21[%c7, %c0_20] : memref<272x1xf32, #tpu.memory_space<vmem>>, vector<256x1xf32>
    %c1 = arith.constant 1 : index
    %c0_21 = arith.constant 0 : index
    %c0_22 = arith.constant 0 : index
    %43 = vector.load %arg2[%c1, %c0_21, %c0_22] : memref<5x1x8xf32, #tpu.memory_space<vmem>>, vector<1x1x8xf32>
    %44 = vector.shape_cast %43 : vector<1x1x8xf32> to vector<1x8xf32>
    %45 = vector.broadcast %42 : vector<256x1xf32> to vector<256x8xf32>
    %46 = vector.broadcast %44 : vector<1x8xf32> to vector<256x8xf32>
    %47 = arith.mulf %45, %46 : vector<256x8xf32>
    %48 = arith.addf %41, %47 : vector<256x8xf32>
    %c8_23 = arith.constant 8 : index
    %c0_24 = arith.constant 0 : index
    %49 = vector.load %arg21[%c8_23, %c0_24] : memref<272x1xf32, #tpu.memory_space<vmem>>, vector<256x1xf32>
    %c2 = arith.constant 2 : index
    %c0_25 = arith.constant 0 : index
    %c0_26 = arith.constant 0 : index
    %50 = vector.load %arg2[%c2, %c0_25, %c0_26] : memref<5x1x8xf32, #tpu.memory_space<vmem>>, vector<1x1x8xf32>
    %51 = vector.shape_cast %50 : vector<1x1x8xf32> to vector<1x8xf32>
    %52 = vector.broadcast %49 : vector<256x1xf32> to vector<256x8xf32>
    %53 = vector.broadcast %51 : vector<1x8xf32> to vector<256x8xf32>
    %54 = arith.mulf %52, %53 : vector<256x8xf32>
    %55 = arith.addf %48, %54 : vector<256x8xf32>
    %c9 = arith.constant 9 : index
    %c0_27 = arith.constant 0 : index
    %56 = vector.load %arg21[%c9, %c0_27] : memref<272x1xf32, #tpu.memory_space<vmem>>, vector<256x1xf32>
    %c3 = arith.constant 3 : index
    %c0_28 = arith.constant 0 : index
    %c0_29 = arith.constant 0 : index
    %57 = vector.load %arg2[%c3, %c0_28, %c0_29] : memref<5x1x8xf32, #tpu.memory_space<vmem>>, vector<1x1x8xf32>
    %58 = vector.shape_cast %57 : vector<1x1x8xf32> to vector<1x8xf32>
    %59 = vector.broadcast %56 : vector<256x1xf32> to vector<256x8xf32>
    %60 = vector.broadcast %58 : vector<1x8xf32> to vector<256x8xf32>
    %61 = arith.mulf %59, %60 : vector<256x8xf32>
    %62 = arith.addf %55, %61 : vector<256x8xf32>
    %c10 = arith.constant 10 : index
    %c0_30 = arith.constant 0 : index
    %63 = vector.load %arg21[%c10, %c0_30] : memref<272x1xf32, #tpu.memory_space<vmem>>, vector<256x1xf32>
    %c4 = arith.constant 4 : index
    %c0_31 = arith.constant 0 : index
    %c0_32 = arith.constant 0 : index
    %64 = vector.load %arg2[%c4, %c0_31, %c0_32] : memref<5x1x8xf32, #tpu.memory_space<vmem>>, vector<1x1x8xf32>
    %65 = vector.shape_cast %64 : vector<1x1x8xf32> to vector<1x8xf32>
    %66 = vector.broadcast %63 : vector<256x1xf32> to vector<256x8xf32>
    %67 = vector.broadcast %65 : vector<1x8xf32> to vector<256x8xf32>
    %68 = arith.mulf %66, %67 : vector<256x8xf32>
    %69 = arith.addf %62, %68 : vector<256x8xf32>
    %c0_33 = arith.constant 0 : index
    %c0_34 = arith.constant 0 : index
    %70 = vector.load %arg3[%c0_33, %c0_34] : memref<1x8xf32, #tpu.memory_space<vmem>>, vector<1x8xf32>
    %71 = vector.broadcast %70 : vector<1x8xf32> to vector<256x8xf32>
    %72 = arith.addf %69, %71 : vector<256x8xf32>
    %cst_35 = arith.constant 0.000000e+00 : f32
    %73 = vector.broadcast %cst_35 : f32 to vector<256x8xf32>
    %74 = arith.maximumf %72, %73 : vector<256x8xf32>
    %75 = tpu.iota {dimensions = array<i32: 0>} : vector<128x256xi32>
    %c2_i32 = arith.constant 2 : i32
    %76 = vector.broadcast %c2_i32 : i32 to vector<128x256xi32>
    %77 = arith.muli %76, %75 : vector<128x256xi32>
    %78 = tpu.iota {dimensions = array<i32: 1>} : vector<128x256xi32>
    %79 = arith.cmpi eq, %78, %77 : vector<128x256xi32>
    %cst_36 = arith.constant 1.000000e+00 : f32
    %cst_37 = arith.constant 0.000000e+00 : f32
    %80 = vector.broadcast %cst_36 : f32 to vector<128x256xf32>
    %81 = vector.broadcast %cst_37 : f32 to vector<128x256xf32>
    %82 = arith.select %79, %80, %81 : vector<128x256xi1>, vector<128x256xf32>
    %c1_i32 = arith.constant 1 : i32
    %83 = vector.broadcast %c1_i32 : i32 to vector<128x256xi32>
    %84 = arith.addi %77, %83 : vector<128x256xi32>
    %85 = arith.cmpi eq, %78, %84 : vector<128x256xi32>
    %cst_38 = arith.constant 1.000000e+00 : f32
    %cst_39 = arith.constant 0.000000e+00 : f32
    %86 = vector.broadcast %cst_38 : f32 to vector<128x256xf32>
    %87 = vector.broadcast %cst_39 : f32 to vector<128x256xf32>
    %88 = arith.select %85, %86, %87 : vector<128x256xi1>, vector<128x256xf32>
    %cst_40 = arith.constant dense<0.000000e+00> : vector<128x8xf32>
    %89 = tpu.matmul %82, %74, %cst_40 {dimension_numbers = #tpu.dot_dimension_numbers<[1], [0], [0], [1], [0, 0, 1, 1], [], []>} : vector<128x256xf32>, vector<256x8xf32>, vector<128x8xf32> -> vector<128x8xf32>
    %cst_41 = arith.constant dense<0.000000e+00> : vector<128x8xf32>
    %90 = tpu.matmul %88, %74, %cst_41 {dimension_numbers = #tpu.dot_dimension_numbers<[1], [0], [0], [1], [0, 0, 1, 1], [], []>} : vector<128x256xf32>, vector<256x8xf32>, vector<128x8xf32> -> vector<128x8xf32>
    %91 = arith.maximumf %89, %90 : vector<128x8xf32>
    %cst_42 = arith.constant 0.000000e+00 : f32
    %92 = vector.broadcast %cst_42 : f32 to vector<144x8xf32>
    %c0_43 = arith.constant 0 : index
    %c0_44 = arith.constant 0 : index
    %93 = vector.load %arg22[%c0_43, %c0_44] : memref<144x8xf32, #tpu.memory_space<vmem>>, vector<144x8xf32>
    tpu.vector_store %arg22[%c0_43, %c0_44], %92 {strides = array<i32>} : memref<144x8xf32, #tpu.memory_space<vmem>>, vector<144x8xf32>,
    %c8_45 = arith.constant 8 : index
    %c0_46 = arith.constant 0 : index
    %94 = vector.load %arg22[%c8_45, %c0_46] : memref<144x8xf32, #tpu.memory_space<vmem>>, vector<128x8xf32>
    tpu.vector_store %arg22[%c8_45, %c0_46], %91 {strides = array<i32>} : memref<144x8xf32, #tpu.memory_space<vmem>>, vector<128x8xf32>,
    %cst_47 = arith.constant 0.000000e+00 : f32
    %95 = vector.broadcast %cst_47 : f32 to vector<128x16xf32>
    %c6_48 = arith.constant 6 : index
    %c0_49 = arith.constant 0 : index
    %96 = vector.load %arg22[%c6_48, %c0_49] : memref<144x8xf32, #tpu.memory_space<vmem>>, vector<128x8xf32>
    %c0_50 = arith.constant 0 : index
    %c0_51 = arith.constant 0 : index
    %c0_52 = arith.constant 0 : index
    %97 = vector.load %arg4[%c0_50, %c0_51, %c0_52] : memref<5x8x16xf32, #tpu.memory_space<vmem>>, vector<1x8x16xf32>
    %98 = vector.shape_cast %97 : vector<1x8x16xf32> to vector<8x16xf32>
    %cst_53 = arith.constant dense<0.000000e+00> : vector<128x16xf32>
    %99 = tpu.matmul %96, %98, %cst_53 {dimension_numbers = #tpu.dot_dimension_numbers<[1], [0], [0], [1], [0, 0, 1, 1], [], []>} : vector<128x8xf32>, vector<8x16xf32>, vector<128x16xf32> -> vector<128x16xf32>
    %100 = arith.addf %95, %99 : vector<128x16xf32>
    %c7_54 = arith.constant 7 : index
    %c0_55 = arith.constant 0 : index
    %101 = vector.load %arg22[%c7_54, %c0_55] : memref<144x8xf32, #tpu.memory_space<vmem>>, vector<128x8xf32>
    %c1_56 = arith.constant 1 : index
    %c0_57 = arith.constant 0 : index
    %c0_58 = arith.constant 0 : index
    %102 = vector.load %arg4[%c1_56, %c0_57, %c0_58] : memref<5x8x16xf32, #tpu.memory_space<vmem>>, vector<1x8x16xf32>
    %103 = vector.shape_cast %102 : vector<1x8x16xf32> to vector<8x16xf32>
    %cst_59 = arith.constant dense<0.000000e+00> : vector<128x16xf32>
    %104 = tpu.matmul %101, %103, %cst_59 {dimension_numbers = #tpu.dot_dimension_numbers<[1], [0], [0], [1], [0, 0, 1, 1], [], []>} : vector<128x8xf32>, vector<8x16xf32>, vector<128x16xf32> -> vector<128x16xf32>
    %105 = arith.addf %100, %104 : vector<128x16xf32>
    %c8_60 = arith.constant 8 : index
    %c0_61 = arith.constant 0 : index
    %106 = vector.load %arg22[%c8_60, %c0_61] : memref<144x8xf32, #tpu.memory_space<vmem>>, vector<128x8xf32>
    %c2_62 = arith.constant 2 : index
    %c0_63 = arith.constant 0 : index
    %c0_64 = arith.constant 0 : index
    %107 = vector.load %arg4[%c2_62, %c0_63, %c0_64] : memref<5x8x16xf32, #tpu.memory_space<vmem>>, vector<1x8x16xf32>
    %108 = vector.shape_cast %107 : vector<1x8x16xf32> to vector<8x16xf32>
    %cst_65 = arith.constant dense<0.000000e+00> : vector<128x16xf32>
    %109 = tpu.matmul %106, %108, %cst_65 {dimension_numbers = #tpu.dot_dimension_numbers<[1], [0], [0], [1], [0, 0, 1, 1], [], []>} : vector<128x8xf32>, vector<8x16xf32>, vector<128x16xf32> -> vector<128x16xf32>
    %110 = arith.addf %105, %109 : vector<128x16xf32>
    %c9_66 = arith.constant 9 : index
    %c0_67 = arith.constant 0 : index
    %111 = vector.load %arg22[%c9_66, %c0_67] : memref<144x8xf32, #tpu.memory_space<vmem>>, vector<128x8xf32>
    %c3_68 = arith.constant 3 : index
    %c0_69 = arith.constant 0 : index
    %c0_70 = arith.constant 0 : index
    %112 = vector.load %arg4[%c3_68, %c0_69, %c0_70] : memref<5x8x16xf32, #tpu.memory_space<vmem>>, vector<1x8x16xf32>
    %113 = vector.shape_cast %112 : vector<1x8x16xf32> to vector<8x16xf32>
    %cst_71 = arith.constant dense<0.000000e+00> : vector<128x16xf32>
    %114 = tpu.matmul %111, %113, %cst_71 {dimension_numbers = #tpu.dot_dimension_numbers<[1], [0], [0], [1], [0, 0, 1, 1], [], []>} : vector<128x8xf32>, vector<8x16xf32>, vector<128x16xf32> -> vector<128x16xf32>
    %115 = arith.addf %110, %114 : vector<128x16xf32>
    %c10_72 = arith.constant 10 : index
    %c0_73 = arith.constant 0 : index
    %116 = vector.load %arg22[%c10_72, %c0_73] : memref<144x8xf32, #tpu.memory_space<vmem>>, vector<128x8xf32>
    %c4_74 = arith.constant 4 : index
    %c0_75 = arith.constant 0 : index
    %c0_76 = arith.constant 0 : index
    %117 = vector.load %arg4[%c4_74, %c0_75, %c0_76] : memref<5x8x16xf32, #tpu.memory_space<vmem>>, vector<1x8x16xf32>
    %118 = vector.shape_cast %117 : vector<1x8x16xf32> to vector<8x16xf32>
    %cst_77 = arith.constant dense<0.000000e+00> : vector<128x16xf32>
    %119 = tpu.matmul %116, %118, %cst_77 {dimension_numbers = #tpu.dot_dimension_numbers<[1], [0], [0], [1], [0, 0, 1, 1], [], []>} : vector<128x8xf32>, vector<8x16xf32>, vector<128x16xf32> -> vector<128x16xf32>
    %120 = arith.addf %115, %119 : vector<128x16xf32>
    %c0_78 = arith.constant 0 : index
    %c0_79 = arith.constant 0 : index
    %121 = vector.load %arg5[%c0_78, %c0_79] : memref<1x16xf32, #tpu.memory_space<vmem>>, vector<1x16xf32>
    %122 = vector.broadcast %121 : vector<1x16xf32> to vector<128x16xf32>
    %123 = arith.addf %120, %122 : vector<128x16xf32>
    %cst_80 = arith.constant 0.000000e+00 : f32
    %124 = vector.broadcast %cst_80 : f32 to vector<128x16xf32>
    %125 = arith.maximumf %123, %124 : vector<128x16xf32>
    %126 = tpu.iota {dimensions = array<i32: 0>} : vector<64x128xi32>
    %c2_i32_81 = arith.constant 2 : i32
    %127 = vector.broadcast %c2_i32_81 : i32 to vector<64x128xi32>
    %128 = arith.muli %127, %126 : vector<64x128xi32>
    %129 = tpu.iota {dimensions = array<i32: 1>} : vector<64x128xi32>
    %130 = arith.cmpi eq, %129, %128 : vector<64x128xi32>
    %cst_82 = arith.constant 1.000000e+00 : f32
    %cst_83 = arith.constant 0.000000e+00 : f32
    %131 = vector.broadcast %cst_82 : f32 to vector<64x128xf32>
    %132 = vector.broadcast %cst_83 : f32 to vector<64x128xf32>
    %133 = arith.select %130, %131, %132 : vector<64x128xi1>, vector<64x128xf32>
    %c1_i32_84 = arith.constant 1 : i32
    %134 = vector.broadcast %c1_i32_84 : i32 to vector<64x128xi32>
    %135 = arith.addi %128, %134 : vector<64x128xi32>
    %136 = arith.cmpi eq, %129, %135 : vector<64x128xi32>
    %cst_85 = arith.constant 1.000000e+00 : f32
    %cst_86 = arith.constant 0.000000e+00 : f32
    %137 = vector.broadcast %cst_85 : f32 to vector<64x128xf32>
    %138 = vector.broadcast %cst_86 : f32 to vector<64x128xf32>
    %139 = arith.select %136, %137, %138 : vector<64x128xi1>, vector<64x128xf32>
    %cst_87 = arith.constant dense<0.000000e+00> : vector<64x16xf32>
    %140 = tpu.matmul %133, %125, %cst_87 {dimension_numbers = #tpu.dot_dimension_numbers<[1], [0], [0], [1], [0, 0, 1, 1], [], []>} : vector<64x128xf32>, vector<128x16xf32>, vector<64x16xf32> -> vector<64x16xf32>
    %cst_88 = arith.constant dense<0.000000e+00> : vector<64x16xf32>
    %141 = tpu.matmul %139, %125, %cst_88 {dimension_numbers = #tpu.dot_dimension_numbers<[1], [0], [0], [1], [0, 0, 1, 1], [], []>} : vector<64x128xf32>, vector<128x16xf32>, vector<64x16xf32> -> vector<64x16xf32>
    %142 = arith.maximumf %140, %141 : vector<64x16xf32>
    %cst_89 = arith.constant 0.000000e+00 : f32
    %143 = vector.broadcast %cst_89 : f32 to vector<80x16xf32>
    %c0_90 = arith.constant 0 : index
    %c0_91 = arith.constant 0 : index
    %144 = vector.load %arg23[%c0_90, %c0_91] : memref<80x16xf32, #tpu.memory_space<vmem>>, vector<80x16xf32>
    tpu.vector_store %arg23[%c0_90, %c0_91], %143 {strides = array<i32>} : memref<80x16xf32, #tpu.memory_space<vmem>>, vector<80x16xf32>,
    %c8_92 = arith.constant 8 : index
    %c0_93 = arith.constant 0 : index
    %145 = vector.load %arg23[%c8_92, %c0_93] : memref<80x16xf32, #tpu.memory_space<vmem>>, vector<64x16xf32>
    tpu.vector_store %arg23[%c8_92, %c0_93], %142 {strides = array<i32>} : memref<80x16xf32, #tpu.memory_space<vmem>>, vector<64x16xf32>,
    %cst_94 = arith.constant 0.000000e+00 : f32
    %146 = vector.broadcast %cst_94 : f32 to vector<64x32xf32>
    %c6_95 = arith.constant 6 : index
    %c0_96 = arith.constant 0 : index
    %147 = vector.load %arg23[%c6_95, %c0_96] : memref<80x16xf32, #tpu.memory_space<vmem>>, vector<64x16xf32>
    %c0_97 = arith.constant 0 : index
    %c0_98 = arith.constant 0 : index
    %c0_99 = arith.constant 0 : index
    %148 = vector.load %arg6[%c0_97, %c0_98, %c0_99] : memref<5x16x32xf32, #tpu.memory_space<vmem>>, vector<1x16x32xf32>
    %149 = vector.shape_cast %148 : vector<1x16x32xf32> to vector<16x32xf32>
    %cst_100 = arith.constant dense<0.000000e+00> : vector<64x32xf32>
    %150 = tpu.matmul %147, %149, %cst_100 {dimension_numbers = #tpu.dot_dimension_numbers<[1], [0], [0], [1], [0, 0, 1, 1], [], []>} : vector<64x16xf32>, vector<16x32xf32>, vector<64x32xf32> -> vector<64x32xf32>
    %151 = arith.addf %146, %150 : vector<64x32xf32>
    %c7_101 = arith.constant 7 : index
    %c0_102 = arith.constant 0 : index
    %152 = vector.load %arg23[%c7_101, %c0_102] : memref<80x16xf32, #tpu.memory_space<vmem>>, vector<64x16xf32>
    %c1_103 = arith.constant 1 : index
    %c0_104 = arith.constant 0 : index
    %c0_105 = arith.constant 0 : index
    %153 = vector.load %arg6[%c1_103, %c0_104, %c0_105] : memref<5x16x32xf32, #tpu.memory_space<vmem>>, vector<1x16x32xf32>
    %154 = vector.shape_cast %153 : vector<1x16x32xf32> to vector<16x32xf32>
    %cst_106 = arith.constant dense<0.000000e+00> : vector<64x32xf32>
    %155 = tpu.matmul %152, %154, %cst_106 {dimension_numbers = #tpu.dot_dimension_numbers<[1], [0], [0], [1], [0, 0, 1, 1], [], []>} : vector<64x16xf32>, vector<16x32xf32>, vector<64x32xf32> -> vector<64x32xf32>
    %156 = arith.addf %151, %155 : vector<64x32xf32>
    %c8_107 = arith.constant 8 : index
    %c0_108 = arith.constant 0 : index
    %157 = vector.load %arg23[%c8_107, %c0_108] : memref<80x16xf32, #tpu.memory_space<vmem>>, vector<64x16xf32>
    %c2_109 = arith.constant 2 : index
    %c0_110 = arith.constant 0 : index
    %c0_111 = arith.constant 0 : index
    %158 = vector.load %arg6[%c2_109, %c0_110, %c0_111] : memref<5x16x32xf32, #tpu.memory_space<vmem>>, vector<1x16x32xf32>
    %159 = vector.shape_cast %158 : vector<1x16x32xf32> to vector<16x32xf32>
    %cst_112 = arith.constant dense<0.000000e+00> : vector<64x32xf32>
    %160 = tpu.matmul %157, %159, %cst_112 {dimension_numbers = #tpu.dot_dimension_numbers<[1], [0], [0], [1], [0, 0, 1, 1], [], []>} : vector<64x16xf32>, vector<16x32xf32>, vector<64x32xf32> -> vector<64x32xf32>
    %161 = arith.addf %156, %160 : vector<64x32xf32>
    %c9_113 = arith.constant 9 : index
    %c0_114 = arith.constant 0 : index
    %162 = vector.load %arg23[%c9_113, %c0_114] : memref<80x16xf32, #tpu.memory_space<vmem>>, vector<64x16xf32>
    %c3_115 = arith.constant 3 : index
    %c0_116 = arith.constant 0 : index
    %c0_117 = arith.constant 0 : index
    %163 = vector.load %arg6[%c3_115, %c0_116, %c0_117] : memref<5x16x32xf32, #tpu.memory_space<vmem>>, vector<1x16x32xf32>
    %164 = vector.shape_cast %163 : vector<1x16x32xf32> to vector<16x32xf32>
    %cst_118 = arith.constant dense<0.000000e+00> : vector<64x32xf32>
    %165 = tpu.matmul %162, %164, %cst_118 {dimension_numbers = #tpu.dot_dimension_numbers<[1], [0], [0], [1], [0, 0, 1, 1], [], []>} : vector<64x16xf32>, vector<16x32xf32>, vector<64x32xf32> -> vector<64x32xf32>
    %166 = arith.addf %161, %165 : vector<64x32xf32>
    %c10_119 = arith.constant 10 : index
    %c0_120 = arith.constant 0 : index
    %167 = vector.load %arg23[%c10_119, %c0_120] : memref<80x16xf32, #tpu.memory_space<vmem>>, vector<64x16xf32>
    %c4_121 = arith.constant 4 : index
    %c0_122 = arith.constant 0 : index
    %c0_123 = arith.constant 0 : index
    %168 = vector.load %arg6[%c4_121, %c0_122, %c0_123] : memref<5x16x32xf32, #tpu.memory_space<vmem>>, vector<1x16x32xf32>
    %169 = vector.shape_cast %168 : vector<1x16x32xf32> to vector<16x32xf32>
    %cst_124 = arith.constant dense<0.000000e+00> : vector<64x32xf32>
    %170 = tpu.matmul %167, %169, %cst_124 {dimension_numbers = #tpu.dot_dimension_numbers<[1], [0], [0], [1], [0, 0, 1, 1], [], []>} : vector<64x16xf32>, vector<16x32xf32>, vector<64x32xf32> -> vector<64x32xf32>
    %171 = arith.addf %166, %170 : vector<64x32xf32>
    %c0_125 = arith.constant 0 : index
    %c0_126 = arith.constant 0 : index
    %172 = vector.load %arg7[%c0_125, %c0_126] : memref<1x32xf32, #tpu.memory_space<vmem>>, vector<1x32xf32>
    %173 = vector.broadcast %172 : vector<1x32xf32> to vector<64x32xf32>
    %174 = arith.addf %171, %173 : vector<64x32xf32>
    %cst_127 = arith.constant 0.000000e+00 : f32
    %175 = vector.broadcast %cst_127 : f32 to vector<64x32xf32>
    %176 = arith.maximumf %174, %175 : vector<64x32xf32>
    %177 = tpu.iota {dimensions = array<i32: 0>} : vector<32x64xi32>
    %c2_i32_128 = arith.constant 2 : i32
    %178 = vector.broadcast %c2_i32_128 : i32 to vector<32x64xi32>
    %179 = arith.muli %178, %177 : vector<32x64xi32>
    %180 = tpu.iota {dimensions = array<i32: 1>} : vector<32x64xi32>
    %181 = arith.cmpi eq, %180, %179 : vector<32x64xi32>
    %cst_129 = arith.constant 1.000000e+00 : f32
    %cst_130 = arith.constant 0.000000e+00 : f32
    %182 = vector.broadcast %cst_129 : f32 to vector<32x64xf32>
    %183 = vector.broadcast %cst_130 : f32 to vector<32x64xf32>
    %184 = arith.select %181, %182, %183 : vector<32x64xi1>, vector<32x64xf32>
    %c1_i32_131 = arith.constant 1 : i32
    %185 = vector.broadcast %c1_i32_131 : i32 to vector<32x64xi32>
    %186 = arith.addi %179, %185 : vector<32x64xi32>
    %187 = arith.cmpi eq, %180, %186 : vector<32x64xi32>
    %cst_132 = arith.constant 1.000000e+00 : f32
    %cst_133 = arith.constant 0.000000e+00 : f32
    %188 = vector.broadcast %cst_132 : f32 to vector<32x64xf32>
    %189 = vector.broadcast %cst_133 : f32 to vector<32x64xf32>
    %190 = arith.select %187, %188, %189 : vector<32x64xi1>, vector<32x64xf32>
    %cst_134 = arith.constant dense<0.000000e+00> : vector<32x32xf32>
    %191 = tpu.matmul %184, %176, %cst_134 {dimension_numbers = #tpu.dot_dimension_numbers<[1], [0], [0], [1], [0, 0, 1, 1], [], []>} : vector<32x64xf32>, vector<64x32xf32>, vector<32x32xf32> -> vector<32x32xf32>
    %cst_135 = arith.constant dense<0.000000e+00> : vector<32x32xf32>
    %192 = tpu.matmul %190, %176, %cst_135 {dimension_numbers = #tpu.dot_dimension_numbers<[1], [0], [0], [1], [0, 0, 1, 1], [], []>} : vector<32x64xf32>, vector<64x32xf32>, vector<32x32xf32> -> vector<32x32xf32>
    %193 = arith.maximumf %191, %192 : vector<32x32xf32>
    %cst_136 = arith.constant 0.000000e+00 : f32
    %194 = vector.broadcast %cst_136 : f32 to vector<48x32xf32>
    %c0_137 = arith.constant 0 : index
    %c0_138 = arith.constant 0 : index
    %195 = vector.load %arg24[%c0_137, %c0_138] : memref<48x32xf32, #tpu.memory_space<vmem>>, vector<48x32xf32>
    tpu.vector_store %arg24[%c0_137, %c0_138], %194 {strides = array<i32>} : memref<48x32xf32, #tpu.memory_space<vmem>>, vector<48x32xf32>,
    %c8_139 = arith.constant 8 : index
    %c0_140 = arith.constant 0 : index
    %196 = vector.load %arg24[%c8_139, %c0_140] : memref<48x32xf32, #tpu.memory_space<vmem>>, vector<32x32xf32>
    tpu.vector_store %arg24[%c8_139, %c0_140], %193 {strides = array<i32>} : memref<48x32xf32, #tpu.memory_space<vmem>>, vector<32x32xf32>,
    %cst_141 = arith.constant 0.000000e+00 : f32
    %197 = vector.broadcast %cst_141 : f32 to vector<32x64xf32>
    %c6_142 = arith.constant 6 : index
    %c0_143 = arith.constant 0 : index
    %198 = vector.load %arg24[%c6_142, %c0_143] : memref<48x32xf32, #tpu.memory_space<vmem>>, vector<32x32xf32>
    %c0_144 = arith.constant 0 : index
    %c0_145 = arith.constant 0 : index
    %c0_146 = arith.constant 0 : index
    %199 = vector.load %arg8[%c0_144, %c0_145, %c0_146] : memref<5x32x64xf32, #tpu.memory_space<vmem>>, vector<1x32x64xf32>
    %200 = vector.shape_cast %199 : vector<1x32x64xf32> to vector<32x64xf32>
    %cst_147 = arith.constant dense<0.000000e+00> : vector<32x64xf32>
    %201 = tpu.matmul %198, %200, %cst_147 {dimension_numbers = #tpu.dot_dimension_numbers<[1], [0], [0], [1], [0, 0, 1, 1], [], []>} : vector<32x32xf32>, vector<32x64xf32>, vector<32x64xf32> -> vector<32x64xf32>
    %202 = arith.addf %197, %201 : vector<32x64xf32>
    %c7_148 = arith.constant 7 : index
    %c0_149 = arith.constant 0 : index
    %203 = vector.load %arg24[%c7_148, %c0_149] : memref<48x32xf32, #tpu.memory_space<vmem>>, vector<32x32xf32>
    %c1_150 = arith.constant 1 : index
    %c0_151 = arith.constant 0 : index
    %c0_152 = arith.constant 0 : index
    %204 = vector.load %arg8[%c1_150, %c0_151, %c0_152] : memref<5x32x64xf32, #tpu.memory_space<vmem>>, vector<1x32x64xf32>
    %205 = vector.shape_cast %204 : vector<1x32x64xf32> to vector<32x64xf32>
    %cst_153 = arith.constant dense<0.000000e+00> : vector<32x64xf32>
    %206 = tpu.matmul %203, %205, %cst_153 {dimension_numbers = #tpu.dot_dimension_numbers<[1], [0], [0], [1], [0, 0, 1, 1], [], []>} : vector<32x32xf32>, vector<32x64xf32>, vector<32x64xf32> -> vector<32x64xf32>
    %207 = arith.addf %202, %206 : vector<32x64xf32>
    %c8_154 = arith.constant 8 : index
    %c0_155 = arith.constant 0 : index
    %208 = vector.load %arg24[%c8_154, %c0_155] : memref<48x32xf32, #tpu.memory_space<vmem>>, vector<32x32xf32>
    %c2_156 = arith.constant 2 : index
    %c0_157 = arith.constant 0 : index
    %c0_158 = arith.constant 0 : index
    %209 = vector.load %arg8[%c2_156, %c0_157, %c0_158] : memref<5x32x64xf32, #tpu.memory_space<vmem>>, vector<1x32x64xf32>
    %210 = vector.shape_cast %209 : vector<1x32x64xf32> to vector<32x64xf32>
    %cst_159 = arith.constant dense<0.000000e+00> : vector<32x64xf32>
    %211 = tpu.matmul %208, %210, %cst_159 {dimension_numbers = #tpu.dot_dimension_numbers<[1], [0], [0], [1], [0, 0, 1, 1], [], []>} : vector<32x32xf32>, vector<32x64xf32>, vector<32x64xf32> -> vector<32x64xf32>
    %212 = arith.addf %207, %211 : vector<32x64xf32>
    %c9_160 = arith.constant 9 : index
    %c0_161 = arith.constant 0 : index
    %213 = vector.load %arg24[%c9_160, %c0_161] : memref<48x32xf32, #tpu.memory_space<vmem>>, vector<32x32xf32>
    %c3_162 = arith.constant 3 : index
    %c0_163 = arith.constant 0 : index
    %c0_164 = arith.constant 0 : index
    %214 = vector.load %arg8[%c3_162, %c0_163, %c0_164] : memref<5x32x64xf32, #tpu.memory_space<vmem>>, vector<1x32x64xf32>
    %215 = vector.shape_cast %214 : vector<1x32x64xf32> to vector<32x64xf32>
    %cst_165 = arith.constant dense<0.000000e+00> : vector<32x64xf32>
    %216 = tpu.matmul %213, %215, %cst_165 {dimension_numbers = #tpu.dot_dimension_numbers<[1], [0], [0], [1], [0, 0, 1, 1], [], []>} : vector<32x32xf32>, vector<32x64xf32>, vector<32x64xf32> -> vector<32x64xf32>
    %217 = arith.addf %212, %216 : vector<32x64xf32>
    %c10_166 = arith.constant 10 : index
    %c0_167 = arith.constant 0 : index
    %218 = vector.load %arg24[%c10_166, %c0_167] : memref<48x32xf32, #tpu.memory_space<vmem>>, vector<32x32xf32>
    %c4_168 = arith.constant 4 : index
    %c0_169 = arith.constant 0 : index
    %c0_170 = arith.constant 0 : index
    %219 = vector.load %arg8[%c4_168, %c0_169, %c0_170] : memref<5x32x64xf32, #tpu.memory_space<vmem>>, vector<1x32x64xf32>
    %220 = vector.shape_cast %219 : vector<1x32x64xf32> to vector<32x64xf32>
    %cst_171 = arith.constant dense<0.000000e+00> : vector<32x64xf32>
    %221 = tpu.matmul %218, %220, %cst_171 {dimension_numbers = #tpu.dot_dimension_numbers<[1], [0], [0], [1], [0, 0, 1, 1], [], []>} : vector<32x32xf32>, vector<32x64xf32>, vector<32x64xf32> -> vector<32x64xf32>
    %222 = arith.addf %217, %221 : vector<32x64xf32>
    %c0_172 = arith.constant 0 : index
    %c0_173 = arith.constant 0 : index
    %223 = vector.load %arg9[%c0_172, %c0_173] : memref<1x64xf32, #tpu.memory_space<vmem>>, vector<1x64xf32>
    %224 = vector.broadcast %223 : vector<1x64xf32> to vector<32x64xf32>
    %225 = arith.addf %222, %224 : vector<32x64xf32>
    %cst_174 = arith.constant 0.000000e+00 : f32
    %226 = vector.broadcast %cst_174 : f32 to vector<32x64xf32>
    %227 = arith.maximumf %225, %226 : vector<32x64xf32>
    %228 = tpu.iota {dimensions = array<i32: 0>} : vector<16x32xi32>
    %c2_i32_175 = arith.constant 2 : i32
    %229 = vector.broadcast %c2_i32_175 : i32 to vector<16x32xi32>
    %230 = arith.muli %229, %228 : vector<16x32xi32>
    %231 = tpu.iota {dimensions = array<i32: 1>} : vector<16x32xi32>
    %232 = arith.cmpi eq, %231, %230 : vector<16x32xi32>
    %cst_176 = arith.constant 1.000000e+00 : f32
    %cst_177 = arith.constant 0.000000e+00 : f32
    %233 = vector.broadcast %cst_176 : f32 to vector<16x32xf32>
    %234 = vector.broadcast %cst_177 : f32 to vector<16x32xf32>
    %235 = arith.select %232, %233, %234 : vector<16x32xi1>, vector<16x32xf32>
    %c1_i32_178 = arith.constant 1 : i32
    %236 = vector.broadcast %c1_i32_178 : i32 to vector<16x32xi32>
    %237 = arith.addi %230, %236 : vector<16x32xi32>
    %238 = arith.cmpi eq, %231, %237 : vector<16x32xi32>
    %cst_179 = arith.constant 1.000000e+00 : f32
    %cst_180 = arith.constant 0.000000e+00 : f32
    %239 = vector.broadcast %cst_179 : f32 to vector<16x32xf32>
    %240 = vector.broadcast %cst_180 : f32 to vector<16x32xf32>
    %241 = arith.select %238, %239, %240 : vector<16x32xi1>, vector<16x32xf32>
    %cst_181 = arith.constant dense<0.000000e+00> : vector<16x64xf32>
    %242 = tpu.matmul %235, %227, %cst_181 {dimension_numbers = #tpu.dot_dimension_numbers<[1], [0], [0], [1], [0, 0, 1, 1], [], []>} : vector<16x32xf32>, vector<32x64xf32>, vector<16x64xf32> -> vector<16x64xf32>
    %cst_182 = arith.constant dense<0.000000e+00> : vector<16x64xf32>
    %243 = tpu.matmul %241, %227, %cst_182 {dimension_numbers = #tpu.dot_dimension_numbers<[1], [0], [0], [1], [0, 0, 1, 1], [], []>} : vector<16x32xf32>, vector<32x64xf32>, vector<16x64xf32> -> vector<16x64xf32>
    %244 = arith.maximumf %242, %243 : vector<16x64xf32>
    %cst_183 = arith.constant 0.000000e+00 : f32
    %245 = vector.broadcast %cst_183 : f32 to vector<32x64xf32>
    %c0_184 = arith.constant 0 : index
    %c0_185 = arith.constant 0 : index
    %246 = vector.load %arg25[%c0_184, %c0_185] : memref<32x64xf32, #tpu.memory_space<vmem>>, vector<32x64xf32>
    tpu.vector_store %arg25[%c0_184, %c0_185], %245 {strides = array<i32>} : memref<32x64xf32, #tpu.memory_space<vmem>>, vector<32x64xf32>,
    %c8_186 = arith.constant 8 : index
    %c0_187 = arith.constant 0 : index
    %247 = vector.load %arg25[%c8_186, %c0_187] : memref<32x64xf32, #tpu.memory_space<vmem>>, vector<16x64xf32>
    tpu.vector_store %arg25[%c8_186, %c0_187], %244 {strides = array<i32>} : memref<32x64xf32, #tpu.memory_space<vmem>>, vector<16x64xf32>,
    %cst_188 = arith.constant 0.000000e+00 : f32
    %248 = vector.broadcast %cst_188 : f32 to vector<16x64xf32>
    %c6_189 = arith.constant 6 : index
    %c0_190 = arith.constant 0 : index
    %249 = vector.load %arg25[%c6_189, %c0_190] : memref<32x64xf32, #tpu.memory_space<vmem>>, vector<16x64xf32>
    %c0_191 = arith.constant 0 : index
    %c0_192 = arith.constant 0 : index
    %c0_193 = arith.constant 0 : index
    %250 = vector.load %arg10[%c0_191, %c0_192, %c0_193] : memref<5x64x64xf32, #tpu.memory_space<vmem>>, vector<1x64x64xf32>
    %251 = vector.shape_cast %250 : vector<1x64x64xf32> to vector<64x64xf32>
    %cst_194 = arith.constant dense<0.000000e+00> : vector<16x64xf32>
    %252 = tpu.matmul %249, %251, %cst_194 {dimension_numbers = #tpu.dot_dimension_numbers<[1], [0], [0], [1], [0, 0, 1, 1], [], []>} : vector<16x64xf32>, vector<64x64xf32>, vector<16x64xf32> -> vector<16x64xf32>
    %253 = arith.addf %248, %252 : vector<16x64xf32>
    %c7_195 = arith.constant 7 : index
    %c0_196 = arith.constant 0 : index
    %254 = vector.load %arg25[%c7_195, %c0_196] : memref<32x64xf32, #tpu.memory_space<vmem>>, vector<16x64xf32>
    %c1_197 = arith.constant 1 : index
    %c0_198 = arith.constant 0 : index
    %c0_199 = arith.constant 0 : index
    %255 = vector.load %arg10[%c1_197, %c0_198, %c0_199] : memref<5x64x64xf32, #tpu.memory_space<vmem>>, vector<1x64x64xf32>
    %256 = vector.shape_cast %255 : vector<1x64x64xf32> to vector<64x64xf32>
    %cst_200 = arith.constant dense<0.000000e+00> : vector<16x64xf32>
    %257 = tpu.matmul %254, %256, %cst_200 {dimension_numbers = #tpu.dot_dimension_numbers<[1], [0], [0], [1], [0, 0, 1, 1], [], []>} : vector<16x64xf32>, vector<64x64xf32>, vector<16x64xf32> -> vector<16x64xf32>
    %258 = arith.addf %253, %257 : vector<16x64xf32>
    %c8_201 = arith.constant 8 : index
    %c0_202 = arith.constant 0 : index
    %259 = vector.load %arg25[%c8_201, %c0_202] : memref<32x64xf32, #tpu.memory_space<vmem>>, vector<16x64xf32>
    %c2_203 = arith.constant 2 : index
    %c0_204 = arith.constant 0 : index
    %c0_205 = arith.constant 0 : index
    %260 = vector.load %arg10[%c2_203, %c0_204, %c0_205] : memref<5x64x64xf32, #tpu.memory_space<vmem>>, vector<1x64x64xf32>
    %261 = vector.shape_cast %260 : vector<1x64x64xf32> to vector<64x64xf32>
    %cst_206 = arith.constant dense<0.000000e+00> : vector<16x64xf32>
    %262 = tpu.matmul %259, %261, %cst_206 {dimension_numbers = #tpu.dot_dimension_numbers<[1], [0], [0], [1], [0, 0, 1, 1], [], []>} : vector<16x64xf32>, vector<64x64xf32>, vector<16x64xf32> -> vector<16x64xf32>
    %263 = arith.addf %258, %262 : vector<16x64xf32>
    %c9_207 = arith.constant 9 : index
    %c0_208 = arith.constant 0 : index
    %264 = vector.load %arg25[%c9_207, %c0_208] : memref<32x64xf32, #tpu.memory_space<vmem>>, vector<16x64xf32>
    %c3_209 = arith.constant 3 : index
    %c0_210 = arith.constant 0 : index
    %c0_211 = arith.constant 0 : index
    %265 = vector.load %arg10[%c3_209, %c0_210, %c0_211] : memref<5x64x64xf32, #tpu.memory_space<vmem>>, vector<1x64x64xf32>
    %266 = vector.shape_cast %265 : vector<1x64x64xf32> to vector<64x64xf32>
    %cst_212 = arith.constant dense<0.000000e+00> : vector<16x64xf32>
    %267 = tpu.matmul %264, %266, %cst_212 {dimension_numbers = #tpu.dot_dimension_numbers<[1], [0], [0], [1], [0, 0, 1, 1], [], []>} : vector<16x64xf32>, vector<64x64xf32>, vector<16x64xf32> -> vector<16x64xf32>
    %268 = arith.addf %263, %267 : vector<16x64xf32>
    %c10_213 = arith.constant 10 : index
    %c0_214 = arith.constant 0 : index
    %269 = vector.load %arg25[%c10_213, %c0_214] : memref<32x64xf32, #tpu.memory_space<vmem>>, vector<16x64xf32>
    %c4_215 = arith.constant 4 : index
    %c0_216 = arith.constant 0 : index
    %c0_217 = arith.constant 0 : index
    %270 = vector.load %arg10[%c4_215, %c0_216, %c0_217] : memref<5x64x64xf32, #tpu.memory_space<vmem>>, vector<1x64x64xf32>
    %271 = vector.shape_cast %270 : vector<1x64x64xf32> to vector<64x64xf32>
    %cst_218 = arith.constant dense<0.000000e+00> : vector<16x64xf32>
    %272 = tpu.matmul %269, %271, %cst_218 {dimension_numbers = #tpu.dot_dimension_numbers<[1], [0], [0], [1], [0, 0, 1, 1], [], []>} : vector<16x64xf32>, vector<64x64xf32>, vector<16x64xf32> -> vector<16x64xf32>
    %273 = arith.addf %268, %272 : vector<16x64xf32>
    %c0_219 = arith.constant 0 : index
    %c0_220 = arith.constant 0 : index
    %274 = vector.load %arg11[%c0_219, %c0_220] : memref<1x64xf32, #tpu.memory_space<vmem>>, vector<1x64xf32>
    %275 = vector.broadcast %274 : vector<1x64xf32> to vector<16x64xf32>
    %276 = arith.addf %273, %275 : vector<16x64xf32>
    %cst_221 = arith.constant 0.000000e+00 : f32
    %277 = vector.broadcast %cst_221 : f32 to vector<16x64xf32>
    %278 = arith.maximumf %276, %277 : vector<16x64xf32>
    %279 = tpu.iota {dimensions = array<i32: 0>} : vector<8x16xi32>
    %c2_i32_222 = arith.constant 2 : i32
    %280 = vector.broadcast %c2_i32_222 : i32 to vector<8x16xi32>
    %281 = arith.muli %280, %279 : vector<8x16xi32>
    %282 = tpu.iota {dimensions = array<i32: 1>} : vector<8x16xi32>
    %283 = arith.cmpi eq, %282, %281 : vector<8x16xi32>
    %cst_223 = arith.constant 1.000000e+00 : f32
    %cst_224 = arith.constant 0.000000e+00 : f32
    %284 = vector.broadcast %cst_223 : f32 to vector<8x16xf32>
    %285 = vector.broadcast %cst_224 : f32 to vector<8x16xf32>
    %286 = arith.select %283, %284, %285 : vector<8x16xi1>, vector<8x16xf32>
    %c1_i32_225 = arith.constant 1 : i32
    %287 = vector.broadcast %c1_i32_225 : i32 to vector<8x16xi32>
    %288 = arith.addi %281, %287 : vector<8x16xi32>
    %289 = arith.cmpi eq, %282, %288 : vector<8x16xi32>
    %cst_226 = arith.constant 1.000000e+00 : f32
    %cst_227 = arith.constant 0.000000e+00 : f32
    %290 = vector.broadcast %cst_226 : f32 to vector<8x16xf32>
    %291 = vector.broadcast %cst_227 : f32 to vector<8x16xf32>
    %292 = arith.select %289, %290, %291 : vector<8x16xi1>, vector<8x16xf32>
    %cst_228 = arith.constant dense<0.000000e+00> : vector<8x64xf32>
    %293 = tpu.matmul %286, %278, %cst_228 {dimension_numbers = #tpu.dot_dimension_numbers<[1], [0], [0], [1], [0, 0, 1, 1], [], []>} : vector<8x16xf32>, vector<16x64xf32>, vector<8x64xf32> -> vector<8x64xf32>
    %cst_229 = arith.constant dense<0.000000e+00> : vector<8x64xf32>
    %294 = tpu.matmul %292, %278, %cst_229 {dimension_numbers = #tpu.dot_dimension_numbers<[1], [0], [0], [1], [0, 0, 1, 1], [], []>} : vector<8x16xf32>, vector<16x64xf32>, vector<8x64xf32> -> vector<8x64xf32>
    %295 = arith.maximumf %293, %294 : vector<8x64xf32>
    %cst_230 = arith.constant 0.000000e+00 : f32
    %296 = vector.broadcast %cst_230 : f32 to vector<24x64xf32>
    %c0_231 = arith.constant 0 : index
    %c0_232 = arith.constant 0 : index
    %297 = vector.load %arg26[%c0_231, %c0_232] : memref<24x64xf32, #tpu.memory_space<vmem>>, vector<24x64xf32>
    tpu.vector_store %arg26[%c0_231, %c0_232], %296 {strides = array<i32>} : memref<24x64xf32, #tpu.memory_space<vmem>>, vector<24x64xf32>,
    %c8_233 = arith.constant 8 : index
    %c0_234 = arith.constant 0 : index
    %298 = vector.load %arg26[%c8_233, %c0_234] : memref<24x64xf32, #tpu.memory_space<vmem>>, vector<8x64xf32>
    tpu.vector_store %arg26[%c8_233, %c0_234], %295 {strides = array<i32>} : memref<24x64xf32, #tpu.memory_space<vmem>>, vector<8x64xf32>,
    %cst_235 = arith.constant 0.000000e+00 : f32
    %299 = vector.broadcast %cst_235 : f32 to vector<8x128xf32>
    %c6_236 = arith.constant 6 : index
    %c0_237 = arith.constant 0 : index
    %300 = vector.load %arg26[%c6_236, %c0_237] : memref<24x64xf32, #tpu.memory_space<vmem>>, vector<8x64xf32>
    %c0_238 = arith.constant 0 : index
    %c0_239 = arith.constant 0 : index
    %c0_240 = arith.constant 0 : index
    %301 = vector.load %arg12[%c0_238, %c0_239, %c0_240] : memref<5x64x128xf32, #tpu.memory_space<vmem>>, vector<1x64x128xf32>
    %302 = vector.shape_cast %301 : vector<1x64x128xf32> to vector<64x128xf32>
    %cst_241 = arith.constant dense<0.000000e+00> : vector<8x128xf32>
    %303 = tpu.matmul %300, %302, %cst_241 {dimension_numbers = #tpu.dot_dimension_numbers<[1], [0], [0], [1], [0, 0, 1, 1], [], []>} : vector<8x64xf32>, vector<64x128xf32>, vector<8x128xf32> -> vector<8x128xf32>
    %304 = arith.addf %299, %303 : vector<8x128xf32>
    %c7_242 = arith.constant 7 : index
    %c0_243 = arith.constant 0 : index
    %305 = vector.load %arg26[%c7_242, %c0_243] : memref<24x64xf32, #tpu.memory_space<vmem>>, vector<8x64xf32>
    %c1_244 = arith.constant 1 : index
    %c0_245 = arith.constant 0 : index
    %c0_246 = arith.constant 0 : index
    %306 = vector.load %arg12[%c1_244, %c0_245, %c0_246] : memref<5x64x128xf32, #tpu.memory_space<vmem>>, vector<1x64x128xf32>
    %307 = vector.shape_cast %306 : vector<1x64x128xf32> to vector<64x128xf32>
    %cst_247 = arith.constant dense<0.000000e+00> : vector<8x128xf32>
    %308 = tpu.matmul %305, %307, %cst_247 {dimension_numbers = #tpu.dot_dimension_numbers<[1], [0], [0], [1], [0, 0, 1, 1], [], []>} : vector<8x64xf32>, vector<64x128xf32>, vector<8x128xf32> -> vector<8x128xf32>
    %309 = arith.addf %304, %308 : vector<8x128xf32>
    %c8_248 = arith.constant 8 : index
    %c0_249 = arith.constant 0 : index
    %310 = vector.load %arg26[%c8_248, %c0_249] : memref<24x64xf32, #tpu.memory_space<vmem>>, vector<8x64xf32>
    %c2_250 = arith.constant 2 : index
    %c0_251 = arith.constant 0 : index
    %c0_252 = arith.constant 0 : index
    %311 = vector.load %arg12[%c2_250, %c0_251, %c0_252] : memref<5x64x128xf32, #tpu.memory_space<vmem>>, vector<1x64x128xf32>
    %312 = vector.shape_cast %311 : vector<1x64x128xf32> to vector<64x128xf32>
    %cst_253 = arith.constant dense<0.000000e+00> : vector<8x128xf32>
    %313 = tpu.matmul %310, %312, %cst_253 {dimension_numbers = #tpu.dot_dimension_numbers<[1], [0], [0], [1], [0, 0, 1, 1], [], []>} : vector<8x64xf32>, vector<64x128xf32>, vector<8x128xf32> -> vector<8x128xf32>
    %314 = arith.addf %309, %313 : vector<8x128xf32>
    %c9_254 = arith.constant 9 : index
    %c0_255 = arith.constant 0 : index
    %315 = vector.load %arg26[%c9_254, %c0_255] : memref<24x64xf32, #tpu.memory_space<vmem>>, vector<8x64xf32>
    %c3_256 = arith.constant 3 : index
    %c0_257 = arith.constant 0 : index
    %c0_258 = arith.constant 0 : index
    %316 = vector.load %arg12[%c3_256, %c0_257, %c0_258] : memref<5x64x128xf32, #tpu.memory_space<vmem>>, vector<1x64x128xf32>
    %317 = vector.shape_cast %316 : vector<1x64x128xf32> to vector<64x128xf32>
    %cst_259 = arith.constant dense<0.000000e+00> : vector<8x128xf32>
    %318 = tpu.matmul %315, %317, %cst_259 {dimension_numbers = #tpu.dot_dimension_numbers<[1], [0], [0], [1], [0, 0, 1, 1], [], []>} : vector<8x64xf32>, vector<64x128xf32>, vector<8x128xf32> -> vector<8x128xf32>
    %319 = arith.addf %314, %318 : vector<8x128xf32>
    %c10_260 = arith.constant 10 : index
    %c0_261 = arith.constant 0 : index
    %320 = vector.load %arg26[%c10_260, %c0_261] : memref<24x64xf32, #tpu.memory_space<vmem>>, vector<8x64xf32>
    %c4_262 = arith.constant 4 : index
    %c0_263 = arith.constant 0 : index
    %c0_264 = arith.constant 0 : index
    %321 = vector.load %arg12[%c4_262, %c0_263, %c0_264] : memref<5x64x128xf32, #tpu.memory_space<vmem>>, vector<1x64x128xf32>
    %322 = vector.shape_cast %321 : vector<1x64x128xf32> to vector<64x128xf32>
    %cst_265 = arith.constant dense<0.000000e+00> : vector<8x128xf32>
    %323 = tpu.matmul %320, %322, %cst_265 {dimension_numbers = #tpu.dot_dimension_numbers<[1], [0], [0], [1], [0, 0, 1, 1], [], []>} : vector<8x64xf32>, vector<64x128xf32>, vector<8x128xf32> -> vector<8x128xf32>
    %324 = arith.addf %319, %323 : vector<8x128xf32>
    %c0_266 = arith.constant 0 : index
    %c0_267 = arith.constant 0 : index
    %325 = vector.load %arg13[%c0_266, %c0_267] : memref<1x128xf32, #tpu.memory_space<vmem>>, vector<1x128xf32>
    %326 = vector.broadcast %325 : vector<1x128xf32> to vector<8x128xf32>
    %327 = arith.addf %324, %326 : vector<8x128xf32>
    %cst_268 = arith.constant 0.000000e+00 : f32
    %328 = vector.broadcast %cst_268 : f32 to vector<8x128xf32>
    %329 = arith.maximumf %327, %328 : vector<8x128xf32>
    %330 = tpu.iota {dimensions = array<i32: 0>} : vector<4x8xi32>
    %c2_i32_269 = arith.constant 2 : i32
    %331 = vector.broadcast %c2_i32_269 : i32 to vector<4x8xi32>
    %332 = arith.muli %331, %330 : vector<4x8xi32>
    %333 = tpu.iota {dimensions = array<i32: 1>} : vector<4x8xi32>
    %334 = arith.cmpi eq, %333, %332 : vector<4x8xi32>
    %cst_270 = arith.constant 1.000000e+00 : f32
    %cst_271 = arith.constant 0.000000e+00 : f32
    %335 = vector.broadcast %cst_270 : f32 to vector<4x8xf32>
    %336 = vector.broadcast %cst_271 : f32 to vector<4x8xf32>
    %337 = arith.select %334, %335, %336 : vector<4x8xi1>, vector<4x8xf32>
    %c1_i32_272 = arith.constant 1 : i32
    %338 = vector.broadcast %c1_i32_272 : i32 to vector<4x8xi32>
    %339 = arith.addi %332, %338 : vector<4x8xi32>
    %340 = arith.cmpi eq, %333, %339 : vector<4x8xi32>
    %cst_273 = arith.constant 1.000000e+00 : f32
    %cst_274 = arith.constant 0.000000e+00 : f32
    %341 = vector.broadcast %cst_273 : f32 to vector<4x8xf32>
    %342 = vector.broadcast %cst_274 : f32 to vector<4x8xf32>
    %343 = arith.select %340, %341, %342 : vector<4x8xi1>, vector<4x8xf32>
    %cst_275 = arith.constant dense<0.000000e+00> : vector<4x128xf32>
    %344 = tpu.matmul %337, %329, %cst_275 {dimension_numbers = #tpu.dot_dimension_numbers<[1], [0], [0], [1], [0, 0, 1, 1], [], []>} : vector<4x8xf32>, vector<8x128xf32>, vector<4x128xf32> -> vector<4x128xf32>
    %cst_276 = arith.constant dense<0.000000e+00> : vector<4x128xf32>
    %345 = tpu.matmul %343, %329, %cst_276 {dimension_numbers = #tpu.dot_dimension_numbers<[1], [0], [0], [1], [0, 0, 1, 1], [], []>} : vector<4x8xf32>, vector<8x128xf32>, vector<4x128xf32> -> vector<4x128xf32>
    %346 = arith.maximumf %344, %345 : vector<4x128xf32>
    %cst_277 = arith.constant 0.000000e+00 : f32
    %347 = vector.broadcast %cst_277 : f32 to vector<20x128xf32>
    %c0_278 = arith.constant 0 : index
    %c0_279 = arith.constant 0 : index
    %348 = vector.load %arg27[%c0_278, %c0_279] : memref<20x128xf32, #tpu.memory_space<vmem>>, vector<20x128xf32>
    tpu.vector_store %arg27[%c0_278, %c0_279], %347 {strides = array<i32>} : memref<20x128xf32, #tpu.memory_space<vmem>>, vector<20x128xf32>,
    %c8_280 = arith.constant 8 : index
    %c0_281 = arith.constant 0 : index
    %349 = vector.load %arg27[%c8_280, %c0_281] : memref<20x128xf32, #tpu.memory_space<vmem>>, vector<4x128xf32>
    tpu.vector_store %arg27[%c8_280, %c0_281], %346 {strides = array<i32>} : memref<20x128xf32, #tpu.memory_space<vmem>>, vector<4x128xf32>,
    %cst_282 = arith.constant 0.000000e+00 : f32
    %350 = vector.broadcast %cst_282 : f32 to vector<4x256xf32>
    %c6_283 = arith.constant 6 : index
    %c0_284 = arith.constant 0 : index
    %351 = vector.load %arg27[%c6_283, %c0_284] : memref<20x128xf32, #tpu.memory_space<vmem>>, vector<4x128xf32>
    %c0_285 = arith.constant 0 : index
    %c0_286 = arith.constant 0 : index
    %c0_287 = arith.constant 0 : index
    %352 = vector.load %arg14[%c0_285, %c0_286, %c0_287] : memref<5x128x256xf32, #tpu.memory_space<vmem>>, vector<1x128x256xf32>
    %353 = vector.shape_cast %352 : vector<1x128x256xf32> to vector<128x256xf32>
    %cst_288 = arith.constant dense<0.000000e+00> : vector<4x256xf32>
    %354 = tpu.matmul %351, %353, %cst_288 {dimension_numbers = #tpu.dot_dimension_numbers<[1], [0], [0], [1], [0, 0, 1, 1], [], []>} : vector<4x128xf32>, vector<128x256xf32>, vector<4x256xf32> -> vector<4x256xf32>
    %355 = arith.addf %350, %354 : vector<4x256xf32>
    %c7_289 = arith.constant 7 : index
    %c0_290 = arith.constant 0 : index
    %356 = vector.load %arg27[%c7_289, %c0_290] : memref<20x128xf32, #tpu.memory_space<vmem>>, vector<4x128xf32>
    %c1_291 = arith.constant 1 : index
    %c0_292 = arith.constant 0 : index
    %c0_293 = arith.constant 0 : index
    %357 = vector.load %arg14[%c1_291, %c0_292, %c0_293] : memref<5x128x256xf32, #tpu.memory_space<vmem>>, vector<1x128x256xf32>
    %358 = vector.shape_cast %357 : vector<1x128x256xf32> to vector<128x256xf32>
    %cst_294 = arith.constant dense<0.000000e+00> : vector<4x256xf32>
    %359 = tpu.matmul %356, %358, %cst_294 {dimension_numbers = #tpu.dot_dimension_numbers<[1], [0], [0], [1], [0, 0, 1, 1], [], []>} : vector<4x128xf32>, vector<128x256xf32>, vector<4x256xf32> -> vector<4x256xf32>
    %360 = arith.addf %355, %359 : vector<4x256xf32>
    %c8_295 = arith.constant 8 : index
    %c0_296 = arith.constant 0 : index
    %361 = vector.load %arg27[%c8_295, %c0_296] : memref<20x128xf32, #tpu.memory_space<vmem>>, vector<4x128xf32>
    %c2_297 = arith.constant 2 : index
    %c0_298 = arith.constant 0 : index
    %c0_299 = arith.constant 0 : index
    %362 = vector.load %arg14[%c2_297, %c0_298, %c0_299] : memref<5x128x256xf32, #tpu.memory_space<vmem>>, vector<1x128x256xf32>
    %363 = vector.shape_cast %362 : vector<1x128x256xf32> to vector<128x256xf32>
    %cst_300 = arith.constant dense<0.000000e+00> : vector<4x256xf32>
    %364 = tpu.matmul %361, %363, %cst_300 {dimension_numbers = #tpu.dot_dimension_numbers<[1], [0], [0], [1], [0, 0, 1, 1], [], []>} : vector<4x128xf32>, vector<128x256xf32>, vector<4x256xf32> -> vector<4x256xf32>
    %365 = arith.addf %360, %364 : vector<4x256xf32>
    %c9_301 = arith.constant 9 : index
    %c0_302 = arith.constant 0 : index
    %366 = vector.load %arg27[%c9_301, %c0_302] : memref<20x128xf32, #tpu.memory_space<vmem>>, vector<4x128xf32>
    %c3_303 = arith.constant 3 : index
    %c0_304 = arith.constant 0 : index
    %c0_305 = arith.constant 0 : index
    %367 = vector.load %arg14[%c3_303, %c0_304, %c0_305] : memref<5x128x256xf32, #tpu.memory_space<vmem>>, vector<1x128x256xf32>
    %368 = vector.shape_cast %367 : vector<1x128x256xf32> to vector<128x256xf32>
    %cst_306 = arith.constant dense<0.000000e+00> : vector<4x256xf32>
    %369 = tpu.matmul %366, %368, %cst_306 {dimension_numbers = #tpu.dot_dimension_numbers<[1], [0], [0], [1], [0, 0, 1, 1], [], []>} : vector<4x128xf32>, vector<128x256xf32>, vector<4x256xf32> -> vector<4x256xf32>
    %370 = arith.addf %365, %369 : vector<4x256xf32>
    %c10_307 = arith.constant 10 : index
    %c0_308 = arith.constant 0 : index
    %371 = vector.load %arg27[%c10_307, %c0_308] : memref<20x128xf32, #tpu.memory_space<vmem>>, vector<4x128xf32>
    %c4_309 = arith.constant 4 : index
    %c0_310 = arith.constant 0 : index
    %c0_311 = arith.constant 0 : index
    %372 = vector.load %arg14[%c4_309, %c0_310, %c0_311] : memref<5x128x256xf32, #tpu.memory_space<vmem>>, vector<1x128x256xf32>
    %373 = vector.shape_cast %372 : vector<1x128x256xf32> to vector<128x256xf32>
    %cst_312 = arith.constant dense<0.000000e+00> : vector<4x256xf32>
    %374 = tpu.matmul %371, %373, %cst_312 {dimension_numbers = #tpu.dot_dimension_numbers<[1], [0], [0], [1], [0, 0, 1, 1], [], []>} : vector<4x128xf32>, vector<128x256xf32>, vector<4x256xf32> -> vector<4x256xf32>
    %375 = arith.addf %370, %374 : vector<4x256xf32>
    %c0_313 = arith.constant 0 : index
    %c0_314 = arith.constant 0 : index
    %376 = vector.load %arg15[%c0_313, %c0_314] : memref<1x256xf32, #tpu.memory_space<vmem>>, vector<1x256xf32>
    %377 = vector.broadcast %376 : vector<1x256xf32> to vector<4x256xf32>
    %378 = arith.addf %375, %377 : vector<4x256xf32>
    %cst_315 = arith.constant 0.000000e+00 : f32
    %379 = vector.broadcast %cst_315 : f32 to vector<4x256xf32>
    %380 = arith.maximumf %378, %379 : vector<4x256xf32>
    %381 = tpu.iota {dimensions = array<i32: 0>} : vector<2x4xi32>
    %c2_i32_316 = arith.constant 2 : i32
    %382 = vector.broadcast %c2_i32_316 : i32 to vector<2x4xi32>
    %383 = arith.muli %382, %381 : vector<2x4xi32>
    %384 = tpu.iota {dimensions = array<i32: 1>} : vector<2x4xi32>
    %385 = arith.cmpi eq, %384, %383 : vector<2x4xi32>
    %cst_317 = arith.constant 1.000000e+00 : f32
    %cst_318 = arith.constant 0.000000e+00 : f32
    %386 = vector.broadcast %cst_317 : f32 to vector<2x4xf32>
    %387 = vector.broadcast %cst_318 : f32 to vector<2x4xf32>
    %388 = arith.select %385, %386, %387 : vector<2x4xi1>, vector<2x4xf32>
    %c1_i32_319 = arith.constant 1 : i32
    %389 = vector.broadcast %c1_i32_319 : i32 to vector<2x4xi32>
    %390 = arith.addi %383, %389 : vector<2x4xi32>
    %391 = arith.cmpi eq, %384, %390 : vector<2x4xi32>
    %cst_320 = arith.constant 1.000000e+00 : f32
    %cst_321 = arith.constant 0.000000e+00 : f32
    %392 = vector.broadcast %cst_320 : f32 to vector<2x4xf32>
    %393 = vector.broadcast %cst_321 : f32 to vector<2x4xf32>
    %394 = arith.select %391, %392, %393 : vector<2x4xi1>, vector<2x4xf32>
    %cst_322 = arith.constant dense<0.000000e+00> : vector<2x256xf32>
    %395 = tpu.matmul %388, %380, %cst_322 {dimension_numbers = #tpu.dot_dimension_numbers<[1], [0], [0], [1], [0, 0, 1, 1], [], []>} : vector<2x4xf32>, vector<4x256xf32>, vector<2x256xf32> -> vector<2x256xf32>
    %cst_323 = arith.constant dense<0.000000e+00> : vector<2x256xf32>
    %396 = tpu.matmul %394, %380, %cst_323 {dimension_numbers = #tpu.dot_dimension_numbers<[1], [0], [0], [1], [0, 0, 1, 1], [], []>} : vector<2x4xf32>, vector<4x256xf32>, vector<2x256xf32> -> vector<2x256xf32>
    %397 = arith.maximumf %395, %396 : vector<2x256xf32>
    %cst_324 = arith.constant 0.000000e+00 : f32
    %398 = vector.broadcast %cst_324 : f32 to vector<18x256xf32>
    %c0_325 = arith.constant 0 : index
    %c0_326 = arith.constant 0 : index
    %399 = vector.load %arg28[%c0_325, %c0_326] : memref<18x256xf32, #tpu.memory_space<vmem>>, vector<18x256xf32>
    tpu.vector_store %arg28[%c0_325, %c0_326], %398 {strides = array<i32>} : memref<18x256xf32, #tpu.memory_space<vmem>>, vector<18x256xf32>,
    %c8_327 = arith.constant 8 : index
    %c0_328 = arith.constant 0 : index
    %400 = vector.load %arg28[%c8_327, %c0_328] : memref<18x256xf32, #tpu.memory_space<vmem>>, vector<2x256xf32>
    tpu.vector_store %arg28[%c8_327, %c0_328], %397 {strides = array<i32>} : memref<18x256xf32, #tpu.memory_space<vmem>>, vector<2x256xf32>,
    %cst_329 = arith.constant 0.000000e+00 : f32
    %401 = vector.broadcast %cst_329 : f32 to vector<2x512xf32>
    %c6_330 = arith.constant 6 : index
    %c0_331 = arith.constant 0 : index
    %402 = vector.load %arg28[%c6_330, %c0_331] : memref<18x256xf32, #tpu.memory_space<vmem>>, vector<2x256xf32>
    %c0_332 = arith.constant 0 : index
    %c0_333 = arith.constant 0 : index
    %c0_334 = arith.constant 0 : index
    %403 = vector.load %arg16[%c0_332, %c0_333, %c0_334] : memref<5x256x512xf32, #tpu.memory_space<vmem>>, vector<1x256x512xf32>
    %404 = vector.shape_cast %403 : vector<1x256x512xf32> to vector<256x512xf32>
    %cst_335 = arith.constant dense<0.000000e+00> : vector<2x512xf32>
    %405 = tpu.matmul %402, %404, %cst_335 {dimension_numbers = #tpu.dot_dimension_numbers<[1], [0], [0], [1], [0, 0, 1, 1], [], []>} : vector<2x256xf32>, vector<256x512xf32>, vector<2x512xf32> -> vector<2x512xf32>
    %406 = arith.addf %401, %405 : vector<2x512xf32>
    %c7_336 = arith.constant 7 : index
    %c0_337 = arith.constant 0 : index
    %407 = vector.load %arg28[%c7_336, %c0_337] : memref<18x256xf32, #tpu.memory_space<vmem>>, vector<2x256xf32>
    %c1_338 = arith.constant 1 : index
    %c0_339 = arith.constant 0 : index
    %c0_340 = arith.constant 0 : index
    %408 = vector.load %arg16[%c1_338, %c0_339, %c0_340] : memref<5x256x512xf32, #tpu.memory_space<vmem>>, vector<1x256x512xf32>
    %409 = vector.shape_cast %408 : vector<1x256x512xf32> to vector<256x512xf32>
    %cst_341 = arith.constant dense<0.000000e+00> : vector<2x512xf32>
    %410 = tpu.matmul %407, %409, %cst_341 {dimension_numbers = #tpu.dot_dimension_numbers<[1], [0], [0], [1], [0, 0, 1, 1], [], []>} : vector<2x256xf32>, vector<256x512xf32>, vector<2x512xf32> -> vector<2x512xf32>
    %411 = arith.addf %406, %410 : vector<2x512xf32>
    %c8_342 = arith.constant 8 : index
    %c0_343 = arith.constant 0 : index
    %412 = vector.load %arg28[%c8_342, %c0_343] : memref<18x256xf32, #tpu.memory_space<vmem>>, vector<2x256xf32>
    %c2_344 = arith.constant 2 : index
    %c0_345 = arith.constant 0 : index
    %c0_346 = arith.constant 0 : index
    %413 = vector.load %arg16[%c2_344, %c0_345, %c0_346] : memref<5x256x512xf32, #tpu.memory_space<vmem>>, vector<1x256x512xf32>
    %414 = vector.shape_cast %413 : vector<1x256x512xf32> to vector<256x512xf32>
    %cst_347 = arith.constant dense<0.000000e+00> : vector<2x512xf32>
    %415 = tpu.matmul %412, %414, %cst_347 {dimension_numbers = #tpu.dot_dimension_numbers<[1], [0], [0], [1], [0, 0, 1, 1], [], []>} : vector<2x256xf32>, vector<256x512xf32>, vector<2x512xf32> -> vector<2x512xf32>
    %416 = arith.addf %411, %415 : vector<2x512xf32>
    %c9_348 = arith.constant 9 : index
    %c0_349 = arith.constant 0 : index
    %417 = vector.load %arg28[%c9_348, %c0_349] : memref<18x256xf32, #tpu.memory_space<vmem>>, vector<2x256xf32>
    %c3_350 = arith.constant 3 : index
    %c0_351 = arith.constant 0 : index
    %c0_352 = arith.constant 0 : index
    %418 = vector.load %arg16[%c3_350, %c0_351, %c0_352] : memref<5x256x512xf32, #tpu.memory_space<vmem>>, vector<1x256x512xf32>
    %419 = vector.shape_cast %418 : vector<1x256x512xf32> to vector<256x512xf32>
    %cst_353 = arith.constant dense<0.000000e+00> : vector<2x512xf32>
    %420 = tpu.matmul %417, %419, %cst_353 {dimension_numbers = #tpu.dot_dimension_numbers<[1], [0], [0], [1], [0, 0, 1, 1], [], []>} : vector<2x256xf32>, vector<256x512xf32>, vector<2x512xf32> -> vector<2x512xf32>
    %421 = arith.addf %416, %420 : vector<2x512xf32>
    %c10_354 = arith.constant 10 : index
    %c0_355 = arith.constant 0 : index
    %422 = vector.load %arg28[%c10_354, %c0_355] : memref<18x256xf32, #tpu.memory_space<vmem>>, vector<2x256xf32>
    %c4_356 = arith.constant 4 : index
    %c0_357 = arith.constant 0 : index
    %c0_358 = arith.constant 0 : index
    %423 = vector.load %arg16[%c4_356, %c0_357, %c0_358] : memref<5x256x512xf32, #tpu.memory_space<vmem>>, vector<1x256x512xf32>
    %424 = vector.shape_cast %423 : vector<1x256x512xf32> to vector<256x512xf32>
    %cst_359 = arith.constant dense<0.000000e+00> : vector<2x512xf32>
    %425 = tpu.matmul %422, %424, %cst_359 {dimension_numbers = #tpu.dot_dimension_numbers<[1], [0], [0], [1], [0, 0, 1, 1], [], []>} : vector<2x256xf32>, vector<256x512xf32>, vector<2x512xf32> -> vector<2x512xf32>
    %426 = arith.addf %421, %425 : vector<2x512xf32>
    %c0_360 = arith.constant 0 : index
    %c0_361 = arith.constant 0 : index
    %427 = vector.load %arg17[%c0_360, %c0_361] : memref<1x512xf32, #tpu.memory_space<vmem>>, vector<1x512xf32>
    %428 = vector.broadcast %427 : vector<1x512xf32> to vector<2x512xf32>
    %429 = arith.addf %426, %428 : vector<2x512xf32>
    %cst_362 = arith.constant 0.000000e+00 : f32
    %430 = vector.broadcast %cst_362 : f32 to vector<2x512xf32>
    %431 = arith.maximumf %429, %430 : vector<2x512xf32>
    %cst_363 = arith.constant dense<0xFF800000> : vector<512xf32>
    %432 = vector.multi_reduction <maximumf>, %431, %cst_363 [0] : vector<2x512xf32> to vector<512xf32>
    %433 = vector.shape_cast %432 : vector<512xf32> to vector<1x512xf32>
    %c0_364 = arith.constant 0 : index
    %c0_365 = arith.constant 0 : index
    %434 = vector.load %arg18[%c0_364, %c0_365] : memref<512x2xf32, #tpu.memory_space<vmem>>, vector<512x2xf32>
    %cst_366 = arith.constant dense<0.000000e+00> : vector<1x2xf32>
    %435 = tpu.matmul %433, %434, %cst_366 {dimension_numbers = #tpu.dot_dimension_numbers<[1], [0], [0], [1], [0, 0, 1, 1], [], []>} : vector<1x512xf32>, vector<512x2xf32>, vector<1x2xf32> -> vector<1x2xf32>
    %c0_367 = arith.constant 0 : index
    %c0_368 = arith.constant 0 : index
    %436 = vector.load %arg19[%c0_367, %c0_368] : memref<1x2xf32, #tpu.memory_space<vmem>>, vector<1x2xf32>
    %437 = arith.addf %435, %436 : vector<1x2xf32>
    %c0_369 = arith.constant 0 : index
    %c0_370 = arith.constant 0 : index
    %c0_371 = arith.constant 0 : index
    %438 = vector.load %arg20[%c0_369, %c0_370, %c0_371] : memref<1x1x2xf32, #tpu.memory_space<vmem>>, vector<1x1x2xf32>
    %439 = vector.shape_cast %438 : vector<1x1x2xf32> to vector<1x2xf32>
    %440 = vector.shape_cast %437 : vector<1x2xf32> to vector<1x1x2xf32>
    tpu.vector_store %arg20[%c0_369, %c0_370, %c0_371], %440 {strides = array<i32>} : memref<1x1x2xf32, #tpu.memory_space<vmem>>, vector<1x1x2xf32>,
    return
  }
  func.func @transform_0(%arg0: i32) -> (i32, i32, i32) {
    %c0_i32 = arith.constant 0 : i32
    %c0_i32_0 = arith.constant 0 : i32
    %c0_i32_1 = arith.constant 0 : i32
    return %arg0, %c0_i32, %c0_i32_0 : i32, i32, i32
  }
  func.func @transform_1(%arg0: i32) -> (i32, i32, i32) {
    %c0_i32 = arith.constant 0 : i32
    %c0_i32_0 = arith.constant 0 : i32
    %c0_i32_1 = arith.constant 0 : i32
    %c0_i32_2 = arith.constant 0 : i32
    return %c0_i32, %c0_i32_0, %c0_i32_1 : i32, i32, i32
  }
  func.func @transform_2(%arg0: i32) -> (i32, i32) {
    %c0_i32 = arith.constant 0 : i32
    %c0_i32_0 = arith.constant 0 : i32
    %c0_i32_1 = arith.constant 0 : i32
    return %c0_i32, %c0_i32_0 : i32, i32
  }
  func.func @transform_3(%arg0: i32) -> (i32, i32, i32) {
    %c0_i32 = arith.constant 0 : i32
    %c0_i32_0 = arith.constant 0 : i32
    %c0_i32_1 = arith.constant 0 : i32
    %c0_i32_2 = arith.constant 0 : i32
    return %c0_i32, %c0_i32_0, %c0_i32_1 : i32, i32, i32
  }
  func.func @transform_4(%arg0: i32) -> (i32, i32) {
    %c0_i32 = arith.constant 0 : i32
    %c0_i32_0 = arith.constant 0 : i32
    %c0_i32_1 = arith.constant 0 : i32
    return %c0_i32, %c0_i32_0 : i32, i32
  }
  func.func @transform_5(%arg0: i32) -> (i32, i32, i32) {
    %c0_i32 = arith.constant 0 : i32
    %c0_i32_0 = arith.constant 0 : i32
    %c0_i32_1 = arith.constant 0 : i32
    %c0_i32_2 = arith.constant 0 : i32
    return %c0_i32, %c0_i32_0, %c0_i32_1 : i32, i32, i32
  }
  func.func @transform_6(%arg0: i32) -> (i32, i32) {
    %c0_i32 = arith.constant 0 : i32
    %c0_i32_0 = arith.constant 0 : i32
    %c0_i32_1 = arith.constant 0 : i32
    return %c0_i32, %c0_i32_0 : i32, i32
  }
  func.func @transform_7(%arg0: i32) -> (i32, i32, i32) {
    %c0_i32 = arith.constant 0 : i32
    %c0_i32_0 = arith.constant 0 : i32
    %c0_i32_1 = arith.constant 0 : i32
    %c0_i32_2 = arith.constant 0 : i32
    return %c0_i32, %c0_i32_0, %c0_i32_1 : i32, i32, i32
  }
  func.func @transform_8(%arg0: i32) -> (i32, i32) {
    %c0_i32 = arith.constant 0 : i32
    %c0_i32_0 = arith.constant 0 : i32
    %c0_i32_1 = arith.constant 0 : i32
    return %c0_i32, %c0_i32_0 : i32, i32
  }
  func.func @transform_9(%arg0: i32) -> (i32, i32, i32) {
    %c0_i32 = arith.constant 0 : i32
    %c0_i32_0 = arith.constant 0 : i32
    %c0_i32_1 = arith.constant 0 : i32
    %c0_i32_2 = arith.constant 0 : i32
    return %c0_i32, %c0_i32_0, %c0_i32_1 : i32, i32, i32
  }
  func.func @transform_10(%arg0: i32) -> (i32, i32) {
    %c0_i32 = arith.constant 0 : i32
    %c0_i32_0 = arith.constant 0 : i32
    %c0_i32_1 = arith.constant 0 : i32
    return %c0_i32, %c0_i32_0 : i32, i32
  }
  func.func @transform_11(%arg0: i32) -> (i32, i32, i32) {
    %c0_i32 = arith.constant 0 : i32
    %c0_i32_0 = arith.constant 0 : i32
    %c0_i32_1 = arith.constant 0 : i32
    %c0_i32_2 = arith.constant 0 : i32
    return %c0_i32, %c0_i32_0, %c0_i32_1 : i32, i32, i32
  }
  func.func @transform_12(%arg0: i32) -> (i32, i32) {
    %c0_i32 = arith.constant 0 : i32
    %c0_i32_0 = arith.constant 0 : i32
    %c0_i32_1 = arith.constant 0 : i32
    return %c0_i32, %c0_i32_0 : i32, i32
  }
  func.func @transform_13(%arg0: i32) -> (i32, i32, i32) {
    %c0_i32 = arith.constant 0 : i32
    %c0_i32_0 = arith.constant 0 : i32
    %c0_i32_1 = arith.constant 0 : i32
    %c0_i32_2 = arith.constant 0 : i32
    return %c0_i32, %c0_i32_0, %c0_i32_1 : i32, i32, i32
  }
  func.func @transform_14(%arg0: i32) -> (i32, i32) {
    %c0_i32 = arith.constant 0 : i32
    %c0_i32_0 = arith.constant 0 : i32
    %c0_i32_1 = arith.constant 0 : i32
    return %c0_i32, %c0_i32_0 : i32, i32
  }
  func.func @transform_15(%arg0: i32) -> (i32, i32, i32) {
    %c0_i32 = arith.constant 0 : i32
    %c0_i32_0 = arith.constant 0 : i32
    %c0_i32_1 = arith.constant 0 : i32
    %c0_i32_2 = arith.constant 0 : i32
    return %c0_i32, %c0_i32_0, %c0_i32_1 : i32, i32, i32
  }
  func.func @transform_16(%arg0: i32) -> (i32, i32) {
    %c0_i32 = arith.constant 0 : i32
    %c0_i32_0 = arith.constant 0 : i32
    %c0_i32_1 = arith.constant 0 : i32
    return %c0_i32, %c0_i32_0 : i32, i32
  }
  func.func @transform_17(%arg0: i32) -> (i32, i32) {
    %c0_i32 = arith.constant 0 : i32
    %c0_i32_0 = arith.constant 0 : i32
    %c0_i32_1 = arith.constant 0 : i32
    return %c0_i32, %c0_i32_0 : i32, i32
  }
  func.func @transform_18(%arg0: i32) -> (i32, i32) {
    %c0_i32 = arith.constant 0 : i32
    %c0_i32_0 = arith.constant 0 : i32
    %c0_i32_1 = arith.constant 0 : i32
    return %c0_i32, %c0_i32_0 : i32, i32
  }
  func.func @transform_19(%arg0: i32) -> (i32, i32, i32) {
    %c0_i32 = arith.constant 0 : i32
    %c0_i32_0 = arith.constant 0 : i32
    %c0_i32_1 = arith.constant 0 : i32
    return %arg0, %c0_i32, %c0_i32_0 : i32, i32, i32
  }
}

</mosaic_0001>

<llo_original>
// kernel: classifier_forward.1
$region0: #{classifier_forward.1}
  #allocation0 [shape = 'u32[]', space=smem, size = 0x4, offset = 0x4, fixed_abs, tag = 'smem constant byte address 0x4 - core index']
  #allocation1 [shape = 'u32[72,128]{1,0:T(1,128)}', space=vmem, size = 0x9000, scoped, tag = 'internal scratch']
  #allocation2 [shape = 'f32[272,1]{1,0:T(8,128)}', space=vmem, size = 0x22000, scoped, tag = 'scratch operand']
  #allocation3 [shape = 'f32[144,8]{1,0:T(8,128)}', space=vmem, size = 0x12000, scoped, tag = 'scratch operand']
  #allocation4 [shape = 'f32[80,16]{1,0:T(8,128)}', space=vmem, size = 0xa000, scoped, tag = 'scratch operand']
  #allocation5 [shape = 'f32[48,32]{1,0:T(8,128)}', space=vmem, size = 0x6000, scoped, tag = 'scratch operand']
  #allocation6 [shape = 'f32[32,64]{1,0:T(8,128)}', space=vmem, size = 0x4000, scoped, tag = 'scratch operand']
  #allocation7 [shape = 'f32[24,64]{1,0:T(8,128)}', space=vmem, size = 0x3000, scoped, tag = 'scratch operand']
  #allocation8 [shape = 'f32[20,128]{1,0:T(8,128)}', space=vmem, size = 0x3000, scoped, tag = 'scratch operand']
  #allocation9 [shape = 'f32[18,256]{1,0:T(8,128)}', space=vmem, size = 0x6000, scoped, tag = 'scratch operand']
  %s0 = inlined_call_operand.vmem [shape: f32[2,256,1], index: 0, kind: input, shape index: {}]
  %s1 = inlined_call_operand.hbm [shape: f32[5,1,8], index: 1, kind: input, shape index: {}]
  %s2 = inlined_call_operand.hbm [shape: f32[1,8], index: 2, kind: input, shape index: {}]
  %s3 = inlined_call_operand.hbm [shape: f32[5,8,16], index: 3, kind: input, shape index: {}]
  %s4 = inlined_call_operand.hbm [shape: f32[1,16], index: 4, kind: input, shape index: {}]
  %s5 = inlined_call_operand.hbm [shape: f32[5,16,32], index: 5, kind: input, shape index: {}]
  %s6 = inlined_call_operand.hbm [shape: f32[1,32], index: 6, kind: input, shape index: {}]
  %s7 = inlined_call_operand.hbm [shape: f32[5,32,64], index: 7, kind: input, shape index: {}]
  %s8 = inlined_call_operand.hbm [shape: f32[1,64], index: 8, kind: input, shape index: {}]
  %s9 = inlined_call_operand.hbm [shape: f32[5,64,64], index: 9, kind: input, shape index: {}]
  %s10 = inlined_call_operand.hbm [shape: f32[1,64], index: 10, kind: input, shape index: {}]
  %s11 = inlined_call_operand.hbm [shape: f32[5,64,128], index: 11, kind: input, shape index: {}]
  %s12 = inlined_call_operand.hbm [shape: f32[1,128], index: 12, kind: input, shape index: {}]
  %s13 = inlined_call_operand.hbm [shape: f32[5,128,256], index: 13, kind: input, shape index: {}]
  %s14 = inlined_call_operand.hbm [shape: f32[1,256], index: 14, kind: input, shape index: {}]
  %s15 = inlined_call_operand.hbm [shape: f32[5,256,512], index: 15, kind: input, shape index: {}]
  %s16 = inlined_call_operand.hbm [shape: f32[1,512], index: 16, kind: input, shape index: {}]
  %s17 = inlined_call_operand.vmem [shape: f32[512,2], index: 17, kind: input, shape index: {}]
  %s18 = inlined_call_operand.hbm [shape: f32[1,2], index: 18, kind: input, shape index: {}]
  %s19 = inlined_call_operand.hbm [shape: f32[2,1,2], index: 19, kind: output, shape index: {}]
  %s20 = sld [smem:[#allocation0]]
  $region177: #{classifier_forward.1} parent=0
    _
  %s22 = ssub.s32 1, %s20
  %s23 = scalar_select 0, %s22, %s20
  $region1: #{classifier_forward.1} parent=0
    #allocation10 [shape = 'u8[2560]{0}', space=vmem, size = 0xc00, scoped, tag = 'input window, operand 1, single buffered']
    #allocation11 [shape = 's32[2]{0}', space=sflag, size = 0x8, scoped, tag = 'scoped memory for classifier_forward.1']
    #allocation12 [shape = 's32[2]{0}', space=sflag, size = 0x8, scoped, tag = 'scoped memory for classifier_forward.1']
    #allocation13 [shape = 'u8[512]{0}', space=vmem, size = 0x400, scoped, tag = 'input window, operand 2, single buffered']
    #allocation14 [shape = 's32[1]{0}', space=sflag, size = 0x4, scoped, tag = 'scoped memory for classifier_forward.1']
    #allocation15 [shape = 'u8[20480]{0}', space=vmem, size = 0x5000, scoped, tag = 'input window, operand 3, single buffered']
    #allocation16 [shape = 'u8[512]{0}', space=vmem, size = 0x400, scoped, tag = 'input window, operand 4, single buffered']
    #allocation17 [shape = 's32[1]{0}', space=sflag, size = 0x4, scoped, tag = 'scoped memory for classifier_forward.1']
    #allocation18 [shape = 'u8[40960]{0}', space=vmem, size = 0xa000, scoped, tag = 'input window, operand 5, single buffered']
    #allocation19 [shape = 'u8[512]{0}', space=vmem, size = 0x400, scoped, tag = 'input window, operand 6, single buffered']
    #allocation20 [shape = 's32[1]{0}', space=sflag, size = 0x4, scoped, tag = 'scoped memory for classifier_forward.1']
    #allocation21 [shape = 'u8[81920]{0}', space=vmem, size = 0x14000, scoped, tag = 'input window, operand 7, single buffered']
    #allocation22 [shape = 'u8[512]{0}', space=vmem, size = 0x400, scoped, tag = 'input window, operand 8, single buffered']
    #allocation23 [shape = 's32[1]{0}', space=sflag, size = 0x4, scoped, tag = 'scoped memory for classifier_forward.1']
    #allocation24 [shape = 'u8[163840]{0}', space=vmem, size = 0x28000, scoped, tag = 'input window, operand 9, single buffered']
    #allocation25 [shape = 'u8[512]{0}', space=vmem, size = 0x400, scoped, tag = 'input window, operand 10, single buffered']
    #allocation26 [shape = 's32[1]{0}', space=sflag, size = 0x4, scoped, tag = 'scoped memory for classifier_forward.1']
    #allocation27 [shape = 'u8[163840]{0}', space=vmem, size = 0x28000, scoped, tag = 'input window, operand 11, single buffered']
    #allocation28 [shape = 'u8[512]{0}', space=vmem, size = 0x400, scoped, tag = 'input window, operand 12, single buffered']
    #allocation29 [shape = 's32[1]{0}', space=sflag, size = 0x4, scoped, tag = 'scoped memory for classifier_forward.1']
    #allocation30 [shape = 'u8[655360]{0}', space=vmem, size = 0xa0000, scoped, tag = 'input window, operand 13, single buffered']
    #allocation31 [shape = 'u8[1024]{0}', space=vmem, size = 0x400, scoped, tag = 'input window, operand 14, single buffered']
    #allocation32 [shape = 's32[1]{0}', space=sflag, size = 0x4, scoped, tag = 'scoped memory for classifier_forward.1']
    #allocation33 [shape = 'u8[2621440]{0}', space=vmem, size = 0x280000, scoped, tag = 'input window, operand 15, single buffered']
    #allocation34 [shape = 'u8[2048]{0}', space=vmem, size = 0x800, scoped, tag = 'input window, operand 16, single buffered']
    #allocation35 [shape = 's32[1]{0}', space=sflag, size = 0x4, scoped, tag = 'scoped memory for classifier_forward.1']
    #allocation36 [shape = 'u8[512]{0}', space=vmem, size = 0x400, scoped, tag = 'input window, operand 18, single buffered']
    #allocation37 [shape = 'u8[1024]{0}', space=vmem, size = 0x400, scoped, tag = 'output window, operand 0']
    %24 = vsyncpa [#allocation11], 0
    %25 = vsyncpa [#allocation14], 0
    %26 = vsyncpa [#allocation17], 0
    %27 = vsyncpa [#allocation20], 0
    %28 = vsyncpa [#allocation23], 0
    %29 = vsyncpa [#allocation26], 0
    %30 = vsyncpa [#allocation29], 0
    %31 = vsyncpa [#allocation32], 0
    %32 = vsyncpa [#allocation35], 0
    %33 = vsyncpa [#allocation12], 0
    %s34 = scalar_lea.sflag [#allocation12], 1
    %35 = vsyncpa %s34, 0
    loop: start=0, step=1, limit=4
    $region2: #{classifier_forward.1} parent=1 // loop_pre_header
      _
    $region3: #{classifier_forward.1} parent=1 // loop_header
      %s37 = sphi 0, %s41
      %p38 = scmp.ge.s32.totalorder %s37, 4
      %s47 = sphi 0, %s49
      %s50 = sphi 0, %s47
      %s51 = sphi 0, %s50
      %s67 = sphi 0, %s51
      %s71 = sphi 0, %s71
      %s73 = sphi 0, %s71
      %s74 = sphi 0, %s73
      %s88 = sphi 0, %s74
      %s92 = sphi 0, %s92
      %s94 = sphi 0, %s92
      %s95 = sphi 0, %s94
      %s109 = sphi 0, %s95
      %s113 = sphi 0, %s113
      %s115 = sphi 0, %s113
      %s116 = sphi 0, %s115
      %s130 = sphi 0, %s116
      %s134 = sphi 0, %s134
      %s136 = sphi 0, %s134
      %s137 = sphi 0, %s136
      %s151 = sphi 0, %s137
      %s155 = sphi 0, %s155
      %s157 = sphi 0, %s155
      %s158 = sphi 0, %s157
      %s172 = sphi 0, %s158
      %s176 = sphi 0, %s176
      %s178 = sphi 0, %s176
      %s179 = sphi 0, %s178
      %s193 = sphi 0, %s179
      %s197 = sphi 0, %s197
      %s199 = sphi 0, %s197
      %s200 = sphi 0, %s199
      %s214 = sphi 0, %s200
      %s218 = sphi 0, %s218
      %s220 = sphi 0, %s218
      %s221 = sphi 0, %s220
      %s235 = sphi 0, %s221
      %s239 = sphi 0, %s239
      %s241 = sphi 0, %s239
      %s242 = sphi 0, %s241
      %s256 = sphi 0, %s242
      %s260 = sphi 0, %s260
      %s262 = sphi 0, %s260
      %s263 = sphi 0, %s262
      %s277 = sphi 0, %s263
      %s281 = sphi 0, %s281
      %s283 = sphi 0, %s281
      %s284 = sphi 0, %s283
      %s298 = sphi 0, %s284
      %s302 = sphi 0, %s302
      %s304 = sphi 0, %s302
      %s305 = sphi 0, %s304
      %s319 = sphi 0, %s305
      %s323 = sphi 0, %s323
      %s325 = sphi 0, %s323
      %s326 = sphi 0, %s325
      %s340 = sphi 0, %s326
      %s344 = sphi 0, %s344
      %s346 = sphi 0, %s344
      %s347 = sphi 0, %s346
      %s361 = sphi 0, %s347
      %s365 = sphi 0, %s365
      %s367 = sphi 0, %s365
      %s368 = sphi 0, %s367
      %s382 = sphi 0, %s368
      %s386 = sphi 0, %s386
      %s388 = sphi 0, %s386
      %s389 = sphi 0, %s388
      %s403 = sphi 0, %s389
      %s407 = sphi 0, %s407
      %s409 = sphi 0, %s407
      %s410 = sphi 0, %s409
      %s424 = sphi 0, %s410
      %s428 = sphi 0, %s428
      %s430 = sphi 0, %s428
      %s431 = sphi 0, %s430
      %s445 = sphi 0, %s431
      %s451 = sphi 0, %s453
      %s454 = sphi 0, %s451
      %s455 = sphi 0, %s454
      %s471 = sphi 0, %s455
    $region4: #{classifier_forward.1} parent=1 // loop_header_branch
      %40 = sbr.rel (%p38) target = $region8
    $region5: #{classifier_forward.1} parent=1 // loop_body
      %s42 = ssub.s32 %s37, 1
      %s43 = ssub.s32 %s37, 2
      %s44 = sadd.s32 %s37, 1
      %s45 = ssub.s32 %s37, %s44
      %p46 = scmp.eq.s32.totalorder %s45, 0
      %s48 = sadd.s32 %s47, 1
      %s49 = scalar_select %p46, %s47, %s48
      %p52 = pneg %p46
      %p53 = scmp.eq.s32.totalorder %s37, 1
      %p54 = por %p52, %p53
      %p55 = scmp.ne.s32.totalorder %s47, %s50
      %p56 = scmp.eq.s32.totalorder %s37, 0
      %p57 = por %p55, %p56
      %p58 = scmp.ne.s32.totalorder %s47, %s50
      %p59 = scmp.eq.s32.totalorder %s42, 1
      %p60 = por %p58, %p59
      %p61 = scmp.ne.s32.totalorder %s50, %s51
      %p62 = scmp.eq.s32.totalorder %s42, 0
      %p63 = por %p61, %p62
      %p64 = scmp.ne.s32.totalorder %s50, %s51
      %p65 = scmp.eq.s32.totalorder %s43, 1
      %p66 = por %p64, %p65
      %p68 = scmp.ne.s32.totalorder %s51, %s67
      %p69 = scmp.eq.s32.totalorder %s43, 0
      %p70 = por %p68, %p69
      %s72 = sadd.s32 %s71, 1
      %p75 = scmp.eq.s32.totalorder %s37, 1
      %p76 = scmp.ne.s32.totalorder %s71, %s73
      %p77 = scmp.eq.s32.totalorder %s37, 0
      %p78 = por %p76, %p77
      %p79 = scmp.ne.s32.totalorder %s71, %s73
      %p80 = scmp.eq.s32.totalorder %s42, 1
      %p81 = por %p79, %p80
      %p82 = scmp.ne.s32.totalorder %s73, %s74
      %p83 = scmp.eq.s32.totalorder %s42, 0
      %p84 = por %p82, %p83
      %p85 = scmp.ne.s32.totalorder %s73, %s74
      %p86 = scmp.eq.s32.totalorder %s43, 1
      %p87 = por %p85, %p86
      %p89 = scmp.ne.s32.totalorder %s74, %s88
      %p90 = scmp.eq.s32.totalorder %s43, 0
      %p91 = por %p89, %p90
      %s93 = sadd.s32 %s92, 1
      %p96 = scmp.eq.s32.totalorder %s37, 1
      %p97 = scmp.ne.s32.totalorder %s92, %s94
      %p98 = scmp.eq.s32.totalorder %s37, 0
      %p99 = por %p97, %p98
      %p100 = scmp.ne.s32.totalorder %s92, %s94
      %p101 = scmp.eq.s32.totalorder %s42, 1
      %p102 = por %p100, %p101
      %p103 = scmp.ne.s32.totalorder %s94, %s95
      %p104 = scmp.eq.s32.totalorder %s42, 0
      %p105 = por %p103, %p104
      %p106 = scmp.ne.s32.totalorder %s94, %s95
      %p107 = scmp.eq.s32.totalorder %s43, 1
      %p108 = por %p106, %p107
      %p110 = scmp.ne.s32.totalorder %s95, %s109
      %p111 = scmp.eq.s32.totalorder %s43, 0
      %p112 = por %p110, %p111
      %s114 = sadd.s32 %s113, 1
      %p117 = scmp.eq.s32.totalorder %s37, 1
      %p118 = scmp.ne.s32.totalorder %s113, %s115
      %p119 = scmp.eq.s32.totalorder %s37, 0
      %p120 = por %p118, %p119
      %p121 = scmp.ne.s32.totalorder %s113, %s115
      %p122 = scmp.eq.s32.totalorder %s42, 1
      %p123 = por %p121, %p122
      %p124 = scmp.ne.s32.totalorder %s115, %s116
      %p125 = scmp.eq.s32.totalorder %s42, 0
      %p126 = por %p124, %p125
      %p127 = scmp.ne.s32.totalorder %s115, %s116
      %p128 = scmp.eq.s32.totalorder %s43, 1
      %p129 = por %p127, %p128
      %p131 = scmp.ne.s32.totalorder %s116, %s130
      %p132 = scmp.eq.s32.totalorder %s43, 0
      %p133 = por %p131, %p132
      %s135 = sadd.s32 %s134, 1
      %p138 = scmp.eq.s32.totalorder %s37, 1
      %p139 = scmp.ne.s32.totalorder %s134, %s136
      %p140 = scmp.eq.s32.totalorder %s37, 0
      %p141 = por %p139, %p140
      %p142 = scmp.ne.s32.totalorder %s134, %s136
      %p143 = scmp.eq.s32.totalorder %s42, 1
      %p144 = por %p142, %p143
      %p145 = scmp.ne.s32.totalorder %s136, %s137
      %p146 = scmp.eq.s32.totalorder %s42, 0
      %p147 = por %p145, %p146
      %p148 = scmp.ne.s32.totalorder %s136, %s137
      %p149 = scmp.eq.s32.totalorder %s43, 1
      %p150 = por %p148, %p149
      %p152 = scmp.ne.s32.totalorder %s137, %s151
      %p153 = scmp.eq.s32.totalorder %s43, 0
      %p154 = por %p152, %p153
      %s156 = sadd.s32 %s155, 1
      %p159 = scmp.eq.s32.totalorder %s37, 1
      %p160 = scmp.ne.s32.totalorder %s155, %s157
      %p161 = scmp.eq.s32.totalorder %s37, 0
      %p162 = por %p160, %p161
      %p163 = scmp.ne.s32.totalorder %s155, %s157
      %p164 = scmp.eq.s32.totalorder %s42, 1
      %p165 = por %p163, %p164
      %p166 = scmp.ne.s32.totalorder %s157, %s158
      %p167 = scmp.eq.s32.totalorder %s42, 0
      %p168 = por %p166, %p167
      %p169 = scmp.ne.s32.totalorder %s157, %s158
      %p170 = scmp.eq.s32.totalorder %s43, 1
      %p171 = por %p169, %p170
      %p173 = scmp.ne.s32.totalorder %s158, %s172
      %p174 = scmp.eq.s32.totalorder %s43, 0
      %p175 = por %p173, %p174
      %s177 = sadd.s32 %s176, 1
      %p180 = scmp.eq.s32.totalorder %s37, 1
      %p181 = scmp.ne.s32.totalorder %s176, %s178
      %p182 = scmp.eq.s32.totalorder %s37, 0
      %p183 = por %p181, %p182
      %p184 = scmp.ne.s32.totalorder %s176, %s178
      %p185 = scmp.eq.s32.totalorder %s42, 1
      %p186 = por %p184, %p185
      %p187 = scmp.ne.s32.totalorder %s178, %s179
      %p188 = scmp.eq.s32.totalorder %s42, 0
      %p189 = por %p187, %p188
      %p190 = scmp.ne.s32.totalorder %s178, %s179
      %p191 = scmp.eq.s32.totalorder %s43, 1
      %p192 = por %p190, %p191
      %p194 = scmp.ne.s32.totalorder %s179, %s193
      %p195 = scmp.eq.s32.totalorder %s43, 0
      %p196 = por %p194, %p195
      %s198 = sadd.s32 %s197, 1
      %p201 = scmp.eq.s32.totalorder %s37, 1
      %p202 = scmp.ne.s32.totalorder %s197, %s199
      %p203 = scmp.eq.s32.totalorder %s37, 0
      %p204 = por %p202, %p203
      %p205 = scmp.ne.s32.totalorder %s197, %s199
      %p206 = scmp.eq.s32.totalorder %s42, 1
      %p207 = por %p205, %p206
      %p208 = scmp.ne.s32.totalorder %s199, %s200
      %p209 = scmp.eq.s32.totalorder %s42, 0
      %p210 = por %p208, %p209
      %p211 = scmp.ne.s32.totalorder %s199, %s200
      %p212 = scmp.eq.s32.totalorder %s43, 1
      %p213 = por %p211, %p212
      %p215 = scmp.ne.s32.totalorder %s200, %s214
      %p216 = scmp.eq.s32.totalorder %s43, 0
      %p217 = por %p215, %p216
      %s219 = sadd.s32 %s218, 1
      %p222 = scmp.eq.s32.totalorder %s37, 1
      %p223 = scmp.ne.s32.totalorder %s218, %s220
      %p224 = scmp.eq.s32.totalorder %s37, 0
      %p225 = por %p223, %p224
      %p226 = scmp.ne.s32.totalorder %s218, %s220
      %p227 = scmp.eq.s32.totalorder %s42, 1
      %p228 = por %p226, %p227
      %p229 = scmp.ne.s32.totalorder %s220, %s221
      %p230 = scmp.eq.s32.totalorder %s42, 0
      %p231 = por %p229, %p230
      %p232 = scmp.ne.s32.totalorder %s220, %s221
      %p233 = scmp.eq.s32.totalorder %s43, 1
      %p234 = por %p232, %p233
      %p236 = scmp.ne.s32.totalorder %s221, %s235
      %p237 = scmp.eq.s32.totalorder %s43, 0
      %p238 = por %p236, %p237
      %s240 = sadd.s32 %s239, 1
      %p243 = scmp.eq.s32.totalorder %s37, 1
      %p244 = scmp.ne.s32.totalorder %s239, %s241
      %p245 = scmp.eq.s32.totalorder %s37, 0
      %p246 = por %p244, %p245
      %p247 = scmp.ne.s32.totalorder %s239, %s241
      %p248 = scmp.eq.s32.totalorder %s42, 1
      %p249 = por %p247, %p248
      %p250 = scmp.ne.s32.totalorder %s241, %s242
      %p251 = scmp.eq.s32.totalorder %s42, 0
      %p252 = por %p250, %p251
      %p253 = scmp.ne.s32.totalorder %s241, %s242
      %p254 = scmp.eq.s32.totalorder %s43, 1
      %p255 = por %p253, %p254
      %p257 = scmp.ne.s32.totalorder %s242, %s256
      %p258 = scmp.eq.s32.totalorder %s43, 0
      %p259 = por %p257, %p258
      %s261 = sadd.s32 %s260, 1
      %p264 = scmp.eq.s32.totalorder %s37, 1
      %p265 = scmp.ne.s32.totalorder %s260, %s262
      %p266 = scmp.eq.s32.totalorder %s37, 0
      %p267 = por %p265, %p266
      %p268 = scmp.ne.s32.totalorder %s260, %s262
      %p269 = scmp.eq.s32.totalorder %s42, 1
      %p270 = por %p268, %p269
      %p271 = scmp.ne.s32.totalorder %s262, %s263
      %p272 = scmp.eq.s32.totalorder %s42, 0
      %p273 = por %p271, %p272
      %p274 = scmp.ne.s32.totalorder %s262, %s263
      %p275 = scmp.eq.s32.totalorder %s43, 1
      %p276 = por %p274, %p275
      %p278 = scmp.ne.s32.totalorder %s263, %s277
      %p279 = scmp.eq.s32.totalorder %s43, 0
      %p280 = por %p278, %p279
      %s282 = sadd.s32 %s281, 1
      %p285 = scmp.eq.s32.totalorder %s37, 1
      %p286 = scmp.ne.s32.totalorder %s281, %s283
      %p287 = scmp.eq.s32.totalorder %s37, 0
      %p288 = por %p286, %p287
      %p289 = scmp.ne.s32.totalorder %s281, %s283
      %p290 = scmp.eq.s32.totalorder %s42, 1
      %p291 = por %p289, %p290
      %p292 = scmp.ne.s32.totalorder %s283, %s284
      %p293 = scmp.eq.s32.totalorder %s42, 0
      %p294 = por %p292, %p293
      %p295 = scmp.ne.s32.totalorder %s283, %s284
      %p296 = scmp.eq.s32.totalorder %s43, 1
      %p297 = por %p295, %p296
      %p299 = scmp.ne.s32.totalorder %s284, %s298
      %p300 = scmp.eq.s32.totalorder %s43, 0
      %p301 = por %p299, %p300
      %s303 = sadd.s32 %s302, 1
      %p306 = scmp.eq.s32.totalorder %s37, 1
      %p307 = scmp.ne.s32.totalorder %s302, %s304
      %p308 = scmp.eq.s32.totalorder %s37, 0
      %p309 = por %p307, %p308
      %p310 = scmp.ne.s32.totalorder %s302, %s304
      %p311 = scmp.eq.s32.totalorder %s42, 1
      %p312 = por %p310, %p311
      %p313 = scmp.ne.s32.totalorder %s304, %s305
      %p314 = scmp.eq.s32.totalorder %s42, 0
      %p315 = por %p313, %p314
      %p316 = scmp.ne.s32.totalorder %s304, %s305
      %p317 = scmp.eq.s32.totalorder %s43, 1
      %p318 = por %p316, %p317
      %p320 = scmp.ne.s32.totalorder %s305, %s319
      %p321 = scmp.eq.s32.totalorder %s43, 0
      %p322 = por %p320, %p321
      %s324 = sadd.s32 %s323, 1
      %p327 = scmp.eq.s32.totalorder %s37, 1
      %p328 = scmp.ne.s32.totalorder %s323, %s325
      %p329 = scmp.eq.s32.totalorder %s37, 0
      %p330 = por %p328, %p329
      %p331 = scmp.ne.s32.totalorder %s323, %s325
      %p332 = scmp.eq.s32.totalorder %s42, 1
      %p333 = por %p331, %p332
      %p334 = scmp.ne.s32.totalorder %s325, %s326
      %p335 = scmp.eq.s32.totalorder %s42, 0
      %p336 = por %p334, %p335
      %p337 = scmp.ne.s32.totalorder %s325, %s326
      %p338 = scmp.eq.s32.totalorder %s43, 1
      %p339 = por %p337, %p338
      %p341 = scmp.ne.s32.totalorder %s326, %s340
      %p342 = scmp.eq.s32.totalorder %s43, 0
      %p343 = por %p341, %p342
      %s345 = sadd.s32 %s344, 1
      %p348 = scmp.eq.s32.totalorder %s37, 1
      %p349 = scmp.ne.s32.totalorder %s344, %s346
      %p350 = scmp.eq.s32.totalorder %s37, 0
      %p351 = por %p349, %p350
      %p352 = scmp.ne.s32.totalorder %s344, %s346
      %p353 = scmp.eq.s32.totalorder %s42, 1
      %p354 = por %p352, %p353
      %p355 = scmp.ne.s32.totalorder %s346, %s347
      %p356 = scmp.eq.s32.totalorder %s42, 0
      %p357 = por %p355, %p356
      %p358 = scmp.ne.s32.totalorder %s346, %s347
      %p359 = scmp.eq.s32.totalorder %s43, 1
      %p360 = por %p358, %p359
      %p362 = scmp.ne.s32.totalorder %s347, %s361
      %p363 = scmp.eq.s32.totalorder %s43, 0
      %p364 = por %p362, %p363
      %s366 = sadd.s32 %s365, 1
      %p369 = scmp.eq.s32.totalorder %s37, 1
      %p370 = scmp.ne.s32.totalorder %s365, %s367
      %p371 = scmp.eq.s32.totalorder %s37, 0
      %p372 = por %p370, %p371
      %p373 = scmp.ne.s32.totalorder %s365, %s367
      %p374 = scmp.eq.s32.totalorder %s42, 1
      %p375 = por %p373, %p374
      %p376 = scmp.ne.s32.totalorder %s367, %s368
      %p377 = scmp.eq.s32.totalorder %s42, 0
      %p378 = por %p376, %p377
      %p379 = scmp.ne.s32.totalorder %s367, %s368
      %p380 = scmp.eq.s32.totalorder %s43, 1
      %p381 = por %p379, %p380
      %p383 = scmp.ne.s32.totalorder %s368, %s382
      %p384 = scmp.eq.s32.totalorder %s43, 0
      %p385 = por %p383, %p384
      %s387 = sadd.s32 %s386, 1
      %p390 = scmp.eq.s32.totalorder %s37, 1
      %p391 = scmp.ne.s32.totalorder %s386, %s388
      %p392 = scmp.eq.s32.totalorder %s37, 0
      %p393 = por %p391, %p392
      %p394 = scmp.ne.s32.totalorder %s386, %s388
      %p395 = scmp.eq.s32.totalorder %s42, 1
      %p396 = por %p394, %p395
      %p397 = scmp.ne.s32.totalorder %s388, %s389
      %p398 = scmp.eq.s32.totalorder %s42, 0
      %p399 = por %p397, %p398
      %p400 = scmp.ne.s32.totalorder %s388, %s389
      %p401 = scmp.eq.s32.totalorder %s43, 1
      %p402 = por %p400, %p401
      %p404 = scmp.ne.s32.totalorder %s389, %s403
      %p405 = scmp.eq.s32.totalorder %s43, 0
      %p406 = por %p404, %p405
      %s408 = sadd.s32 %s407, 1
      %p411 = scmp.eq.s32.totalorder %s37, 1
      %p412 = scmp.ne.s32.totalorder %s407, %s409
      %p413 = scmp.eq.s32.totalorder %s37, 0
      %p414 = por %p412, %p413
      %p415 = scmp.ne.s32.totalorder %s407, %s409
      %p416 = scmp.eq.s32.totalorder %s42, 1
      %p417 = por %p415, %p416
      %p418 = scmp.ne.s32.totalorder %s409, %s410
      %p419 = scmp.eq.s32.totalorder %s42, 0
      %p420 = por %p418, %p419
      %p421 = scmp.ne.s32.totalorder %s409, %s410
      %p422 = scmp.eq.s32.totalorder %s43, 1
      %p423 = por %p421, %p422
      %p425 = scmp.ne.s32.totalorder %s410, %s424
      %p426 = scmp.eq.s32.totalorder %s43, 0
      %p427 = por %p425, %p426
      %s429 = sadd.s32 %s428, 1
      %p432 = scmp.eq.s32.totalorder %s37, 1
      %p433 = scmp.ne.s32.totalorder %s428, %s430
      %p434 = scmp.eq.s32.totalorder %s37, 0
      %p435 = por %p433, %p434
      %p436 = scmp.ne.s32.totalorder %s428, %s430
      %p437 = scmp.eq.s32.totalorder %s42, 1
      %p438 = por %p436, %p437
      %p439 = scmp.ne.s32.totalorder %s430, %s431
      %p440 = scmp.eq.s32.totalorder %s42, 0
      %p441 = por %p439, %p440
      %p442 = scmp.ne.s32.totalorder %s430, %s431
      %p443 = scmp.eq.s32.totalorder %s43, 1
      %p444 = por %p442, %p443
      %p446 = scmp.ne.s32.totalorder %s431, %s445
      %p447 = scmp.eq.s32.totalorder %s43, 0
      %p448 = por %p446, %p447
      %s449 = ssub.s32 %s37, %s44
      %p450 = scmp.eq.s32.totalorder %s449, 0
      %s452 = sadd.s32 %s451, 1
      %s453 = scalar_select %p450, %s451, %s452
      %p456 = pneg %p450
      %p457 = scmp.eq.s32.totalorder %s37, 1
      %p458 = por %p456, %p457
      %p459 = scmp.ne.s32.totalorder %s451, %s454
      %p460 = scmp.eq.s32.totalorder %s37, 0
      %p461 = por %p459, %p460
      %p462 = scmp.ne.s32.totalorder %s451, %s454
      %p463 = scmp.eq.s32.totalorder %s42, 1
      %p464 = por %p462, %p463
      %p465 = scmp.ne.s32.totalorder %s454, %s455
      %p466 = scmp.eq.s32.totalorder %s42, 0
      %p467 = por %p465, %p466
      %p468 = scmp.ne.s32.totalorder %s454, %s455
      %p469 = scmp.eq.s32.totalorder %s43, 1
      %p470 = por %p468, %p469
      %p472 = scmp.ne.s32.totalorder %s455, %s471
      %p473 = scmp.eq.s32.totalorder %s43, 0
      %p474 = por %p472, %p473
      %p475 = scmp.le.s32.totalorder 1, %s37
      %p476 = scmp.lt.s32.totalorder %s37, 3
      %p477 = pnand %p475, %p476
      %p478 = pneg %p477
      // Predicated region
      $region9: #{classifier_forward.1} parent=5 // pred_check
        _
      $region10: #{classifier_forward.1} parent=5 // pred_check_branch
        %480 = sbr.rel (%p477) target = $region12
      $region11: #{classifier_forward.1} parent=5 // pred_region
        %s481 = ssub.s32 %s37, 1
        // Predicated region
        $region13: #{classifier_forward.1} parent=11 // pred_check
          %p482 = pneg %p84
        $region14: #{classifier_forward.1} parent=11 // pred_check_branch
          %484 = sbr.rel (%p482) target = $region16
        $region15: #{classifier_forward.1} parent=11 // pred_region
          %486 = vsyncadd [#allocation11], 0
          %s487 = sshll.u32 %s1, 4
          %s488 = int_to_ptr.hbm [resolvable:$true] %s487
          %s489 = sshll.u32 [#allocation10], 4
          %s490 = int_to_ptr.vmem [resolvable:$true] %s489
          %495 = dma.hbm_to_vmem [thread:$0]  %s488, 80, %s490, [#allocation11], 16, 16, 1
        $region16: #{classifier_forward.1} parent=11 // pred_fallthru
          _
        // Predicated region
        $region17: #{classifier_forward.1} parent=11 // pred_check
          %p496 = pneg %p105
        $region18: #{classifier_forward.1} parent=11 // pred_check_branch
          %498 = sbr.rel (%p496) target = $region20
        $region19: #{classifier_forward.1} parent=11 // pred_region
          %500 = vsyncadd [#allocation14], 0
          %s502 = sshll.u32 %s2, 4
          %s503 = int_to_ptr.hbm [resolvable:$true] %s502
          %s504 = sshll.u32 [#allocation13], 4
          %s505 = int_to_ptr.vmem [resolvable:$true] %s504
          %507 = dma.hbm_to_vmem [thread:$0]  %s503, 16, %s505, [#allocation14]
        $region20: #{classifier_forward.1} parent=11 // pred_fallthru
          _
        // Predicated region
        $region21: #{classifier_forward.1} parent=11 // pred_check
          %p508 = pneg %p126
        $region22: #{classifier_forward.1} parent=11 // pred_check_branch
          %510 = sbr.rel (%p508) target = $region24
        $region23: #{classifier_forward.1} parent=11 // pred_region
          %512 = vsyncadd [#allocation14], 0
          %s513 = sshll.u32 %s3, 4
          %s514 = int_to_ptr.hbm [resolvable:$true] %s513
          %s515 = sshll.u32 [#allocation15], 4
          %s516 = int_to_ptr.vmem [resolvable:$true] %s515
          %521 = dma.hbm_to_vmem [thread:$0]  %s514, 640, %s516, [#allocation14], 128, 128, 8
        $region24: #{classifier_forward.1} parent=11 // pred_fallthru
          _
        // Predicated region
        $region25: #{classifier_forward.1} parent=11 // pred_check
          %p522 = pneg %p147
        $region26: #{classifier_forward.1} parent=11 // pred_check_branch
          %524 = sbr.rel (%p522) target = $region28
        $region27: #{classifier_forward.1} parent=11 // pred_region
          %526 = vsyncadd [#allocation17], 0
          %s528 = sshll.u32 %s4, 4
          %s529 = int_to_ptr.hbm [resolvable:$true] %s528
          %s530 = sshll.u32 [#allocation16], 4
          %s531 = int_to_ptr.vmem [resolvable:$true] %s530
          %533 = dma.hbm_to_vmem [thread:$0]  %s529, 16, %s531, [#allocation17]
        $region28: #{classifier_forward.1} parent=11 // pred_fallthru
          _
        // Predicated region
        $region29: #{classifier_forward.1} parent=11 // pred_check
          %p534 = pneg %p168
        $region30: #{classifier_forward.1} parent=11 // pred_check_branch
          %536 = sbr.rel (%p534) target = $region32
        $region31: #{classifier_forward.1} parent=11 // pred_region
          %538 = vsyncadd [#allocation17], 0
          %s539 = sshll.u32 %s5, 4
          %s540 = int_to_ptr.hbm [resolvable:$true] %s539
          %s541 = sshll.u32 [#allocation18], 4
          %s542 = int_to_ptr.vmem [resolvable:$true] %s541
          %547 = dma.hbm_to_vmem [thread:$0]  %s540, 1280, %s542, [#allocation17], 128, 128, 8
        $region32: #{classifier_forward.1} parent=11 // pred_fallthru
          _
        // Predicated region
        $region33: #{classifier_forward.1} parent=11 // pred_check
          %p548 = pneg %p189
        $region34: #{classifier_forward.1} parent=11 // pred_check_branch
          %550 = sbr.rel (%p548) target = $region36
        $region35: #{classifier_forward.1} parent=11 // pred_region
          %552 = vsyncadd [#allocation20], 0
          %s554 = sshll.u32 %s6, 4
          %s555 = int_to_ptr.hbm [resolvable:$true] %s554
          %s556 = sshll.u32 [#allocation19], 4
          %s557 = int_to_ptr.vmem [resolvable:$true] %s556
          %559 = dma.hbm_to_vmem [thread:$0]  %s555, 16, %s557, [#allocation20]
        $region36: #{classifier_forward.1} parent=11 // pred_fallthru
          _
        // Predicated region
        $region37: #{classifier_forward.1} parent=11 // pred_check
          %p560 = pneg %p210
        $region38: #{classifier_forward.1} parent=11 // pred_check_branch
          %562 = sbr.rel (%p560) target = $region40
        $region39: #{classifier_forward.1} parent=11 // pred_region
          %564 = vsyncadd [#allocation20], 0
          %s565 = sshll.u32 %s7, 4
          %s566 = int_to_ptr.hbm [resolvable:$true] %s565
          %s567 = sshll.u32 [#allocation21], 4
          %s568 = int_to_ptr.vmem [resolvable:$true] %s567
          %573 = dma.hbm_to_vmem [thread:$0]  %s566, 2560, %s568, [#allocation20], 128, 128, 8
        $region40: #{classifier_forward.1} parent=11 // pred_fallthru
          _
        // Predicated region
        $region41: #{classifier_forward.1} parent=11 // pred_check
          %p574 = pneg %p231
        $region42: #{classifier_forward.1} parent=11 // pred_check_branch
          %576 = sbr.rel (%p574) target = $region44
        $region43: #{classifier_forward.1} parent=11 // pred_region
          %578 = vsyncadd [#allocation23], 0
          %s580 = sshll.u32 %s8, 4
          %s581 = int_to_ptr.hbm [resolvable:$true] %s580
          %s582 = sshll.u32 [#allocation22], 4
          %s583 = int_to_ptr.vmem [resolvable:$true] %s582
          %585 = dma.hbm_to_vmem [thread:$0]  %s581, 16, %s583, [#allocation23]
        $region44: #{classifier_forward.1} parent=11 // pred_fallthru
          _
        // Predicated region
        $region45: #{classifier_forward.1} parent=11 // pred_check
          %p586 = pneg %p252
        $region46: #{classifier_forward.1} parent=11 // pred_check_branch
          %588 = sbr.rel (%p586) target = $region48
        $region47: #{classifier_forward.1} parent=11 // pred_region
          %590 = vsyncadd [#allocation23], 0
          %s591 = sshll.u32 %s9, 4
          %s592 = int_to_ptr.hbm [resolvable:$true] %s591
          %s593 = sshll.u32 [#allocation24], 4
          %s594 = int_to_ptr.vmem [resolvable:$true] %s593
          %599 = dma.hbm_to_vmem [thread:$0]  %s592, 5120, %s594, [#allocation23], 128, 128, 8
        $region48: #{classifier_forward.1} parent=11 // pred_fallthru
          _
        // Predicated region
        $region49: #{classifier_forward.1} parent=11 // pred_check
          %p600 = pneg %p273
        $region50: #{classifier_forward.1} parent=11 // pred_check_branch
          %602 = sbr.rel (%p600) target = $region52
        $region51: #{classifier_forward.1} parent=11 // pred_region
          %604 = vsyncadd [#allocation26], 0
          %s606 = sshll.u32 %s10, 4
          %s607 = int_to_ptr.hbm [resolvable:$true] %s606
          %s608 = sshll.u32 [#allocation25], 4
          %s609 = int_to_ptr.vmem [resolvable:$true] %s608
          %611 = dma.hbm_to_vmem [thread:$0]  %s607, 16, %s609, [#allocation26]
        $region52: #{classifier_forward.1} parent=11 // pred_fallthru
          _
        // Predicated region
        $region53: #{classifier_forward.1} parent=11 // pred_check
          %p612 = pneg %p294
        $region54: #{classifier_forward.1} parent=11 // pred_check_branch
          %614 = sbr.rel (%p612) target = $region56
        $region55: #{classifier_forward.1} parent=11 // pred_region
          %616 = vsyncadd [#allocation26], 0
          %s617 = sshll.u32 %s11, 4
          %s618 = int_to_ptr.hbm [resolvable:$true] %s617
          %s619 = sshll.u32 [#allocation27], 4
          %s620 = int_to_ptr.vmem [resolvable:$true] %s619
          %625 = dma.hbm_to_vmem [thread:$0]  %s618, 5120, %s620, [#allocation26], 128, 128, 8
        $region56: #{classifier_forward.1} parent=11 // pred_fallthru
          _
        // Predicated region
        $region57: #{classifier_forward.1} parent=11 // pred_check
          %p626 = pneg %p315
        $region58: #{classifier_forward.1} parent=11 // pred_check_branch
          %628 = sbr.rel (%p626) target = $region60
        $region59: #{classifier_forward.1} parent=11 // pred_region
          %630 = vsyncadd [#allocation29], 0
          %s632 = sshll.u32 %s12, 4
          %s633 = int_to_ptr.hbm [resolvable:$true] %s632
          %s634 = sshll.u32 [#allocation28], 4
          %s635 = int_to_ptr.vmem [resolvable:$true] %s634
          %637 = dma.hbm_to_vmem [thread:$0]  %s633, 16, %s635, [#allocation29]
        $region60: #{classifier_forward.1} parent=11 // pred_fallthru
          _
        // Predicated region
        $region61: #{classifier_forward.1} parent=11 // pred_check
          %p638 = pneg %p336
        $region62: #{classifier_forward.1} parent=11 // pred_check_branch
          %640 = sbr.rel (%p638) target = $region64
        $region63: #{classifier_forward.1} parent=11 // pred_region
          %642 = vsyncadd [#allocation29], 0
          %s643 = sshll.u32 %s13, 4
          %s644 = int_to_ptr.hbm [resolvable:$true] %s643
          %s645 = sshll.u32 [#allocation30], 4
          %s646 = int_to_ptr.vmem [resolvable:$true] %s645
          %651 = dma.hbm_to_vmem [thread:$0]  %s644, 20480, %s646, [#allocation29], 256, 256, 16
        $region64: #{classifier_forward.1} parent=11 // pred_fallthru
          _
        // Predicated region
        $region65: #{classifier_forward.1} parent=11 // pred_check
          %p652 = pneg %p357
        $region66: #{classifier_forward.1} parent=11 // pred_check_branch
          %654 = sbr.rel (%p652) target = $region68
        $region67: #{classifier_forward.1} parent=11 // pred_region
          %656 = vsyncadd [#allocation32], 0
          %s658 = sshll.u32 %s14, 4
          %s659 = int_to_ptr.hbm [resolvable:$true] %s658
          %s660 = sshll.u32 [#allocation31], 4
          %s661 = int_to_ptr.vmem [resolvable:$true] %s660
          %663 = dma.hbm_to_vmem [thread:$0]  %s659, 32, %s661, [#allocation32]
        $region68: #{classifier_forward.1} parent=11 // pred_fallthru
          _
        // Predicated region
        $region69: #{classifier_forward.1} parent=11 // pred_check
          %p664 = pneg %p378
        $region70: #{classifier_forward.1} parent=11 // pred_check_branch
          %666 = sbr.rel (%p664) target = $region72
        $region71: #{classifier_forward.1} parent=11 // pred_region
          %668 = vsyncadd [#allocation32], 0
          %s669 = sshll.u32 %s15, 4
          %s670 = int_to_ptr.hbm [resolvable:$true] %s669
          %s671 = sshll.u32 [#allocation33], 4
          %s672 = int_to_ptr.vmem [resolvable:$true] %s671
          %677 = dma.hbm_to_vmem [thread:$0]  %s670, 81920, %s672, [#allocation32], 512, 512, 32
        $region72: #{classifier_forward.1} parent=11 // pred_fallthru
          _
        // Predicated region
        $region73: #{classifier_forward.1} parent=11 // pred_check
          %p678 = pneg %p399
        $region74: #{classifier_forward.1} parent=11 // pred_check_branch
          %680 = sbr.rel (%p678) target = $region76
        $region75: #{classifier_forward.1} parent=11 // pred_region
          %682 = vsyncadd [#allocation35], 0
          %s684 = sshll.u32 %s16, 4
          %s685 = int_to_ptr.hbm [resolvable:$true] %s684
          %s686 = sshll.u32 [#allocation34], 4
          %s687 = int_to_ptr.vmem [resolvable:$true] %s686
          %689 = dma.hbm_to_vmem [thread:$0]  %s685, 64, %s687, [#allocation35]
        $region76: #{classifier_forward.1} parent=11 // pred_fallthru
          _
        // Predicated region
        $region77: #{classifier_forward.1} parent=11 // pred_check
          %p690 = pneg %p420
        $region78: #{classifier_forward.1} parent=11 // pred_check_branch
          %692 = sbr.rel (%p690) target = $region80
        $region79: #{classifier_forward.1} parent=11 // pred_region
          _
        $region80: #{classifier_forward.1} parent=11 // pred_fallthru
          _
        // Predicated region
        $region81: #{classifier_forward.1} parent=11 // pred_check
          %p693 = pneg %p441
        $region82: #{classifier_forward.1} parent=11 // pred_check_branch
          %695 = sbr.rel (%p693) target = $region84
        $region83: #{classifier_forward.1} parent=11 // pred_region
          %697 = vsyncadd [#allocation35], 0
          %s699 = sshll.u32 %s18, 4
          %s700 = int_to_ptr.hbm [resolvable:$true] %s699
          %s701 = sshll.u32 [#allocation36], 4
          %s702 = int_to_ptr.vmem [resolvable:$true] %s701
          %704 = dma.hbm_to_vmem [thread:$0]  %s700, 16, %s702, [#allocation35]
        $region84: #{classifier_forward.1} parent=11 // pred_fallthru
          _
      $region12: #{classifier_forward.1} parent=5 // pred_fallthru
        _
      %p705 = scmp.lt.s32.totalorder %s37, 2
      // Predicated region
      $region85: #{classifier_forward.1} parent=5 // pred_check
        %p706 = pneg %p705
      $region86: #{classifier_forward.1} parent=5 // pred_check_branch
        %708 = sbr.rel (%p706) target = $region88
      $region87: #{classifier_forward.1} parent=5 // pred_region
        // Predicated region
        $region89: #{classifier_forward.1} parent=87 // pred_check
          %p709 = pneg %p57
        $region90: #{classifier_forward.1} parent=87 // pred_check_branch
          %711 = sbr.rel (%p709) target = $region92
        $region91: #{classifier_forward.1} parent=87 // pred_region
          %p712 = scmp.lt.s32.totalorder %s37, 1
          %s713 = scalar_select %p712, %s37, 1
          %s714 = smul.addr %s713, 32
          %s715 = smul.addr %s714, 8
          %s716 = scalar_lea.vmem %s0, %s715
        $region92: #{classifier_forward.1} parent=87 // pred_fallthru
          _
      $region88: #{classifier_forward.1} parent=5 // pred_fallthru
        _
      %p717 = scmp.le.s32.totalorder 1, %s37
      %p718 = scmp.lt.s32.totalorder %s37, 3
      %p719 = pnand %p717, %p718
      %p720 = pneg %p719
      // Predicated region
      $region93: #{classifier_forward.1} parent=5 // pred_check
        _
      $region94: #{classifier_forward.1} parent=5 // pred_check_branch
        %722 = sbr.rel (%p719) target = $region96
      $region95: #{classifier_forward.1} parent=5 // pred_region
        %s723 = ssub.s32 %s37, 1
        // Predicated region
        $region97: #{classifier_forward.1} parent=95 // pred_check
          %p724 = pneg %p84
        $region98: #{classifier_forward.1} parent=95 // pred_check_branch
          %726 = sbr.rel (%p724) target = $region100
        $region99: #{classifier_forward.1} parent=95 // pred_region
          %728 = dma.done [#allocation11], 80
        $region100: #{classifier_forward.1} parent=95 // pred_fallthru
          _
        // Predicated region
        $region101: #{classifier_forward.1} parent=95 // pred_check
          %p729 = pneg %p105
        $region102: #{classifier_forward.1} parent=95 // pred_check_branch
          %731 = sbr.rel (%p729) target = $region104
        $region103: #{classifier_forward.1} parent=95 // pred_region
          %733 = dma.done [#allocation14], 16
        $region104: #{classifier_forward.1} parent=95 // pred_fallthru
          _
        // Predicated region
        $region105: #{classifier_forward.1} parent=95 // pred_check
          %p734 = pneg %p126
        $region106: #{classifier_forward.1} parent=95 // pred_check_branch
          %736 = sbr.rel (%p734) target = $region108
        $region107: #{classifier_forward.1} parent=95 // pred_region
          %738 = dma.done [#allocation14], 640
        $region108: #{classifier_forward.1} parent=95 // pred_fallthru
          _
        // Predicated region
        $region109: #{classifier_forward.1} parent=95 // pred_check
          %p739 = pneg %p147
        $region110: #{classifier_forward.1} parent=95 // pred_check_branch
          %741 = sbr.rel (%p739) target = $region112
        $region111: #{classifier_forward.1} parent=95 // pred_region
          %743 = dma.done [#allocation17], 16
        $region112: #{classifier_forward.1} parent=95 // pred_fallthru
          _
        // Predicated region
        $region113: #{classifier_forward.1} parent=95 // pred_check
          %p744 = pneg %p168
        $region114: #{classifier_forward.1} parent=95 // pred_check_branch
          %746 = sbr.rel (%p744) target = $region116
        $region115: #{classifier_forward.1} parent=95 // pred_region
          %748 = dma.done [#allocation17], 1280
        $region116: #{classifier_forward.1} parent=95 // pred_fallthru
          _
        // Predicated region
        $region117: #{classifier_forward.1} parent=95 // pred_check
          %p749 = pneg %p189
        $region118: #{classifier_forward.1} parent=95 // pred_check_branch
          %751 = sbr.rel (%p749) target = $region120
        $region119: #{classifier_forward.1} parent=95 // pred_region
          %753 = dma.done [#allocation20], 16
        $region120: #{classifier_forward.1} parent=95 // pred_fallthru
          _
        // Predicated region
        $region121: #{classifier_forward.1} parent=95 // pred_check
          %p754 = pneg %p210
        $region122: #{classifier_forward.1} parent=95 // pred_check_branch
          %756 = sbr.rel (%p754) target = $region124
        $region123: #{classifier_forward.1} parent=95 // pred_region
          %758 = dma.done [#allocation20], 2560
        $region124: #{classifier_forward.1} parent=95 // pred_fallthru
          _
        // Predicated region
        $region125: #{classifier_forward.1} parent=95 // pred_check
          %p759 = pneg %p231
        $region126: #{classifier_forward.1} parent=95 // pred_check_branch
          %761 = sbr.rel (%p759) target = $region128
        $region127: #{classifier_forward.1} parent=95 // pred_region
          %763 = dma.done [#allocation23], 16
        $region128: #{classifier_forward.1} parent=95 // pred_fallthru
          _
        // Predicated region
        $region129: #{classifier_forward.1} parent=95 // pred_check
          %p764 = pneg %p252
        $region130: #{classifier_forward.1} parent=95 // pred_check_branch
          %766 = sbr.rel (%p764) target = $region132
        $region131: #{classifier_forward.1} parent=95 // pred_region
          %768 = dma.done [#allocation23], 5120
        $region132: #{classifier_forward.1} parent=95 // pred_fallthru
          _
        // Predicated region
        $region133: #{classifier_forward.1} parent=95 // pred_check
          %p769 = pneg %p273
        $region134: #{classifier_forward.1} parent=95 // pred_check_branch
          %771 = sbr.rel (%p769) target = $region136
        $region135: #{classifier_forward.1} parent=95 // pred_region
          %773 = dma.done [#allocation26], 16
        $region136: #{classifier_forward.1} parent=95 // pred_fallthru
          _
        // Predicated region
        $region137: #{classifier_forward.1} parent=95 // pred_check
          %p774 = pneg %p294
        $region138: #{classifier_forward.1} parent=95 // pred_check_branch
          %776 = sbr.rel (%p774) target = $region140
        $region139: #{classifier_forward.1} parent=95 // pred_region
          %778 = dma.done [#allocation26], 5120
        $region140: #{classifier_forward.1} parent=95 // pred_fallthru
          _
        // Predicated region
        $region141: #{classifier_forward.1} parent=95 // pred_check
          %p779 = pneg %p315
        $region142: #{classifier_forward.1} parent=95 // pred_check_branch
          %781 = sbr.rel (%p779) target = $region144
        $region143: #{classifier_forward.1} parent=95 // pred_region
          %783 = dma.done [#allocation29], 16
        $region144: #{classifier_forward.1} parent=95 // pred_fallthru
          _
        // Predicated region
        $region145: #{classifier_forward.1} parent=95 // pred_check
          %p784 = pneg %p336
        $region146: #{classifier_forward.1} parent=95 // pred_check_branch
          %786 = sbr.rel (%p784) target = $region148
        $region147: #{classifier_forward.1} parent=95 // pred_region
          %788 = dma.done [#allocation29], 20480
        $region148: #{classifier_forward.1} parent=95 // pred_fallthru
          _
        // Predicated region
        $region149: #{classifier_forward.1} parent=95 // pred_check
          %p789 = pneg %p357
        $region150: #{classifier_forward.1} parent=95 // pred_check_branch
          %791 = sbr.rel (%p789) target = $region152
        $region151: #{classifier_forward.1} parent=95 // pred_region
          %793 = dma.done [#allocation32], 32
        $region152: #{classifier_forward.1} parent=95 // pred_fallthru
          _
        // Predicated region
        $region153: #{classifier_forward.1} parent=95 // pred_check
          %p794 = pneg %p378
        $region154: #{classifier_forward.1} parent=95 // pred_check_branch
          %796 = sbr.rel (%p794) target = $region156
        $region155: #{classifier_forward.1} parent=95 // pred_region
          %798 = dma.done [#allocation32], 81920
        $region156: #{classifier_forward.1} parent=95 // pred_fallthru
          _
        // Predicated region
        $region157: #{classifier_forward.1} parent=95 // pred_check
          %p799 = pneg %p399
        $region158: #{classifier_forward.1} parent=95 // pred_check_branch
          %801 = sbr.rel (%p799) target = $region160
        $region159: #{classifier_forward.1} parent=95 // pred_region
          %803 = dma.done [#allocation35], 64
        $region160: #{classifier_forward.1} parent=95 // pred_fallthru
          _
        // Predicated region
        $region161: #{classifier_forward.1} parent=95 // pred_check
          %p804 = pneg %p441
        $region162: #{classifier_forward.1} parent=95 // pred_check_branch
          %806 = sbr.rel (%p804) target = $region164
        $region163: #{classifier_forward.1} parent=95 // pred_region
          %808 = dma.done [#allocation35], 16
        $region164: #{classifier_forward.1} parent=95 // pred_fallthru
          _
        %p809 = scmp.lt.s32.totalorder %s42, 1
        %s810 = scalar_select %p809, %s42, 1
        %s811 = smul.addr %s810, 32
        %s812 = smul.addr %s811, 8
        %s813 = scalar_lea.vmem %s0, %s812
        %p814 = pneg %p63
        %p815 = pneg %p60
        %p816 = pneg %p84
        %p817 = pneg %p81
        %p818 = pneg %p105
        %p819 = pneg %p102
        %p820 = pneg %p126
        %p821 = pneg %p123
        %p822 = pneg %p147
        %p823 = pneg %p144
        %p824 = pneg %p168
        %p825 = pneg %p165
        %p826 = pneg %p189
        %p827 = pneg %p186
        %p828 = pneg %p210
        %p829 = pneg %p207
        %p830 = pneg %p231
        %p831 = pneg %p228
        %p832 = pneg %p252
        %p833 = pneg %p249
        %p834 = pneg %p273
        %p835 = pneg %p270
        %p836 = pneg %p294
        %p837 = pneg %p291
        %p838 = pneg %p315
        %p839 = pneg %p312
        %p840 = pneg %p336
        %p841 = pneg %p333
        %p842 = pneg %p357
        %p843 = pneg %p354
        %p844 = pneg %p378
        %p845 = pneg %p375
        %p846 = pneg %p399
        %p847 = pneg %p396
        %p848 = pneg %p420
        %p849 = pneg %p417
        %p850 = pneg %p441
        %p851 = pneg %p438
        %p852 = pneg %p467
        %p853 = pneg %p464
        %s854 = sand.u32 %s454, 1
        %s855 = scalar_lea.sflag [#allocation12], %s854
        %s856 = sand.u32 %s454, 1
        %s857 = scalar_lea.vmem [#allocation37], %s856
        %p858 = scmp.lt.s32.totalorder %s42, 1
        %s859 = scalar_select %p858, %s42, 1
        %s860 = smul.addr %s859, 32
        %s861 = smul.addr %s860, 8
        %s862 = scalar_lea.vmem %s0, %s861
        %v863 = vld [vmem:[%s862] sm:$0xff]
        %v864 = vld [vmem:[%s862 + $0x8] sm:$0xff]
        %v865 = vld [vmem:[%s862 + $0x10] sm:$0xff]
        %v866 = vld [vmem:[%s862 + $0x18] sm:$0xff]
        %v867 = vld [vmem:[%s862 + $0x20] sm:$0xff]
        %v868 = vld [vmem:[%s862 + $0x28] sm:$0xff]
        %v869 = vld [vmem:[%s862 + $0x30] sm:$0xff]
        %v870 = vld [vmem:[%s862 + $0x38] sm:$0xff]
        %v871 = vld [vmem:[%s862 + $0x40] sm:$0xff]
        %v872 = vld [vmem:[%s862 + $0x48] sm:$0xff]
        %v873 = vld [vmem:[%s862 + $0x50] sm:$0xff]
        %v874 = vld [vmem:[%s862 + $0x58] sm:$0xff]
        %v875 = vld [vmem:[%s862 + $0x60] sm:$0xff]
        %v876 = vld [vmem:[%s862 + $0x68] sm:$0xff]
        %v877 = vld [vmem:[%s862 + $0x70] sm:$0xff]
        %v878 = vld [vmem:[%s862 + $0x78] sm:$0xff]
        %v879 = vld [vmem:[%s862 + $0x80] sm:$0xff]
        %v880 = vld [vmem:[%s862 + $0x88] sm:$0xff]
        %v881 = vld [vmem:[%s862 + $0x90] sm:$0xff]
        %v882 = vld [vmem:[%s862 + $0x98] sm:$0xff]
        %v883 = vld [vmem:[%s862 + $0xa0] sm:$0xff]
        %v884 = vld [vmem:[%s862 + $0xa8] sm:$0xff]
        %v885 = vld [vmem:[%s862 + $0xb0] sm:$0xff]
        %v886 = vld [vmem:[%s862 + $0xb8] sm:$0xff]
        %v887 = vld [vmem:[%s862 + $0xc0] sm:$0xff]
        %v888 = vld [vmem:[%s862 + $0xc8] sm:$0xff]
        %v889 = vld [vmem:[%s862 + $0xd0] sm:$0xff]
        %v890 = vld [vmem:[%s862 + $0xd8] sm:$0xff]
        %v891 = vld [vmem:[%s862 + $0xe0] sm:$0xff]
        %v892 = vld [vmem:[%s862 + $0xe8] sm:$0xff]
        %v893 = vld [vmem:[%s862 + $0xf0] sm:$0xff]
        %v894 = vld [vmem:[%s862 + $0xf8] sm:$0xff]
        %vm895 = vcmp.lt.f32.partialorder %v863, 0.0001
        %vm896 = vcmp.lt.f32.partialorder %v864, 0.0001
        %vm897 = vcmp.lt.f32.partialorder %v865, 0.0001
        %vm898 = vcmp.lt.f32.partialorder %v866, 0.0001
        %vm899 = vcmp.lt.f32.partialorder %v867, 0.0001
        %vm900 = vcmp.lt.f32.partialorder %v868, 0.0001
        %vm901 = vcmp.lt.f32.partialorder %v869, 0.0001
        %vm902 = vcmp.lt.f32.partialorder %v870, 0.0001
        %vm903 = vcmp.lt.f32.partialorder %v871, 0.0001
        %vm904 = vcmp.lt.f32.partialorder %v872, 0.0001
        %vm905 = vcmp.lt.f32.partialorder %v873, 0.0001
        %vm906 = vcmp.lt.f32.partialorder %v874, 0.0001
        %vm907 = vcmp.lt.f32.partialorder %v875, 0.0001
        %vm908 = vcmp.lt.f32.partialorder %v876, 0.0001
        %vm909 = vcmp.lt.f32.partialorder %v877, 0.0001
        %vm910 = vcmp.lt.f32.partialorder %v878, 0.0001
        %vm911 = vcmp.lt.f32.partialorder %v879, 0.0001
        %vm912 = vcmp.lt.f32.partialorder %v880, 0.0001
        %vm913 = vcmp.lt.f32.partialorder %v881, 0.0001
        %vm914 = vcmp.lt.f32.partialorder %v882, 0.0001
        %vm915 = vcmp.lt.f32.partialorder %v883, 0.0001
        %vm916 = vcmp.lt.f32.partialorder %v884, 0.0001
        %vm917 = vcmp.lt.f32.partialorder %v885, 0.0001
        %vm918 = vcmp.lt.f32.partialorder %v886, 0.0001
        %vm919 = vcmp.lt.f32.partialorder %v887, 0.0001
        %vm920 = vcmp.lt.f32.partialorder %v888, 0.0001
        %vm921 = vcmp.lt.f32.partialorder %v889, 0.0001
        %vm922 = vcmp.lt.f32.partialorder %v890, 0.0001
        %vm923 = vcmp.lt.f32.partialorder %v891, 0.0001
        %vm924 = vcmp.lt.f32.partialorder %v892, 0.0001
        %vm925 = vcmp.lt.f32.partialorder %v893, 0.0001
        %vm926 = vcmp.lt.f32.partialorder %v894, 0.0001
        %v927 = vsel %vm895, 0.0, %v863
        %v928 = vsel %vm896, 0.0, %v864
        %v929 = vsel %vm897, 0.0, %v865
        %v930 = vsel %vm898, 0.0, %v866
        %v931 = vsel %vm899, 0.0, %v867
        %v932 = vsel %vm900, 0.0, %v868
        %v933 = vsel %vm901, 0.0, %v869
        %v934 = vsel %vm902, 0.0, %v870
        %v935 = vsel %vm903, 0.0, %v871
        %v936 = vsel %vm904, 0.0, %v872
        %v937 = vsel %vm905, 0.0, %v873
        %v938 = vsel %vm906, 0.0, %v874
        %v939 = vsel %vm907, 0.0, %v875
        %v940 = vsel %vm908, 0.0, %v876
        %v941 = vsel %vm909, 0.0, %v877
        %v942 = vsel %vm910, 0.0, %v878
        %v943 = vsel %vm911, 0.0, %v879
        %v944 = vsel %vm912, 0.0, %v880
        %v945 = vsel %vm913, 0.0, %v881
        %v946 = vsel %vm914, 0.0, %v882
        %v947 = vsel %vm915, 0.0, %v883
        %v948 = vsel %vm916, 0.0, %v884
        %v949 = vsel %vm917, 0.0, %v885
        %v950 = vsel %vm918, 0.0, %v886
        %v951 = vsel %vm919, 0.0, %v887
        %v952 = vsel %vm920, 0.0, %v888
        %v953 = vsel %vm921, 0.0, %v889
        %v954 = vsel %vm922, 0.0, %v890
        %v955 = vsel %vm923, 0.0, %v891
        %v956 = vsel %vm924, 0.0, %v892
        %v957 = vsel %vm925, 0.0, %v893
        %v958 = vsel %vm926, 0.0, %v894
        %vm959 = vcmp.ne.f32.partialorder %v927, 0.0
        %vm960 = vcmp.ne.f32.partialorder %v928, 0.0
        %vm961 = vcmp.ne.f32.partialorder %v929, 0.0
        %vm962 = vcmp.ne.f32.partialorder %v930, 0.0
        %vm963 = vcmp.ne.f32.partialorder %v931, 0.0
        %vm964 = vcmp.ne.f32.partialorder %v932, 0.0
        %vm965 = vcmp.ne.f32.partialorder %v933, 0.0
        %vm966 = vcmp.ne.f32.partialorder %v934, 0.0
        %vm967 = vcmp.ne.f32.partialorder %v935, 0.0
        %vm968 = vcmp.ne.f32.partialorder %v936, 0.0
        %vm969 = vcmp.ne.f32.partialorder %v937, 0.0
        %vm970 = vcmp.ne.f32.partialorder %v938, 0.0
        %vm971 = vcmp.ne.f32.partialorder %v939, 0.0
        %vm972 = vcmp.ne.f32.partialorder %v940, 0.0
        %vm973 = vcmp.ne.f32.partialorder %v941, 0.0
        %vm974 = vcmp.ne.f32.partialorder %v942, 0.0
        %vm975 = vcmp.ne.f32.partialorder %v943, 0.0
        %vm976 = vcmp.ne.f32.partialorder %v944, 0.0
        %vm977 = vcmp.ne.f32.partialorder %v945, 0.0
        %vm978 = vcmp.ne.f32.partialorder %v946, 0.0
        %vm979 = vcmp.ne.f32.partialorder %v947, 0.0
        %vm980 = vcmp.ne.f32.partialorder %v948, 0.0
        %vm981 = vcmp.ne.f32.partialorder %v949, 0.0
        %vm982 = vcmp.ne.f32.partialorder %v950, 0.0
        %vm983 = vcmp.ne.f32.partialorder %v951, 0.0
        %vm984 = vcmp.ne.f32.partialorder %v952, 0.0
        %vm985 = vcmp.ne.f32.partialorder %v953, 0.0
        %vm986 = vcmp.ne.f32.partialorder %v954, 0.0
        %vm987 = vcmp.ne.f32.partialorder %v955, 0.0
        %vm988 = vcmp.ne.f32.partialorder %v956, 0.0
        %vm989 = vcmp.ne.f32.partialorder %v957, 0.0
        %vm990 = vcmp.ne.f32.partialorder %v958, 0.0
        %v991 = vsel %vm959, %v927, 1.0
        %v992 = vsel %vm960, %v928, 1.0
        %v993 = vsel %vm961, %v929, 1.0
        %v994 = vsel %vm962, %v930, 1.0
        %v995 = vsel %vm963, %v931, 1.0
        %v996 = vsel %vm964, %v932, 1.0
        %v997 = vsel %vm965, %v933, 1.0
        %v998 = vsel %vm966, %v934, 1.0
        %v999 = vsel %vm967, %v935, 1.0
        %v1000 = vsel %vm968, %v936, 1.0
        %v1001 = vsel %vm969, %v937, 1.0
        %v1002 = vsel %vm970, %v938, 1.0
        %v1003 = vsel %vm971, %v939, 1.0
        %v1004 = vsel %vm972, %v940, 1.0
        %v1005 = vsel %vm973, %v941, 1.0
        %v1006 = vsel %vm974, %v942, 1.0
        %v1007 = vsel %vm975, %v943, 1.0
        %v1008 = vsel %vm976, %v944, 1.0
        %v1009 = vsel %vm977, %v945, 1.0
        %v1010 = vsel %vm978, %v946, 1.0
        %v1011 = vsel %vm979, %v947, 1.0
        %v1012 = vsel %vm980, %v948, 1.0
        %v1013 = vsel %vm981, %v949, 1.0
        %v1014 = vsel %vm982, %v950, 1.0
        %v1015 = vsel %vm983, %v951, 1.0
        %v1016 = vsel %vm984, %v952, 1.0
        %v1017 = vsel %vm985, %v953, 1.0
        %v1018 = vsel %vm986, %v954, 1.0
        %v1019 = vsel %vm987, %v955, 1.0
        %v1020 = vsel %vm988, %v956, 1.0
        %v1021 = vsel %vm989, %v957, 1.0
        %v1022 = vsel %vm990, %v958, 1.0
        %v1023 = vlog2.pop %v991
        %v1024 = vmul.f32 %v1023, 0.6931472
        %v1025 = vlog2.pop %v992
        %v1026 = vmul.f32 %v1025, 0.6931472
        %v1027 = vlog2.pop %v993
        %v1028 = vmul.f32 %v1027, 0.6931472
        %v1029 = vlog2.pop %v994
        %v1030 = vmul.f32 %v1029, 0.6931472
        %v1031 = vlog2.pop %v995
        %v1032 = vmul.f32 %v1031, 0.6931472
        %v1033 = vlog2.pop %v996
        %v1034 = vmul.f32 %v1033, 0.6931472
        %v1035 = vlog2.pop %v997
        %v1036 = vmul.f32 %v1035, 0.6931472
        %v1037 = vlog2.pop %v998
        %v1038 = vmul.f32 %v1037, 0.6931472
        %v1039 = vlog2.pop %v999
        %v1040 = vmul.f32 %v1039, 0.6931472
        %v1041 = vlog2.pop %v1000
        %v1042 = vmul.f32 %v1041, 0.6931472
        %v1043 = vlog2.pop %v1001
        %v1044 = vmul.f32 %v1043, 0.6931472
        %v1045 = vlog2.pop %v1002
        %v1046 = vmul.f32 %v1045, 0.6931472
        %v1047 = vlog2.pop %v1003
        %v1048 = vmul.f32 %v1047, 0.6931472
        %v1049 = vlog2.pop %v1004
        %v1050 = vmul.f32 %v1049, 0.6931472
        %v1051 = vlog2.pop %v1005
        %v1052 = vmul.f32 %v1051, 0.6931472
        %v1053 = vlog2.pop %v1006
        %v1054 = vmul.f32 %v1053, 0.6931472
        %v1055 = vlog2.pop %v1007
        %v1056 = vmul.f32 %v1055, 0.6931472
        %v1057 = vlog2.pop %v1008
        %v1058 = vmul.f32 %v1057, 0.6931472
        %v1059 = vlog2.pop %v1009
        %v1060 = vmul.f32 %v1059, 0.6931472
        %v1061 = vlog2.pop %v1010
        %v1062 = vmul.f32 %v1061, 0.6931472
        %v1063 = vlog2.pop %v1011
        %v1064 = vmul.f32 %v1063, 0.6931472
        %v1065 = vlog2.pop %v1012
        %v1066 = vmul.f32 %v1065, 0.6931472
        %v1067 = vlog2.pop %v1013
        %v1068 = vmul.f32 %v1067, 0.6931472
        %v1069 = vlog2.pop %v1014
        %v1070 = vmul.f32 %v1069, 0.6931472
        %v1071 = vlog2.pop %v1015
        %v1072 = vmul.f32 %v1071, 0.6931472
        %v1073 = vlog2.pop %v1016
        %v1074 = vmul.f32 %v1073, 0.6931472
        %v1075 = vlog2.pop %v1017
        %v1076 = vmul.f32 %v1075, 0.6931472
        %v1077 = vlog2.pop %v1018
        %v1078 = vmul.f32 %v1077, 0.6931472
        %v1079 = vlog2.pop %v1019
        %v1080 = vmul.f32 %v1079, 0.6931472
        %v1081 = vlog2.pop %v1020
        %v1082 = vmul.f32 %v1081, 0.6931472
        %v1083 = vlog2.pop %v1021
        %v1084 = vmul.f32 %v1083, 0.6931472
        %v1085 = vlog2.pop %v1022
        %v1086 = vmul.f32 %v1085, 0.6931472
        %v1087 = vmul.f32 %v1024, 0.4342945
        %v1088 = vmul.f32 %v1026, 0.4342945
        %v1089 = vmul.f32 %v1028, 0.4342945
        %v1090 = vmul.f32 %v1030, 0.4342945
        %v1091 = vmul.f32 %v1032, 0.4342945
        %v1092 = vmul.f32 %v1034, 0.4342945
        %v1093 = vmul.f32 %v1036, 0.4342945
        %v1094 = vmul.f32 %v1038, 0.4342945
        %v1095 = vmul.f32 %v1040, 0.4342945
        %v1096 = vmul.f32 %v1042, 0.4342945
        %v1097 = vmul.f32 %v1044, 0.4342945
        %v1098 = vmul.f32 %v1046, 0.4342945
        %v1099 = vmul.f32 %v1048, 0.4342945
        %v1100 = vmul.f32 %v1050, 0.4342945
        %v1101 = vmul.f32 %v1052, 0.4342945
        %v1102 = vmul.f32 %v1054, 0.4342945
        %v1103 = vmul.f32 %v1056, 0.4342945
        %v1104 = vmul.f32 %v1058, 0.4342945
        %v1105 = vmul.f32 %v1060, 0.4342945
        %v1106 = vmul.f32 %v1062, 0.4342945
        %v1107 = vmul.f32 %v1064, 0.4342945
        %v1108 = vmul.f32 %v1066, 0.4342945
        %v1109 = vmul.f32 %v1068, 0.4342945
        %v1110 = vmul.f32 %v1070, 0.4342945
        %v1111 = vmul.f32 %v1072, 0.4342945
        %v1112 = vmul.f32 %v1074, 0.4342945
        %v1113 = vmul.f32 %v1076, 0.4342945
        %v1114 = vmul.f32 %v1078, 0.4342945
        %v1115 = vmul.f32 %v1080, 0.4342945
        %v1116 = vmul.f32 %v1082, 0.4342945
        %v1117 = vmul.f32 %v1084, 0.4342945
        %v1118 = vmul.f32 %v1086, 0.4342945
        %v1119 = vsel %vm959, %v1087, inf
        %v1120 = vsel %vm960, %v1088, inf
        %v1121 = vsel %vm961, %v1089, inf
        %v1122 = vsel %vm962, %v1090, inf
        %v1123 = vsel %vm963, %v1091, inf
        %v1124 = vsel %vm964, %v1092, inf
        %v1125 = vsel %vm965, %v1093, inf
        %v1126 = vsel %vm966, %v1094, inf
        %v1127 = vsel %vm967, %v1095, inf
        %v1128 = vsel %vm968, %v1096, inf
        %v1129 = vsel %vm969, %v1097, inf
        %v1130 = vsel %vm970, %v1098, inf
        %v1131 = vsel %vm971, %v1099, inf
        %v1132 = vsel %vm972, %v1100, inf
        %v1133 = vsel %vm973, %v1101, inf
        %v1134 = vsel %vm974, %v1102, inf
        %v1135 = vsel %vm975, %v1103, inf
        %v1136 = vsel %vm976, %v1104, inf
        %v1137 = vsel %vm977, %v1105, inf
        %v1138 = vsel %vm978, %v1106, inf
        %v1139 = vsel %vm979, %v1107, inf
        %v1140 = vsel %vm980, %v1108, inf
        %v1141 = vsel %vm981, %v1109, inf
        %v1142 = vsel %vm982, %v1110, inf
        %v1143 = vsel %vm983, %v1111, inf
        %v1144 = vsel %vm984, %v1112, inf
        %v1145 = vsel %vm985, %v1113, inf
        %v1146 = vsel %vm986, %v1114, inf
        %v1147 = vsel %vm987, %v1115, inf
        %v1148 = vsel %vm988, %v1116, inf
        %v1149 = vsel %vm989, %v1117, inf
        %v1150 = vsel %vm990, %v1118, inf
        %vm1151 = vcmask 7168
        %v1152 = vsel %vm1151, %v1119, inf
        %v1153 = vsel %vm1151, %v1120, inf
        %v1154 = vsel %vm1151, %v1121, inf
        %v1155 = vsel %vm1151, %v1122, inf
        %v1156 = vsel %vm1151, %v1123, inf
        %v1157 = vmin.f32 %v1152, %v1156
        %v1158 = vsel %vm1151, %v1124, inf
        %v1159 = vmin.f32 %v1153, %v1158
        %v1160 = vsel %vm1151, %v1125, inf
        %v1161 = vmin.f32 %v1154, %v1160
        %v1162 = vsel %vm1151, %v1126, inf
        %v1163 = vmin.f32 %v1155, %v1162
        %v1164 = vsel %vm1151, %v1127, inf
        %v1165 = vmin.f32 %v1157, %v1164
        %v1166 = vsel %vm1151, %v1128, inf
        %v1167 = vmin.f32 %v1159, %v1166
        %v1168 = vsel %vm1151, %v1129, inf
        %v1169 = vmin.f32 %v1161, %v1168
        %v1170 = vsel %vm1151, %v1130, inf
        %v1171 = vmin.f32 %v1163, %v1170
        %v1172 = vsel %vm1151, %v1131, inf
        %v1173 = vmin.f32 %v1165, %v1172
        %v1174 = vsel %vm1151, %v1132, inf
        %v1175 = vmin.f32 %v1167, %v1174
        %v1176 = vsel %vm1151, %v1133, inf
        %v1177 = vmin.f32 %v1169, %v1176
        %v1178 = vsel %vm1151, %v1134, inf
        %v1179 = vmin.f32 %v1171, %v1178
        %v1180 = vsel %vm1151, %v1135, inf
        %v1181 = vmin.f32 %v1173, %v1180
        %v1182 = vsel %vm1151, %v1136, inf
        %v1183 = vmin.f32 %v1175, %v1182
        %v1184 = vsel %vm1151, %v1137, inf
        %v1185 = vmin.f32 %v1177, %v1184
        %v1186 = vsel %vm1151, %v1138, inf
        %v1187 = vmin.f32 %v1179, %v1186
        %v1188 = vsel %vm1151, %v1139, inf
        %v1189 = vmin.f32 %v1181, %v1188
        %v1190 = vsel %vm1151, %v1140, inf
        %v1191 = vmin.f32 %v1183, %v1190
        %v1192 = vsel %vm1151, %v1141, inf
        %v1193 = vmin.f32 %v1185, %v1192
        %v1194 = vsel %vm1151, %v1142, inf
        %v1195 = vmin.f32 %v1187, %v1194
        %v1196 = vsel %vm1151, %v1143, inf
        %v1197 = vmin.f32 %v1189, %v1196
        %v1198 = vsel %vm1151, %v1144, inf
        %v1199 = vmin.f32 %v1191, %v1198
        %v1200 = vsel %vm1151, %v1145, inf
        %v1201 = vmin.f32 %v1193, %v1200
        %v1202 = vsel %vm1151, %v1146, inf
        %v1203 = vmin.f32 %v1195, %v1202
        %v1204 = vsel %vm1151, %v1147, inf
        %v1205 = vmin.f32 %v1197, %v1204
        %v1206 = vsel %vm1151, %v1148, inf
        %v1207 = vmin.f32 %v1199, %v1206
        %v1208 = vsel %vm1151, %v1149, inf
        %v1209 = vmin.f32 %v1201, %v1208
        %v1210 = vsel %vm1151, %v1150, inf
        %v1211 = vmin.f32 %v1203, %v1210
        %v1212 = vmin.f32 %v1205, %v1207
        %v1213 = vmin.f32 %v1209, %v1211
        %v1214 = vmin.f32 %v1212, %v1213
        %1215 = vmin.xlane.f32.xlu0 %v1214
        %v1216 = vpop.xlane.xlu0 %1215
        %v1217 = vrot.slane %v1216, 4
        %v1218 = vmin.f32 %v1216, %v1217
        %v1219 = vrot.slane %v1218, 2
        %v1220 = vmin.f32 %v1218, %v1219
        %v1221 = vrot.slane %v1220, 1
        %v1222 = vmin.f32 %v1220, %v1221
        %s1223 = vtos %v1222
        %v1224 = vstv %s1223
        %v1225 = vsub.f32 %v1087, %v1224
        %v1226 = vsub.f32 %v1088, %v1224
        %v1227 = vsub.f32 %v1089, %v1224
        %v1228 = vsub.f32 %v1090, %v1224
        %v1229 = vsub.f32 %v1091, %v1224
        %v1230 = vsub.f32 %v1092, %v1224
        %v1231 = vsub.f32 %v1093, %v1224
        %v1232 = vsub.f32 %v1094, %v1224
        %v1233 = vsub.f32 %v1095, %v1224
        %v1234 = vsub.f32 %v1096, %v1224
        %v1235 = vsub.f32 %v1097, %v1224
        %v1236 = vsub.f32 %v1098, %v1224
        %v1237 = vsub.f32 %v1099, %v1224
        %v1238 = vsub.f32 %v1100, %v1224
        %v1239 = vsub.f32 %v1101, %v1224
        %v1240 = vsub.f32 %v1102, %v1224
        %v1241 = vsub.f32 %v1103, %v1224
        %v1242 = vsub.f32 %v1104, %v1224
        %v1243 = vsub.f32 %v1105, %v1224
        %v1244 = vsub.f32 %v1106, %v1224
        %v1245 = vsub.f32 %v1107, %v1224
        %v1246 = vsub.f32 %v1108, %v1224
        %v1247 = vsub.f32 %v1109, %v1224
        %v1248 = vsub.f32 %v1110, %v1224
        %v1249 = vsub.f32 %v1111, %v1224
        %v1250 = vsub.f32 %v1112, %v1224
        %v1251 = vsub.f32 %v1113, %v1224
        %v1252 = vsub.f32 %v1114, %v1224
        %v1253 = vsub.f32 %v1115, %v1224
        %v1254 = vsub.f32 %v1116, %v1224
        %v1255 = vsub.f32 %v1117, %v1224
        %v1256 = vsub.f32 %v1118, %v1224
        %v1257 = vsel %vm959, %v1225, -inf
        %v1258 = vsel %vm960, %v1226, -inf
        %v1259 = vsel %vm961, %v1227, -inf
        %v1260 = vsel %vm962, %v1228, -inf
        %v1261 = vsel %vm963, %v1229, -inf
        %v1262 = vsel %vm964, %v1230, -inf
        %v1263 = vsel %vm965, %v1231, -inf
        %v1264 = vsel %vm966, %v1232, -inf
        %v1265 = vsel %vm967, %v1233, -inf
        %v1266 = vsel %vm968, %v1234, -inf
        %v1267 = vsel %vm969, %v1235, -inf
        %v1268 = vsel %vm970, %v1236, -inf
        %v1269 = vsel %vm971, %v1237, -inf
        %v1270 = vsel %vm972, %v1238, -inf
        %v1271 = vsel %vm973, %v1239, -inf
        %v1272 = vsel %vm974, %v1240, -inf
        %v1273 = vsel %vm975, %v1241, -inf
        %v1274 = vsel %vm976, %v1242, -inf
        %v1275 = vsel %vm977, %v1243, -inf
        %v1276 = vsel %vm978, %v1244, -inf
        %v1277 = vsel %vm979, %v1245, -inf
        %v1278 = vsel %vm980, %v1246, -inf
        %v1279 = vsel %vm981, %v1247, -inf
        %v1280 = vsel %vm982, %v1248, -inf
        %v1281 = vsel %vm983, %v1249, -inf
        %v1282 = vsel %vm984, %v1250, -inf
        %v1283 = vsel %vm985, %v1251, -inf
        %v1284 = vsel %vm986, %v1252, -inf
        %v1285 = vsel %vm987, %v1253, -inf
        %v1286 = vsel %vm988, %v1254, -inf
        %v1287 = vsel %vm989, %v1255, -inf
        %v1288 = vsel %vm990, %v1256, -inf
        %v1289 = vsel %vm1151, %v1257, -inf
        %v1290 = vsel %vm1151, %v1258, -inf
        %v1291 = vsel %vm1151, %v1259, -inf
        %v1292 = vsel %vm1151, %v1260, -inf
        %v1293 = vsel %vm1151, %v1261, -inf
        %v1294 = vmax.f32 %v1289, %v1293
        %v1295 = vsel %vm1151, %v1262, -inf
        %v1296 = vmax.f32 %v1290, %v1295
        %v1297 = vsel %vm1151, %v1263, -inf
        %v1298 = vmax.f32 %v1291, %v1297
        %v1299 = vsel %vm1151, %v1264, -inf
        %v1300 = vmax.f32 %v1292, %v1299
        %v1301 = vsel %vm1151, %v1265, -inf
        %v1302 = vmax.f32 %v1294, %v1301
        %v1303 = vsel %vm1151, %v1266, -inf
        %v1304 = vmax.f32 %v1296, %v1303
        %v1305 = vsel %vm1151, %v1267, -inf
        %v1306 = vmax.f32 %v1298, %v1305
        %v1307 = vsel %vm1151, %v1268, -inf
        %v1308 = vmax.f32 %v1300, %v1307
        %v1309 = vsel %vm1151, %v1269, -inf
        %v1310 = vmax.f32 %v1302, %v1309
        %v1311 = vsel %vm1151, %v1270, -inf
        %v1312 = vmax.f32 %v1304, %v1311
        %v1313 = vsel %vm1151, %v1271, -inf
        %v1314 = vmax.f32 %v1306, %v1313
        %v1315 = vsel %vm1151, %v1272, -inf
        %v1316 = vmax.f32 %v1308, %v1315
        %v1317 = vsel %vm1151, %v1273, -inf
        %v1318 = vmax.f32 %v1310, %v1317
        %v1319 = vsel %vm1151, %v1274, -inf
        %v1320 = vmax.f32 %v1312, %v1319
        %v1321 = vsel %vm1151, %v1275, -inf
        %v1322 = vmax.f32 %v1314, %v1321
        %v1323 = vsel %vm1151, %v1276, -inf
        %v1324 = vmax.f32 %v1316, %v1323
        %v1325 = vsel %vm1151, %v1277, -inf
        %v1326 = vmax.f32 %v1318, %v1325
        %v1327 = vsel %vm1151, %v1278, -inf
        %v1328 = vmax.f32 %v1320, %v1327
        %v1329 = vsel %vm1151, %v1279, -inf
        %v1330 = vmax.f32 %v1322, %v1329
        %v1331 = vsel %vm1151, %v1280, -inf
        %v1332 = vmax.f32 %v1324, %v1331
        %v1333 = vsel %vm1151, %v1281, -inf
        %v1334 = vmax.f32 %v1326, %v1333
        %v1335 = vsel %vm1151, %v1282, -inf
        %v1336 = vmax.f32 %v1328, %v1335
        %v1337 = vsel %vm1151, %v1283, -inf
        %v1338 = vmax.f32 %v1330, %v1337
        %v1339 = vsel %vm1151, %v1284, -inf
        %v1340 = vmax.f32 %v1332, %v1339
        %v1341 = vsel %vm1151, %v1285, -inf
        %v1342 = vmax.f32 %v1334, %v1341
        %v1343 = vsel %vm1151, %v1286, -inf
        %v1344 = vmax.f32 %v1336, %v1343
        %v1345 = vsel %vm1151, %v1287, -inf
        %v1346 = vmax.f32 %v1338, %v1345
        %v1347 = vsel %vm1151, %v1288, -inf
        %v1348 = vmax.f32 %v1340, %v1347
        %v1349 = vmax.f32 %v1342, %v1344
        %v1350 = vmax.f32 %v1346, %v1348
        %v1351 = vmax.f32 %v1349, %v1350
        %1352 = vmax.xlane.f32.xlu0 %v1351
        %v1353 = vpop.xlane.xlu0 %1352
        %v1354 = vrot.slane %v1353, 4
        %v1355 = vmax.f32 %v1353, %v1354
        %v1356 = vrot.slane %v1355, 2
        %v1357 = vmax.f32 %v1355, %v1356
        %v1358 = vrot.slane %v1357, 1
        %v1359 = vmax.f32 %v1357, %v1358
        %s1360 = vtos %v1359
        %v1361 = vstv %s1360
        %v1362 = vrcp.pop %v1361
        %v1363 = vmul.f32 %v1361, %v1362
        %v1364 = vsub.f32 1.0, %v1363
        %v1365 = vmul.f32 %v1362, %v1364
        %v1366 = vadd.f32 %v1362, %v1365
        %vm1367 = vweird.f32 %v1361
        %vm1368 = vweird.f32 %v1362
        %vm1369 = vmor %vm1367, %vm1368
        %v1370 = vsel %vm1369, %v1362, %v1366
        %v1371 = vand.u32 2147483647, %v1361
        %vm1372 = vcmp.eq.f32.partialorder %v1371, 8.507059e+37
        %v1373 = vand.u32 %v1361, 2147483648
        %v1374 = vor.u32 1.1754944e-38, %v1373
        %v1375 = vsel %vm1372, %v1374, %v1370
        %v1376 = vmul.f32 %v1225, %v1375
        %v1377 = vmul.f32 %v1226, %v1375
        %v1378 = vmul.f32 %v1227, %v1375
        %v1379 = vmul.f32 %v1228, %v1375
        %v1380 = vmul.f32 %v1229, %v1375
        %v1381 = vmul.f32 %v1230, %v1375
        %v1382 = vmul.f32 %v1231, %v1375
        %v1383 = vmul.f32 %v1232, %v1375
        %v1384 = vmul.f32 %v1233, %v1375
        %v1385 = vmul.f32 %v1234, %v1375
        %v1386 = vmul.f32 %v1235, %v1375
        %v1387 = vmul.f32 %v1236, %v1375
        %v1388 = vmul.f32 %v1237, %v1375
        %v1389 = vmul.f32 %v1238, %v1375
        %v1390 = vmul.f32 %v1239, %v1375
        %v1391 = vmul.f32 %v1240, %v1375
        %v1392 = vmul.f32 %v1241, %v1375
        %v1393 = vmul.f32 %v1242, %v1375
        %v1394 = vmul.f32 %v1243, %v1375
        %v1395 = vmul.f32 %v1244, %v1375
        %v1396 = vmul.f32 %v1245, %v1375
        %v1397 = vmul.f32 %v1246, %v1375
        %v1398 = vmul.f32 %v1247, %v1375
        %v1399 = vmul.f32 %v1248, %v1375
        %v1400 = vmul.f32 %v1249, %v1375
        %v1401 = vmul.f32 %v1250, %v1375
        %v1402 = vmul.f32 %v1251, %v1375
        %v1403 = vmul.f32 %v1252, %v1375
        %v1404 = vmul.f32 %v1253, %v1375
        %v1405 = vmul.f32 %v1254, %v1375
        %v1406 = vmul.f32 %v1255, %v1375
        %v1407 = vmul.f32 %v1256, %v1375
        %v1408 = vsel %vm959, %v1376, 0.0
        %v1409 = vsel %vm960, %v1377, 0.0
        %v1410 = vsel %vm961, %v1378, 0.0
        %v1411 = vsel %vm962, %v1379, 0.0
        %v1412 = vsel %vm963, %v1380, 0.0
        %v1413 = vsel %vm964, %v1381, 0.0
        %v1414 = vsel %vm965, %v1382, 0.0
        %v1415 = vsel %vm966, %v1383, 0.0
        %v1416 = vsel %vm967, %v1384, 0.0
        %v1417 = vsel %vm968, %v1385, 0.0
        %v1418 = vsel %vm969, %v1386, 0.0
        %v1419 = vsel %vm970, %v1387, 0.0
        %v1420 = vsel %vm971, %v1388, 0.0
        %v1421 = vsel %vm972, %v1389, 0.0
        %v1422 = vsel %vm973, %v1390, 0.0
        %v1423 = vsel %vm974, %v1391, 0.0
        %v1424 = vsel %vm975, %v1392, 0.0
        %v1425 = vsel %vm976, %v1393, 0.0
        %v1426 = vsel %vm977, %v1394, 0.0
        %v1427 = vsel %vm978, %v1395, 0.0
        %v1428 = vsel %vm979, %v1396, 0.0
        %v1429 = vsel %vm980, %v1397, 0.0
        %v1430 = vsel %vm981, %v1398, 0.0
        %v1431 = vsel %vm982, %v1399, 0.0
        %v1432 = vsel %vm983, %v1400, 0.0
        %v1433 = vsel %vm984, %v1401, 0.0
        %v1434 = vsel %vm985, %v1402, 0.0
        %v1435 = vsel %vm986, %v1403, 0.0
        %v1436 = vsel %vm987, %v1404, 0.0
        %v1437 = vsel %vm988, %v1405, 0.0
        %v1438 = vsel %vm989, %v1406, 0.0
        %v1439 = vsel %vm990, %v1407, 0.0
        %1440 = vst.msk [vmem:[#allocation2] sm:$0xff] %vm1151, 0.0
        %1441 = vst.msk [vmem:[#allocation2 + $0x8] sm:$0xff] %vm1151, 0.0
        %1442 = vst.msk [vmem:[#allocation2 + $0x10] sm:$0xff] %vm1151, 0.0
        %1443 = vst.msk [vmem:[#allocation2 + $0x18] sm:$0xff] %vm1151, 0.0
        %1444 = vst.msk [vmem:[#allocation2 + $0x20] sm:$0xff] %vm1151, 0.0
        %1445 = vst.msk [vmem:[#allocation2 + $0x28] sm:$0xff] %vm1151, 0.0
        %1446 = vst.msk [vmem:[#allocation2 + $0x30] sm:$0xff] %vm1151, 0.0
        %1447 = vst.msk [vmem:[#allocation2 + $0x38] sm:$0xff] %vm1151, 0.0
        %1448 = vst.msk [vmem:[#allocation2 + $0x40] sm:$0xff] %vm1151, 0.0
        %1449 = vst.msk [vmem:[#allocation2 + $0x48] sm:$0xff] %vm1151, 0.0
        %1450 = vst.msk [vmem:[#allocation2 + $0x50] sm:$0xff] %vm1151, 0.0
        %1451 = vst.msk [vmem:[#allocation2 + $0x58] sm:$0xff] %vm1151, 0.0
        %1452 = vst.msk [vmem:[#allocation2 + $0x60] sm:$0xff] %vm1151, 0.0
        %1453 = vst.msk [vmem:[#allocation2 + $0x68] sm:$0xff] %vm1151, 0.0
        %1454 = vst.msk [vmem:[#allocation2 + $0x70] sm:$0xff] %vm1151, 0.0
        %1455 = vst.msk [vmem:[#allocation2 + $0x78] sm:$0xff] %vm1151, 0.0
        %1456 = vst.msk [vmem:[#allocation2 + $0x80] sm:$0xff] %vm1151, 0.0
        %1457 = vst.msk [vmem:[#allocation2 + $0x88] sm:$0xff] %vm1151, 0.0
        %1458 = vst.msk [vmem:[#allocation2 + $0x90] sm:$0xff] %vm1151, 0.0
        %1459 = vst.msk [vmem:[#allocation2 + $0x98] sm:$0xff] %vm1151, 0.0
        %1460 = vst.msk [vmem:[#allocation2 + $0xa0] sm:$0xff] %vm1151, 0.0
        %1461 = vst.msk [vmem:[#allocation2 + $0xa8] sm:$0xff] %vm1151, 0.0
        %1462 = vst.msk [vmem:[#allocation2 + $0xb0] sm:$0xff] %vm1151, 0.0
        %1463 = vst.msk [vmem:[#allocation2 + $0xb8] sm:$0xff] %vm1151, 0.0
        %1464 = vst.msk [vmem:[#allocation2 + $0xc0] sm:$0xff] %vm1151, 0.0
        %1465 = vst.msk [vmem:[#allocation2 + $0xc8] sm:$0xff] %vm1151, 0.0
        %1466 = vst.msk [vmem:[#allocation2 + $0xd0] sm:$0xff] %vm1151, 0.0
        %1467 = vst.msk [vmem:[#allocation2 + $0xd8] sm:$0xff] %vm1151, 0.0
        %1468 = vst.msk [vmem:[#allocation2 + $0xe0] sm:$0xff] %vm1151, 0.0
        %1469 = vst.msk [vmem:[#allocation2 + $0xe8] sm:$0xff] %vm1151, 0.0
        %1470 = vst.msk [vmem:[#allocation2 + $0xf0] sm:$0xff] %vm1151, 0.0
        %1471 = vst.msk [vmem:[#allocation2 + $0xf8] sm:$0xff] %vm1151, 0.0
        %1472 = vst.msk [vmem:[#allocation2 + $0x100] sm:$0xff] %vm1151, 0.0
        %1473 = vst.msk [vmem:[#allocation2 + $0x108] sm:$0xff] %vm1151, 0.0
        %1474 = vst.msk [vmem:[#allocation2 + $0x8] sm:$0xff] %vm1151, %v1408
        %1475 = vst.msk [vmem:[#allocation2 + $0x10] sm:$0xff] %vm1151, %v1409
        %1476 = vst.msk [vmem:[#allocation2 + $0x18] sm:$0xff] %vm1151, %v1410
        %1477 = vst.msk [vmem:[#allocation2 + $0x20] sm:$0xff] %vm1151, %v1411
        %1478 = vst.msk [vmem:[#allocation2 + $0x28] sm:$0xff] %vm1151, %v1412
        %1479 = vst.msk [vmem:[#allocation2 + $0x30] sm:$0xff] %vm1151, %v1413
        %1480 = vst.msk [vmem:[#allocation2 + $0x38] sm:$0xff] %vm1151, %v1414
        %1481 = vst.msk [vmem:[#allocation2 + $0x40] sm:$0xff] %vm1151, %v1415
        %1482 = vst.msk [vmem:[#allocation2 + $0x48] sm:$0xff] %vm1151, %v1416
        %1483 = vst.msk [vmem:[#allocation2 + $0x50] sm:$0xff] %vm1151, %v1417
        %1484 = vst.msk [vmem:[#allocation2 + $0x58] sm:$0xff] %vm1151, %v1418
        %1485 = vst.msk [vmem:[#allocation2 + $0x60] sm:$0xff] %vm1151, %v1419
        %1486 = vst.msk [vmem:[#allocation2 + $0x68] sm:$0xff] %vm1151, %v1420
        %1487 = vst.msk [vmem:[#allocation2 + $0x70] sm:$0xff] %vm1151, %v1421
        %1488 = vst.msk [vmem:[#allocation2 + $0x78] sm:$0xff] %vm1151, %v1422
        %1489 = vst.msk [vmem:[#allocation2 + $0x80] sm:$0xff] %vm1151, %v1423
        %1490 = vst.msk [vmem:[#allocation2 + $0x88] sm:$0xff] %vm1151, %v1424
        %1491 = vst.msk [vmem:[#allocation2 + $0x90] sm:$0xff] %vm1151, %v1425
        %1492 = vst.msk [vmem:[#allocation2 + $0x98] sm:$0xff] %vm1151, %v1426
        %1493 = vst.msk [vmem:[#allocation2 + $0xa0] sm:$0xff] %vm1151, %v1427
        %1494 = vst.msk [vmem:[#allocation2 + $0xa8] sm:$0xff] %vm1151, %v1428
        %1495 = vst.msk [vmem:[#allocation2 + $0xb0] sm:$0xff] %vm1151, %v1429
        %1496 = vst.msk [vmem:[#allocation2 + $0xb8] sm:$0xff] %vm1151, %v1430
        %1497 = vst.msk [vmem:[#allocation2 + $0xc0] sm:$0xff] %vm1151, %v1431
        %1498 = vst.msk [vmem:[#allocation2 + $0xc8] sm:$0xff] %vm1151, %v1432
        %1499 = vst.msk [vmem:[#allocation2 + $0xd0] sm:$0xff] %vm1151, %v1433
        %1500 = vst.msk [vmem:[#allocation2 + $0xd8] sm:$0xff] %vm1151, %v1434
        %1501 = vst.msk [vmem:[#allocation2 + $0xe0] sm:$0xff] %vm1151, %v1435
        %1502 = vst.msk [vmem:[#allocation2 + $0xe8] sm:$0xff] %vm1151, %v1436
        %1503 = vst.msk [vmem:[#allocation2 + $0xf0] sm:$0xff] %vm1151, %v1437
        %1504 = vst.msk [vmem:[#allocation2 + $0xf8] sm:$0xff] %vm1151, %v1438
        %1505 = vst.msk [vmem:[#allocation2 + $0x100] sm:$0xff] %vm1151, %v1439
        %v1506 = vld [vmem:[#allocation2 + $0x6] sm:$0xff]
        %v1507 = vld [vmem:[#allocation2 + $0xe] sm:$0xff]
        %v1508 = vld [vmem:[#allocation2 + $0x16] sm:$0xff]
        %v1509 = vld [vmem:[#allocation2 + $0x1e] sm:$0xff]
        %v1510 = vld [vmem:[#allocation2 + $0x26] sm:$0xff]
        %v1511 = vld [vmem:[#allocation2 + $0x2e] sm:$0xff]
        %v1512 = vld [vmem:[#allocation2 + $0x36] sm:$0xff]
        %v1513 = vld [vmem:[#allocation2 + $0x3e] sm:$0xff]
        %v1514 = vld [vmem:[#allocation2 + $0x46] sm:$0xff]
        %v1515 = vld [vmem:[#allocation2 + $0x4e] sm:$0xff]
        %v1516 = vld [vmem:[#allocation2 + $0x56] sm:$0xff]
        %v1517 = vld [vmem:[#allocation2 + $0x5e] sm:$0xff]
        %v1518 = vld [vmem:[#allocation2 + $0x66] sm:$0xff]
        %v1519 = vld [vmem:[#allocation2 + $0x6e] sm:$0xff]
        %v1520 = vld [vmem:[#allocation2 + $0x76] sm:$0xff]
        %v1521 = vld [vmem:[#allocation2 + $0x7e] sm:$0xff]
        %v1522 = vld [vmem:[#allocation2 + $0x86] sm:$0xff]
        %v1523 = vld [vmem:[#allocation2 + $0x8e] sm:$0xff]
        %v1524 = vld [vmem:[#allocation2 + $0x96] sm:$0xff]
        %v1525 = vld [vmem:[#allocation2 + $0x9e] sm:$0xff]
        %v1526 = vld [vmem:[#allocation2 + $0xa6] sm:$0xff]
        %v1527 = vld [vmem:[#allocation2 + $0xae] sm:$0xff]
        %v1528 = vld [vmem:[#allocation2 + $0xb6] sm:$0xff]
        %v1529 = vld [vmem:[#allocation2 + $0xbe] sm:$0xff]
        %v1530 = vld [vmem:[#allocation2 + $0xc6] sm:$0xff]
        %v1531 = vld [vmem:[#allocation2 + $0xce] sm:$0xff]
        %v1532 = vld [vmem:[#allocation2 + $0xd6] sm:$0xff]
        %v1533 = vld [vmem:[#allocation2 + $0xde] sm:$0xff]
        %v1534 = vld [vmem:[#allocation2 + $0xe6] sm:$0xff]
        %v1535 = vld [vmem:[#allocation2 + $0xee] sm:$0xff]
        %v1536 = vld [vmem:[#allocation2 + $0xf6] sm:$0xff]
        %v1537 = vld [vmem:[#allocation2 + $0xfe] sm:$0xff]
        %v1538 = vld [vmem:[#allocation10] sm:$0x1]
        %1540 = vset.pattern.permute.xlu0 0
        %1541 = vperm.xlu0 %1540, %v1506
        %v1542 = vpop.permute.xlu0 %1541
        %1545 = vset.pattern.permute.xlu0 0
        %1546 = vperm.xlu0 %1545, %v1507
        %v1547 = vpop.permute.xlu0 %1546
        %1550 = vset.pattern.permute.xlu0 0
        %1551 = vperm.xlu0 %1550, %v1508
        %v1552 = vpop.permute.xlu0 %1551
        %1555 = vset.pattern.permute.xlu0 0
        %1556 = vperm.xlu0 %1555, %v1509
        %v1557 = vpop.permute.xlu0 %1556
        %1560 = vset.pattern.permute.xlu0 0
        %1561 = vperm.xlu0 %1560, %v1510
        %v1562 = vpop.permute.xlu0 %1561
        %1565 = vset.pattern.permute.xlu0 0
        %1566 = vperm.xlu0 %1565, %v1511
        %v1567 = vpop.permute.xlu0 %1566
        %1570 = vset.pattern.permute.xlu0 0
        %1571 = vperm.xlu0 %1570, %v1512
        %v1572 = vpop.permute.xlu0 %1571
        %1575 = vset.pattern.permute.xlu0 0
        %1576 = vperm.xlu0 %1575, %v1513
        %v1577 = vpop.permute.xlu0 %1576
        %1580 = vset.pattern.permute.xlu0 0
        %1581 = vperm.xlu0 %1580, %v1514
        %v1582 = vpop.permute.xlu0 %1581
        %1585 = vset.pattern.permute.xlu0 0
        %1586 = vperm.xlu0 %1585, %v1515
        %v1587 = vpop.permute.xlu0 %1586
        %1590 = vset.pattern.permute.xlu0 0
        %1591 = vperm.xlu0 %1590, %v1516
        %v1592 = vpop.permute.xlu0 %1591
        %1595 = vset.pattern.permute.xlu0 0
        %1596 = vperm.xlu0 %1595, %v1517
        %v1597 = vpop.permute.xlu0 %1596
        %1600 = vset.pattern.permute.xlu0 0
        %1601 = vperm.xlu0 %1600, %v1518
        %v1602 = vpop.permute.xlu0 %1601
        %1605 = vset.pattern.permute.xlu0 0
        %1606 = vperm.xlu0 %1605, %v1519
        %v1607 = vpop.permute.xlu0 %1606
        %1610 = vset.pattern.permute.xlu0 0
        %1611 = vperm.xlu0 %1610, %v1520
        %v1612 = vpop.permute.xlu0 %1611
        %1615 = vset.pattern.permute.xlu0 0
        %1616 = vperm.xlu0 %1615, %v1521
        %v1617 = vpop.permute.xlu0 %1616
        %1620 = vset.pattern.permute.xlu0 0
        %1621 = vperm.xlu0 %1620, %v1522
        %v1622 = vpop.permute.xlu0 %1621
        %1625 = vset.pattern.permute.xlu0 0
        %1626 = vperm.xlu0 %1625, %v1523
        %v1627 = vpop.permute.xlu0 %1626
        %1630 = vset.pattern.permute.xlu0 0
        %1631 = vperm.xlu0 %1630, %v1524
        %v1632 = vpop.permute.xlu0 %1631
        %1635 = vset.pattern.permute.xlu0 0
        %1636 = vperm.xlu0 %1635, %v1525
        %v1637 = vpop.permute.xlu0 %1636
        %1640 = vset.pattern.permute.xlu0 0
        %1641 = vperm.xlu0 %1640, %v1526
        %v1642 = vpop.permute.xlu0 %1641
        %1645 = vset.pattern.permute.xlu0 0
        %1646 = vperm.xlu0 %1645, %v1527
        %v1647 = vpop.permute.xlu0 %1646
        %1650 = vset.pattern.permute.xlu0 0
        %1651 = vperm.xlu0 %1650, %v1528
        %v1652 = vpop.permute.xlu0 %1651
        %1655 = vset.pattern.permute.xlu0 0
        %1656 = vperm.xlu0 %1655, %v1529
        %v1657 = vpop.permute.xlu0 %1656
        %1660 = vset.pattern.permute.xlu0 0
        %1661 = vperm.xlu0 %1660, %v1530
        %v1662 = vpop.permute.xlu0 %1661
        %1665 = vset.pattern.permute.xlu0 0
        %1666 = vperm.xlu0 %1665, %v1531
        %v1667 = vpop.permute.xlu0 %1666
        %1670 = vset.pattern.permute.xlu0 0
        %1671 = vperm.xlu0 %1670, %v1532
        %v1672 = vpop.permute.xlu0 %1671
        %1675 = vset.pattern.permute.xlu0 0
        %1676 = vperm.xlu0 %1675, %v1533
        %v1677 = vpop.permute.xlu0 %1676
        %1680 = vset.pattern.permute.xlu0 0
        %1681 = vperm.xlu0 %1680, %v1534
        %v1682 = vpop.permute.xlu0 %1681
        %1685 = vset.pattern.permute.xlu0 0
        %1686 = vperm.xlu0 %1685, %v1535
        %v1687 = vpop.permute.xlu0 %1686
        %1690 = vset.pattern.permute.xlu0 0
        %1691 = vperm.xlu0 %1690, %v1536
        %v1692 = vpop.permute.xlu0 %1691
        %1695 = vset.pattern.permute.xlu0 0
        %1696 = vperm.xlu0 %1695, %v1537
        %v1697 = vpop.permute.xlu0 %1696
        %v1700 = vperm.slane %v1538, 0
        %v1702 = vmul.f32 %v1542, %v1700
        %v1703 = vmul.f32 %v1547, %v1700
        %v1704 = vmul.f32 %v1552, %v1700
        %v1705 = vmul.f32 %v1557, %v1700
        %v1706 = vmul.f32 %v1562, %v1700
        %v1707 = vmul.f32 %v1567, %v1700
        %v1708 = vmul.f32 %v1572, %v1700
        %v1709 = vmul.f32 %v1577, %v1700
        %v1710 = vmul.f32 %v1582, %v1700
        %v1711 = vmul.f32 %v1587, %v1700
        %v1712 = vmul.f32 %v1592, %v1700
        %v1713 = vmul.f32 %v1597, %v1700
        %v1714 = vmul.f32 %v1602, %v1700
        %v1715 = vmul.f32 %v1607, %v1700
        %v1716 = vmul.f32 %v1612, %v1700
        %v1717 = vmul.f32 %v1617, %v1700
        %v1718 = vmul.f32 %v1622, %v1700
        %v1719 = vmul.f32 %v1627, %v1700
        %v1720 = vmul.f32 %v1632, %v1700
        %v1721 = vmul.f32 %v1637, %v1700
        %v1722 = vmul.f32 %v1642, %v1700
        %v1723 = vmul.f32 %v1647, %v1700
        %v1724 = vmul.f32 %v1652, %v1700
        %v1725 = vmul.f32 %v1657, %v1700
        %v1726 = vmul.f32 %v1662, %v1700
        %v1727 = vmul.f32 %v1667, %v1700
        %v1728 = vmul.f32 %v1672, %v1700
        %v1729 = vmul.f32 %v1677, %v1700
        %v1730 = vmul.f32 %v1682, %v1700
        %v1731 = vmul.f32 %v1687, %v1700
        %v1732 = vmul.f32 %v1692, %v1700
        %v1733 = vmul.f32 %v1697, %v1700
        %v1734 = vadd.f32 %v1702, 0.0
        %v1735 = vadd.f32 %v1703, 0.0
        %v1736 = vadd.f32 %v1704, 0.0
        %v1737 = vadd.f32 %v1705, 0.0
        %v1738 = vadd.f32 %v1706, 0.0
        %v1739 = vadd.f32 %v1707, 0.0
        %v1740 = vadd.f32 %v1708, 0.0
        %v1741 = vadd.f32 %v1709, 0.0
        %v1742 = vadd.f32 %v1710, 0.0
        %v1743 = vadd.f32 %v1711, 0.0
        %v1744 = vadd.f32 %v1712, 0.0
        %v1745 = vadd.f32 %v1713, 0.0
        %v1746 = vadd.f32 %v1714, 0.0
        %v1747 = vadd.f32 %v1715, 0.0
        %v1748 = vadd.f32 %v1716, 0.0
        %v1749 = vadd.f32 %v1717, 0.0
        %v1750 = vadd.f32 %v1718, 0.0
        %v1751 = vadd.f32 %v1719, 0.0
        %v1752 = vadd.f32 %v1720, 0.0
        %v1753 = vadd.f32 %v1721, 0.0
        %v1754 = vadd.f32 %v1722, 0.0
        %v1755 = vadd.f32 %v1723, 0.0
        %v1756 = vadd.f32 %v1724, 0.0
        %v1757 = vadd.f32 %v1725, 0.0
        %v1758 = vadd.f32 %v1726, 0.0
        %v1759 = vadd.f32 %v1727, 0.0
        %v1760 = vadd.f32 %v1728, 0.0
        %v1761 = vadd.f32 %v1729, 0.0
        %v1762 = vadd.f32 %v1730, 0.0
        %v1763 = vadd.f32 %v1731, 0.0
        %v1764 = vadd.f32 %v1732, 0.0
        %v1765 = vadd.f32 %v1733, 0.0
        %v1766 = vld [vmem:[#allocation2 + $0x7] sm:$0xff]
        %v1767 = vld [vmem:[#allocation2 + $0xf] sm:$0xff]
        %v1768 = vld [vmem:[#allocation2 + $0x17] sm:$0xff]
        %v1769 = vld [vmem:[#allocation2 + $0x1f] sm:$0xff]
        %v1770 = vld [vmem:[#allocation2 + $0x27] sm:$0xff]
        %v1771 = vld [vmem:[#allocation2 + $0x2f] sm:$0xff]
        %v1772 = vld [vmem:[#allocation2 + $0x37] sm:$0xff]
        %v1773 = vld [vmem:[#allocation2 + $0x3f] sm:$0xff]
        %v1774 = vld [vmem:[#allocation2 + $0x47] sm:$0xff]
        %v1775 = vld [vmem:[#allocation2 + $0x4f] sm:$0xff]
        %v1776 = vld [vmem:[#allocation2 + $0x57] sm:$0xff]
        %v1777 = vld [vmem:[#allocation2 + $0x5f] sm:$0xff]
        %v1778 = vld [vmem:[#allocation2 + $0x67] sm:$0xff]
        %v1779 = vld [vmem:[#allocation2 + $0x6f] sm:$0xff]
        %v1780 = vld [vmem:[#allocation2 + $0x77] sm:$0xff]
        %v1781 = vld [vmem:[#allocation2 + $0x7f] sm:$0xff]
        %v1782 = vld [vmem:[#allocation2 + $0x87] sm:$0xff]
        %v1783 = vld [vmem:[#allocation2 + $0x8f] sm:$0xff]
        %v1784 = vld [vmem:[#allocation2 + $0x97] sm:$0xff]
        %v1785 = vld [vmem:[#allocation2 + $0x9f] sm:$0xff]
        %v1786 = vld [vmem:[#allocation2 + $0xa7] sm:$0xff]
        %v1787 = vld [vmem:[#allocation2 + $0xaf] sm:$0xff]
        %v1788 = vld [vmem:[#allocation2 + $0xb7] sm:$0xff]
        %v1789 = vld [vmem:[#allocation2 + $0xbf] sm:$0xff]
        %v1790 = vld [vmem:[#allocation2 + $0xc7] sm:$0xff]
        %v1791 = vld [vmem:[#allocation2 + $0xcf] sm:$0xff]
        %v1792 = vld [vmem:[#allocation2 + $0xd7] sm:$0xff]
        %v1793 = vld [vmem:[#allocation2 + $0xdf] sm:$0xff]
        %v1794 = vld [vmem:[#allocation2 + $0xe7] sm:$0xff]
        %v1795 = vld [vmem:[#allocation2 + $0xef] sm:$0xff]
        %v1796 = vld [vmem:[#allocation2 + $0xf7] sm:$0xff]
        %v1797 = vld [vmem:[#allocation2 + $0xff] sm:$0xff]
        %s1798 = scalar_lea.vmem [#allocation10], 1
        %v1799 = vld [vmem:[%s1798] sm:$0x1]
        %1801 = vset.pattern.permute.xlu0 0
        %1802 = vperm.xlu0 %1801, %v1766
        %v1803 = vpop.permute.xlu0 %1802
        %1806 = vset.pattern.permute.xlu0 0
        %1807 = vperm.xlu0 %1806, %v1767
        %v1808 = vpop.permute.xlu0 %1807
        %1811 = vset.pattern.permute.xlu0 0
        %1812 = vperm.xlu0 %1811, %v1768
        %v1813 = vpop.permute.xlu0 %1812
        %1816 = vset.pattern.permute.xlu0 0
        %1817 = vperm.xlu0 %1816, %v1769
        %v1818 = vpop.permute.xlu0 %1817
        %1821 = vset.pattern.permute.xlu0 0
        %1822 = vperm.xlu0 %1821, %v1770
        %v1823 = vpop.permute.xlu0 %1822
        %1826 = vset.pattern.permute.xlu0 0
        %1827 = vperm.xlu0 %1826, %v1771
        %v1828 = vpop.permute.xlu0 %1827
        %1831 = vset.pattern.permute.xlu0 0
        %1832 = vperm.xlu0 %1831, %v1772
        %v1833 = vpop.permute.xlu0 %1832
        %1836 = vset.pattern.permute.xlu0 0
        %1837 = vperm.xlu0 %1836, %v1773
        %v1838 = vpop.permute.xlu0 %1837
        %1841 = vset.pattern.permute.xlu0 0
        %1842 = vperm.xlu0 %1841, %v1774
        %v1843 = vpop.permute.xlu0 %1842
        %1846 = vset.pattern.permute.xlu0 0
        %1847 = vperm.xlu0 %1846, %v1775
        %v1848 = vpop.permute.xlu0 %1847
        %1851 = vset.pattern.permute.xlu0 0
        %1852 = vperm.xlu0 %1851, %v1776
        %v1853 = vpop.permute.xlu0 %1852
        %1856 = vset.pattern.permute.xlu0 0
        %1857 = vperm.xlu0 %1856, %v1777
        %v1858 = vpop.permute.xlu0 %1857
        %1861 = vset.pattern.permute.xlu0 0
        %1862 = vperm.xlu0 %1861, %v1778
        %v1863 = vpop.permute.xlu0 %1862
        %1866 = vset.pattern.permute.xlu0 0
        %1867 = vperm.xlu0 %1866, %v1779
        %v1868 = vpop.permute.xlu0 %1867
        %1871 = vset.pattern.permute.xlu0 0
        %1872 = vperm.xlu0 %1871, %v1780
        %v1873 = vpop.permute.xlu0 %1872
        %1876 = vset.pattern.permute.xlu0 0
        %1877 = vperm.xlu0 %1876, %v1781
        %v1878 = vpop.permute.xlu0 %1877
        %1881 = vset.pattern.permute.xlu0 0
        %1882 = vperm.xlu0 %1881, %v1782
        %v1883 = vpop.permute.xlu0 %1882
        %1886 = vset.pattern.permute.xlu0 0
        %1887 = vperm.xlu0 %1886, %v1783
        %v1888 = vpop.permute.xlu0 %1887
        %1891 = vset.pattern.permute.xlu0 0
        %1892 = vperm.xlu0 %1891, %v1784
        %v1893 = vpop.permute.xlu0 %1892
        %1896 = vset.pattern.permute.xlu0 0
        %1897 = vperm.xlu0 %1896, %v1785
        %v1898 = vpop.permute.xlu0 %1897
        %1901 = vset.pattern.permute.xlu0 0
        %1902 = vperm.xlu0 %1901, %v1786
        %v1903 = vpop.permute.xlu0 %1902
        %1906 = vset.pattern.permute.xlu0 0
        %1907 = vperm.xlu0 %1906, %v1787
        %v1908 = vpop.permute.xlu0 %1907
        %1911 = vset.pattern.permute.xlu0 0
        %1912 = vperm.xlu0 %1911, %v1788
        %v1913 = vpop.permute.xlu0 %1912
        %1916 = vset.pattern.permute.xlu0 0
        %1917 = vperm.xlu0 %1916, %v1789
        %v1918 = vpop.permute.xlu0 %1917
        %1921 = vset.pattern.permute.xlu0 0
        %1922 = vperm.xlu0 %1921, %v1790
        %v1923 = vpop.permute.xlu0 %1922
        %1926 = vset.pattern.permute.xlu0 0
        %1927 = vperm.xlu0 %1926, %v1791
        %v1928 = vpop.permute.xlu0 %1927
        %1931 = vset.pattern.permute.xlu0 0
        %1932 = vperm.xlu0 %1931, %v1792
        %v1933 = vpop.permute.xlu0 %1932
        %1936 = vset.pattern.permute.xlu0 0
        %1937 = vperm.xlu0 %1936, %v1793
        %v1938 = vpop.permute.xlu0 %1937
        %1941 = vset.pattern.permute.xlu0 0
        %1942 = vperm.xlu0 %1941, %v1794
        %v1943 = vpop.permute.xlu0 %1942
        %1946 = vset.pattern.permute.xlu0 0
        %1947 = vperm.xlu0 %1946, %v1795
        %v1948 = vpop.permute.xlu0 %1947
        %1951 = vset.pattern.permute.xlu0 0
        %1952 = vperm.xlu0 %1951, %v1796
        %v1953 = vpop.permute.xlu0 %1952
        %1956 = vset.pattern.permute.xlu0 0
        %1957 = vperm.xlu0 %1956, %v1797
        %v1958 = vpop.permute.xlu0 %1957
        %v1961 = vperm.slane %v1799, 0
        %v1963 = vmul.f32 %v1803, %v1961
        %v1964 = vmul.f32 %v1808, %v1961
        %v1965 = vmul.f32 %v1813, %v1961
        %v1966 = vmul.f32 %v1818, %v1961
        %v1967 = vmul.f32 %v1823, %v1961
        %v1968 = vmul.f32 %v1828, %v1961
        %v1969 = vmul.f32 %v1833, %v1961
        %v1970 = vmul.f32 %v1838, %v1961
        %v1971 = vmul.f32 %v1843, %v1961
        %v1972 = vmul.f32 %v1848, %v1961
        %v1973 = vmul.f32 %v1853, %v1961
        %v1974 = vmul.f32 %v1858, %v1961
        %v1975 = vmul.f32 %v1863, %v1961
        %v1976 = vmul.f32 %v1868, %v1961
        %v1977 = vmul.f32 %v1873, %v1961
        %v1978 = vmul.f32 %v1878, %v1961
        %v1979 = vmul.f32 %v1883, %v1961
        %v1980 = vmul.f32 %v1888, %v1961
        %v1981 = vmul.f32 %v1893, %v1961
        %v1982 = vmul.f32 %v1898, %v1961
        %v1983 = vmul.f32 %v1903, %v1961
        %v1984 = vmul.f32 %v1908, %v1961
        %v1985 = vmul.f32 %v1913, %v1961
        %v1986 = vmul.f32 %v1918, %v1961
        %v1987 = vmul.f32 %v1923, %v1961
        %v1988 = vmul.f32 %v1928, %v1961
        %v1989 = vmul.f32 %v1933, %v1961
        %v1990 = vmul.f32 %v1938, %v1961
        %v1991 = vmul.f32 %v1943, %v1961
        %v1992 = vmul.f32 %v1948, %v1961
        %v1993 = vmul.f32 %v1953, %v1961
        %v1994 = vmul.f32 %v1958, %v1961
        %v1995 = vadd.f32 %v1734, %v1963
        %v1996 = vadd.f32 %v1735, %v1964
        %v1997 = vadd.f32 %v1736, %v1965
        %v1998 = vadd.f32 %v1737, %v1966
        %v1999 = vadd.f32 %v1738, %v1967
        %v2000 = vadd.f32 %v1739, %v1968
        %v2001 = vadd.f32 %v1740, %v1969
        %v2002 = vadd.f32 %v1741, %v1970
        %v2003 = vadd.f32 %v1742, %v1971
        %v2004 = vadd.f32 %v1743, %v1972
        %v2005 = vadd.f32 %v1744, %v1973
        %v2006 = vadd.f32 %v1745, %v1974
        %v2007 = vadd.f32 %v1746, %v1975
        %v2008 = vadd.f32 %v1747, %v1976
        %v2009 = vadd.f32 %v1748, %v1977
        %v2010 = vadd.f32 %v1749, %v1978
        %v2011 = vadd.f32 %v1750, %v1979
        %v2012 = vadd.f32 %v1751, %v1980
        %v2013 = vadd.f32 %v1752, %v1981
        %v2014 = vadd.f32 %v1753, %v1982
        %v2015 = vadd.f32 %v1754, %v1983
        %v2016 = vadd.f32 %v1755, %v1984
        %v2017 = vadd.f32 %v1756, %v1985
        %v2018 = vadd.f32 %v1757, %v1986
        %v2019 = vadd.f32 %v1758, %v1987
        %v2020 = vadd.f32 %v1759, %v1988
        %v2021 = vadd.f32 %v1760, %v1989
        %v2022 = vadd.f32 %v1761, %v1990
        %v2023 = vadd.f32 %v1762, %v1991
        %v2024 = vadd.f32 %v1763, %v1992
        %v2025 = vadd.f32 %v1764, %v1993
        %v2026 = vadd.f32 %v1765, %v1994
        %v2027 = vld [vmem:[#allocation2 + $0x8] sm:$0xff]
        %v2028 = vld [vmem:[#allocation2 + $0x10] sm:$0xff]
        %v2029 = vld [vmem:[#allocation2 + $0x18] sm:$0xff]
        %v2030 = vld [vmem:[#allocation2 + $0x20] sm:$0xff]
        %v2031 = vld [vmem:[#allocation2 + $0x28] sm:$0xff]
        %v2032 = vld [vmem:[#allocation2 + $0x30] sm:$0xff]
        %v2033 = vld [vmem:[#allocation2 + $0x38] sm:$0xff]
        %v2034 = vld [vmem:[#allocation2 + $0x40] sm:$0xff]
        %v2035 = vld [vmem:[#allocation2 + $0x48] sm:$0xff]
        %v2036 = vld [vmem:[#allocation2 + $0x50] sm:$0xff]
        %v2037 = vld [vmem:[#allocation2 + $0x58] sm:$0xff]
        %v2038 = vld [vmem:[#allocation2 + $0x60] sm:$0xff]
        %v2039 = vld [vmem:[#allocation2 + $0x68] sm:$0xff]
        %v2040 = vld [vmem:[#allocation2 + $0x70] sm:$0xff]
        %v2041 = vld [vmem:[#allocation2 + $0x78] sm:$0xff]
        %v2042 = vld [vmem:[#allocation2 + $0x80] sm:$0xff]
        %v2043 = vld [vmem:[#allocation2 + $0x88] sm:$0xff]
        %v2044 = vld [vmem:[#allocation2 + $0x90] sm:$0xff]
        %v2045 = vld [vmem:[#allocation2 + $0x98] sm:$0xff]
        %v2046 = vld [vmem:[#allocation2 + $0xa0] sm:$0xff]
        %v2047 = vld [vmem:[#allocation2 + $0xa8] sm:$0xff]
        %v2048 = vld [vmem:[#allocation2 + $0xb0] sm:$0xff]
        %v2049 = vld [vmem:[#allocation2 + $0xb8] sm:$0xff]
        %v2050 = vld [vmem:[#allocation2 + $0xc0] sm:$0xff]
        %v2051 = vld [vmem:[#allocation2 + $0xc8] sm:$0xff]
        %v2052 = vld [vmem:[#allocation2 + $0xd0] sm:$0xff]
        %v2053 = vld [vmem:[#allocation2 + $0xd8] sm:$0xff]
        %v2054 = vld [vmem:[#allocation2 + $0xe0] sm:$0xff]
        %v2055 = vld [vmem:[#allocation2 + $0xe8] sm:$0xff]
        %v2056 = vld [vmem:[#allocation2 + $0xf0] sm:$0xff]
        %v2057 = vld [vmem:[#allocation2 + $0xf8] sm:$0xff]
        %v2058 = vld [vmem:[#allocation2 + $0x100] sm:$0xff]
        %s2059 = scalar_lea.vmem [#allocation10], 2
        %v2060 = vld [vmem:[%s2059] sm:$0x1]
        %2062 = vset.pattern.permute.xlu0 0
        %2063 = vperm.xlu0 %2062, %v2027
        %v2064 = vpop.permute.xlu0 %2063
        %2067 = vset.pattern.permute.xlu0 0
        %2068 = vperm.xlu0 %2067, %v2028
        %v2069 = vpop.permute.xlu0 %2068
        %2072 = vset.pattern.permute.xlu0 0
        %2073 = vperm.xlu0 %2072, %v2029
        %v2074 = vpop.permute.xlu0 %2073
        %2077 = vset.pattern.permute.xlu0 0
        %2078 = vperm.xlu0 %2077, %v2030
        %v2079 = vpop.permute.xlu0 %2078
        %2082 = vset.pattern.permute.xlu0 0
        %2083 = vperm.xlu0 %2082, %v2031
        %v2084 = vpop.permute.xlu0 %2083
        %2087 = vset.pattern.permute.xlu0 0
        %2088 = vperm.xlu0 %2087, %v2032
        %v2089 = vpop.permute.xlu0 %2088
        %2092 = vset.pattern.permute.xlu0 0
        %2093 = vperm.xlu0 %2092, %v2033
        %v2094 = vpop.permute.xlu0 %2093
        %2097 = vset.pattern.permute.xlu0 0
        %2098 = vperm.xlu0 %2097, %v2034
        %v2099 = vpop.permute.xlu0 %2098
        %2102 = vset.pattern.permute.xlu0 0
        %2103 = vperm.xlu0 %2102, %v2035
        %v2104 = vpop.permute.xlu0 %2103
        %2107 = vset.pattern.permute.xlu0 0
        %2108 = vperm.xlu0 %2107, %v2036
        %v2109 = vpop.permute.xlu0 %2108
        %2112 = vset.pattern.permute.xlu0 0
        %2113 = vperm.xlu0 %2112, %v2037
        %v2114 = vpop.permute.xlu0 %2113
        %2117 = vset.pattern.permute.xlu0 0
        %2118 = vperm.xlu0 %2117, %v2038
        %v2119 = vpop.permute.xlu0 %2118
        %2122 = vset.pattern.permute.xlu0 0
        %2123 = vperm.xlu0 %2122, %v2039
        %v2124 = vpop.permute.xlu0 %2123
        %2127 = vset.pattern.permute.xlu0 0
        %2128 = vperm.xlu0 %2127, %v2040
        %v2129 = vpop.permute.xlu0 %2128
        %2132 = vset.pattern.permute.xlu0 0
        %2133 = vperm.xlu0 %2132, %v2041
        %v2134 = vpop.permute.xlu0 %2133
        %2137 = vset.pattern.permute.xlu0 0
        %2138 = vperm.xlu0 %2137, %v2042
        %v2139 = vpop.permute.xlu0 %2138
        %2142 = vset.pattern.permute.xlu0 0
        %2143 = vperm.xlu0 %2142, %v2043
        %v2144 = vpop.permute.xlu0 %2143
        %2147 = vset.pattern.permute.xlu0 0
        %2148 = vperm.xlu0 %2147, %v2044
        %v2149 = vpop.permute.xlu0 %2148
        %2152 = vset.pattern.permute.xlu0 0
        %2153 = vperm.xlu0 %2152, %v2045
        %v2154 = vpop.permute.xlu0 %2153
        %2157 = vset.pattern.permute.xlu0 0
        %2158 = vperm.xlu0 %2157, %v2046
        %v2159 = vpop.permute.xlu0 %2158
        %2162 = vset.pattern.permute.xlu0 0
        %2163 = vperm.xlu0 %2162, %v2047
        %v2164 = vpop.permute.xlu0 %2163
        %2167 = vset.pattern.permute.xlu0 0
        %2168 = vperm.xlu0 %2167, %v2048
        %v2169 = vpop.permute.xlu0 %2168
        %2172 = vset.pattern.permute.xlu0 0
        %2173 = vperm.xlu0 %2172, %v2049
        %v2174 = vpop.permute.xlu0 %2173
        %2177 = vset.pattern.permute.xlu0 0
        %2178 = vperm.xlu0 %2177, %v2050
        %v2179 = vpop.permute.xlu0 %2178
        %2182 = vset.pattern.permute.xlu0 0
        %2183 = vperm.xlu0 %2182, %v2051
        %v2184 = vpop.permute.xlu0 %2183
        %2187 = vset.pattern.permute.xlu0 0
        %2188 = vperm.xlu0 %2187, %v2052
        %v2189 = vpop.permute.xlu0 %2188
        %2192 = vset.pattern.permute.xlu0 0
        %2193 = vperm.xlu0 %2192, %v2053
        %v2194 = vpop.permute.xlu0 %2193
        %2197 = vset.pattern.permute.xlu0 0
        %2198 = vperm.xlu0 %2197, %v2054
        %v2199 = vpop.permute.xlu0 %2198
        %2202 = vset.pattern.permute.xlu0 0
        %2203 = vperm.xlu0 %2202, %v2055
        %v2204 = vpop.permute.xlu0 %2203
        %2207 = vset.pattern.permute.xlu0 0
        %2208 = vperm.xlu0 %2207, %v2056
        %v2209 = vpop.permute.xlu0 %2208
        %2212 = vset.pattern.permute.xlu0 0
        %2213 = vperm.xlu0 %2212, %v2057
        %v2214 = vpop.permute.xlu0 %2213
        %2217 = vset.pattern.permute.xlu0 0
        %2218 = vperm.xlu0 %2217, %v2058
        %v2219 = vpop.permute.xlu0 %2218
        %v2222 = vperm.slane %v2060, 0
        %v2224 = vmul.f32 %v2064, %v2222
        %v2225 = vmul.f32 %v2069, %v2222
        %v2226 = vmul.f32 %v2074, %v2222
        %v2227 = vmul.f32 %v2079, %v2222
        %v2228 = vmul.f32 %v2084, %v2222
        %v2229 = vmul.f32 %v2089, %v2222
        %v2230 = vmul.f32 %v2094, %v2222
        %v2231 = vmul.f32 %v2099, %v2222
        %v2232 = vmul.f32 %v2104, %v2222
        %v2233 = vmul.f32 %v2109, %v2222
        %v2234 = vmul.f32 %v2114, %v2222
        %v2235 = vmul.f32 %v2119, %v2222
        %v2236 = vmul.f32 %v2124, %v2222
        %v2237 = vmul.f32 %v2129, %v2222
        %v2238 = vmul.f32 %v2134, %v2222
        %v2239 = vmul.f32 %v2139, %v2222
        %v2240 = vmul.f32 %v2144, %v2222
        %v2241 = vmul.f32 %v2149, %v2222
        %v2242 = vmul.f32 %v2154, %v2222
        %v2243 = vmul.f32 %v2159, %v2222
        %v2244 = vmul.f32 %v2164, %v2222
        %v2245 = vmul.f32 %v2169, %v2222
        %v2246 = vmul.f32 %v2174, %v2222
        %v2247 = vmul.f32 %v2179, %v2222
        %v2248 = vmul.f32 %v2184, %v2222
        %v2249 = vmul.f32 %v2189, %v2222
        %v2250 = vmul.f32 %v2194, %v2222
        %v2251 = vmul.f32 %v2199, %v2222
        %v2252 = vmul.f32 %v2204, %v2222
        %v2253 = vmul.f32 %v2209, %v2222
        %v2254 = vmul.f32 %v2214, %v2222
        %v2255 = vmul.f32 %v2219, %v2222
        %v2256 = vadd.f32 %v1995, %v2224
        %v2257 = vadd.f32 %v1996, %v2225
        %v2258 = vadd.f32 %v1997, %v2226
        %v2259 = vadd.f32 %v1998, %v2227
        %v2260 = vadd.f32 %v1999, %v2228
        %v2261 = vadd.f32 %v2000, %v2229
        %v2262 = vadd.f32 %v2001, %v2230
        %v2263 = vadd.f32 %v2002, %v2231
        %v2264 = vadd.f32 %v2003, %v2232
        %v2265 = vadd.f32 %v2004, %v2233
        %v2266 = vadd.f32 %v2005, %v2234
        %v2267 = vadd.f32 %v2006, %v2235
        %v2268 = vadd.f32 %v2007, %v2236
        %v2269 = vadd.f32 %v2008, %v2237
        %v2270 = vadd.f32 %v2009, %v2238
        %v2271 = vadd.f32 %v2010, %v2239
        %v2272 = vadd.f32 %v2011, %v2240
        %v2273 = vadd.f32 %v2012, %v2241
        %v2274 = vadd.f32 %v2013, %v2242
        %v2275 = vadd.f32 %v2014, %v2243
        %v2276 = vadd.f32 %v2015, %v2244
        %v2277 = vadd.f32 %v2016, %v2245
        %v2278 = vadd.f32 %v2017, %v2246
        %v2279 = vadd.f32 %v2018, %v2247
        %v2280 = vadd.f32 %v2019, %v2248
        %v2281 = vadd.f32 %v2020, %v2249
        %v2282 = vadd.f32 %v2021, %v2250
        %v2283 = vadd.f32 %v2022, %v2251
        %v2284 = vadd.f32 %v2023, %v2252
        %v2285 = vadd.f32 %v2024, %v2253
        %v2286 = vadd.f32 %v2025, %v2254
        %v2287 = vadd.f32 %v2026, %v2255
        %v2288 = vld [vmem:[#allocation2 + $0x9] sm:$0xff]
        %v2289 = vld [vmem:[#allocation2 + $0x11] sm:$0xff]
        %v2290 = vld [vmem:[#allocation2 + $0x19] sm:$0xff]
        %v2291 = vld [vmem:[#allocation2 + $0x21] sm:$0xff]
        %v2292 = vld [vmem:[#allocation2 + $0x29] sm:$0xff]
        %v2293 = vld [vmem:[#allocation2 + $0x31] sm:$0xff]
        %v2294 = vld [vmem:[#allocation2 + $0x39] sm:$0xff]
        %v2295 = vld [vmem:[#allocation2 + $0x41] sm:$0xff]
        %v2296 = vld [vmem:[#allocation2 + $0x49] sm:$0xff]
        %v2297 = vld [vmem:[#allocation2 + $0x51] sm:$0xff]
        %v2298 = vld [vmem:[#allocation2 + $0x59] sm:$0xff]
        %v2299 = vld [vmem:[#allocation2 + $0x61] sm:$0xff]
        %v2300 = vld [vmem:[#allocation2 + $0x69] sm:$0xff]
        %v2301 = vld [vmem:[#allocation2 + $0x71] sm:$0xff]
        %v2302 = vld [vmem:[#allocation2 + $0x79] sm:$0xff]
        %v2303 = vld [vmem:[#allocation2 + $0x81] sm:$0xff]
        %v2304 = vld [vmem:[#allocation2 + $0x89] sm:$0xff]
        %v2305 = vld [vmem:[#allocation2 + $0x91] sm:$0xff]
        %v2306 = vld [vmem:[#allocation2 + $0x99] sm:$0xff]
        %v2307 = vld [vmem:[#allocation2 + $0xa1] sm:$0xff]
        %v2308 = vld [vmem:[#allocation2 + $0xa9] sm:$0xff]
        %v2309 = vld [vmem:[#allocation2 + $0xb1] sm:$0xff]
        %v2310 = vld [vmem:[#allocation2 + $0xb9] sm:$0xff]
        %v2311 = vld [vmem:[#allocation2 + $0xc1] sm:$0xff]
        %v2312 = vld [vmem:[#allocation2 + $0xc9] sm:$0xff]
        %v2313 = vld [vmem:[#allocation2 + $0xd1] sm:$0xff]
        %v2314 = vld [vmem:[#allocation2 + $0xd9] sm:$0xff]
        %v2315 = vld [vmem:[#allocation2 + $0xe1] sm:$0xff]
        %v2316 = vld [vmem:[#allocation2 + $0xe9] sm:$0xff]
        %v2317 = vld [vmem:[#allocation2 + $0xf1] sm:$0xff]
        %v2318 = vld [vmem:[#allocation2 + $0xf9] sm:$0xff]
        %v2319 = vld [vmem:[#allocation2 + $0x101] sm:$0xff]
        %s2320 = scalar_lea.vmem [#allocation10], 3
        %v2321 = vld [vmem:[%s2320] sm:$0x1]
        %2323 = vset.pattern.permute.xlu0 0
        %2324 = vperm.xlu0 %2323, %v2288
        %v2325 = vpop.permute.xlu0 %2324
        %2328 = vset.pattern.permute.xlu0 0
        %2329 = vperm.xlu0 %2328, %v2289
        %v2330 = vpop.permute.xlu0 %2329
        %2333 = vset.pattern.permute.xlu0 0
        %2334 = vperm.xlu0 %2333, %v2290
        %v2335 = vpop.permute.xlu0 %2334
        %2338 = vset.pattern.permute.xlu0 0
        %2339 = vperm.xlu0 %2338, %v2291
        %v2340 = vpop.permute.xlu0 %2339
        %2343 = vset.pattern.permute.xlu0 0
        %2344 = vperm.xlu0 %2343, %v2292
        %v2345 = vpop.permute.xlu0 %2344
        %2348 = vset.pattern.permute.xlu0 0
        %2349 = vperm.xlu0 %2348, %v2293
        %v2350 = vpop.permute.xlu0 %2349
        %2353 = vset.pattern.permute.xlu0 0
        %2354 = vperm.xlu0 %2353, %v2294
        %v2355 = vpop.permute.xlu0 %2354
        %2358 = vset.pattern.permute.xlu0 0
        %2359 = vperm.xlu0 %2358, %v2295
        %v2360 = vpop.permute.xlu0 %2359
        %2363 = vset.pattern.permute.xlu0 0
        %2364 = vperm.xlu0 %2363, %v2296
        %v2365 = vpop.permute.xlu0 %2364
        %2368 = vset.pattern.permute.xlu0 0
        %2369 = vperm.xlu0 %2368, %v2297
        %v2370 = vpop.permute.xlu0 %2369
        %2373 = vset.pattern.permute.xlu0 0
        %2374 = vperm.xlu0 %2373, %v2298
        %v2375 = vpop.permute.xlu0 %2374
        %2378 = vset.pattern.permute.xlu0 0
        %2379 = vperm.xlu0 %2378, %v2299
        %v2380 = vpop.permute.xlu0 %2379
        %2383 = vset.pattern.permute.xlu0 0
        %2384 = vperm.xlu0 %2383, %v2300
        %v2385 = vpop.permute.xlu0 %2384
        %2388 = vset.pattern.permute.xlu0 0
        %2389 = vperm.xlu0 %2388, %v2301
        %v2390 = vpop.permute.xlu0 %2389
        %2393 = vset.pattern.permute.xlu0 0
        %2394 = vperm.xlu0 %2393, %v2302
        %v2395 = vpop.permute.xlu0 %2394
        %2398 = vset.pattern.permute.xlu0 0
        %2399 = vperm.xlu0 %2398, %v2303
        %v2400 = vpop.permute.xlu0 %2399
        %2403 = vset.pattern.permute.xlu0 0
        %2404 = vperm.xlu0 %2403, %v2304
        %v2405 = vpop.permute.xlu0 %2404
        %2408 = vset.pattern.permute.xlu0 0
        %2409 = vperm.xlu0 %2408, %v2305
        %v2410 = vpop.permute.xlu0 %2409
        %2413 = vset.pattern.permute.xlu0 0
        %2414 = vperm.xlu0 %2413, %v2306
        %v2415 = vpop.permute.xlu0 %2414
        %2418 = vset.pattern.permute.xlu0 0
        %2419 = vperm.xlu0 %2418, %v2307
        %v2420 = vpop.permute.xlu0 %2419
        %2423 = vset.pattern.permute.xlu0 0
        %2424 = vperm.xlu0 %2423, %v2308
        %v2425 = vpop.permute.xlu0 %2424
        %2428 = vset.pattern.permute.xlu0 0
        %2429 = vperm.xlu0 %2428, %v2309
        %v2430 = vpop.permute.xlu0 %2429
        %2433 = vset.pattern.permute.xlu0 0
        %2434 = vperm.xlu0 %2433, %v2310
        %v2435 = vpop.permute.xlu0 %2434
        %2438 = vset.pattern.permute.xlu0 0
        %2439 = vperm.xlu0 %2438, %v2311
        %v2440 = vpop.permute.xlu0 %2439
        %2443 = vset.pattern.permute.xlu0 0
        %2444 = vperm.xlu0 %2443, %v2312
        %v2445 = vpop.permute.xlu0 %2444
        %2448 = vset.pattern.permute.xlu0 0
        %2449 = vperm.xlu0 %2448, %v2313
        %v2450 = vpop.permute.xlu0 %2449
        %2453 = vset.pattern.permute.xlu0 0
        %2454 = vperm.xlu0 %2453, %v2314
        %v2455 = vpop.permute.xlu0 %2454
        %2458 = vset.pattern.permute.xlu0 0
        %2459 = vperm.xlu0 %2458, %v2315
        %v2460 = vpop.permute.xlu0 %2459
        %2463 = vset.pattern.permute.xlu0 0
        %2464 = vperm.xlu0 %2463, %v2316
        %v2465 = vpop.permute.xlu0 %2464
        %2468 = vset.pattern.permute.xlu0 0
        %2469 = vperm.xlu0 %2468, %v2317
        %v2470 = vpop.permute.xlu0 %2469
        %2473 = vset.pattern.permute.xlu0 0
        %2474 = vperm.xlu0 %2473, %v2318
        %v2475 = vpop.permute.xlu0 %2474
        %2478 = vset.pattern.permute.xlu0 0
        %2479 = vperm.xlu0 %2478, %v2319
        %v2480 = vpop.permute.xlu0 %2479
        %v2483 = vperm.slane %v2321, 0
        %v2485 = vmul.f32 %v2325, %v2483
        %v2486 = vmul.f32 %v2330, %v2483
        %v2487 = vmul.f32 %v2335, %v2483
        %v2488 = vmul.f32 %v2340, %v2483
        %v2489 = vmul.f32 %v2345, %v2483
        %v2490 = vmul.f32 %v2350, %v2483
        %v2491 = vmul.f32 %v2355, %v2483
        %v2492 = vmul.f32 %v2360, %v2483
        %v2493 = vmul.f32 %v2365, %v2483
        %v2494 = vmul.f32 %v2370, %v2483
        %v2495 = vmul.f32 %v2375, %v2483
        %v2496 = vmul.f32 %v2380, %v2483
        %v2497 = vmul.f32 %v2385, %v2483
        %v2498 = vmul.f32 %v2390, %v2483
        %v2499 = vmul.f32 %v2395, %v2483
        %v2500 = vmul.f32 %v2400, %v2483
        %v2501 = vmul.f32 %v2405, %v2483
        %v2502 = vmul.f32 %v2410, %v2483
        %v2503 = vmul.f32 %v2415, %v2483
        %v2504 = vmul.f32 %v2420, %v2483
        %v2505 = vmul.f32 %v2425, %v2483
        %v2506 = vmul.f32 %v2430, %v2483
        %v2507 = vmul.f32 %v2435, %v2483
        %v2508 = vmul.f32 %v2440, %v2483
        %v2509 = vmul.f32 %v2445, %v2483
        %v2510 = vmul.f32 %v2450, %v2483
        %v2511 = vmul.f32 %v2455, %v2483
        %v2512 = vmul.f32 %v2460, %v2483
        %v2513 = vmul.f32 %v2465, %v2483
        %v2514 = vmul.f32 %v2470, %v2483
        %v2515 = vmul.f32 %v2475, %v2483
        %v2516 = vmul.f32 %v2480, %v2483
        %v2517 = vadd.f32 %v2256, %v2485
        %v2518 = vadd.f32 %v2257, %v2486
        %v2519 = vadd.f32 %v2258, %v2487
        %v2520 = vadd.f32 %v2259, %v2488
        %v2521 = vadd.f32 %v2260, %v2489
        %v2522 = vadd.f32 %v2261, %v2490
        %v2523 = vadd.f32 %v2262, %v2491
        %v2524 = vadd.f32 %v2263, %v2492
        %v2525 = vadd.f32 %v2264, %v2493
        %v2526 = vadd.f32 %v2265, %v2494
        %v2527 = vadd.f32 %v2266, %v2495
        %v2528 = vadd.f32 %v2267, %v2496
        %v2529 = vadd.f32 %v2268, %v2497
        %v2530 = vadd.f32 %v2269, %v2498
        %v2531 = vadd.f32 %v2270, %v2499
        %v2532 = vadd.f32 %v2271, %v2500
        %v2533 = vadd.f32 %v2272, %v2501
        %v2534 = vadd.f32 %v2273, %v2502
        %v2535 = vadd.f32 %v2274, %v2503
        %v2536 = vadd.f32 %v2275, %v2504
        %v2537 = vadd.f32 %v2276, %v2505
        %v2538 = vadd.f32 %v2277, %v2506
        %v2539 = vadd.f32 %v2278, %v2507
        %v2540 = vadd.f32 %v2279, %v2508
        %v2541 = vadd.f32 %v2280, %v2509
        %v2542 = vadd.f32 %v2281, %v2510
        %v2543 = vadd.f32 %v2282, %v2511
        %v2544 = vadd.f32 %v2283, %v2512
        %v2545 = vadd.f32 %v2284, %v2513
        %v2546 = vadd.f32 %v2285, %v2514
        %v2547 = vadd.f32 %v2286, %v2515
        %v2548 = vadd.f32 %v2287, %v2516
        %v2549 = vld [vmem:[#allocation2 + $0xa] sm:$0xff]
        %v2550 = vld [vmem:[#allocation2 + $0x12] sm:$0xff]
        %v2551 = vld [vmem:[#allocation2 + $0x1a] sm:$0xff]
        %v2552 = vld [vmem:[#allocation2 + $0x22] sm:$0xff]
        %v2553 = vld [vmem:[#allocation2 + $0x2a] sm:$0xff]
        %v2554 = vld [vmem:[#allocation2 + $0x32] sm:$0xff]
        %v2555 = vld [vmem:[#allocation2 + $0x3a] sm:$0xff]
        %v2556 = vld [vmem:[#allocation2 + $0x42] sm:$0xff]
        %v2557 = vld [vmem:[#allocation2 + $0x4a] sm:$0xff]
        %v2558 = vld [vmem:[#allocation2 + $0x52] sm:$0xff]
        %v2559 = vld [vmem:[#allocation2 + $0x5a] sm:$0xff]
        %v2560 = vld [vmem:[#allocation2 + $0x62] sm:$0xff]
        %v2561 = vld [vmem:[#allocation2 + $0x6a] sm:$0xff]
        %v2562 = vld [vmem:[#allocation2 + $0x72] sm:$0xff]
        %v2563 = vld [vmem:[#allocation2 + $0x7a] sm:$0xff]
        %v2564 = vld [vmem:[#allocation2 + $0x82] sm:$0xff]
        %v2565 = vld [vmem:[#allocation2 + $0x8a] sm:$0xff]
        %v2566 = vld [vmem:[#allocation2 + $0x92] sm:$0xff]
        %v2567 = vld [vmem:[#allocation2 + $0x9a] sm:$0xff]
        %v2568 = vld [vmem:[#allocation2 + $0xa2] sm:$0xff]
        %v2569 = vld [vmem:[#allocation2 + $0xaa] sm:$0xff]
        %v2570 = vld [vmem:[#allocation2 + $0xb2] sm:$0xff]
        %v2571 = vld [vmem:[#allocation2 + $0xba] sm:$0xff]
        %v2572 = vld [vmem:[#allocation2 + $0xc2] sm:$0xff]
        %v2573 = vld [vmem:[#allocation2 + $0xca] sm:$0xff]
        %v2574 = vld [vmem:[#allocation2 + $0xd2] sm:$0xff]
        %v2575 = vld [vmem:[#allocation2 + $0xda] sm:$0xff]
        %v2576 = vld [vmem:[#allocation2 + $0xe2] sm:$0xff]
        %v2577 = vld [vmem:[#allocation2 + $0xea] sm:$0xff]
        %v2578 = vld [vmem:[#allocation2 + $0xf2] sm:$0xff]
        %v2579 = vld [vmem:[#allocation2 + $0xfa] sm:$0xff]
        %v2580 = vld [vmem:[#allocation2 + $0x102] sm:$0xff]
        %s2581 = scalar_lea.vmem [#allocation10], 4
        %v2582 = vld [vmem:[%s2581] sm:$0x1]
        %2584 = vset.pattern.permute.xlu0 0
        %2585 = vperm.xlu0 %2584, %v2549
        %v2586 = vpop.permute.xlu0 %2585
        %2589 = vset.pattern.permute.xlu0 0
        %2590 = vperm.xlu0 %2589, %v2550
        %v2591 = vpop.permute.xlu0 %2590
        %2594 = vset.pattern.permute.xlu0 0
        %2595 = vperm.xlu0 %2594, %v2551
        %v2596 = vpop.permute.xlu0 %2595
        %2599 = vset.pattern.permute.xlu0 0
        %2600 = vperm.xlu0 %2599, %v2552
        %v2601 = vpop.permute.xlu0 %2600
        %2604 = vset.pattern.permute.xlu0 0
        %2605 = vperm.xlu0 %2604, %v2553
        %v2606 = vpop.permute.xlu0 %2605
        %2609 = vset.pattern.permute.xlu0 0
        %2610 = vperm.xlu0 %2609, %v2554
        %v2611 = vpop.permute.xlu0 %2610
        %2614 = vset.pattern.permute.xlu0 0
        %2615 = vperm.xlu0 %2614, %v2555
        %v2616 = vpop.permute.xlu0 %2615
        %2619 = vset.pattern.permute.xlu0 0
        %2620 = vperm.xlu0 %2619, %v2556
        %v2621 = vpop.permute.xlu0 %2620
        %2624 = vset.pattern.permute.xlu0 0
        %2625 = vperm.xlu0 %2624, %v2557
        %v2626 = vpop.permute.xlu0 %2625
        %2629 = vset.pattern.permute.xlu0 0
        %2630 = vperm.xlu0 %2629, %v2558
        %v2631 = vpop.permute.xlu0 %2630
        %2634 = vset.pattern.permute.xlu0 0
        %2635 = vperm.xlu0 %2634, %v2559
        %v2636 = vpop.permute.xlu0 %2635
        %2639 = vset.pattern.permute.xlu0 0
        %2640 = vperm.xlu0 %2639, %v2560
        %v2641 = vpop.permute.xlu0 %2640
        %2644 = vset.pattern.permute.xlu0 0
        %2645 = vperm.xlu0 %2644, %v2561
        %v2646 = vpop.permute.xlu0 %2645
        %2649 = vset.pattern.permute.xlu0 0
        %2650 = vperm.xlu0 %2649, %v2562
        %v2651 = vpop.permute.xlu0 %2650
        %2654 = vset.pattern.permute.xlu0 0
        %2655 = vperm.xlu0 %2654, %v2563
        %v2656 = vpop.permute.xlu0 %2655
        %2659 = vset.pattern.permute.xlu0 0
        %2660 = vperm.xlu0 %2659, %v2564
        %v2661 = vpop.permute.xlu0 %2660
        %2664 = vset.pattern.permute.xlu0 0
        %2665 = vperm.xlu0 %2664, %v2565
        %v2666 = vpop.permute.xlu0 %2665
        %2669 = vset.pattern.permute.xlu0 0
        %2670 = vperm.xlu0 %2669, %v2566
        %v2671 = vpop.permute.xlu0 %2670
        %2674 = vset.pattern.permute.xlu0 0
        %2675 = vperm.xlu0 %2674, %v2567
        %v2676 = vpop.permute.xlu0 %2675
        %2679 = vset.pattern.permute.xlu0 0
        %2680 = vperm.xlu0 %2679, %v2568
        %v2681 = vpop.permute.xlu0 %2680
        %2684 = vset.pattern.permute.xlu0 0
        %2685 = vperm.xlu0 %2684, %v2569
        %v2686 = vpop.permute.xlu0 %2685
        %2689 = vset.pattern.permute.xlu0 0
        %2690 = vperm.xlu0 %2689, %v2570
        %v2691 = vpop.permute.xlu0 %2690
        %2694 = vset.pattern.permute.xlu0 0
        %2695 = vperm.xlu0 %2694, %v2571
        %v2696 = vpop.permute.xlu0 %2695
        %2699 = vset.pattern.permute.xlu0 0
        %2700 = vperm.xlu0 %2699, %v2572
        %v2701 = vpop.permute.xlu0 %2700
        %2704 = vset.pattern.permute.xlu0 0
        %2705 = vperm.xlu0 %2704, %v2573
        %v2706 = vpop.permute.xlu0 %2705
        %2709 = vset.pattern.permute.xlu0 0
        %2710 = vperm.xlu0 %2709, %v2574
        %v2711 = vpop.permute.xlu0 %2710
        %2714 = vset.pattern.permute.xlu0 0
        %2715 = vperm.xlu0 %2714, %v2575
        %v2716 = vpop.permute.xlu0 %2715
        %2719 = vset.pattern.permute.xlu0 0
        %2720 = vperm.xlu0 %2719, %v2576
        %v2721 = vpop.permute.xlu0 %2720
        %2724 = vset.pattern.permute.xlu0 0
        %2725 = vperm.xlu0 %2724, %v2577
        %v2726 = vpop.permute.xlu0 %2725
        %2729 = vset.pattern.permute.xlu0 0
        %2730 = vperm.xlu0 %2729, %v2578
        %v2731 = vpop.permute.xlu0 %2730
        %2734 = vset.pattern.permute.xlu0 0
        %2735 = vperm.xlu0 %2734, %v2579
        %v2736 = vpop.permute.xlu0 %2735
        %2739 = vset.pattern.permute.xlu0 0
        %2740 = vperm.xlu0 %2739, %v2580
        %v2741 = vpop.permute.xlu0 %2740
        %v2744 = vperm.slane %v2582, 0
        %v2746 = vmul.f32 %v2586, %v2744
        %v2747 = vmul.f32 %v2591, %v2744
        %v2748 = vmul.f32 %v2596, %v2744
        %v2749 = vmul.f32 %v2601, %v2744
        %v2750 = vmul.f32 %v2606, %v2744
        %v2751 = vmul.f32 %v2611, %v2744
        %v2752 = vmul.f32 %v2616, %v2744
        %v2753 = vmul.f32 %v2621, %v2744
        %v2754 = vmul.f32 %v2626, %v2744
        %v2755 = vmul.f32 %v2631, %v2744
        %v2756 = vmul.f32 %v2636, %v2744
        %v2757 = vmul.f32 %v2641, %v2744
        %v2758 = vmul.f32 %v2646, %v2744
        %v2759 = vmul.f32 %v2651, %v2744
        %v2760 = vmul.f32 %v2656, %v2744
        %v2761 = vmul.f32 %v2661, %v2744
        %v2762 = vmul.f32 %v2666, %v2744
        %v2763 = vmul.f32 %v2671, %v2744
        %v2764 = vmul.f32 %v2676, %v2744
        %v2765 = vmul.f32 %v2681, %v2744
        %v2766 = vmul.f32 %v2686, %v2744
        %v2767 = vmul.f32 %v2691, %v2744
        %v2768 = vmul.f32 %v2696, %v2744
        %v2769 = vmul.f32 %v2701, %v2744
        %v2770 = vmul.f32 %v2706, %v2744
        %v2771 = vmul.f32 %v2711, %v2744
        %v2772 = vmul.f32 %v2716, %v2744
        %v2773 = vmul.f32 %v2721, %v2744
        %v2774 = vmul.f32 %v2726, %v2744
        %v2775 = vmul.f32 %v2731, %v2744
        %v2776 = vmul.f32 %v2736, %v2744
        %v2777 = vmul.f32 %v2741, %v2744
        %v2778 = vadd.f32 %v2517, %v2746
        %v2779 = vadd.f32 %v2518, %v2747
        %v2780 = vadd.f32 %v2519, %v2748
        %v2781 = vadd.f32 %v2520, %v2749
        %v2782 = vadd.f32 %v2521, %v2750
        %v2783 = vadd.f32 %v2522, %v2751
        %v2784 = vadd.f32 %v2523, %v2752
        %v2785 = vadd.f32 %v2524, %v2753
        %v2786 = vadd.f32 %v2525, %v2754
        %v2787 = vadd.f32 %v2526, %v2755
        %v2788 = vadd.f32 %v2527, %v2756
        %v2789 = vadd.f32 %v2528, %v2757
        %v2790 = vadd.f32 %v2529, %v2758
        %v2791 = vadd.f32 %v2530, %v2759
        %v2792 = vadd.f32 %v2531, %v2760
        %v2793 = vadd.f32 %v2532, %v2761
        %v2794 = vadd.f32 %v2533, %v2762
        %v2795 = vadd.f32 %v2534, %v2763
        %v2796 = vadd.f32 %v2535, %v2764
        %v2797 = vadd.f32 %v2536, %v2765
        %v2798 = vadd.f32 %v2537, %v2766
        %v2799 = vadd.f32 %v2538, %v2767
        %v2800 = vadd.f32 %v2539, %v2768
        %v2801 = vadd.f32 %v2540, %v2769
        %v2802 = vadd.f32 %v2541, %v2770
        %v2803 = vadd.f32 %v2542, %v2771
        %v2804 = vadd.f32 %v2543, %v2772
        %v2805 = vadd.f32 %v2544, %v2773
        %v2806 = vadd.f32 %v2545, %v2774
        %v2807 = vadd.f32 %v2546, %v2775
        %v2808 = vadd.f32 %v2547, %v2776
        %v2809 = vadd.f32 %v2548, %v2777
        %v2810 = vld [vmem:[#allocation13] sm:$0x1]
        %v2812 = vperm.slane %v2810, 0
        %v2814 = vadd.f32 %v2778, %v2812
        %v2815 = vadd.f32 %v2779, %v2812
        %v2816 = vadd.f32 %v2780, %v2812
        %v2817 = vadd.f32 %v2781, %v2812
        %v2818 = vadd.f32 %v2782, %v2812
        %v2819 = vadd.f32 %v2783, %v2812
        %v2820 = vadd.f32 %v2784, %v2812
        %v2821 = vadd.f32 %v2785, %v2812
        %v2822 = vadd.f32 %v2786, %v2812
        %v2823 = vadd.f32 %v2787, %v2812
        %v2824 = vadd.f32 %v2788, %v2812
        %v2825 = vadd.f32 %v2789, %v2812
        %v2826 = vadd.f32 %v2790, %v2812
        %v2827 = vadd.f32 %v2791, %v2812
        %v2828 = vadd.f32 %v2792, %v2812
        %v2829 = vadd.f32 %v2793, %v2812
        %v2830 = vadd.f32 %v2794, %v2812
        %v2831 = vadd.f32 %v2795, %v2812
        %v2832 = vadd.f32 %v2796, %v2812
        %v2833 = vadd.f32 %v2797, %v2812
        %v2834 = vadd.f32 %v2798, %v2812
        %v2835 = vadd.f32 %v2799, %v2812
        %v2836 = vadd.f32 %v2800, %v2812
        %v2837 = vadd.f32 %v2801, %v2812
        %v2838 = vadd.f32 %v2802, %v2812
        %v2839 = vadd.f32 %v2803, %v2812
        %v2840 = vadd.f32 %v2804, %v2812
        %v2841 = vadd.f32 %v2805, %v2812
        %v2842 = vadd.f32 %v2806, %v2812
        %v2843 = vadd.f32 %v2807, %v2812
        %v2844 = vadd.f32 %v2808, %v2812
        %v2845 = vadd.f32 %v2809, %v2812
        %v2846 = vmax.f32 %v2814, 0.0
        %v2847 = vmax.f32 %v2815, 0.0
        %v2848 = vmax.f32 %v2816, 0.0
        %v2849 = vmax.f32 %v2817, 0.0
        %v2850 = vmax.f32 %v2818, 0.0
        %v2851 = vmax.f32 %v2819, 0.0
        %v2852 = vmax.f32 %v2820, 0.0
        %v2853 = vmax.f32 %v2821, 0.0
        %v2854 = vmax.f32 %v2822, 0.0
        %v2855 = vmax.f32 %v2823, 0.0
        %v2856 = vmax.f32 %v2824, 0.0
        %v2857 = vmax.f32 %v2825, 0.0
        %v2858 = vmax.f32 %v2826, 0.0
        %v2859 = vmax.f32 %v2827, 0.0
        %v2860 = vmax.f32 %v2828, 0.0
        %v2861 = vmax.f32 %v2829, 0.0
        %v2862 = vmax.f32 %v2830, 0.0
        %v2863 = vmax.f32 %v2831, 0.0
        %v2864 = vmax.f32 %v2832, 0.0
        %v2865 = vmax.f32 %v2833, 0.0
        %v2866 = vmax.f32 %v2834, 0.0
        %v2867 = vmax.f32 %v2835, 0.0
        %v2868 = vmax.f32 %v2836, 0.0
        %v2869 = vmax.f32 %v2837, 0.0
        %v2870 = vmax.f32 %v2838, 0.0
        %v2871 = vmax.f32 %v2839, 0.0
        %v2872 = vmax.f32 %v2840, 0.0
        %v2873 = vmax.f32 %v2841, 0.0
        %v2874 = vmax.f32 %v2842, 0.0
        %v2875 = vmax.f32 %v2843, 0.0
        %v2876 = vmax.f32 %v2844, 0.0
        %v2877 = vmax.f32 %v2845, 0.0
        %v2878 = vlaneseq
        %v2879 = vshrl.u32 %v2878, 7
        %v2880 = vadd.s32 %v2879, 8
        %v2881 = vadd.s32 %v2879, 16
        %v2882 = vadd.s32 %v2879, 24
        %v2883 = vadd.s32 %v2879, 32
        %v2884 = vadd.s32 %v2879, 40
        %v2885 = vadd.s32 %v2879, 48
        %v2886 = vadd.s32 %v2879, 56
        %v2887 = vadd.s32 %v2879, 64
        %v2888 = vadd.s32 %v2879, 72
        %v2889 = vadd.s32 %v2879, 80
        %v2890 = vadd.s32 %v2879, 88
        %v2891 = vadd.s32 %v2879, 96
        %v2892 = vadd.s32 %v2879, 104
        %v2893 = vadd.s32 %v2879, 112
        %v2894 = vadd.s32 %v2879, 120
        %v2895 = vmul.u32 %v2879, 2
        %v2896 = vmul.u32 %v2880, 2
        %v2897 = vmul.u32 %v2881, 2
        %v2898 = vmul.u32 %v2882, 2
        %v2899 = vmul.u32 %v2883, 2
        %v2900 = vmul.u32 %v2884, 2
        %v2901 = vmul.u32 %v2885, 2
        %v2902 = vmul.u32 %v2886, 2
        %v2903 = vmul.u32 %v2887, 2
        %v2904 = vmul.u32 %v2888, 2
        %v2905 = vmul.u32 %v2889, 2
        %v2906 = vmul.u32 %v2890, 2
        %v2907 = vmul.u32 %v2891, 2
        %v2908 = vmul.u32 %v2892, 2
        %v2909 = vmul.u32 %v2893, 2
        %v2910 = vmul.u32 %v2894, 2
        %v2911 = vlaneseq
        %v2912 = vand.u32 %v2911, 127
        %v2913 = vadd.s32 %v2912, 128
        %vm2914 = vcmp.eq.s32.totalorder %v2912, %v2895
        %vm2915 = vcmp.eq.s32.totalorder %v2913, %v2895
        %vm2916 = vcmp.eq.s32.totalorder %v2912, %v2896
        %vm2917 = vcmp.eq.s32.totalorder %v2913, %v2896
        %vm2918 = vcmp.eq.s32.totalorder %v2912, %v2897
        %vm2919 = vcmp.eq.s32.totalorder %v2913, %v2897
        %vm2920 = vcmp.eq.s32.totalorder %v2912, %v2898
        %vm2921 = vcmp.eq.s32.totalorder %v2913, %v2898
        %vm2922 = vcmp.eq.s32.totalorder %v2912, %v2899
        %vm2923 = vcmp.eq.s32.totalorder %v2913, %v2899
        %vm2924 = vcmp.eq.s32.totalorder %v2912, %v2900
        %vm2925 = vcmp.eq.s32.totalorder %v2913, %v2900
        %vm2926 = vcmp.eq.s32.totalorder %v2912, %v2901
        %vm2927 = vcmp.eq.s32.totalorder %v2913, %v2901
        %vm2928 = vcmp.eq.s32.totalorder %v2912, %v2902
        %vm2929 = vcmp.eq.s32.totalorder %v2913, %v2902
        %vm2930 = vcmp.eq.s32.totalorder %v2912, %v2903
        %vm2931 = vcmp.eq.s32.totalorder %v2913, %v2903
        %vm2932 = vcmp.eq.s32.totalorder %v2912, %v2904
        %vm2933 = vcmp.eq.s32.totalorder %v2913, %v2904
        %vm2934 = vcmp.eq.s32.totalorder %v2912, %v2905
        %vm2935 = vcmp.eq.s32.totalorder %v2913, %v2905
        %vm2936 = vcmp.eq.s32.totalorder %v2912, %v2906
        %vm2937 = vcmp.eq.s32.totalorder %v2913, %v2906
        %vm2938 = vcmp.eq.s32.totalorder %v2912, %v2907
        %vm2939 = vcmp.eq.s32.totalorder %v2913, %v2907
        %vm2940 = vcmp.eq.s32.totalorder %v2912, %v2908
        %vm2941 = vcmp.eq.s32.totalorder %v2913, %v2908
        %vm2942 = vcmp.eq.s32.totalorder %v2912, %v2909
        %vm2943 = vcmp.eq.s32.totalorder %v2913, %v2909
        %vm2944 = vcmp.eq.s32.totalorder %v2912, %v2910
        %vm2945 = vcmp.eq.s32.totalorder %v2913, %v2910
        %v2946 = vsel %vm2914, 1.0, 0.0
        %v2947 = vsel %vm2915, 1.0, 0.0
        %v2948 = vsel %vm2916, 1.0, 0.0
        %v2949 = vsel %vm2917, 1.0, 0.0
        %v2950 = vsel %vm2918, 1.0, 0.0
        %v2951 = vsel %vm2919, 1.0, 0.0
        %v2952 = vsel %vm2920, 1.0, 0.0
        %v2953 = vsel %vm2921, 1.0, 0.0
        %v2954 = vsel %vm2922, 1.0, 0.0
        %v2955 = vsel %vm2923, 1.0, 0.0
        %v2956 = vsel %vm2924, 1.0, 0.0
        %v2957 = vsel %vm2925, 1.0, 0.0
        %v2958 = vsel %vm2926, 1.0, 0.0
        %v2959 = vsel %vm2927, 1.0, 0.0
        %v2960 = vsel %vm2928, 1.0, 0.0
        %v2961 = vsel %vm2929, 1.0, 0.0
        %v2962 = vsel %vm2930, 1.0, 0.0
        %v2963 = vsel %vm2931, 1.0, 0.0
        %v2964 = vsel %vm2932, 1.0, 0.0
        %v2965 = vsel %vm2933, 1.0, 0.0
        %v2966 = vsel %vm2934, 1.0, 0.0
        %v2967 = vsel %vm2935, 1.0, 0.0
        %v2968 = vsel %vm2936, 1.0, 0.0
        %v2969 = vsel %vm2937, 1.0, 0.0
        %v2970 = vsel %vm2938, 1.0, 0.0
        %v2971 = vsel %vm2939, 1.0, 0.0
        %v2972 = vsel %vm2940, 1.0, 0.0
        %v2973 = vsel %vm2941, 1.0, 0.0
        %v2974 = vsel %vm2942, 1.0, 0.0
        %v2975 = vsel %vm2943, 1.0, 0.0
        %v2976 = vsel %vm2944, 1.0, 0.0
        %v2977 = vsel %vm2945, 1.0, 0.0
        %v2978 = vadd.s32 %v2895, 1
        %v2979 = vadd.s32 %v2896, 1
        %v2980 = vadd.s32 %v2897, 1
        %v2981 = vadd.s32 %v2898, 1
        %v2982 = vadd.s32 %v2899, 1
        %v2983 = vadd.s32 %v2900, 1
        %v2984 = vadd.s32 %v2901, 1
        %v2985 = vadd.s32 %v2902, 1
        %v2986 = vadd.s32 %v2903, 1
        %v2987 = vadd.s32 %v2904, 1
        %v2988 = vadd.s32 %v2905, 1
        %v2989 = vadd.s32 %v2906, 1
        %v2990 = vadd.s32 %v2907, 1
        %v2991 = vadd.s32 %v2908, 1
        %v2992 = vadd.s32 %v2909, 1
        %v2993 = vadd.s32 %v2910, 1
        %vm2994 = vcmp.eq.s32.totalorder %v2912, %v2978
        %vm2995 = vcmp.eq.s32.totalorder %v2913, %v2978
        %vm2996 = vcmp.eq.s32.totalorder %v2912, %v2979
        %vm2997 = vcmp.eq.s32.totalorder %v2913, %v2979
        %vm2998 = vcmp.eq.s32.totalorder %v2912, %v2980
        %vm2999 = vcmp.eq.s32.totalorder %v2913, %v2980
        %vm3000 = vcmp.eq.s32.totalorder %v2912, %v2981
        %vm3001 = vcmp.eq.s32.totalorder %v2913, %v2981
        %vm3002 = vcmp.eq.s32.totalorder %v2912, %v2982
        %vm3003 = vcmp.eq.s32.totalorder %v2913, %v2982
        %vm3004 = vcmp.eq.s32.totalorder %v2912, %v2983
        %vm3005 = vcmp.eq.s32.totalorder %v2913, %v2983
        %vm3006 = vcmp.eq.s32.totalorder %v2912, %v2984
        %vm3007 = vcmp.eq.s32.totalorder %v2913, %v2984
        %vm3008 = vcmp.eq.s32.totalorder %v2912, %v2985
        %vm3009 = vcmp.eq.s32.totalorder %v2913, %v2985
        %vm3010 = vcmp.eq.s32.totalorder %v2912, %v2986
        %vm3011 = vcmp.eq.s32.totalorder %v2913, %v2986
        %vm3012 = vcmp.eq.s32.totalorder %v2912, %v2987
        %vm3013 = vcmp.eq.s32.totalorder %v2913, %v2987
        %vm3014 = vcmp.eq.s32.totalorder %v2912, %v2988
        %vm3015 = vcmp.eq.s32.totalorder %v2913, %v2988
        %vm3016 = vcmp.eq.s32.totalorder %v2912, %v2989
        %vm3017 = vcmp.eq.s32.totalorder %v2913, %v2989
        %vm3018 = vcmp.eq.s32.totalorder %v2912, %v2990
        %vm3019 = vcmp.eq.s32.totalorder %v2913, %v2990
        %vm3020 = vcmp.eq.s32.totalorder %v2912, %v2991
        %vm3021 = vcmp.eq.s32.totalorder %v2913, %v2991
        %vm3022 = vcmp.eq.s32.totalorder %v2912, %v2992
        %vm3023 = vcmp.eq.s32.totalorder %v2913, %v2992
        %vm3024 = vcmp.eq.s32.totalorder %v2912, %v2993
        %vm3025 = vcmp.eq.s32.totalorder %v2913, %v2993
        %v3026 = vsel %vm2994, 1.0, 0.0
        %v3027 = vsel %vm2995, 1.0, 0.0
        %v3028 = vsel %vm2996, 1.0, 0.0
        %v3029 = vsel %vm2997, 1.0, 0.0
        %v3030 = vsel %vm2998, 1.0, 0.0
        %v3031 = vsel %vm2999, 1.0, 0.0
        %v3032 = vsel %vm3000, 1.0, 0.0
        %v3033 = vsel %vm3001, 1.0, 0.0
        %v3034 = vsel %vm3002, 1.0, 0.0
        %v3035 = vsel %vm3003, 1.0, 0.0
        %v3036 = vsel %vm3004, 1.0, 0.0
        %v3037 = vsel %vm3005, 1.0, 0.0
        %v3038 = vsel %vm3006, 1.0, 0.0
        %v3039 = vsel %vm3007, 1.0, 0.0
        %v3040 = vsel %vm3008, 1.0, 0.0
        %v3041 = vsel %vm3009, 1.0, 0.0
        %v3042 = vsel %vm3010, 1.0, 0.0
        %v3043 = vsel %vm3011, 1.0, 0.0
        %v3044 = vsel %vm3012, 1.0, 0.0
        %v3045 = vsel %vm3013, 1.0, 0.0
        %v3046 = vsel %vm3014, 1.0, 0.0
        %v3047 = vsel %vm3015, 1.0, 0.0
        %v3048 = vsel %vm3016, 1.0, 0.0
        %v3049 = vsel %vm3017, 1.0, 0.0
        %v3050 = vsel %vm3018, 1.0, 0.0
        %v3051 = vsel %vm3019, 1.0, 0.0
        %v3052 = vsel %vm3020, 1.0, 0.0
        %v3053 = vsel %vm3021, 1.0, 0.0
        %v3054 = vsel %vm3022, 1.0, 0.0
        %v3055 = vsel %vm3023, 1.0, 0.0
        %v3056 = vsel %vm3024, 1.0, 0.0
        %v3057 = vsel %vm3025, 1.0, 0.0
        %3058 = vmatpush.msra.mxu0 %v2861
        %3059 = vmatpush.msra.mxu0 %v2860
        %3060 = vmatpush.msra.mxu0 %v2859
        %3061 = vmatpush.msra.mxu0 %v2858
        %3062 = vmatpush.msra.mxu0 %v2857
        %3063 = vmatpush.msra.mxu0 %v2856
        %3064 = vmatpush.msra.mxu0 %v2855
        %3065 = vmatpush.msra.mxu0 %v2854
        %3066 = vmatpush.msra.mxu0 %v2853
        %3067 = vmatpush.msra.mxu0 %v2852
        %3068 = vmatpush.msra.mxu0 %v2851
        %3069 = vmatpush.msra.mxu0 %v2850
        %3070 = vmatpush.msra.mxu0 %v2849
        %3071 = vmatpush.msra.mxu0 %v2848
        %3072 = vmatpush.msra.mxu0 %v2847
        %3073 = vmatpush.msra.mxu0 %v2846
        %3074 = vmatmul.f32.gmra.mxu0 %v2946
        %v3075 = vpop.f32.mrf.mxu0
        %v3076 = vadd.f32 0.0, %v3075
        %3077 = vmatmul.f32.gmra.mxu0 %v2948
        %v3078 = vpop.f32.mrf.mxu0
        %v3079 = vadd.f32 0.0, %v3078
        %3080 = vmatmul.f32.gmra.mxu0 %v2950
        %v3081 = vpop.f32.mrf.mxu0
        %v3082 = vadd.f32 0.0, %v3081
        %3083 = vmatmul.f32.gmra.mxu0 %v2952
        %v3084 = vpop.f32.mrf.mxu0
        %v3085 = vadd.f32 0.0, %v3084
        %3086 = vmatmul.f32.gmra.mxu0 %v2954
        %v3087 = vpop.f32.mrf.mxu0
        %v3088 = vadd.f32 0.0, %v3087
        %3089 = vmatmul.f32.gmra.mxu0 %v2956
        %v3090 = vpop.f32.mrf.mxu0
        %v3091 = vadd.f32 0.0, %v3090
        %3092 = vmatmul.f32.gmra.mxu0 %v2958
        %v3093 = vpop.f32.mrf.mxu0
        %v3094 = vadd.f32 0.0, %v3093
        %3095 = vmatmul.f32.gmra.mxu0 %v2960
        %v3096 = vpop.f32.mrf.mxu0
        %v3097 = vadd.f32 0.0, %v3096
        %3098 = vmatmul.f32.gmra.mxu0 %v2962
        %v3099 = vpop.f32.mrf.mxu0
        %v3100 = vadd.f32 0.0, %v3099
        %3101 = vmatmul.f32.gmra.mxu0 %v2964
        %v3102 = vpop.f32.mrf.mxu0
        %v3103 = vadd.f32 0.0, %v3102
        %3104 = vmatmul.f32.gmra.mxu0 %v2966
        %v3105 = vpop.f32.mrf.mxu0
        %v3106 = vadd.f32 0.0, %v3105
        %3107 = vmatmul.f32.gmra.mxu0 %v2968
        %v3108 = vpop.f32.mrf.mxu0
        %v3109 = vadd.f32 0.0, %v3108
        %3110 = vmatmul.f32.gmra.mxu0 %v2970
        %v3111 = vpop.f32.mrf.mxu0
        %v3112 = vadd.f32 0.0, %v3111
        %3113 = vmatmul.f32.gmra.mxu0 %v2972
        %v3114 = vpop.f32.mrf.mxu0
        %v3115 = vadd.f32 0.0, %v3114
        %3116 = vmatmul.f32.gmra.mxu0 %v2974
        %v3117 = vpop.f32.mrf.mxu0
        %v3118 = vadd.f32 0.0, %v3117
        %3119 = vmatmul.f32.gmra.mxu0 %v2976
        %v3120 = vpop.f32.mrf.mxu0
        %v3121 = vadd.f32 0.0, %v3120
        %3122 = vdwg.mxu0
        %3123 = vmatpush.msra.mxu0 %v2877
        %3124 = vmatpush.msra.mxu0 %v2876
        %3125 = vmatpush.msra.mxu0 %v2875
        %3126 = vmatpush.msra.mxu0 %v2874
        %3127 = vmatpush.msra.mxu0 %v2873
        %3128 = vmatpush.msra.mxu0 %v2872
        %3129 = vmatpush.msra.mxu0 %v2871
        %3130 = vmatpush.msra.mxu0 %v2870
        %3131 = vmatpush.msra.mxu0 %v2869
        %3132 = vmatpush.msra.mxu0 %v2868
        %3133 = vmatpush.msra.mxu0 %v2867
        %3134 = vmatpush.msra.mxu0 %v2866
        %3135 = vmatpush.msra.mxu0 %v2865
        %3136 = vmatpush.msra.mxu0 %v2864
        %3137 = vmatpush.msra.mxu0 %v2863
        %3138 = vmatpush.msra.mxu0 %v2862
        %3139 = vmatmul.f32.gmra.mxu0 %v2947
        %v3140 = vpop.f32.mrf.mxu0
        %v3141 = vadd.f32 %v3076, %v3140
        %3142 = vmatmul.f32.gmra.mxu0 %v2949
        %v3143 = vpop.f32.mrf.mxu0
        %v3144 = vadd.f32 %v3079, %v3143
        %3145 = vmatmul.f32.gmra.mxu0 %v2951
        %v3146 = vpop.f32.mrf.mxu0
        %v3147 = vadd.f32 %v3082, %v3146
        %3148 = vmatmul.f32.gmra.mxu0 %v2953
        %v3149 = vpop.f32.mrf.mxu0
        %v3150 = vadd.f32 %v3085, %v3149
        %3151 = vmatmul.f32.gmra.mxu0 %v2955
        %v3152 = vpop.f32.mrf.mxu0
        %v3153 = vadd.f32 %v3088, %v3152
        %3154 = vmatmul.f32.gmra.mxu0 %v2957
        %v3155 = vpop.f32.mrf.mxu0
        %v3156 = vadd.f32 %v3091, %v3155
        %3157 = vmatmul.f32.gmra.mxu0 %v2959
        %v3158 = vpop.f32.mrf.mxu0
        %v3159 = vadd.f32 %v3094, %v3158
        %3160 = vmatmul.f32.gmra.mxu0 %v2961
        %v3161 = vpop.f32.mrf.mxu0
        %v3162 = vadd.f32 %v3097, %v3161
        %3163 = vmatmul.f32.gmra.mxu0 %v2963
        %v3164 = vpop.f32.mrf.mxu0
        %v3165 = vadd.f32 %v3100, %v3164
        %3166 = vmatmul.f32.gmra.mxu0 %v2965
        %v3167 = vpop.f32.mrf.mxu0
        %v3168 = vadd.f32 %v3103, %v3167
        %3169 = vmatmul.f32.gmra.mxu0 %v2967
        %v3170 = vpop.f32.mrf.mxu0
        %v3171 = vadd.f32 %v3106, %v3170
        %3172 = vmatmul.f32.gmra.mxu0 %v2969
        %v3173 = vpop.f32.mrf.mxu0
        %v3174 = vadd.f32 %v3109, %v3173
        %3175 = vmatmul.f32.gmra.mxu0 %v2971
        %v3176 = vpop.f32.mrf.mxu0
        %v3177 = vadd.f32 %v3112, %v3176
        %3178 = vmatmul.f32.gmra.mxu0 %v2973
        %v3179 = vpop.f32.mrf.mxu0
        %v3180 = vadd.f32 %v3115, %v3179
        %3181 = vmatmul.f32.gmra.mxu0 %v2975
        %v3182 = vpop.f32.mrf.mxu0
        %v3183 = vadd.f32 %v3118, %v3182
        %3184 = vmatmul.f32.gmra.mxu0 %v2977
        %v3185 = vpop.f32.mrf.mxu0
        %v3186 = vadd.f32 %v3121, %v3185
        %3187 = vdwg.mxu0
        %3188 = vmatpush.msra.mxu0 %v2861
        %3189 = vmatpush.msra.mxu0 %v2860
        %3190 = vmatpush.msra.mxu0 %v2859
        %3191 = vmatpush.msra.mxu0 %v2858
        %3192 = vmatpush.msra.mxu0 %v2857
        %3193 = vmatpush.msra.mxu0 %v2856
        %3194 = vmatpush.msra.mxu0 %v2855
        %3195 = vmatpush.msra.mxu0 %v2854
        %3196 = vmatpush.msra.mxu0 %v2853
        %3197 = vmatpush.msra.mxu0 %v2852
        %3198 = vmatpush.msra.mxu0 %v2851
        %3199 = vmatpush.msra.mxu0 %v2850
        %3200 = vmatpush.msra.mxu0 %v2849
        %3201 = vmatpush.msra.mxu0 %v2848
        %3202 = vmatpush.msra.mxu0 %v2847
        %3203 = vmatpush.msra.mxu0 %v2846
        %3204 = vmatmul.f32.gmra.mxu0 %v3026
        %v3205 = vpop.f32.mrf.mxu0
        %v3206 = vadd.f32 0.0, %v3205
        %3207 = vmatmul.f32.gmra.mxu0 %v3028
        %v3208 = vpop.f32.mrf.mxu0
        %v3209 = vadd.f32 0.0, %v3208
        %3210 = vmatmul.f32.gmra.mxu0 %v3030
        %v3211 = vpop.f32.mrf.mxu0
        %v3212 = vadd.f32 0.0, %v3211
        %3213 = vmatmul.f32.gmra.mxu0 %v3032
        %v3214 = vpop.f32.mrf.mxu0
        %v3215 = vadd.f32 0.0, %v3214
        %3216 = vmatmul.f32.gmra.mxu0 %v3034
        %v3217 = vpop.f32.mrf.mxu0
        %v3218 = vadd.f32 0.0, %v3217
        %3219 = vmatmul.f32.gmra.mxu0 %v3036
        %v3220 = vpop.f32.mrf.mxu0
        %v3221 = vadd.f32 0.0, %v3220
        %3222 = vmatmul.f32.gmra.mxu0 %v3038
        %v3223 = vpop.f32.mrf.mxu0
        %v3224 = vadd.f32 0.0, %v3223
        %3225 = vmatmul.f32.gmra.mxu0 %v3040
        %v3226 = vpop.f32.mrf.mxu0
        %v3227 = vadd.f32 0.0, %v3226
        %3228 = vmatmul.f32.gmra.mxu0 %v3042
        %v3229 = vpop.f32.mrf.mxu0
        %v3230 = vadd.f32 0.0, %v3229
        %3231 = vmatmul.f32.gmra.mxu0 %v3044
        %v3232 = vpop.f32.mrf.mxu0
        %v3233 = vadd.f32 0.0, %v3232
        %3234 = vmatmul.f32.gmra.mxu0 %v3046
        %v3235 = vpop.f32.mrf.mxu0
        %v3236 = vadd.f32 0.0, %v3235
        %3237 = vmatmul.f32.gmra.mxu0 %v3048
        %v3238 = vpop.f32.mrf.mxu0
        %v3239 = vadd.f32 0.0, %v3238
        %3240 = vmatmul.f32.gmra.mxu0 %v3050
        %v3241 = vpop.f32.mrf.mxu0
        %v3242 = vadd.f32 0.0, %v3241
        %3243 = vmatmul.f32.gmra.mxu0 %v3052
        %v3244 = vpop.f32.mrf.mxu0
        %v3245 = vadd.f32 0.0, %v3244
        %3246 = vmatmul.f32.gmra.mxu0 %v3054
        %v3247 = vpop.f32.mrf.mxu0
        %v3248 = vadd.f32 0.0, %v3247
        %3249 = vmatmul.f32.gmra.mxu0 %v3056
        %v3250 = vpop.f32.mrf.mxu0
        %v3251 = vadd.f32 0.0, %v3250
        %3252 = vdwg.mxu0
        %3253 = vmatpush.msra.mxu0 %v2877
        %3254 = vmatpush.msra.mxu0 %v2876
        %3255 = vmatpush.msra.mxu0 %v2875
        %3256 = vmatpush.msra.mxu0 %v2874
        %3257 = vmatpush.msra.mxu0 %v2873
        %3258 = vmatpush.msra.mxu0 %v2872
        %3259 = vmatpush.msra.mxu0 %v2871
        %3260 = vmatpush.msra.mxu0 %v2870
        %3261 = vmatpush.msra.mxu0 %v2869
        %3262 = vmatpush.msra.mxu0 %v2868
        %3263 = vmatpush.msra.mxu0 %v2867
        %3264 = vmatpush.msra.mxu0 %v2866
        %3265 = vmatpush.msra.mxu0 %v2865
        %3266 = vmatpush.msra.mxu0 %v2864
        %3267 = vmatpush.msra.mxu0 %v2863
        %3268 = vmatpush.msra.mxu0 %v2862
        %3269 = vmatmul.f32.gmra.mxu0 %v3027
        %v3270 = vpop.f32.mrf.mxu0
        %v3271 = vadd.f32 %v3206, %v3270
        %3272 = vmatmul.f32.gmra.mxu0 %v3029
        %v3273 = vpop.f32.mrf.mxu0
        %v3274 = vadd.f32 %v3209, %v3273
        %3275 = vmatmul.f32.gmra.mxu0 %v3031
        %v3276 = vpop.f32.mrf.mxu0
        %v3277 = vadd.f32 %v3212, %v3276
        %3278 = vmatmul.f32.gmra.mxu0 %v3033
        %v3279 = vpop.f32.mrf.mxu0
        %v3280 = vadd.f32 %v3215, %v3279
        %3281 = vmatmul.f32.gmra.mxu0 %v3035
        %v3282 = vpop.f32.mrf.mxu0
        %v3283 = vadd.f32 %v3218, %v3282
        %3284 = vmatmul.f32.gmra.mxu0 %v3037
        %v3285 = vpop.f32.mrf.mxu0
        %v3286 = vadd.f32 %v3221, %v3285
        %3287 = vmatmul.f32.gmra.mxu0 %v3039
        %v3288 = vpop.f32.mrf.mxu0
        %v3289 = vadd.f32 %v3224, %v3288
        %3290 = vmatmul.f32.gmra.mxu0 %v3041
        %v3291 = vpop.f32.mrf.mxu0
        %v3292 = vadd.f32 %v3227, %v3291
        %3293 = vmatmul.f32.gmra.mxu0 %v3043
        %v3294 = vpop.f32.mrf.mxu0
        %v3295 = vadd.f32 %v3230, %v3294
        %3296 = vmatmul.f32.gmra.mxu0 %v3045
        %v3297 = vpop.f32.mrf.mxu0
        %v3298 = vadd.f32 %v3233, %v3297
        %3299 = vmatmul.f32.gmra.mxu0 %v3047
        %v3300 = vpop.f32.mrf.mxu0
        %v3301 = vadd.f32 %v3236, %v3300
        %3302 = vmatmul.f32.gmra.mxu0 %v3049
        %v3303 = vpop.f32.mrf.mxu0
        %v3304 = vadd.f32 %v3239, %v3303
        %3305 = vmatmul.f32.gmra.mxu0 %v3051
        %v3306 = vpop.f32.mrf.mxu0
        %v3307 = vadd.f32 %v3242, %v3306
        %3308 = vmatmul.f32.gmra.mxu0 %v3053
        %v3309 = vpop.f32.mrf.mxu0
        %v3310 = vadd.f32 %v3245, %v3309
        %3311 = vmatmul.f32.gmra.mxu0 %v3055
        %v3312 = vpop.f32.mrf.mxu0
        %v3313 = vadd.f32 %v3248, %v3312
        %3314 = vmatmul.f32.gmra.mxu0 %v3057
        %v3315 = vpop.f32.mrf.mxu0
        %v3316 = vadd.f32 %v3251, %v3315
        %3317 = vdwg.mxu0
        %v3318 = vmax.f32 %v3141, %v3271
        %v3319 = vmax.f32 %v3144, %v3274
        %v3320 = vmax.f32 %v3147, %v3277
        %v3321 = vmax.f32 %v3150, %v3280
        %v3322 = vmax.f32 %v3153, %v3283
        %v3323 = vmax.f32 %v3156, %v3286
        %v3324 = vmax.f32 %v3159, %v3289
        %v3325 = vmax.f32 %v3162, %v3292
        %v3326 = vmax.f32 %v3165, %v3295
        %v3327 = vmax.f32 %v3168, %v3298
        %v3328 = vmax.f32 %v3171, %v3301
        %v3329 = vmax.f32 %v3174, %v3304
        %v3330 = vmax.f32 %v3177, %v3307
        %v3331 = vmax.f32 %v3180, %v3310
        %v3332 = vmax.f32 %v3183, %v3313
        %v3333 = vmax.f32 %v3186, %v3316
        %vm3334 = vcmask 64512
        %3335 = vst.msk [vmem:[#allocation3] sm:$0xff] %vm3334, 0.0
        %3336 = vst.msk [vmem:[#allocation3 + $0x8] sm:$0xff] %vm3334, 0.0
        %3337 = vst.msk [vmem:[#allocation3 + $0x10] sm:$0xff] %vm3334, 0.0
        %3338 = vst.msk [vmem:[#allocation3 + $0x18] sm:$0xff] %vm3334, 0.0
        %3339 = vst.msk [vmem:[#allocation3 + $0x20] sm:$0xff] %vm3334, 0.0
        %3340 = vst.msk [vmem:[#allocation3 + $0x28] sm:$0xff] %vm3334, 0.0
        %3341 = vst.msk [vmem:[#allocation3 + $0x30] sm:$0xff] %vm3334, 0.0
        %3342 = vst.msk [vmem:[#allocation3 + $0x38] sm:$0xff] %vm3334, 0.0
        %3343 = vst.msk [vmem:[#allocation3 + $0x40] sm:$0xff] %vm3334, 0.0
        %3344 = vst.msk [vmem:[#allocation3 + $0x48] sm:$0xff] %vm3334, 0.0
        %3345 = vst.msk [vmem:[#allocation3 + $0x50] sm:$0xff] %vm3334, 0.0
        %3346 = vst.msk [vmem:[#allocation3 + $0x58] sm:$0xff] %vm3334, 0.0
        %3347 = vst.msk [vmem:[#allocation3 + $0x60] sm:$0xff] %vm3334, 0.0
        %3348 = vst.msk [vmem:[#allocation3 + $0x68] sm:$0xff] %vm3334, 0.0
        %3349 = vst.msk [vmem:[#allocation3 + $0x70] sm:$0xff] %vm3334, 0.0
        %3350 = vst.msk [vmem:[#allocation3 + $0x78] sm:$0xff] %vm3334, 0.0
        %3351 = vst.msk [vmem:[#allocation3 + $0x80] sm:$0xff] %vm3334, 0.0
        %3352 = vst.msk [vmem:[#allocation3 + $0x88] sm:$0xff] %vm3334, 0.0
        %3353 = vst.msk [vmem:[#allocation3 + $0x8] sm:$0xff] %vm3334, %v3318
        %3354 = vst.msk [vmem:[#allocation3 + $0x10] sm:$0xff] %vm3334, %v3319
        %3355 = vst.msk [vmem:[#allocation3 + $0x18] sm:$0xff] %vm3334, %v3320
        %3356 = vst.msk [vmem:[#allocation3 + $0x20] sm:$0xff] %vm3334, %v3321
        %3357 = vst.msk [vmem:[#allocation3 + $0x28] sm:$0xff] %vm3334, %v3322
        %3358 = vst.msk [vmem:[#allocation3 + $0x30] sm:$0xff] %vm3334, %v3323
        %3359 = vst.msk [vmem:[#allocation3 + $0x38] sm:$0xff] %vm3334, %v3324
        %3360 = vst.msk [vmem:[#allocation3 + $0x40] sm:$0xff] %vm3334, %v3325
        %3361 = vst.msk [vmem:[#allocation3 + $0x48] sm:$0xff] %vm3334, %v3326
        %3362 = vst.msk [vmem:[#allocation3 + $0x50] sm:$0xff] %vm3334, %v3327
        %3363 = vst.msk [vmem:[#allocation3 + $0x58] sm:$0xff] %vm3334, %v3328
        %3364 = vst.msk [vmem:[#allocation3 + $0x60] sm:$0xff] %vm3334, %v3329
        %3365 = vst.msk [vmem:[#allocation3 + $0x68] sm:$0xff] %vm3334, %v3330
        %3366 = vst.msk [vmem:[#allocation3 + $0x70] sm:$0xff] %vm3334, %v3331
        %3367 = vst.msk [vmem:[#allocation3 + $0x78] sm:$0xff] %vm3334, %v3332
        %3368 = vst.msk [vmem:[#allocation3 + $0x80] sm:$0xff] %vm3334, %v3333
        %v3369 = vld [vmem:[#allocation3 + $0x6] sm:$0xff]
        %v3370 = vld [vmem:[#allocation3 + $0xe] sm:$0xff]
        %v3371 = vld [vmem:[#allocation3 + $0x16] sm:$0xff]
        %v3372 = vld [vmem:[#allocation3 + $0x1e] sm:$0xff]
        %v3373 = vld [vmem:[#allocation3 + $0x26] sm:$0xff]
        %v3374 = vld [vmem:[#allocation3 + $0x2e] sm:$0xff]
        %v3375 = vld [vmem:[#allocation3 + $0x36] sm:$0xff]
        %v3376 = vld [vmem:[#allocation3 + $0x3e] sm:$0xff]
        %v3377 = vld [vmem:[#allocation3 + $0x46] sm:$0xff]
        %v3378 = vld [vmem:[#allocation3 + $0x4e] sm:$0xff]
        %v3379 = vld [vmem:[#allocation3 + $0x56] sm:$0xff]
        %v3380 = vld [vmem:[#allocation3 + $0x5e] sm:$0xff]
        %v3381 = vld [vmem:[#allocation3 + $0x66] sm:$0xff]
        %v3382 = vld [vmem:[#allocation3 + $0x6e] sm:$0xff]
        %v3383 = vld [vmem:[#allocation3 + $0x76] sm:$0xff]
        %v3384 = vld [vmem:[#allocation3 + $0x7e] sm:$0xff]
        %v3385 = vld [vmem:[#allocation15] sm:$0xff]
        %v3386 = vld [vmem:[#allocation3 + $0x7] sm:$0xff]
        %v3387 = vld [vmem:[#allocation3 + $0xf] sm:$0xff]
        %v3388 = vld [vmem:[#allocation3 + $0x17] sm:$0xff]
        %v3389 = vld [vmem:[#allocation3 + $0x1f] sm:$0xff]
        %v3390 = vld [vmem:[#allocation3 + $0x27] sm:$0xff]
        %v3391 = vld [vmem:[#allocation3 + $0x2f] sm:$0xff]
        %v3392 = vld [vmem:[#allocation3 + $0x37] sm:$0xff]
        %v3393 = vld [vmem:[#allocation3 + $0x3f] sm:$0xff]
        %v3394 = vld [vmem:[#allocation3 + $0x47] sm:$0xff]
        %v3395 = vld [vmem:[#allocation3 + $0x4f] sm:$0xff]
        %v3396 = vld [vmem:[#allocation3 + $0x57] sm:$0xff]
        %v3397 = vld [vmem:[#allocation3 + $0x5f] sm:$0xff]
        %v3398 = vld [vmem:[#allocation3 + $0x67] sm:$0xff]
        %v3399 = vld [vmem:[#allocation3 + $0x6f] sm:$0xff]
        %v3400 = vld [vmem:[#allocation3 + $0x77] sm:$0xff]
        %v3401 = vld [vmem:[#allocation3 + $0x7f] sm:$0xff]
        %s3402 = scalar_lea.vmem [#allocation15], 8
        %v3403 = vld [vmem:[%s3402] sm:$0xff]
        %v3405 = vsel %vm3334, %v3386, 0
        %v3408 = vsel %vm3334, %v3387, 0
        %v3411 = vsel %vm3334, %v3388, 0
        %v3414 = vsel %vm3334, %v3389, 0
        %v3417 = vsel %vm3334, %v3390, 0
        %v3420 = vsel %vm3334, %v3391, 0
        %v3423 = vsel %vm3334, %v3392, 0
        %v3426 = vsel %vm3334, %v3393, 0
        %v3429 = vsel %vm3334, %v3394, 0
        %v3432 = vsel %vm3334, %v3395, 0
        %v3435 = vsel %vm3334, %v3396, 0
        %v3438 = vsel %vm3334, %v3397, 0
        %v3441 = vsel %vm3334, %v3398, 0
        %v3444 = vsel %vm3334, %v3399, 0
        %v3447 = vsel %vm3334, %v3400, 0
        %v3450 = vsel %vm3334, %v3401, 0
        %3452 = vmatpush.msra.mxu0 0.0
        %3453 = vmatpush.msra.mxu0 0.0
        %3454 = vmatpush.msra.mxu0 0.0
        %3455 = vmatpush.msra.mxu0 0.0
        %3456 = vmatpush.msra.mxu0 0.0
        %3457 = vmatpush.msra.mxu0 0.0
        %3458 = vmatpush.msra.mxu0 0.0
        %3459 = vmatpush.msra.mxu0 0.0
        %3460 = vmatpush.msra.mxu0 0.0
        %3461 = vmatpush.msra.mxu0 0.0
        %3462 = vmatpush.msra.mxu0 0.0
        %3463 = vmatpush.msra.mxu0 0.0
        %3464 = vmatpush.msra.mxu0 0.0
        %3465 = vmatpush.msra.mxu0 0.0
        %3466 = vmatpush.msra.mxu0 0.0
        %3467 = vmatpush.msra.mxu0 %v3403
        %3468 = vmatmul.f32.gmra.mxu0 %v3405
        %v3469 = vpop.f32.mrf.mxu0
        %v3470 = vadd.f32 0.0, %v3469
        %3471 = vmatmul.f32.gmra.mxu0 %v3408
        %v3472 = vpop.f32.mrf.mxu0
        %v3473 = vadd.f32 0.0, %v3472
        %3474 = vmatmul.f32.gmra.mxu0 %v3411
        %v3475 = vpop.f32.mrf.mxu0
        %v3476 = vadd.f32 0.0, %v3475
        %3477 = vmatmul.f32.gmra.mxu0 %v3414
        %v3478 = vpop.f32.mrf.mxu0
        %v3479 = vadd.f32 0.0, %v3478
        %3480 = vmatmul.f32.gmra.mxu0 %v3417
        %v3481 = vpop.f32.mrf.mxu0
        %v3482 = vadd.f32 0.0, %v3481
        %3483 = vmatmul.f32.gmra.mxu0 %v3420
        %v3484 = vpop.f32.mrf.mxu0
        %v3485 = vadd.f32 0.0, %v3484
        %3486 = vmatmul.f32.gmra.mxu0 %v3423
        %v3487 = vpop.f32.mrf.mxu0
        %v3488 = vadd.f32 0.0, %v3487
        %3489 = vmatmul.f32.gmra.mxu0 %v3426
        %v3490 = vpop.f32.mrf.mxu0
        %v3491 = vadd.f32 0.0, %v3490
        %3492 = vmatmul.f32.gmra.mxu0 %v3429
        %v3493 = vpop.f32.mrf.mxu0
        %v3494 = vadd.f32 0.0, %v3493
        %3495 = vmatmul.f32.gmra.mxu0 %v3432
        %v3496 = vpop.f32.mrf.mxu0
        %v3497 = vadd.f32 0.0, %v3496
        %3498 = vmatmul.f32.gmra.mxu0 %v3435
        %v3499 = vpop.f32.mrf.mxu0
        %v3500 = vadd.f32 0.0, %v3499
        %3501 = vmatmul.f32.gmra.mxu0 %v3438
        %v3502 = vpop.f32.mrf.mxu0
        %v3503 = vadd.f32 0.0, %v3502
        %3504 = vmatmul.f32.gmra.mxu0 %v3441
        %v3505 = vpop.f32.mrf.mxu0
        %v3506 = vadd.f32 0.0, %v3505
        %3507 = vmatmul.f32.gmra.mxu0 %v3444
        %v3508 = vpop.f32.mrf.mxu0
        %v3509 = vadd.f32 0.0, %v3508
        %3510 = vmatmul.f32.gmra.mxu0 %v3447
        %v3511 = vpop.f32.mrf.mxu0
        %v3512 = vadd.f32 0.0, %v3511
        %3513 = vmatmul.f32.gmra.mxu0 %v3450
        %v3514 = vpop.f32.mrf.mxu0
        %v3515 = vadd.f32 0.0, %v3514
        %3516 = vdwg.mxu0
        %v3518 = vsel %vm3334, %v3369, 0
        %v3521 = vsel %vm3334, %v3370, 0
        %v3524 = vsel %vm3334, %v3371, 0
        %v3527 = vsel %vm3334, %v3372, 0
        %v3530 = vsel %vm3334, %v3373, 0
        %v3533 = vsel %vm3334, %v3374, 0
        %v3536 = vsel %vm3334, %v3375, 0
        %v3539 = vsel %vm3334, %v3376, 0
        %v3542 = vsel %vm3334, %v3377, 0
        %v3545 = vsel %vm3334, %v3378, 0
        %v3548 = vsel %vm3334, %v3379, 0
        %v3551 = vsel %vm3334, %v3380, 0
        %v3554 = vsel %vm3334, %v3381, 0
        %v3557 = vsel %vm3334, %v3382, 0
        %v3560 = vsel %vm3334, %v3383, 0
        %v3563 = vsel %vm3334, %v3384, 0
        %3565 = vmatpush.msra.mxu0 0.0
        %3566 = vmatpush.msra.mxu0 0.0
        %3567 = vmatpush.msra.mxu0 0.0
        %3568 = vmatpush.msra.mxu0 0.0
        %3569 = vmatpush.msra.mxu0 0.0
        %3570 = vmatpush.msra.mxu0 0.0
        %3571 = vmatpush.msra.mxu0 0.0
        %3572 = vmatpush.msra.mxu0 0.0
        %3573 = vmatpush.msra.mxu0 0.0
        %3574 = vmatpush.msra.mxu0 0.0
        %3575 = vmatpush.msra.mxu0 0.0
        %3576 = vmatpush.msra.mxu0 0.0
        %3577 = vmatpush.msra.mxu0 0.0
        %3578 = vmatpush.msra.mxu0 0.0
        %3579 = vmatpush.msra.mxu0 0.0
        %3580 = vmatpush.msra.mxu0 %v3385
        %3581 = vmatmul.f32.gmra.mxu0 %v3518
        %v3582 = vpop.f32.mrf.mxu0
        %v3583 = vadd.f32 %v3470, %v3582
        %3584 = vmatmul.f32.gmra.mxu0 %v3521
        %v3585 = vpop.f32.mrf.mxu0
        %v3586 = vadd.f32 %v3473, %v3585
        %3587 = vmatmul.f32.gmra.mxu0 %v3524
        %v3588 = vpop.f32.mrf.mxu0
        %v3589 = vadd.f32 %v3476, %v3588
        %3590 = vmatmul.f32.gmra.mxu0 %v3527
        %v3591 = vpop.f32.mrf.mxu0
        %v3592 = vadd.f32 %v3479, %v3591
        %3593 = vmatmul.f32.gmra.mxu0 %v3530
        %v3594 = vpop.f32.mrf.mxu0
        %v3595 = vadd.f32 %v3482, %v3594
        %3596 = vmatmul.f32.gmra.mxu0 %v3533
        %v3597 = vpop.f32.mrf.mxu0
        %v3598 = vadd.f32 %v3485, %v3597
        %3599 = vmatmul.f32.gmra.mxu0 %v3536
        %v3600 = vpop.f32.mrf.mxu0
        %v3601 = vadd.f32 %v3488, %v3600
        %3602 = vmatmul.f32.gmra.mxu0 %v3539
        %v3603 = vpop.f32.mrf.mxu0
        %v3604 = vadd.f32 %v3491, %v3603
        %3605 = vmatmul.f32.gmra.mxu0 %v3542
        %v3606 = vpop.f32.mrf.mxu0
        %v3607 = vadd.f32 %v3494, %v3606
        %3608 = vmatmul.f32.gmra.mxu0 %v3545
        %v3609 = vpop.f32.mrf.mxu0
        %v3610 = vadd.f32 %v3497, %v3609
        %3611 = vmatmul.f32.gmra.mxu0 %v3548
        %v3612 = vpop.f32.mrf.mxu0
        %v3613 = vadd.f32 %v3500, %v3612
        %3614 = vmatmul.f32.gmra.mxu0 %v3551
        %v3615 = vpop.f32.mrf.mxu0
        %v3616 = vadd.f32 %v3503, %v3615
        %3617 = vmatmul.f32.gmra.mxu0 %v3554
        %v3618 = vpop.f32.mrf.mxu0
        %v3619 = vadd.f32 %v3506, %v3618
        %3620 = vmatmul.f32.gmra.mxu0 %v3557
        %v3621 = vpop.f32.mrf.mxu0
        %v3622 = vadd.f32 %v3509, %v3621
        %3623 = vmatmul.f32.gmra.mxu0 %v3560
        %v3624 = vpop.f32.mrf.mxu0
        %v3625 = vadd.f32 %v3512, %v3624
        %3626 = vmatmul.f32.gmra.mxu0 %v3563
        %v3627 = vpop.f32.mrf.mxu0
        %v3628 = vadd.f32 %v3515, %v3627
        %3629 = vdwg.mxu0
        %v3630 = vld [vmem:[#allocation3 + $0x8] sm:$0xff]
        %v3631 = vld [vmem:[#allocation3 + $0x10] sm:$0xff]
        %v3632 = vld [vmem:[#allocation3 + $0x18] sm:$0xff]
        %v3633 = vld [vmem:[#allocation3 + $0x20] sm:$0xff]
        %v3634 = vld [vmem:[#allocation3 + $0x28] sm:$0xff]
        %v3635 = vld [vmem:[#allocation3 + $0x30] sm:$0xff]
        %v3636 = vld [vmem:[#allocation3 + $0x38] sm:$0xff]
        %v3637 = vld [vmem:[#allocation3 + $0x40] sm:$0xff]
        %v3638 = vld [vmem:[#allocation3 + $0x48] sm:$0xff]
        %v3639 = vld [vmem:[#allocation3 + $0x50] sm:$0xff]
        %v3640 = vld [vmem:[#allocation3 + $0x58] sm:$0xff]
        %v3641 = vld [vmem:[#allocation3 + $0x60] sm:$0xff]
        %v3642 = vld [vmem:[#allocation3 + $0x68] sm:$0xff]
        %v3643 = vld [vmem:[#allocation3 + $0x70] sm:$0xff]
        %v3644 = vld [vmem:[#allocation3 + $0x78] sm:$0xff]
        %v3645 = vld [vmem:[#allocation3 + $0x80] sm:$0xff]
        %s3646 = scalar_lea.vmem [#allocation15], 16
        %v3647 = vld [vmem:[%s3646] sm:$0xff]
        %v3649 = vsel %vm3334, %v3630, 0
        %v3652 = vsel %vm3334, %v3631, 0
        %v3655 = vsel %vm3334, %v3632, 0
        %v3658 = vsel %vm3334, %v3633, 0
        %v3661 = vsel %vm3334, %v3634, 0
        %v3664 = vsel %vm3334, %v3635, 0
        %v3667 = vsel %vm3334, %v3636, 0
        %v3670 = vsel %vm3334, %v3637, 0
        %v3673 = vsel %vm3334, %v3638, 0
        %v3676 = vsel %vm3334, %v3639, 0
        %v3679 = vsel %vm3334, %v3640, 0
        %v3682 = vsel %vm3334, %v3641, 0
        %v3685 = vsel %vm3334, %v3642, 0
        %v3688 = vsel %vm3334, %v3643, 0
        %v3691 = vsel %vm3334, %v3644, 0
        %v3694 = vsel %vm3334, %v3645, 0
        %3696 = vmatpush.msra.mxu0 0.0
        %3697 = vmatpush.msra.mxu0 0.0
        %3698 = vmatpush.msra.mxu0 0.0
        %3699 = vmatpush.msra.mxu0 0.0
        %3700 = vmatpush.msra.mxu0 0.0
        %3701 = vmatpush.msra.mxu0 0.0
        %3702 = vmatpush.msra.mxu0 0.0
        %3703 = vmatpush.msra.mxu0 0.0
        %3704 = vmatpush.msra.mxu0 0.0
        %3705 = vmatpush.msra.mxu0 0.0
        %3706 = vmatpush.msra.mxu0 0.0
        %3707 = vmatpush.msra.mxu0 0.0
        %3708 = vmatpush.msra.mxu0 0.0
        %3709 = vmatpush.msra.mxu0 0.0
        %3710 = vmatpush.msra.mxu0 0.0
        %3711 = vmatpush.msra.mxu0 %v3647
        %3712 = vmatmul.f32.gmra.mxu0 %v3649
        %v3713 = vpop.f32.mrf.mxu0
        %v3714 = vadd.f32 0.0, %v3713
        %3715 = vmatmul.f32.gmra.mxu0 %v3652
        %v3716 = vpop.f32.mrf.mxu0
        %v3717 = vadd.f32 0.0, %v3716
        %3718 = vmatmul.f32.gmra.mxu0 %v3655
        %v3719 = vpop.f32.mrf.mxu0
        %v3720 = vadd.f32 0.0, %v3719
        %3721 = vmatmul.f32.gmra.mxu0 %v3658
        %v3722 = vpop.f32.mrf.mxu0
        %v3723 = vadd.f32 0.0, %v3722
        %3724 = vmatmul.f32.gmra.mxu0 %v3661
        %v3725 = vpop.f32.mrf.mxu0
        %v3726 = vadd.f32 0.0, %v3725
        %3727 = vmatmul.f32.gmra.mxu0 %v3664
        %v3728 = vpop.f32.mrf.mxu0
        %v3729 = vadd.f32 0.0, %v3728
        %3730 = vmatmul.f32.gmra.mxu0 %v3667
        %v3731 = vpop.f32.mrf.mxu0
        %v3732 = vadd.f32 0.0, %v3731
        %3733 = vmatmul.f32.gmra.mxu0 %v3670
        %v3734 = vpop.f32.mrf.mxu0
        %v3735 = vadd.f32 0.0, %v3734
        %3736 = vmatmul.f32.gmra.mxu0 %v3673
        %v3737 = vpop.f32.mrf.mxu0
        %v3738 = vadd.f32 0.0, %v3737
        %3739 = vmatmul.f32.gmra.mxu0 %v3676
        %v3740 = vpop.f32.mrf.mxu0
        %v3741 = vadd.f32 0.0, %v3740
        %3742 = vmatmul.f32.gmra.mxu0 %v3679
        %v3743 = vpop.f32.mrf.mxu0
        %v3744 = vadd.f32 0.0, %v3743
        %3745 = vmatmul.f32.gmra.mxu0 %v3682
        %v3746 = vpop.f32.mrf.mxu0
        %v3747 = vadd.f32 0.0, %v3746
        %3748 = vmatmul.f32.gmra.mxu0 %v3685
        %v3749 = vpop.f32.mrf.mxu0
        %v3750 = vadd.f32 0.0, %v3749
        %3751 = vmatmul.f32.gmra.mxu0 %v3688
        %v3752 = vpop.f32.mrf.mxu0
        %v3753 = vadd.f32 0.0, %v3752
        %3754 = vmatmul.f32.gmra.mxu0 %v3691
        %v3755 = vpop.f32.mrf.mxu0
        %v3756 = vadd.f32 0.0, %v3755
        %3757 = vmatmul.f32.gmra.mxu0 %v3694
        %v3758 = vpop.f32.mrf.mxu0
        %v3759 = vadd.f32 0.0, %v3758
        %3760 = vdwg.mxu0
        %v3761 = vadd.f32 %v3583, %v3714
        %v3762 = vadd.f32 %v3586, %v3717
        %v3763 = vadd.f32 %v3589, %v3720
        %v3764 = vadd.f32 %v3592, %v3723
        %v3765 = vadd.f32 %v3595, %v3726
        %v3766 = vadd.f32 %v3598, %v3729
        %v3767 = vadd.f32 %v3601, %v3732
        %v3768 = vadd.f32 %v3604, %v3735
        %v3769 = vadd.f32 %v3607, %v3738
        %v3770 = vadd.f32 %v3610, %v3741
        %v3771 = vadd.f32 %v3613, %v3744
        %v3772 = vadd.f32 %v3616, %v3747
        %v3773 = vadd.f32 %v3619, %v3750
        %v3774 = vadd.f32 %v3622, %v3753
        %v3775 = vadd.f32 %v3625, %v3756
        %v3776 = vadd.f32 %v3628, %v3759
        %v3777 = vld [vmem:[#allocation3 + $0x9] sm:$0xff]
        %v3778 = vld [vmem:[#allocation3 + $0x11] sm:$0xff]
        %v3779 = vld [vmem:[#allocation3 + $0x19] sm:$0xff]
        %v3780 = vld [vmem:[#allocation3 + $0x21] sm:$0xff]
        %v3781 = vld [vmem:[#allocation3 + $0x29] sm:$0xff]
        %v3782 = vld [vmem:[#allocation3 + $0x31] sm:$0xff]
        %v3783 = vld [vmem:[#allocation3 + $0x39] sm:$0xff]
        %v3784 = vld [vmem:[#allocation3 + $0x41] sm:$0xff]
        %v3785 = vld [vmem:[#allocation3 + $0x49] sm:$0xff]
        %v3786 = vld [vmem:[#allocation3 + $0x51] sm:$0xff]
        %v3787 = vld [vmem:[#allocation3 + $0x59] sm:$0xff]
        %v3788 = vld [vmem:[#allocation3 + $0x61] sm:$0xff]
        %v3789 = vld [vmem:[#allocation3 + $0x69] sm:$0xff]
        %v3790 = vld [vmem:[#allocation3 + $0x71] sm:$0xff]
        %v3791 = vld [vmem:[#allocation3 + $0x79] sm:$0xff]
        %v3792 = vld [vmem:[#allocation3 + $0x81] sm:$0xff]
        %s3793 = scalar_lea.vmem [#allocation15], 24
        %v3794 = vld [vmem:[%s3793] sm:$0xff]
        %v3796 = vsel %vm3334, %v3777, 0
        %v3799 = vsel %vm3334, %v3778, 0
        %v3802 = vsel %vm3334, %v3779, 0
        %v3805 = vsel %vm3334, %v3780, 0
        %v3808 = vsel %vm3334, %v3781, 0
        %v3811 = vsel %vm3334, %v3782, 0
        %v3814 = vsel %vm3334, %v3783, 0
        %v3817 = vsel %vm3334, %v3784, 0
        %v3820 = vsel %vm3334, %v3785, 0
        %v3823 = vsel %vm3334, %v3786, 0
        %v3826 = vsel %vm3334, %v3787, 0
        %v3829 = vsel %vm3334, %v3788, 0
        %v3832 = vsel %vm3334, %v3789, 0
        %v3835 = vsel %vm3334, %v3790, 0
        %v3838 = vsel %vm3334, %v3791, 0
        %v3841 = vsel %vm3334, %v3792, 0
        %3843 = vmatpush.msra.mxu0 0.0
        %3844 = vmatpush.msra.mxu0 0.0
        %3845 = vmatpush.msra.mxu0 0.0
        %3846 = vmatpush.msra.mxu0 0.0
        %3847 = vmatpush.msra.mxu0 0.0
        %3848 = vmatpush.msra.mxu0 0.0
        %3849 = vmatpush.msra.mxu0 0.0
        %3850 = vmatpush.msra.mxu0 0.0
        %3851 = vmatpush.msra.mxu0 0.0
        %3852 = vmatpush.msra.mxu0 0.0
        %3853 = vmatpush.msra.mxu0 0.0
        %3854 = vmatpush.msra.mxu0 0.0
        %3855 = vmatpush.msra.mxu0 0.0
        %3856 = vmatpush.msra.mxu0 0.0
        %3857 = vmatpush.msra.mxu0 0.0
        %3858 = vmatpush.msra.mxu0 %v3794
        %3859 = vmatmul.f32.gmra.mxu0 %v3796
        %v3860 = vpop.f32.mrf.mxu0
        %v3861 = vadd.f32 0.0, %v3860
        %3862 = vmatmul.f32.gmra.mxu0 %v3799
        %v3863 = vpop.f32.mrf.mxu0
        %v3864 = vadd.f32 0.0, %v3863
        %3865 = vmatmul.f32.gmra.mxu0 %v3802
        %v3866 = vpop.f32.mrf.mxu0
        %v3867 = vadd.f32 0.0, %v3866
        %3868 = vmatmul.f32.gmra.mxu0 %v3805
        %v3869 = vpop.f32.mrf.mxu0
        %v3870 = vadd.f32 0.0, %v3869
        %3871 = vmatmul.f32.gmra.mxu0 %v3808
        %v3872 = vpop.f32.mrf.mxu0
        %v3873 = vadd.f32 0.0, %v3872
        %3874 = vmatmul.f32.gmra.mxu0 %v3811
        %v3875 = vpop.f32.mrf.mxu0
        %v3876 = vadd.f32 0.0, %v3875
        %3877 = vmatmul.f32.gmra.mxu0 %v3814
        %v3878 = vpop.f32.mrf.mxu0
        %v3879 = vadd.f32 0.0, %v3878
        %3880 = vmatmul.f32.gmra.mxu0 %v3817
        %v3881 = vpop.f32.mrf.mxu0
        %v3882 = vadd.f32 0.0, %v3881
        %3883 = vmatmul.f32.gmra.mxu0 %v3820
        %v3884 = vpop.f32.mrf.mxu0
        %v3885 = vadd.f32 0.0, %v3884
        %3886 = vmatmul.f32.gmra.mxu0 %v3823
        %v3887 = vpop.f32.mrf.mxu0
        %v3888 = vadd.f32 0.0, %v3887
        %3889 = vmatmul.f32.gmra.mxu0 %v3826
        %v3890 = vpop.f32.mrf.mxu0
        %v3891 = vadd.f32 0.0, %v3890
        %3892 = vmatmul.f32.gmra.mxu0 %v3829
        %v3893 = vpop.f32.mrf.mxu0
        %v3894 = vadd.f32 0.0, %v3893
        %3895 = vmatmul.f32.gmra.mxu0 %v3832
        %v3896 = vpop.f32.mrf.mxu0
        %v3897 = vadd.f32 0.0, %v3896
        %3898 = vmatmul.f32.gmra.mxu0 %v3835
        %v3899 = vpop.f32.mrf.mxu0
        %v3900 = vadd.f32 0.0, %v3899
        %3901 = vmatmul.f32.gmra.mxu0 %v3838
        %v3902 = vpop.f32.mrf.mxu0
        %v3903 = vadd.f32 0.0, %v3902
        %3904 = vmatmul.f32.gmra.mxu0 %v3841
        %v3905 = vpop.f32.mrf.mxu0
        %v3906 = vadd.f32 0.0, %v3905
        %3907 = vdwg.mxu0
        %v3908 = vadd.f32 %v3761, %v3861
        %v3909 = vadd.f32 %v3762, %v3864
        %v3910 = vadd.f32 %v3763, %v3867
        %v3911 = vadd.f32 %v3764, %v3870
        %v3912 = vadd.f32 %v3765, %v3873
        %v3913 = vadd.f32 %v3766, %v3876
        %v3914 = vadd.f32 %v3767, %v3879
        %v3915 = vadd.f32 %v3768, %v3882
        %v3916 = vadd.f32 %v3769, %v3885
        %v3917 = vadd.f32 %v3770, %v3888
        %v3918 = vadd.f32 %v3771, %v3891
        %v3919 = vadd.f32 %v3772, %v3894
        %v3920 = vadd.f32 %v3773, %v3897
        %v3921 = vadd.f32 %v3774, %v3900
        %v3922 = vadd.f32 %v3775, %v3903
        %v3923 = vadd.f32 %v3776, %v3906
        %v3924 = vld [vmem:[#allocation3 + $0xa] sm:$0xff]
        %v3925 = vld [vmem:[#allocation3 + $0x12] sm:$0xff]
        %v3926 = vld [vmem:[#allocation3 + $0x1a] sm:$0xff]
        %v3927 = vld [vmem:[#allocation3 + $0x22] sm:$0xff]
        %v3928 = vld [vmem:[#allocation3 + $0x2a] sm:$0xff]
        %v3929 = vld [vmem:[#allocation3 + $0x32] sm:$0xff]
        %v3930 = vld [vmem:[#allocation3 + $0x3a] sm:$0xff]
        %v3931 = vld [vmem:[#allocation3 + $0x42] sm:$0xff]
        %v3932 = vld [vmem:[#allocation3 + $0x4a] sm:$0xff]
        %v3933 = vld [vmem:[#allocation3 + $0x52] sm:$0xff]
        %v3934 = vld [vmem:[#allocation3 + $0x5a] sm:$0xff]
        %v3935 = vld [vmem:[#allocation3 + $0x62] sm:$0xff]
        %v3936 = vld [vmem:[#allocation3 + $0x6a] sm:$0xff]
        %v3937 = vld [vmem:[#allocation3 + $0x72] sm:$0xff]
        %v3938 = vld [vmem:[#allocation3 + $0x7a] sm:$0xff]
        %v3939 = vld [vmem:[#allocation3 + $0x82] sm:$0xff]
        %s3940 = scalar_lea.vmem [#allocation15], 32
        %v3941 = vld [vmem:[%s3940] sm:$0xff]
        %v3943 = vsel %vm3334, %v3924, 0
        %v3946 = vsel %vm3334, %v3925, 0
        %v3949 = vsel %vm3334, %v3926, 0
        %v3952 = vsel %vm3334, %v3927, 0
        %v3955 = vsel %vm3334, %v3928, 0
        %v3958 = vsel %vm3334, %v3929, 0
        %v3961 = vsel %vm3334, %v3930, 0
        %v3964 = vsel %vm3334, %v3931, 0
        %v3967 = vsel %vm3334, %v3932, 0
        %v3970 = vsel %vm3334, %v3933, 0
        %v3973 = vsel %vm3334, %v3934, 0
        %v3976 = vsel %vm3334, %v3935, 0
        %v3979 = vsel %vm3334, %v3936, 0
        %v3982 = vsel %vm3334, %v3937, 0
        %v3985 = vsel %vm3334, %v3938, 0
        %v3988 = vsel %vm3334, %v3939, 0
        %3990 = vmatpush.msra.mxu0 0.0
        %3991 = vmatpush.msra.mxu0 0.0
        %3992 = vmatpush.msra.mxu0 0.0
        %3993 = vmatpush.msra.mxu0 0.0
        %3994 = vmatpush.msra.mxu0 0.0
        %3995 = vmatpush.msra.mxu0 0.0
        %3996 = vmatpush.msra.mxu0 0.0
        %3997 = vmatpush.msra.mxu0 0.0
        %3998 = vmatpush.msra.mxu0 0.0
        %3999 = vmatpush.msra.mxu0 0.0
        %4000 = vmatpush.msra.mxu0 0.0
        %4001 = vmatpush.msra.mxu0 0.0
        %4002 = vmatpush.msra.mxu0 0.0
        %4003 = vmatpush.msra.mxu0 0.0
        %4004 = vmatpush.msra.mxu0 0.0
        %4005 = vmatpush.msra.mxu0 %v3941
        %4006 = vmatmul.f32.gmra.mxu0 %v3943
        %v4007 = vpop.f32.mrf.mxu0
        %v4008 = vadd.f32 0.0, %v4007
        %4009 = vmatmul.f32.gmra.mxu0 %v3946
        %v4010 = vpop.f32.mrf.mxu0
        %v4011 = vadd.f32 0.0, %v4010
        %4012 = vmatmul.f32.gmra.mxu0 %v3949
        %v4013 = vpop.f32.mrf.mxu0
        %v4014 = vadd.f32 0.0, %v4013
        %4015 = vmatmul.f32.gmra.mxu0 %v3952
        %v4016 = vpop.f32.mrf.mxu0
        %v4017 = vadd.f32 0.0, %v4016
        %4018 = vmatmul.f32.gmra.mxu0 %v3955
        %v4019 = vpop.f32.mrf.mxu0
        %v4020 = vadd.f32 0.0, %v4019
        %4021 = vmatmul.f32.gmra.mxu0 %v3958
        %v4022 = vpop.f32.mrf.mxu0
        %v4023 = vadd.f32 0.0, %v4022
        %4024 = vmatmul.f32.gmra.mxu0 %v3961
        %v4025 = vpop.f32.mrf.mxu0
        %v4026 = vadd.f32 0.0, %v4025
        %4027 = vmatmul.f32.gmra.mxu0 %v3964
        %v4028 = vpop.f32.mrf.mxu0
        %v4029 = vadd.f32 0.0, %v4028
        %4030 = vmatmul.f32.gmra.mxu0 %v3967
        %v4031 = vpop.f32.mrf.mxu0
        %v4032 = vadd.f32 0.0, %v4031
        %4033 = vmatmul.f32.gmra.mxu0 %v3970
        %v4034 = vpop.f32.mrf.mxu0
        %v4035 = vadd.f32 0.0, %v4034
        %4036 = vmatmul.f32.gmra.mxu0 %v3973
        %v4037 = vpop.f32.mrf.mxu0
        %v4038 = vadd.f32 0.0, %v4037
        %4039 = vmatmul.f32.gmra.mxu0 %v3976
        %v4040 = vpop.f32.mrf.mxu0
        %v4041 = vadd.f32 0.0, %v4040
        %4042 = vmatmul.f32.gmra.mxu0 %v3979
        %v4043 = vpop.f32.mrf.mxu0
        %v4044 = vadd.f32 0.0, %v4043
        %4045 = vmatmul.f32.gmra.mxu0 %v3982
        %v4046 = vpop.f32.mrf.mxu0
        %v4047 = vadd.f32 0.0, %v4046
        %4048 = vmatmul.f32.gmra.mxu0 %v3985
        %v4049 = vpop.f32.mrf.mxu0
        %v4050 = vadd.f32 0.0, %v4049
        %4051 = vmatmul.f32.gmra.mxu0 %v3988
        %v4052 = vpop.f32.mrf.mxu0
        %v4053 = vadd.f32 0.0, %v4052
        %4054 = vdwg.mxu0
        %v4055 = vadd.f32 %v3908, %v4008
        %v4056 = vadd.f32 %v3909, %v4011
        %v4057 = vadd.f32 %v3910, %v4014
        %v4058 = vadd.f32 %v3911, %v4017
        %v4059 = vadd.f32 %v3912, %v4020
        %v4060 = vadd.f32 %v3913, %v4023
        %v4061 = vadd.f32 %v3914, %v4026
        %v4062 = vadd.f32 %v3915, %v4029
        %v4063 = vadd.f32 %v3916, %v4032
        %v4064 = vadd.f32 %v3917, %v4035
        %v4065 = vadd.f32 %v3918, %v4038
        %v4066 = vadd.f32 %v3919, %v4041
        %v4067 = vadd.f32 %v3920, %v4044
        %v4068 = vadd.f32 %v3921, %v4047
        %v4069 = vadd.f32 %v3922, %v4050
        %v4070 = vadd.f32 %v3923, %v4053
        %v4071 = vld [vmem:[#allocation16] sm:$0x1]
        %v4073 = vperm.slane %v4071, 0
        %v4075 = vadd.f32 %v4055, %v4073
        %v4076 = vadd.f32 %v4056, %v4073
        %v4077 = vadd.f32 %v4057, %v4073
        %v4078 = vadd.f32 %v4058, %v4073
        %v4079 = vadd.f32 %v4059, %v4073
        %v4080 = vadd.f32 %v4060, %v4073
        %v4081 = vadd.f32 %v4061, %v4073
        %v4082 = vadd.f32 %v4062, %v4073
        %v4083 = vadd.f32 %v4063, %v4073
        %v4084 = vadd.f32 %v4064, %v4073
        %v4085 = vadd.f32 %v4065, %v4073
        %v4086 = vadd.f32 %v4066, %v4073
        %v4087 = vadd.f32 %v4067, %v4073
        %v4088 = vadd.f32 %v4068, %v4073
        %v4089 = vadd.f32 %v4069, %v4073
        %v4090 = vadd.f32 %v4070, %v4073
        %v4091 = vmax.f32 %v4075, 0.0
        %v4092 = vmax.f32 %v4076, 0.0
        %v4093 = vmax.f32 %v4077, 0.0
        %v4094 = vmax.f32 %v4078, 0.0
        %v4095 = vmax.f32 %v4079, 0.0
        %v4096 = vmax.f32 %v4080, 0.0
        %v4097 = vmax.f32 %v4081, 0.0
        %v4098 = vmax.f32 %v4082, 0.0
        %v4099 = vmax.f32 %v4083, 0.0
        %v4100 = vmax.f32 %v4084, 0.0
        %v4101 = vmax.f32 %v4085, 0.0
        %v4102 = vmax.f32 %v4086, 0.0
        %v4103 = vmax.f32 %v4087, 0.0
        %v4104 = vmax.f32 %v4088, 0.0
        %v4105 = vmax.f32 %v4089, 0.0
        %v4106 = vmax.f32 %v4090, 0.0
        %4107 = vmatpush.msra.mxu0 %v4106
        %4108 = vmatpush.msra.mxu0 %v4105
        %4109 = vmatpush.msra.mxu0 %v4104
        %4110 = vmatpush.msra.mxu0 %v4103
        %4111 = vmatpush.msra.mxu0 %v4102
        %4112 = vmatpush.msra.mxu0 %v4101
        %4113 = vmatpush.msra.mxu0 %v4100
        %4114 = vmatpush.msra.mxu0 %v4099
        %4115 = vmatpush.msra.mxu0 %v4098
        %4116 = vmatpush.msra.mxu0 %v4097
        %4117 = vmatpush.msra.mxu0 %v4096
        %4118 = vmatpush.msra.mxu0 %v4095
        %4119 = vmatpush.msra.mxu0 %v4094
        %4120 = vmatpush.msra.mxu0 %v4093
        %4121 = vmatpush.msra.mxu0 %v4092
        %4122 = vmatpush.msra.mxu0 %v4091
        %4123 = vmatmul.f32.gmra.mxu0 %v2946
        %v4124 = vpop.f32.mrf.mxu0
        %v4125 = vadd.f32 0.0, %v4124
        %4126 = vmatmul.f32.gmra.mxu0 %v2948
        %v4127 = vpop.f32.mrf.mxu0
        %v4128 = vadd.f32 0.0, %v4127
        %4129 = vmatmul.f32.gmra.mxu0 %v2950
        %v4130 = vpop.f32.mrf.mxu0
        %v4131 = vadd.f32 0.0, %v4130
        %4132 = vmatmul.f32.gmra.mxu0 %v2952
        %v4133 = vpop.f32.mrf.mxu0
        %v4134 = vadd.f32 0.0, %v4133
        %4135 = vmatmul.f32.gmra.mxu0 %v2954
        %v4136 = vpop.f32.mrf.mxu0
        %v4137 = vadd.f32 0.0, %v4136
        %4138 = vmatmul.f32.gmra.mxu0 %v2956
        %v4139 = vpop.f32.mrf.mxu0
        %v4140 = vadd.f32 0.0, %v4139
        %4141 = vmatmul.f32.gmra.mxu0 %v2958
        %v4142 = vpop.f32.mrf.mxu0
        %v4143 = vadd.f32 0.0, %v4142
        %4144 = vmatmul.f32.gmra.mxu0 %v2960
        %v4145 = vpop.f32.mrf.mxu0
        %v4146 = vadd.f32 0.0, %v4145
        %4147 = vdwg.mxu0
        %4148 = vmatpush.msra.mxu0 %v4106
        %4149 = vmatpush.msra.mxu0 %v4105
        %4150 = vmatpush.msra.mxu0 %v4104
        %4151 = vmatpush.msra.mxu0 %v4103
        %4152 = vmatpush.msra.mxu0 %v4102
        %4153 = vmatpush.msra.mxu0 %v4101
        %4154 = vmatpush.msra.mxu0 %v4100
        %4155 = vmatpush.msra.mxu0 %v4099
        %4156 = vmatpush.msra.mxu0 %v4098
        %4157 = vmatpush.msra.mxu0 %v4097
        %4158 = vmatpush.msra.mxu0 %v4096
        %4159 = vmatpush.msra.mxu0 %v4095
        %4160 = vmatpush.msra.mxu0 %v4094
        %4161 = vmatpush.msra.mxu0 %v4093
        %4162 = vmatpush.msra.mxu0 %v4092
        %4163 = vmatpush.msra.mxu0 %v4091
        %4164 = vmatmul.f32.gmra.mxu0 %v3026
        %v4165 = vpop.f32.mrf.mxu0
        %v4166 = vadd.f32 0.0, %v4165
        %4167 = vmatmul.f32.gmra.mxu0 %v3028
        %v4168 = vpop.f32.mrf.mxu0
        %v4169 = vadd.f32 0.0, %v4168
        %4170 = vmatmul.f32.gmra.mxu0 %v3030
        %v4171 = vpop.f32.mrf.mxu0
        %v4172 = vadd.f32 0.0, %v4171
        %4173 = vmatmul.f32.gmra.mxu0 %v3032
        %v4174 = vpop.f32.mrf.mxu0
        %v4175 = vadd.f32 0.0, %v4174
        %4176 = vmatmul.f32.gmra.mxu0 %v3034
        %v4177 = vpop.f32.mrf.mxu0
        %v4178 = vadd.f32 0.0, %v4177
        %4179 = vmatmul.f32.gmra.mxu0 %v3036
        %v4180 = vpop.f32.mrf.mxu0
        %v4181 = vadd.f32 0.0, %v4180
        %4182 = vmatmul.f32.gmra.mxu0 %v3038
        %v4183 = vpop.f32.mrf.mxu0
        %v4184 = vadd.f32 0.0, %v4183
        %4185 = vmatmul.f32.gmra.mxu0 %v3040
        %v4186 = vpop.f32.mrf.mxu0
        %v4187 = vadd.f32 0.0, %v4186
        %4188 = vdwg.mxu0
        %v4189 = vmax.f32 %v4125, %v4166
        %v4190 = vmax.f32 %v4128, %v4169
        %v4191 = vmax.f32 %v4131, %v4172
        %v4192 = vmax.f32 %v4134, %v4175
        %v4193 = vmax.f32 %v4137, %v4178
        %v4194 = vmax.f32 %v4140, %v4181
        %v4195 = vmax.f32 %v4143, %v4184
        %v4196 = vmax.f32 %v4146, %v4187
        %vm4197 = vcmask 130048
        %4198 = vst.msk [vmem:[#allocation4] sm:$0xff] %vm4197, 0.0
        %4199 = vst.msk [vmem:[#allocation4 + $0x8] sm:$0xff] %vm4197, 0.0
        %4200 = vst.msk [vmem:[#allocation4 + $0x10] sm:$0xff] %vm4197, 0.0
        %4201 = vst.msk [vmem:[#allocation4 + $0x18] sm:$0xff] %vm4197, 0.0
        %4202 = vst.msk [vmem:[#allocation4 + $0x20] sm:$0xff] %vm4197, 0.0
        %4203 = vst.msk [vmem:[#allocation4 + $0x28] sm:$0xff] %vm4197, 0.0
        %4204 = vst.msk [vmem:[#allocation4 + $0x30] sm:$0xff] %vm4197, 0.0
        %4205 = vst.msk [vmem:[#allocation4 + $0x38] sm:$0xff] %vm4197, 0.0
        %4206 = vst.msk [vmem:[#allocation4 + $0x40] sm:$0xff] %vm4197, 0.0
        %4207 = vst.msk [vmem:[#allocation4 + $0x48] sm:$0xff] %vm4197, 0.0
        %4208 = vst.msk [vmem:[#allocation4 + $0x8] sm:$0xff] %vm4197, %v4189
        %4209 = vst.msk [vmem:[#allocation4 + $0x10] sm:$0xff] %vm4197, %v4190
        %4210 = vst.msk [vmem:[#allocation4 + $0x18] sm:$0xff] %vm4197, %v4191
        %4211 = vst.msk [vmem:[#allocation4 + $0x20] sm:$0xff] %vm4197, %v4192
        %4212 = vst.msk [vmem:[#allocation4 + $0x28] sm:$0xff] %vm4197, %v4193
        %4213 = vst.msk [vmem:[#allocation4 + $0x30] sm:$0xff] %vm4197, %v4194
        %4214 = vst.msk [vmem:[#allocation4 + $0x38] sm:$0xff] %vm4197, %v4195
        %4215 = vst.msk [vmem:[#allocation4 + $0x40] sm:$0xff] %vm4197, %v4196
        %v4216 = vld [vmem:[#allocation4 + $0x6] sm:$0xff]
        %v4217 = vld [vmem:[#allocation4 + $0xe] sm:$0xff]
        %v4218 = vld [vmem:[#allocation4 + $0x16] sm:$0xff]
        %v4219 = vld [vmem:[#allocation4 + $0x1e] sm:$0xff]
        %v4220 = vld [vmem:[#allocation4 + $0x26] sm:$0xff]
        %v4221 = vld [vmem:[#allocation4 + $0x2e] sm:$0xff]
        %v4222 = vld [vmem:[#allocation4 + $0x36] sm:$0xff]
        %v4223 = vld [vmem:[#allocation4 + $0x3e] sm:$0xff]
        %v4224 = vld [vmem:[#allocation18] sm:$0xff]
        %v4225 = vld [vmem:[#allocation18 + $0x8] sm:$0xff]
        %v4226 = vld [vmem:[#allocation4 + $0x7] sm:$0xff]
        %v4227 = vld [vmem:[#allocation4 + $0xf] sm:$0xff]
        %v4228 = vld [vmem:[#allocation4 + $0x17] sm:$0xff]
        %v4229 = vld [vmem:[#allocation4 + $0x1f] sm:$0xff]
        %v4230 = vld [vmem:[#allocation4 + $0x27] sm:$0xff]
        %v4231 = vld [vmem:[#allocation4 + $0x2f] sm:$0xff]
        %v4232 = vld [vmem:[#allocation4 + $0x37] sm:$0xff]
        %v4233 = vld [vmem:[#allocation4 + $0x3f] sm:$0xff]
        %s4234 = scalar_lea.vmem [#allocation18], 16
        %v4235 = vld [vmem:[%s4234] sm:$0xff]
        %v4236 = vld [vmem:[%s4234 + $0x8] sm:$0xff]
        %v4238 = vsel %vm4197, %v4226, 0
        %v4241 = vsel %vm4197, %v4227, 0
        %v4244 = vsel %vm4197, %v4228, 0
        %v4247 = vsel %vm4197, %v4229, 0
        %v4250 = vsel %vm4197, %v4230, 0
        %v4253 = vsel %vm4197, %v4231, 0
        %v4256 = vsel %vm4197, %v4232, 0
        %v4259 = vsel %vm4197, %v4233, 0
        %4261 = vmatpush.msra.mxu0 0.0
        %4262 = vmatpush.msra.mxu0 0.0
        %4263 = vmatpush.msra.mxu0 0.0
        %4264 = vmatpush.msra.mxu0 0.0
        %4265 = vmatpush.msra.mxu0 0.0
        %4266 = vmatpush.msra.mxu0 0.0
        %4267 = vmatpush.msra.mxu0 0.0
        %4268 = vmatpush.msra.mxu0 0.0
        %4269 = vmatpush.msra.mxu0 0.0
        %4270 = vmatpush.msra.mxu0 0.0
        %4271 = vmatpush.msra.mxu0 0.0
        %4272 = vmatpush.msra.mxu0 0.0
        %4273 = vmatpush.msra.mxu0 0.0
        %4274 = vmatpush.msra.mxu0 0.0
        %4275 = vmatpush.msra.mxu0 %v4236
        %4276 = vmatpush.msra.mxu0 %v4235
        %4277 = vmatmul.f32.gmra.mxu0 %v4238
        %v4278 = vpop.f32.mrf.mxu0
        %v4279 = vadd.f32 0.0, %v4278
        %4280 = vmatmul.f32.gmra.mxu0 %v4241
        %v4281 = vpop.f32.mrf.mxu0
        %v4282 = vadd.f32 0.0, %v4281
        %4283 = vmatmul.f32.gmra.mxu0 %v4244
        %v4284 = vpop.f32.mrf.mxu0
        %v4285 = vadd.f32 0.0, %v4284
        %4286 = vmatmul.f32.gmra.mxu0 %v4247
        %v4287 = vpop.f32.mrf.mxu0
        %v4288 = vadd.f32 0.0, %v4287
        %4289 = vmatmul.f32.gmra.mxu0 %v4250
        %v4290 = vpop.f32.mrf.mxu0
        %v4291 = vadd.f32 0.0, %v4290
        %4292 = vmatmul.f32.gmra.mxu0 %v4253
        %v4293 = vpop.f32.mrf.mxu0
        %v4294 = vadd.f32 0.0, %v4293
        %4295 = vmatmul.f32.gmra.mxu0 %v4256
        %v4296 = vpop.f32.mrf.mxu0
        %v4297 = vadd.f32 0.0, %v4296
        %4298 = vmatmul.f32.gmra.mxu0 %v4259
        %v4299 = vpop.f32.mrf.mxu0
        %v4300 = vadd.f32 0.0, %v4299
        %4301 = vdwg.mxu0
        %v4303 = vsel %vm4197, %v4216, 0
        %v4306 = vsel %vm4197, %v4217, 0
        %v4309 = vsel %vm4197, %v4218, 0
        %v4312 = vsel %vm4197, %v4219, 0
        %v4315 = vsel %vm4197, %v4220, 0
        %v4318 = vsel %vm4197, %v4221, 0
        %v4321 = vsel %vm4197, %v4222, 0
        %v4324 = vsel %vm4197, %v4223, 0
        %4326 = vmatpush.msra.mxu0 0.0
        %4327 = vmatpush.msra.mxu0 0.0
        %4328 = vmatpush.msra.mxu0 0.0
        %4329 = vmatpush.msra.mxu0 0.0
        %4330 = vmatpush.msra.mxu0 0.0
        %4331 = vmatpush.msra.mxu0 0.0
        %4332 = vmatpush.msra.mxu0 0.0
        %4333 = vmatpush.msra.mxu0 0.0
        %4334 = vmatpush.msra.mxu0 0.0
        %4335 = vmatpush.msra.mxu0 0.0
        %4336 = vmatpush.msra.mxu0 0.0
        %4337 = vmatpush.msra.mxu0 0.0
        %4338 = vmatpush.msra.mxu0 0.0
        %4339 = vmatpush.msra.mxu0 0.0
        %4340 = vmatpush.msra.mxu0 %v4225
        %4341 = vmatpush.msra.mxu0 %v4224
        %4342 = vmatmul.f32.gmra.mxu0 %v4303
        %v4343 = vpop.f32.mrf.mxu0
        %v4344 = vadd.f32 %v4279, %v4343
        %4345 = vmatmul.f32.gmra.mxu0 %v4306
        %v4346 = vpop.f32.mrf.mxu0
        %v4347 = vadd.f32 %v4282, %v4346
        %4348 = vmatmul.f32.gmra.mxu0 %v4309
        %v4349 = vpop.f32.mrf.mxu0
        %v4350 = vadd.f32 %v4285, %v4349
        %4351 = vmatmul.f32.gmra.mxu0 %v4312
        %v4352 = vpop.f32.mrf.mxu0
        %v4353 = vadd.f32 %v4288, %v4352
        %4354 = vmatmul.f32.gmra.mxu0 %v4315
        %v4355 = vpop.f32.mrf.mxu0
        %v4356 = vadd.f32 %v4291, %v4355
        %4357 = vmatmul.f32.gmra.mxu0 %v4318
        %v4358 = vpop.f32.mrf.mxu0
        %v4359 = vadd.f32 %v4294, %v4358
        %4360 = vmatmul.f32.gmra.mxu0 %v4321
        %v4361 = vpop.f32.mrf.mxu0
        %v4362 = vadd.f32 %v4297, %v4361
        %4363 = vmatmul.f32.gmra.mxu0 %v4324
        %v4364 = vpop.f32.mrf.mxu0
        %v4365 = vadd.f32 %v4300, %v4364
        %4366 = vdwg.mxu0
        %v4367 = vld [vmem:[#allocation4 + $0x8] sm:$0xff]
        %v4368 = vld [vmem:[#allocation4 + $0x10] sm:$0xff]
        %v4369 = vld [vmem:[#allocation4 + $0x18] sm:$0xff]
        %v4370 = vld [vmem:[#allocation4 + $0x20] sm:$0xff]
        %v4371 = vld [vmem:[#allocation4 + $0x28] sm:$0xff]
        %v4372 = vld [vmem:[#allocation4 + $0x30] sm:$0xff]
        %v4373 = vld [vmem:[#allocation4 + $0x38] sm:$0xff]
        %v4374 = vld [vmem:[#allocation4 + $0x40] sm:$0xff]
        %s4375 = scalar_lea.vmem [#allocation18], 32
        %v4376 = vld [vmem:[%s4375] sm:$0xff]
        %v4377 = vld [vmem:[%s4375 + $0x8] sm:$0xff]
        %v4379 = vsel %vm4197, %v4367, 0
        %v4382 = vsel %vm4197, %v4368, 0
        %v4385 = vsel %vm4197, %v4369, 0
        %v4388 = vsel %vm4197, %v4370, 0
        %v4391 = vsel %vm4197, %v4371, 0
        %v4394 = vsel %vm4197, %v4372, 0
        %v4397 = vsel %vm4197, %v4373, 0
        %v4400 = vsel %vm4197, %v4374, 0
        %4402 = vmatpush.msra.mxu0 0.0
        %4403 = vmatpush.msra.mxu0 0.0
        %4404 = vmatpush.msra.mxu0 0.0
        %4405 = vmatpush.msra.mxu0 0.0
        %4406 = vmatpush.msra.mxu0 0.0
        %4407 = vmatpush.msra.mxu0 0.0
        %4408 = vmatpush.msra.mxu0 0.0
        %4409 = vmatpush.msra.mxu0 0.0
        %4410 = vmatpush.msra.mxu0 0.0
        %4411 = vmatpush.msra.mxu0 0.0
        %4412 = vmatpush.msra.mxu0 0.0
        %4413 = vmatpush.msra.mxu0 0.0
        %4414 = vmatpush.msra.mxu0 0.0
        %4415 = vmatpush.msra.mxu0 0.0
        %4416 = vmatpush.msra.mxu0 %v4377
        %4417 = vmatpush.msra.mxu0 %v4376
        %4418 = vmatmul.f32.gmra.mxu0 %v4379
        %v4419 = vpop.f32.mrf.mxu0
        %v4420 = vadd.f32 0.0, %v4419
        %4421 = vmatmul.f32.gmra.mxu0 %v4382
        %v4422 = vpop.f32.mrf.mxu0
        %v4423 = vadd.f32 0.0, %v4422
        %4424 = vmatmul.f32.gmra.mxu0 %v4385
        %v4425 = vpop.f32.mrf.mxu0
        %v4426 = vadd.f32 0.0, %v4425
        %4427 = vmatmul.f32.gmra.mxu0 %v4388
        %v4428 = vpop.f32.mrf.mxu0
        %v4429 = vadd.f32 0.0, %v4428
        %4430 = vmatmul.f32.gmra.mxu0 %v4391
        %v4431 = vpop.f32.mrf.mxu0
        %v4432 = vadd.f32 0.0, %v4431
        %4433 = vmatmul.f32.gmra.mxu0 %v4394
        %v4434 = vpop.f32.mrf.mxu0
        %v4435 = vadd.f32 0.0, %v4434
        %4436 = vmatmul.f32.gmra.mxu0 %v4397
        %v4437 = vpop.f32.mrf.mxu0
        %v4438 = vadd.f32 0.0, %v4437
        %4439 = vmatmul.f32.gmra.mxu0 %v4400
        %v4440 = vpop.f32.mrf.mxu0
        %v4441 = vadd.f32 0.0, %v4440
        %4442 = vdwg.mxu0
        %v4443 = vadd.f32 %v4344, %v4420
        %v4444 = vadd.f32 %v4347, %v4423
        %v4445 = vadd.f32 %v4350, %v4426
        %v4446 = vadd.f32 %v4353, %v4429
        %v4447 = vadd.f32 %v4356, %v4432
        %v4448 = vadd.f32 %v4359, %v4435
        %v4449 = vadd.f32 %v4362, %v4438
        %v4450 = vadd.f32 %v4365, %v4441
        %v4451 = vld [vmem:[#allocation4 + $0x9] sm:$0xff]
        %v4452 = vld [vmem:[#allocation4 + $0x11] sm:$0xff]
        %v4453 = vld [vmem:[#allocation4 + $0x19] sm:$0xff]
        %v4454 = vld [vmem:[#allocation4 + $0x21] sm:$0xff]
        %v4455 = vld [vmem:[#allocation4 + $0x29] sm:$0xff]
        %v4456 = vld [vmem:[#allocation4 + $0x31] sm:$0xff]
        %v4457 = vld [vmem:[#allocation4 + $0x39] sm:$0xff]
        %v4458 = vld [vmem:[#allocation4 + $0x41] sm:$0xff]
        %s4459 = scalar_lea.vmem [#allocation18], 48
        %v4460 = vld [vmem:[%s4459] sm:$0xff]
        %v4461 = vld [vmem:[%s4459 + $0x8] sm:$0xff]
        %v4463 = vsel %vm4197, %v4451, 0
        %v4466 = vsel %vm4197, %v4452, 0
        %v4469 = vsel %vm4197, %v4453, 0
        %v4472 = vsel %vm4197, %v4454, 0
        %v4475 = vsel %vm4197, %v4455, 0
        %v4478 = vsel %vm4197, %v4456, 0
        %v4481 = vsel %vm4197, %v4457, 0
        %v4484 = vsel %vm4197, %v4458, 0
        %4486 = vmatpush.msra.mxu0 0.0
        %4487 = vmatpush.msra.mxu0 0.0
        %4488 = vmatpush.msra.mxu0 0.0
        %4489 = vmatpush.msra.mxu0 0.0
        %4490 = vmatpush.msra.mxu0 0.0
        %4491 = vmatpush.msra.mxu0 0.0
        %4492 = vmatpush.msra.mxu0 0.0
        %4493 = vmatpush.msra.mxu0 0.0
        %4494 = vmatpush.msra.mxu0 0.0
        %4495 = vmatpush.msra.mxu0 0.0
        %4496 = vmatpush.msra.mxu0 0.0
        %4497 = vmatpush.msra.mxu0 0.0
        %4498 = vmatpush.msra.mxu0 0.0
        %4499 = vmatpush.msra.mxu0 0.0
        %4500 = vmatpush.msra.mxu0 %v4461
        %4501 = vmatpush.msra.mxu0 %v4460
        %4502 = vmatmul.f32.gmra.mxu0 %v4463
        %v4503 = vpop.f32.mrf.mxu0
        %v4504 = vadd.f32 0.0, %v4503
        %4505 = vmatmul.f32.gmra.mxu0 %v4466
        %v4506 = vpop.f32.mrf.mxu0
        %v4507 = vadd.f32 0.0, %v4506
        %4508 = vmatmul.f32.gmra.mxu0 %v4469
        %v4509 = vpop.f32.mrf.mxu0
        %v4510 = vadd.f32 0.0, %v4509
        %4511 = vmatmul.f32.gmra.mxu0 %v4472
        %v4512 = vpop.f32.mrf.mxu0
        %v4513 = vadd.f32 0.0, %v4512
        %4514 = vmatmul.f32.gmra.mxu0 %v4475
        %v4515 = vpop.f32.mrf.mxu0
        %v4516 = vadd.f32 0.0, %v4515
        %4517 = vmatmul.f32.gmra.mxu0 %v4478
        %v4518 = vpop.f32.mrf.mxu0
        %v4519 = vadd.f32 0.0, %v4518
        %4520 = vmatmul.f32.gmra.mxu0 %v4481
        %v4521 = vpop.f32.mrf.mxu0
        %v4522 = vadd.f32 0.0, %v4521
        %4523 = vmatmul.f32.gmra.mxu0 %v4484
        %v4524 = vpop.f32.mrf.mxu0
        %v4525 = vadd.f32 0.0, %v4524
        %4526 = vdwg.mxu0
        %v4527 = vadd.f32 %v4443, %v4504
        %v4528 = vadd.f32 %v4444, %v4507
        %v4529 = vadd.f32 %v4445, %v4510
        %v4530 = vadd.f32 %v4446, %v4513
        %v4531 = vadd.f32 %v4447, %v4516
        %v4532 = vadd.f32 %v4448, %v4519
        %v4533 = vadd.f32 %v4449, %v4522
        %v4534 = vadd.f32 %v4450, %v4525
        %v4535 = vld [vmem:[#allocation4 + $0xa] sm:$0xff]
        %v4536 = vld [vmem:[#allocation4 + $0x12] sm:$0xff]
        %v4537 = vld [vmem:[#allocation4 + $0x1a] sm:$0xff]
        %v4538 = vld [vmem:[#allocation4 + $0x22] sm:$0xff]
        %v4539 = vld [vmem:[#allocation4 + $0x2a] sm:$0xff]
        %v4540 = vld [vmem:[#allocation4 + $0x32] sm:$0xff]
        %v4541 = vld [vmem:[#allocation4 + $0x3a] sm:$0xff]
        %v4542 = vld [vmem:[#allocation4 + $0x42] sm:$0xff]
        %s4543 = scalar_lea.vmem [#allocation18], 64
        %v4544 = vld [vmem:[%s4543] sm:$0xff]
        %v4545 = vld [vmem:[%s4543 + $0x8] sm:$0xff]
        %v4547 = vsel %vm4197, %v4535, 0
        %v4550 = vsel %vm4197, %v4536, 0
        %v4553 = vsel %vm4197, %v4537, 0
        %v4556 = vsel %vm4197, %v4538, 0
        %v4559 = vsel %vm4197, %v4539, 0
        %v4562 = vsel %vm4197, %v4540, 0
        %v4565 = vsel %vm4197, %v4541, 0
        %v4568 = vsel %vm4197, %v4542, 0
        %4570 = vmatpush.msra.mxu0 0.0
        %4571 = vmatpush.msra.mxu0 0.0
        %4572 = vmatpush.msra.mxu0 0.0
        %4573 = vmatpush.msra.mxu0 0.0
        %4574 = vmatpush.msra.mxu0 0.0
        %4575 = vmatpush.msra.mxu0 0.0
        %4576 = vmatpush.msra.mxu0 0.0
        %4577 = vmatpush.msra.mxu0 0.0
        %4578 = vmatpush.msra.mxu0 0.0
        %4579 = vmatpush.msra.mxu0 0.0
        %4580 = vmatpush.msra.mxu0 0.0
        %4581 = vmatpush.msra.mxu0 0.0
        %4582 = vmatpush.msra.mxu0 0.0
        %4583 = vmatpush.msra.mxu0 0.0
        %4584 = vmatpush.msra.mxu0 %v4545
        %4585 = vmatpush.msra.mxu0 %v4544
        %4586 = vmatmul.f32.gmra.mxu0 %v4547
        %v4587 = vpop.f32.mrf.mxu0
        %v4588 = vadd.f32 0.0, %v4587
        %4589 = vmatmul.f32.gmra.mxu0 %v4550
        %v4590 = vpop.f32.mrf.mxu0
        %v4591 = vadd.f32 0.0, %v4590
        %4592 = vmatmul.f32.gmra.mxu0 %v4553
        %v4593 = vpop.f32.mrf.mxu0
        %v4594 = vadd.f32 0.0, %v4593
        %4595 = vmatmul.f32.gmra.mxu0 %v4556
        %v4596 = vpop.f32.mrf.mxu0
        %v4597 = vadd.f32 0.0, %v4596
        %4598 = vmatmul.f32.gmra.mxu0 %v4559
        %v4599 = vpop.f32.mrf.mxu0
        %v4600 = vadd.f32 0.0, %v4599
        %4601 = vmatmul.f32.gmra.mxu0 %v4562
        %v4602 = vpop.f32.mrf.mxu0
        %v4603 = vadd.f32 0.0, %v4602
        %4604 = vmatmul.f32.gmra.mxu0 %v4565
        %v4605 = vpop.f32.mrf.mxu0
        %v4606 = vadd.f32 0.0, %v4605
        %4607 = vmatmul.f32.gmra.mxu0 %v4568
        %v4608 = vpop.f32.mrf.mxu0
        %v4609 = vadd.f32 0.0, %v4608
        %4610 = vdwg.mxu0
        %v4611 = vadd.f32 %v4527, %v4588
        %v4612 = vadd.f32 %v4528, %v4591
        %v4613 = vadd.f32 %v4529, %v4594
        %v4614 = vadd.f32 %v4530, %v4597
        %v4615 = vadd.f32 %v4531, %v4600
        %v4616 = vadd.f32 %v4532, %v4603
        %v4617 = vadd.f32 %v4533, %v4606
        %v4618 = vadd.f32 %v4534, %v4609
        %v4619 = vld [vmem:[#allocation19] sm:$0x1]
        %v4621 = vperm.slane %v4619, 0
        %v4623 = vadd.f32 %v4611, %v4621
        %v4624 = vadd.f32 %v4612, %v4621
        %v4625 = vadd.f32 %v4613, %v4621
        %v4626 = vadd.f32 %v4614, %v4621
        %v4627 = vadd.f32 %v4615, %v4621
        %v4628 = vadd.f32 %v4616, %v4621
        %v4629 = vadd.f32 %v4617, %v4621
        %v4630 = vadd.f32 %v4618, %v4621
        %v4631 = vmax.f32 %v4623, 0.0
        %v4632 = vmax.f32 %v4624, 0.0
        %v4633 = vmax.f32 %v4625, 0.0
        %v4634 = vmax.f32 %v4626, 0.0
        %v4635 = vmax.f32 %v4627, 0.0
        %v4636 = vmax.f32 %v4628, 0.0
        %v4637 = vmax.f32 %v4629, 0.0
        %v4638 = vmax.f32 %v4630, 0.0
        %vm4639 = vcmask 523264
        %v4641 = vsel %vm4639, %v2946, 0
        %v4644 = vsel %vm4639, %v2948, 0
        %v4647 = vsel %vm4639, %v2950, 0
        %v4650 = vsel %vm4639, %v2952, 0
        %4652 = vmatpush.msra.mxu0 0.0
        %4653 = vmatpush.msra.mxu0 0.0
        %4654 = vmatpush.msra.mxu0 0.0
        %4655 = vmatpush.msra.mxu0 0.0
        %4656 = vmatpush.msra.mxu0 0.0
        %4657 = vmatpush.msra.mxu0 0.0
        %4658 = vmatpush.msra.mxu0 0.0
        %4659 = vmatpush.msra.mxu0 0.0
        %4660 = vmatpush.msra.mxu0 %v4638
        %4661 = vmatpush.msra.mxu0 %v4637
        %4662 = vmatpush.msra.mxu0 %v4636
        %4663 = vmatpush.msra.mxu0 %v4635
        %4664 = vmatpush.msra.mxu0 %v4634
        %4665 = vmatpush.msra.mxu0 %v4633
        %4666 = vmatpush.msra.mxu0 %v4632
        %4667 = vmatpush.msra.mxu0 %v4631
        %4668 = vmatmul.f32.gmra.mxu0 %v4641
        %v4669 = vpop.f32.mrf.mxu0
        %v4670 = vadd.f32 0.0, %v4669
        %4671 = vmatmul.f32.gmra.mxu0 %v4644
        %v4672 = vpop.f32.mrf.mxu0
        %v4673 = vadd.f32 0.0, %v4672
        %4674 = vmatmul.f32.gmra.mxu0 %v4647
        %v4675 = vpop.f32.mrf.mxu0
        %v4676 = vadd.f32 0.0, %v4675
        %4677 = vmatmul.f32.gmra.mxu0 %v4650
        %v4678 = vpop.f32.mrf.mxu0
        %v4679 = vadd.f32 0.0, %v4678
        %4680 = vdwg.mxu0
        %v4682 = vsel %vm4639, %v3026, 0
        %v4685 = vsel %vm4639, %v3028, 0
        %v4688 = vsel %vm4639, %v3030, 0
        %v4691 = vsel %vm4639, %v3032, 0
        %4693 = vmatpush.msra.mxu0 0.0
        %4694 = vmatpush.msra.mxu0 0.0
        %4695 = vmatpush.msra.mxu0 0.0
        %4696 = vmatpush.msra.mxu0 0.0
        %4697 = vmatpush.msra.mxu0 0.0
        %4698 = vmatpush.msra.mxu0 0.0
        %4699 = vmatpush.msra.mxu0 0.0
        %4700 = vmatpush.msra.mxu0 0.0
        %4701 = vmatpush.msra.mxu0 %v4638
        %4702 = vmatpush.msra.mxu0 %v4637
        %4703 = vmatpush.msra.mxu0 %v4636
        %4704 = vmatpush.msra.mxu0 %v4635
        %4705 = vmatpush.msra.mxu0 %v4634
        %4706 = vmatpush.msra.mxu0 %v4633
        %4707 = vmatpush.msra.mxu0 %v4632
        %4708 = vmatpush.msra.mxu0 %v4631
        %4709 = vmatmul.f32.gmra.mxu0 %v4682
        %v4710 = vpop.f32.mrf.mxu0
        %v4711 = vadd.f32 0.0, %v4710
        %4712 = vmatmul.f32.gmra.mxu0 %v4685
        %v4713 = vpop.f32.mrf.mxu0
        %v4714 = vadd.f32 0.0, %v4713
        %4715 = vmatmul.f32.gmra.mxu0 %v4688
        %v4716 = vpop.f32.mrf.mxu0
        %v4717 = vadd.f32 0.0, %v4716
        %4718 = vmatmul.f32.gmra.mxu0 %v4691
        %v4719 = vpop.f32.mrf.mxu0
        %v4720 = vadd.f32 0.0, %v4719
        %4721 = vdwg.mxu0
        %v4722 = vmax.f32 %v4670, %v4711
        %v4723 = vmax.f32 %v4673, %v4714
        %v4724 = vmax.f32 %v4676, %v4717
        %v4725 = vmax.f32 %v4679, %v4720
        %vm4726 = vcmask 261120
        %4727 = vst.msk [vmem:[#allocation5] sm:$0xff] %vm4726, 0.0
        %4728 = vst.msk [vmem:[#allocation5 + $0x8] sm:$0xff] %vm4726, 0.0
        %4729 = vst.msk [vmem:[#allocation5 + $0x10] sm:$0xff] %vm4726, 0.0
        %4730 = vst.msk [vmem:[#allocation5 + $0x18] sm:$0xff] %vm4726, 0.0
        %4731 = vst.msk [vmem:[#allocation5 + $0x20] sm:$0xff] %vm4726, 0.0
        %4732 = vst.msk [vmem:[#allocation5 + $0x28] sm:$0xff] %vm4726, 0.0
        %4733 = vst.msk [vmem:[#allocation5 + $0x8] sm:$0xff] %vm4726, %v4722
        %4734 = vst.msk [vmem:[#allocation5 + $0x10] sm:$0xff] %vm4726, %v4723
        %4735 = vst.msk [vmem:[#allocation5 + $0x18] sm:$0xff] %vm4726, %v4724
        %4736 = vst.msk [vmem:[#allocation5 + $0x20] sm:$0xff] %vm4726, %v4725
        %v4737 = vld [vmem:[#allocation5 + $0x6] sm:$0xff]
        %v4738 = vld [vmem:[#allocation5 + $0xe] sm:$0xff]
        %v4739 = vld [vmem:[#allocation5 + $0x16] sm:$0xff]
        %v4740 = vld [vmem:[#allocation5 + $0x1e] sm:$0xff]
        %v4741 = vld [vmem:[#allocation21] sm:$0xff]
        %v4742 = vld [vmem:[#allocation21 + $0x8] sm:$0xff]
        %v4743 = vld [vmem:[#allocation21 + $0x10] sm:$0xff]
        %v4744 = vld [vmem:[#allocation21 + $0x18] sm:$0xff]
        %v4745 = vld [vmem:[#allocation5 + $0x7] sm:$0xff]
        %v4746 = vld [vmem:[#allocation5 + $0xf] sm:$0xff]
        %v4747 = vld [vmem:[#allocation5 + $0x17] sm:$0xff]
        %v4748 = vld [vmem:[#allocation5 + $0x1f] sm:$0xff]
        %s4749 = scalar_lea.vmem [#allocation21], 32
        %v4750 = vld [vmem:[%s4749] sm:$0xff]
        %v4751 = vld [vmem:[%s4749 + $0x8] sm:$0xff]
        %v4752 = vld [vmem:[%s4749 + $0x10] sm:$0xff]
        %v4753 = vld [vmem:[%s4749 + $0x18] sm:$0xff]
        %v4755 = vsel %vm4726, %v4745, 0
        %v4758 = vsel %vm4726, %v4746, 0
        %v4761 = vsel %vm4726, %v4747, 0
        %v4764 = vsel %vm4726, %v4748, 0
        %4766 = vmatpush.msra.mxu0 0.0
        %4767 = vmatpush.msra.mxu0 0.0
        %4768 = vmatpush.msra.mxu0 0.0
        %4769 = vmatpush.msra.mxu0 0.0
        %4770 = vmatpush.msra.mxu0 0.0
        %4771 = vmatpush.msra.mxu0 0.0
        %4772 = vmatpush.msra.mxu0 0.0
        %4773 = vmatpush.msra.mxu0 0.0
        %4774 = vmatpush.msra.mxu0 0.0
        %4775 = vmatpush.msra.mxu0 0.0
        %4776 = vmatpush.msra.mxu0 0.0
        %4777 = vmatpush.msra.mxu0 0.0
        %4778 = vmatpush.msra.mxu0 %v4753
        %4779 = vmatpush.msra.mxu0 %v4752
        %4780 = vmatpush.msra.mxu0 %v4751
        %4781 = vmatpush.msra.mxu0 %v4750
        %4782 = vmatmul.f32.gmra.mxu0 %v4755
        %v4783 = vpop.f32.mrf.mxu0
        %v4784 = vadd.f32 0.0, %v4783
        %4785 = vmatmul.f32.gmra.mxu0 %v4758
        %v4786 = vpop.f32.mrf.mxu0
        %v4787 = vadd.f32 0.0, %v4786
        %4788 = vmatmul.f32.gmra.mxu0 %v4761
        %v4789 = vpop.f32.mrf.mxu0
        %v4790 = vadd.f32 0.0, %v4789
        %4791 = vmatmul.f32.gmra.mxu0 %v4764
        %v4792 = vpop.f32.mrf.mxu0
        %v4793 = vadd.f32 0.0, %v4792
        %4794 = vdwg.mxu0
        %v4796 = vsel %vm4726, %v4737, 0
        %v4799 = vsel %vm4726, %v4738, 0
        %v4802 = vsel %vm4726, %v4739, 0
        %v4805 = vsel %vm4726, %v4740, 0
        %4807 = vmatpush.msra.mxu0 0.0
        %4808 = vmatpush.msra.mxu0 0.0
        %4809 = vmatpush.msra.mxu0 0.0
        %4810 = vmatpush.msra.mxu0 0.0
        %4811 = vmatpush.msra.mxu0 0.0
        %4812 = vmatpush.msra.mxu0 0.0
        %4813 = vmatpush.msra.mxu0 0.0
        %4814 = vmatpush.msra.mxu0 0.0
        %4815 = vmatpush.msra.mxu0 0.0
        %4816 = vmatpush.msra.mxu0 0.0
        %4817 = vmatpush.msra.mxu0 0.0
        %4818 = vmatpush.msra.mxu0 0.0
        %4819 = vmatpush.msra.mxu0 %v4744
        %4820 = vmatpush.msra.mxu0 %v4743
        %4821 = vmatpush.msra.mxu0 %v4742
        %4822 = vmatpush.msra.mxu0 %v4741
        %4823 = vmatmul.f32.gmra.mxu0 %v4796
        %v4824 = vpop.f32.mrf.mxu0
        %v4825 = vadd.f32 %v4784, %v4824
        %4826 = vmatmul.f32.gmra.mxu0 %v4799
        %v4827 = vpop.f32.mrf.mxu0
        %v4828 = vadd.f32 %v4787, %v4827
        %4829 = vmatmul.f32.gmra.mxu0 %v4802
        %v4830 = vpop.f32.mrf.mxu0
        %v4831 = vadd.f32 %v4790, %v4830
        %4832 = vmatmul.f32.gmra.mxu0 %v4805
        %v4833 = vpop.f32.mrf.mxu0
        %v4834 = vadd.f32 %v4793, %v4833
        %4835 = vdwg.mxu0
        %v4836 = vld [vmem:[#allocation5 + $0x8] sm:$0xff]
        %v4837 = vld [vmem:[#allocation5 + $0x10] sm:$0xff]
        %v4838 = vld [vmem:[#allocation5 + $0x18] sm:$0xff]
        %v4839 = vld [vmem:[#allocation5 + $0x20] sm:$0xff]
        %s4840 = scalar_lea.vmem [#allocation21], 64
        %v4841 = vld [vmem:[%s4840] sm:$0xff]
        %v4842 = vld [vmem:[%s4840 + $0x8] sm:$0xff]
        %v4843 = vld [vmem:[%s4840 + $0x10] sm:$0xff]
        %v4844 = vld [vmem:[%s4840 + $0x18] sm:$0xff]
        %v4846 = vsel %vm4726, %v4836, 0
        %v4849 = vsel %vm4726, %v4837, 0
        %v4852 = vsel %vm4726, %v4838, 0
        %v4855 = vsel %vm4726, %v4839, 0
        %4857 = vmatpush.msra.mxu0 0.0
        %4858 = vmatpush.msra.mxu0 0.0
        %4859 = vmatpush.msra.mxu0 0.0
        %4860 = vmatpush.msra.mxu0 0.0
        %4861 = vmatpush.msra.mxu0 0.0
        %4862 = vmatpush.msra.mxu0 0.0
        %4863 = vmatpush.msra.mxu0 0.0
        %4864 = vmatpush.msra.mxu0 0.0
        %4865 = vmatpush.msra.mxu0 0.0
        %4866 = vmatpush.msra.mxu0 0.0
        %4867 = vmatpush.msra.mxu0 0.0
        %4868 = vmatpush.msra.mxu0 0.0
        %4869 = vmatpush.msra.mxu0 %v4844
        %4870 = vmatpush.msra.mxu0 %v4843
        %4871 = vmatpush.msra.mxu0 %v4842
        %4872 = vmatpush.msra.mxu0 %v4841
        %4873 = vmatmul.f32.gmra.mxu0 %v4846
        %v4874 = vpop.f32.mrf.mxu0
        %v4875 = vadd.f32 0.0, %v4874
        %4876 = vmatmul.f32.gmra.mxu0 %v4849
        %v4877 = vpop.f32.mrf.mxu0
        %v4878 = vadd.f32 0.0, %v4877
        %4879 = vmatmul.f32.gmra.mxu0 %v4852
        %v4880 = vpop.f32.mrf.mxu0
        %v4881 = vadd.f32 0.0, %v4880
        %4882 = vmatmul.f32.gmra.mxu0 %v4855
        %v4883 = vpop.f32.mrf.mxu0
        %v4884 = vadd.f32 0.0, %v4883
        %4885 = vdwg.mxu0
        %v4886 = vadd.f32 %v4825, %v4875
        %v4887 = vadd.f32 %v4828, %v4878
        %v4888 = vadd.f32 %v4831, %v4881
        %v4889 = vadd.f32 %v4834, %v4884
        %v4890 = vld [vmem:[#allocation5 + $0x9] sm:$0xff]
        %v4891 = vld [vmem:[#allocation5 + $0x11] sm:$0xff]
        %v4892 = vld [vmem:[#allocation5 + $0x19] sm:$0xff]
        %v4893 = vld [vmem:[#allocation5 + $0x21] sm:$0xff]
        %s4894 = scalar_lea.vmem [#allocation21], 96
        %v4895 = vld [vmem:[%s4894] sm:$0xff]
        %v4896 = vld [vmem:[%s4894 + $0x8] sm:$0xff]
        %v4897 = vld [vmem:[%s4894 + $0x10] sm:$0xff]
        %v4898 = vld [vmem:[%s4894 + $0x18] sm:$0xff]
        %v4900 = vsel %vm4726, %v4890, 0
        %v4903 = vsel %vm4726, %v4891, 0
        %v4906 = vsel %vm4726, %v4892, 0
        %v4909 = vsel %vm4726, %v4893, 0
        %4911 = vmatpush.msra.mxu0 0.0
        %4912 = vmatpush.msra.mxu0 0.0
        %4913 = vmatpush.msra.mxu0 0.0
        %4914 = vmatpush.msra.mxu0 0.0
        %4915 = vmatpush.msra.mxu0 0.0
        %4916 = vmatpush.msra.mxu0 0.0
        %4917 = vmatpush.msra.mxu0 0.0
        %4918 = vmatpush.msra.mxu0 0.0
        %4919 = vmatpush.msra.mxu0 0.0
        %4920 = vmatpush.msra.mxu0 0.0
        %4921 = vmatpush.msra.mxu0 0.0
        %4922 = vmatpush.msra.mxu0 0.0
        %4923 = vmatpush.msra.mxu0 %v4898
        %4924 = vmatpush.msra.mxu0 %v4897
        %4925 = vmatpush.msra.mxu0 %v4896
        %4926 = vmatpush.msra.mxu0 %v4895
        %4927 = vmatmul.f32.gmra.mxu0 %v4900
        %v4928 = vpop.f32.mrf.mxu0
        %v4929 = vadd.f32 0.0, %v4928
        %4930 = vmatmul.f32.gmra.mxu0 %v4903
        %v4931 = vpop.f32.mrf.mxu0
        %v4932 = vadd.f32 0.0, %v4931
        %4933 = vmatmul.f32.gmra.mxu0 %v4906
        %v4934 = vpop.f32.mrf.mxu0
        %v4935 = vadd.f32 0.0, %v4934
        %4936 = vmatmul.f32.gmra.mxu0 %v4909
        %v4937 = vpop.f32.mrf.mxu0
        %v4938 = vadd.f32 0.0, %v4937
        %4939 = vdwg.mxu0
        %v4940 = vadd.f32 %v4886, %v4929
        %v4941 = vadd.f32 %v4887, %v4932
        %v4942 = vadd.f32 %v4888, %v4935
        %v4943 = vadd.f32 %v4889, %v4938
        %v4944 = vld [vmem:[#allocation5 + $0xa] sm:$0xff]
        %v4945 = vld [vmem:[#allocation5 + $0x12] sm:$0xff]
        %v4946 = vld [vmem:[#allocation5 + $0x1a] sm:$0xff]
        %v4947 = vld [vmem:[#allocation5 + $0x22] sm:$0xff]
        %s4948 = scalar_lea.vmem [#allocation21], 128
        %v4949 = vld [vmem:[%s4948] sm:$0xff]
        %v4950 = vld [vmem:[%s4948 + $0x8] sm:$0xff]
        %v4951 = vld [vmem:[%s4948 + $0x10] sm:$0xff]
        %v4952 = vld [vmem:[%s4948 + $0x18] sm:$0xff]
        %v4954 = vsel %vm4726, %v4944, 0
        %v4957 = vsel %vm4726, %v4945, 0
        %v4960 = vsel %vm4726, %v4946, 0
        %v4963 = vsel %vm4726, %v4947, 0
        %4965 = vmatpush.msra.mxu0 0.0
        %4966 = vmatpush.msra.mxu0 0.0
        %4967 = vmatpush.msra.mxu0 0.0
        %4968 = vmatpush.msra.mxu0 0.0
        %4969 = vmatpush.msra.mxu0 0.0
        %4970 = vmatpush.msra.mxu0 0.0
        %4971 = vmatpush.msra.mxu0 0.0
        %4972 = vmatpush.msra.mxu0 0.0
        %4973 = vmatpush.msra.mxu0 0.0
        %4974 = vmatpush.msra.mxu0 0.0
        %4975 = vmatpush.msra.mxu0 0.0
        %4976 = vmatpush.msra.mxu0 0.0
        %4977 = vmatpush.msra.mxu0 %v4952
        %4978 = vmatpush.msra.mxu0 %v4951
        %4979 = vmatpush.msra.mxu0 %v4950
        %4980 = vmatpush.msra.mxu0 %v4949
        %4981 = vmatmul.f32.gmra.mxu0 %v4954
        %v4982 = vpop.f32.mrf.mxu0
        %v4983 = vadd.f32 0.0, %v4982
        %4984 = vmatmul.f32.gmra.mxu0 %v4957
        %v4985 = vpop.f32.mrf.mxu0
        %v4986 = vadd.f32 0.0, %v4985
        %4987 = vmatmul.f32.gmra.mxu0 %v4960
        %v4988 = vpop.f32.mrf.mxu0
        %v4989 = vadd.f32 0.0, %v4988
        %4990 = vmatmul.f32.gmra.mxu0 %v4963
        %v4991 = vpop.f32.mrf.mxu0
        %v4992 = vadd.f32 0.0, %v4991
        %4993 = vdwg.mxu0
        %v4994 = vadd.f32 %v4940, %v4983
        %v4995 = vadd.f32 %v4941, %v4986
        %v4996 = vadd.f32 %v4942, %v4989
        %v4997 = vadd.f32 %v4943, %v4992
        %v4998 = vld [vmem:[#allocation22] sm:$0x1]
        %v5000 = vperm.slane %v4998, 0
        %v5002 = vadd.f32 %v4994, %v5000
        %v5003 = vadd.f32 %v4995, %v5000
        %v5004 = vadd.f32 %v4996, %v5000
        %v5005 = vadd.f32 %v4997, %v5000
        %v5006 = vmax.f32 %v5002, 0.0
        %v5007 = vmax.f32 %v5003, 0.0
        %v5008 = vmax.f32 %v5004, 0.0
        %v5009 = vmax.f32 %v5005, 0.0
        %v5010 = vsel %vm4726, %v2946, 0
        %v5012 = vsel %vm4726, %v2948, 0
        %5014 = vmatpush.msra.mxu0 0.0
        %5015 = vmatpush.msra.mxu0 0.0
        %5016 = vmatpush.msra.mxu0 0.0
        %5017 = vmatpush.msra.mxu0 0.0
        %5018 = vmatpush.msra.mxu0 0.0
        %5019 = vmatpush.msra.mxu0 0.0
        %5020 = vmatpush.msra.mxu0 0.0
        %5021 = vmatpush.msra.mxu0 0.0
        %5022 = vmatpush.msra.mxu0 0.0
        %5023 = vmatpush.msra.mxu0 0.0
        %5024 = vmatpush.msra.mxu0 0.0
        %5025 = vmatpush.msra.mxu0 0.0
        %5026 = vmatpush.msra.mxu0 %v5009
        %5027 = vmatpush.msra.mxu0 %v5008
        %5028 = vmatpush.msra.mxu0 %v5007
        %5029 = vmatpush.msra.mxu0 %v5006
        %5030 = vmatmul.f32.gmra.mxu0 %v5010
        %v5031 = vpop.f32.mrf.mxu0
        %v5032 = vadd.f32 0.0, %v5031
        %5033 = vmatmul.f32.gmra.mxu0 %v5012
        %v5034 = vpop.f32.mrf.mxu0
        %v5035 = vadd.f32 0.0, %v5034
        %5036 = vdwg.mxu0
        %v5037 = vsel %vm4726, %v3026, 0
        %v5039 = vsel %vm4726, %v3028, 0
        %5041 = vmatpush.msra.mxu0 0.0
        %5042 = vmatpush.msra.mxu0 0.0
        %5043 = vmatpush.msra.mxu0 0.0
        %5044 = vmatpush.msra.mxu0 0.0
        %5045 = vmatpush.msra.mxu0 0.0
        %5046 = vmatpush.msra.mxu0 0.0
        %5047 = vmatpush.msra.mxu0 0.0
        %5048 = vmatpush.msra.mxu0 0.0
        %5049 = vmatpush.msra.mxu0 0.0
        %5050 = vmatpush.msra.mxu0 0.0
        %5051 = vmatpush.msra.mxu0 0.0
        %5052 = vmatpush.msra.mxu0 0.0
        %5053 = vmatpush.msra.mxu0 %v5009
        %5054 = vmatpush.msra.mxu0 %v5008
        %5055 = vmatpush.msra.mxu0 %v5007
        %5056 = vmatpush.msra.mxu0 %v5006
        %5057 = vmatmul.f32.gmra.mxu0 %v5037
        %v5058 = vpop.f32.mrf.mxu0
        %v5059 = vadd.f32 0.0, %v5058
        %5060 = vmatmul.f32.gmra.mxu0 %v5039
        %v5061 = vpop.f32.mrf.mxu0
        %v5062 = vadd.f32 0.0, %v5061
        %5063 = vdwg.mxu0
        %v5064 = vmax.f32 %v5032, %v5059
        %v5065 = vmax.f32 %v5035, %v5062
        %5066 = vst.msk [vmem:[#allocation6] sm:$0xff] %vm4639, 0.0
        %5067 = vst.msk [vmem:[#allocation6 + $0x8] sm:$0xff] %vm4639, 0.0
        %5068 = vst.msk [vmem:[#allocation6 + $0x10] sm:$0xff] %vm4639, 0.0
        %5069 = vst.msk [vmem:[#allocation6 + $0x18] sm:$0xff] %vm4639, 0.0
        %5070 = vst.msk [vmem:[#allocation6 + $0x8] sm:$0xff] %vm4639, %v5064
        %5071 = vst.msk [vmem:[#allocation6 + $0x10] sm:$0xff] %vm4639, %v5065
        %v5072 = vld [vmem:[#allocation6 + $0x6] sm:$0xff]
        %v5073 = vld [vmem:[#allocation6 + $0xe] sm:$0xff]
        %v5074 = vld [vmem:[#allocation24] sm:$0xff]
        %v5075 = vld [vmem:[#allocation24 + $0x8] sm:$0xff]
        %v5076 = vld [vmem:[#allocation24 + $0x10] sm:$0xff]
        %v5077 = vld [vmem:[#allocation24 + $0x18] sm:$0xff]
        %v5078 = vld [vmem:[#allocation24 + $0x20] sm:$0xff]
        %v5079 = vld [vmem:[#allocation24 + $0x28] sm:$0xff]
        %v5080 = vld [vmem:[#allocation24 + $0x30] sm:$0xff]
        %v5081 = vld [vmem:[#allocation24 + $0x38] sm:$0xff]
        %v5082 = vld [vmem:[#allocation6 + $0x7] sm:$0xff]
        %v5083 = vld [vmem:[#allocation6 + $0xf] sm:$0xff]
        %s5084 = scalar_lea.vmem [#allocation24], 64
        %v5085 = vld [vmem:[%s5084] sm:$0xff]
        %v5086 = vld [vmem:[%s5084 + $0x8] sm:$0xff]
        %v5087 = vld [vmem:[%s5084 + $0x10] sm:$0xff]
        %v5088 = vld [vmem:[%s5084 + $0x18] sm:$0xff]
        %v5089 = vld [vmem:[%s5084 + $0x20] sm:$0xff]
        %v5090 = vld [vmem:[%s5084 + $0x28] sm:$0xff]
        %v5091 = vld [vmem:[%s5084 + $0x30] sm:$0xff]
        %v5092 = vld [vmem:[%s5084 + $0x38] sm:$0xff]
        %v5094 = vsel %vm4639, %v5082, 0
        %v5097 = vsel %vm4639, %v5083, 0
        %5099 = vmatpush.msra.mxu0 0.0
        %5100 = vmatpush.msra.mxu0 0.0
        %5101 = vmatpush.msra.mxu0 0.0
        %5102 = vmatpush.msra.mxu0 0.0
        %5103 = vmatpush.msra.mxu0 0.0
        %5104 = vmatpush.msra.mxu0 0.0
        %5105 = vmatpush.msra.mxu0 0.0
        %5106 = vmatpush.msra.mxu0 0.0
        %5107 = vmatpush.msra.mxu0 %v5092
        %5108 = vmatpush.msra.mxu0 %v5091
        %5109 = vmatpush.msra.mxu0 %v5090
        %5110 = vmatpush.msra.mxu0 %v5089
        %5111 = vmatpush.msra.mxu0 %v5088
        %5112 = vmatpush.msra.mxu0 %v5087
        %5113 = vmatpush.msra.mxu0 %v5086
        %5114 = vmatpush.msra.mxu0 %v5085
        %5115 = vmatmul.f32.gmra.mxu0 %v5094
        %v5116 = vpop.f32.mrf.mxu0
        %v5117 = vadd.f32 0.0, %v5116
        %5118 = vmatmul.f32.gmra.mxu0 %v5097
        %v5119 = vpop.f32.mrf.mxu0
        %v5120 = vadd.f32 0.0, %v5119
        %5121 = vdwg.mxu0
        %v5123 = vsel %vm4639, %v5072, 0
        %v5126 = vsel %vm4639, %v5073, 0
        %5128 = vmatpush.msra.mxu0 0.0
        %5129 = vmatpush.msra.mxu0 0.0
        %5130 = vmatpush.msra.mxu0 0.0
        %5131 = vmatpush.msra.mxu0 0.0
        %5132 = vmatpush.msra.mxu0 0.0
        %5133 = vmatpush.msra.mxu0 0.0
        %5134 = vmatpush.msra.mxu0 0.0
        %5135 = vmatpush.msra.mxu0 0.0
        %5136 = vmatpush.msra.mxu0 %v5081
        %5137 = vmatpush.msra.mxu0 %v5080
        %5138 = vmatpush.msra.mxu0 %v5079
        %5139 = vmatpush.msra.mxu0 %v5078
        %5140 = vmatpush.msra.mxu0 %v5077
        %5141 = vmatpush.msra.mxu0 %v5076
        %5142 = vmatpush.msra.mxu0 %v5075
        %5143 = vmatpush.msra.mxu0 %v5074
        %5144 = vmatmul.f32.gmra.mxu0 %v5123
        %v5145 = vpop.f32.mrf.mxu0
        %v5146 = vadd.f32 %v5117, %v5145
        %5147 = vmatmul.f32.gmra.mxu0 %v5126
        %v5148 = vpop.f32.mrf.mxu0
        %v5149 = vadd.f32 %v5120, %v5148
        %5150 = vdwg.mxu0
        %v5151 = vld [vmem:[#allocation6 + $0x8] sm:$0xff]
        %v5152 = vld [vmem:[#allocation6 + $0x10] sm:$0xff]
        %s5153 = scalar_lea.vmem [#allocation24], 128
        %v5154 = vld [vmem:[%s5153] sm:$0xff]
        %v5155 = vld [vmem:[%s5153 + $0x8] sm:$0xff]
        %v5156 = vld [vmem:[%s5153 + $0x10] sm:$0xff]
        %v5157 = vld [vmem:[%s5153 + $0x18] sm:$0xff]
        %v5158 = vld [vmem:[%s5153 + $0x20] sm:$0xff]
        %v5159 = vld [vmem:[%s5153 + $0x28] sm:$0xff]
        %v5160 = vld [vmem:[%s5153 + $0x30] sm:$0xff]
        %v5161 = vld [vmem:[%s5153 + $0x38] sm:$0xff]
        %v5163 = vsel %vm4639, %v5151, 0
        %v5166 = vsel %vm4639, %v5152, 0
        %5168 = vmatpush.msra.mxu0 0.0
        %5169 = vmatpush.msra.mxu0 0.0
        %5170 = vmatpush.msra.mxu0 0.0
        %5171 = vmatpush.msra.mxu0 0.0
        %5172 = vmatpush.msra.mxu0 0.0
        %5173 = vmatpush.msra.mxu0 0.0
        %5174 = vmatpush.msra.mxu0 0.0
        %5175 = vmatpush.msra.mxu0 0.0
        %5176 = vmatpush.msra.mxu0 %v5161
        %5177 = vmatpush.msra.mxu0 %v5160
        %5178 = vmatpush.msra.mxu0 %v5159
        %5179 = vmatpush.msra.mxu0 %v5158
        %5180 = vmatpush.msra.mxu0 %v5157
        %5181 = vmatpush.msra.mxu0 %v5156
        %5182 = vmatpush.msra.mxu0 %v5155
        %5183 = vmatpush.msra.mxu0 %v5154
        %5184 = vmatmul.f32.gmra.mxu0 %v5163
        %v5185 = vpop.f32.mrf.mxu0
        %v5186 = vadd.f32 0.0, %v5185
        %5187 = vmatmul.f32.gmra.mxu0 %v5166
        %v5188 = vpop.f32.mrf.mxu0
        %v5189 = vadd.f32 0.0, %v5188
        %5190 = vdwg.mxu0
        %v5191 = vadd.f32 %v5146, %v5186
        %v5192 = vadd.f32 %v5149, %v5189
        %v5193 = vld [vmem:[#allocation6 + $0x9] sm:$0xff]
        %v5194 = vld [vmem:[#allocation6 + $0x11] sm:$0xff]
        %s5195 = scalar_lea.vmem [#allocation24], 192
        %v5196 = vld [vmem:[%s5195] sm:$0xff]
        %v5197 = vld [vmem:[%s5195 + $0x8] sm:$0xff]
        %v5198 = vld [vmem:[%s5195 + $0x10] sm:$0xff]
        %v5199 = vld [vmem:[%s5195 + $0x18] sm:$0xff]
        %v5200 = vld [vmem:[%s5195 + $0x20] sm:$0xff]
        %v5201 = vld [vmem:[%s5195 + $0x28] sm:$0xff]
        %v5202 = vld [vmem:[%s5195 + $0x30] sm:$0xff]
        %v5203 = vld [vmem:[%s5195 + $0x38] sm:$0xff]
        %v5205 = vsel %vm4639, %v5193, 0
        %v5208 = vsel %vm4639, %v5194, 0
        %5210 = vmatpush.msra.mxu0 0.0
        %5211 = vmatpush.msra.mxu0 0.0
        %5212 = vmatpush.msra.mxu0 0.0
        %5213 = vmatpush.msra.mxu0 0.0
        %5214 = vmatpush.msra.mxu0 0.0
        %5215 = vmatpush.msra.mxu0 0.0
        %5216 = vmatpush.msra.mxu0 0.0
        %5217 = vmatpush.msra.mxu0 0.0
        %5218 = vmatpush.msra.mxu0 %v5203
        %5219 = vmatpush.msra.mxu0 %v5202
        %5220 = vmatpush.msra.mxu0 %v5201
        %5221 = vmatpush.msra.mxu0 %v5200
        %5222 = vmatpush.msra.mxu0 %v5199
        %5223 = vmatpush.msra.mxu0 %v5198
        %5224 = vmatpush.msra.mxu0 %v5197
        %5225 = vmatpush.msra.mxu0 %v5196
        %5226 = vmatmul.f32.gmra.mxu0 %v5205
        %v5227 = vpop.f32.mrf.mxu0
        %v5228 = vadd.f32 0.0, %v5227
        %5229 = vmatmul.f32.gmra.mxu0 %v5208
        %v5230 = vpop.f32.mrf.mxu0
        %v5231 = vadd.f32 0.0, %v5230
        %5232 = vdwg.mxu0
        %v5233 = vadd.f32 %v5191, %v5228
        %v5234 = vadd.f32 %v5192, %v5231
        %v5235 = vld [vmem:[#allocation6 + $0xa] sm:$0xff]
        %v5236 = vld [vmem:[#allocation6 + $0x12] sm:$0xff]
        %s5237 = scalar_lea.vmem [#allocation24], 256
        %v5238 = vld [vmem:[%s5237] sm:$0xff]
        %v5239 = vld [vmem:[%s5237 + $0x8] sm:$0xff]
        %v5240 = vld [vmem:[%s5237 + $0x10] sm:$0xff]
        %v5241 = vld [vmem:[%s5237 + $0x18] sm:$0xff]
        %v5242 = vld [vmem:[%s5237 + $0x20] sm:$0xff]
        %v5243 = vld [vmem:[%s5237 + $0x28] sm:$0xff]
        %v5244 = vld [vmem:[%s5237 + $0x30] sm:$0xff]
        %v5245 = vld [vmem:[%s5237 + $0x38] sm:$0xff]
        %v5247 = vsel %vm4639, %v5235, 0
        %v5250 = vsel %vm4639, %v5236, 0
        %5252 = vmatpush.msra.mxu0 0.0
        %5253 = vmatpush.msra.mxu0 0.0
        %5254 = vmatpush.msra.mxu0 0.0
        %5255 = vmatpush.msra.mxu0 0.0
        %5256 = vmatpush.msra.mxu0 0.0
        %5257 = vmatpush.msra.mxu0 0.0
        %5258 = vmatpush.msra.mxu0 0.0
        %5259 = vmatpush.msra.mxu0 0.0
        %5260 = vmatpush.msra.mxu0 %v5245
        %5261 = vmatpush.msra.mxu0 %v5244
        %5262 = vmatpush.msra.mxu0 %v5243
        %5263 = vmatpush.msra.mxu0 %v5242
        %5264 = vmatpush.msra.mxu0 %v5241
        %5265 = vmatpush.msra.mxu0 %v5240
        %5266 = vmatpush.msra.mxu0 %v5239
        %5267 = vmatpush.msra.mxu0 %v5238
        %5268 = vmatmul.f32.gmra.mxu0 %v5247
        %v5269 = vpop.f32.mrf.mxu0
        %v5270 = vadd.f32 0.0, %v5269
        %5271 = vmatmul.f32.gmra.mxu0 %v5250
        %v5272 = vpop.f32.mrf.mxu0
        %v5273 = vadd.f32 0.0, %v5272
        %5274 = vdwg.mxu0
        %v5275 = vadd.f32 %v5233, %v5270
        %v5276 = vadd.f32 %v5234, %v5273
        %v5277 = vld [vmem:[#allocation25] sm:$0x1]
        %v5279 = vperm.slane %v5277, 0
        %v5281 = vadd.f32 %v5275, %v5279
        %v5282 = vadd.f32 %v5276, %v5279
        %v5283 = vmax.f32 %v5281, 0.0
        %v5284 = vmax.f32 %v5282, 0.0
        %v5285 = vsel %vm4197, %v2946, 0
        %5287 = vmatpush.msra.mxu0 0.0
        %5288 = vmatpush.msra.mxu0 0.0
        %5289 = vmatpush.msra.mxu0 0.0
        %5290 = vmatpush.msra.mxu0 0.0
        %5291 = vmatpush.msra.mxu0 0.0
        %5292 = vmatpush.msra.mxu0 0.0
        %5293 = vmatpush.msra.mxu0 0.0
        %5294 = vmatpush.msra.mxu0 0.0
        %5295 = vmatpush.msra.mxu0 0.0
        %5296 = vmatpush.msra.mxu0 0.0
        %5297 = vmatpush.msra.mxu0 0.0
        %5298 = vmatpush.msra.mxu0 0.0
        %5299 = vmatpush.msra.mxu0 0.0
        %5300 = vmatpush.msra.mxu0 0.0
        %5301 = vmatpush.msra.mxu0 %v5284
        %5302 = vmatpush.msra.mxu0 %v5283
        %5303 = vmatmul.f32.gmra.mxu0 %v5285
        %v5304 = vpop.f32.mrf.mxu0
        %v5305 = vadd.f32 0.0, %v5304
        %5306 = vdwg.mxu0
        %v5307 = vsel %vm4197, %v3026, 0
        %5309 = vmatpush.msra.mxu0 0.0
        %5310 = vmatpush.msra.mxu0 0.0
        %5311 = vmatpush.msra.mxu0 0.0
        %5312 = vmatpush.msra.mxu0 0.0
        %5313 = vmatpush.msra.mxu0 0.0
        %5314 = vmatpush.msra.mxu0 0.0
        %5315 = vmatpush.msra.mxu0 0.0
        %5316 = vmatpush.msra.mxu0 0.0
        %5317 = vmatpush.msra.mxu0 0.0
        %5318 = vmatpush.msra.mxu0 0.0
        %5319 = vmatpush.msra.mxu0 0.0
        %5320 = vmatpush.msra.mxu0 0.0
        %5321 = vmatpush.msra.mxu0 0.0
        %5322 = vmatpush.msra.mxu0 0.0
        %5323 = vmatpush.msra.mxu0 %v5284
        %5324 = vmatpush.msra.mxu0 %v5283
        %5325 = vmatmul.f32.gmra.mxu0 %v5307
        %v5326 = vpop.f32.mrf.mxu0
        %v5327 = vadd.f32 0.0, %v5326
        %5328 = vdwg.mxu0
        %v5329 = vmax.f32 %v5305, %v5327
        %5330 = vst.msk [vmem:[#allocation7] sm:$0xff] %vm4639, 0.0
        %5331 = vst.msk [vmem:[#allocation7 + $0x8] sm:$0xff] %vm4639, 0.0
        %5332 = vst.msk [vmem:[#allocation7 + $0x10] sm:$0xff] %vm4639, 0.0
        %5333 = vst.msk [vmem:[#allocation7 + $0x8] sm:$0xff] %vm4639, %v5329
        %v5334 = vld [vmem:[#allocation7 + $0x6] sm:$0xff]
        %v5335 = vld [vmem:[#allocation27] sm:$0xff]
        %v5336 = vld [vmem:[#allocation27 + $0x8] sm:$0xff]
        %v5337 = vld [vmem:[#allocation27 + $0x10] sm:$0xff]
        %v5338 = vld [vmem:[#allocation27 + $0x18] sm:$0xff]
        %v5339 = vld [vmem:[#allocation27 + $0x20] sm:$0xff]
        %v5340 = vld [vmem:[#allocation27 + $0x28] sm:$0xff]
        %v5341 = vld [vmem:[#allocation27 + $0x30] sm:$0xff]
        %v5342 = vld [vmem:[#allocation27 + $0x38] sm:$0xff]
        %v5343 = vld [vmem:[#allocation7 + $0x7] sm:$0xff]
        %s5344 = scalar_lea.vmem [#allocation27], 64
        %v5345 = vld [vmem:[%s5344] sm:$0xff]
        %v5346 = vld [vmem:[%s5344 + $0x8] sm:$0xff]
        %v5347 = vld [vmem:[%s5344 + $0x10] sm:$0xff]
        %v5348 = vld [vmem:[%s5344 + $0x18] sm:$0xff]
        %v5349 = vld [vmem:[%s5344 + $0x20] sm:$0xff]
        %v5350 = vld [vmem:[%s5344 + $0x28] sm:$0xff]
        %v5351 = vld [vmem:[%s5344 + $0x30] sm:$0xff]
        %v5352 = vld [vmem:[%s5344 + $0x38] sm:$0xff]
        %v5354 = vsel %vm4639, %v5343, 0
        %5356 = vmatpush.msra.mxu0 0.0
        %5357 = vmatpush.msra.mxu0 0.0
        %5358 = vmatpush.msra.mxu0 0.0
        %5359 = vmatpush.msra.mxu0 0.0
        %5360 = vmatpush.msra.mxu0 0.0
        %5361 = vmatpush.msra.mxu0 0.0
        %5362 = vmatpush.msra.mxu0 0.0
        %5363 = vmatpush.msra.mxu0 0.0
        %5364 = vmatpush.msra.mxu0 %v5352
        %5365 = vmatpush.msra.mxu0 %v5351
        %5366 = vmatpush.msra.mxu0 %v5350
        %5367 = vmatpush.msra.mxu0 %v5349
        %5368 = vmatpush.msra.mxu0 %v5348
        %5369 = vmatpush.msra.mxu0 %v5347
        %5370 = vmatpush.msra.mxu0 %v5346
        %5371 = vmatpush.msra.mxu0 %v5345
        %5372 = vmatmul.f32.gmra.mxu0 %v5354
        %v5373 = vpop.f32.mrf.mxu0
        %v5374 = vadd.f32 0.0, %v5373
        %5375 = vdwg.mxu0
        %v5377 = vsel %vm4639, %v5334, 0
        %5379 = vmatpush.msra.mxu0 0.0
        %5380 = vmatpush.msra.mxu0 0.0
        %5381 = vmatpush.msra.mxu0 0.0
        %5382 = vmatpush.msra.mxu0 0.0
        %5383 = vmatpush.msra.mxu0 0.0
        %5384 = vmatpush.msra.mxu0 0.0
        %5385 = vmatpush.msra.mxu0 0.0
        %5386 = vmatpush.msra.mxu0 0.0
        %5387 = vmatpush.msra.mxu0 %v5342
        %5388 = vmatpush.msra.mxu0 %v5341
        %5389 = vmatpush.msra.mxu0 %v5340
        %5390 = vmatpush.msra.mxu0 %v5339
        %5391 = vmatpush.msra.mxu0 %v5338
        %5392 = vmatpush.msra.mxu0 %v5337
        %5393 = vmatpush.msra.mxu0 %v5336
        %5394 = vmatpush.msra.mxu0 %v5335
        %5395 = vmatmul.f32.gmra.mxu0 %v5377
        %v5396 = vpop.f32.mrf.mxu0
        %v5397 = vadd.f32 %v5374, %v5396
        %5398 = vdwg.mxu0
        %v5399 = vld [vmem:[#allocation7 + $0x8] sm:$0xff]
        %s5400 = scalar_lea.vmem [#allocation27], 128
        %v5401 = vld [vmem:[%s5400] sm:$0xff]
        %v5402 = vld [vmem:[%s5400 + $0x8] sm:$0xff]
        %v5403 = vld [vmem:[%s5400 + $0x10] sm:$0xff]
        %v5404 = vld [vmem:[%s5400 + $0x18] sm:$0xff]
        %v5405 = vld [vmem:[%s5400 + $0x20] sm:$0xff]
        %v5406 = vld [vmem:[%s5400 + $0x28] sm:$0xff]
        %v5407 = vld [vmem:[%s5400 + $0x30] sm:$0xff]
        %v5408 = vld [vmem:[%s5400 + $0x38] sm:$0xff]
        %v5410 = vsel %vm4639, %v5399, 0
        %5412 = vmatpush.msra.mxu0 0.0
        %5413 = vmatpush.msra.mxu0 0.0
        %5414 = vmatpush.msra.mxu0 0.0
        %5415 = vmatpush.msra.mxu0 0.0
        %5416 = vmatpush.msra.mxu0 0.0
        %5417 = vmatpush.msra.mxu0 0.0
        %5418 = vmatpush.msra.mxu0 0.0
        %5419 = vmatpush.msra.mxu0 0.0
        %5420 = vmatpush.msra.mxu0 %v5408
        %5421 = vmatpush.msra.mxu0 %v5407
        %5422 = vmatpush.msra.mxu0 %v5406
        %5423 = vmatpush.msra.mxu0 %v5405
        %5424 = vmatpush.msra.mxu0 %v5404
        %5425 = vmatpush.msra.mxu0 %v5403
        %5426 = vmatpush.msra.mxu0 %v5402
        %5427 = vmatpush.msra.mxu0 %v5401
        %5428 = vmatmul.f32.gmra.mxu0 %v5410
        %v5429 = vpop.f32.mrf.mxu0
        %v5430 = vadd.f32 0.0, %v5429
        %5431 = vdwg.mxu0
        %v5432 = vadd.f32 %v5397, %v5430
        %v5433 = vld [vmem:[#allocation7 + $0x9] sm:$0xff]
        %s5434 = scalar_lea.vmem [#allocation27], 192
        %v5435 = vld [vmem:[%s5434] sm:$0xff]
        %v5436 = vld [vmem:[%s5434 + $0x8] sm:$0xff]
        %v5437 = vld [vmem:[%s5434 + $0x10] sm:$0xff]
        %v5438 = vld [vmem:[%s5434 + $0x18] sm:$0xff]
        %v5439 = vld [vmem:[%s5434 + $0x20] sm:$0xff]
        %v5440 = vld [vmem:[%s5434 + $0x28] sm:$0xff]
        %v5441 = vld [vmem:[%s5434 + $0x30] sm:$0xff]
        %v5442 = vld [vmem:[%s5434 + $0x38] sm:$0xff]
        %v5444 = vsel %vm4639, %v5433, 0
        %5446 = vmatpush.msra.mxu0 0.0
        %5447 = vmatpush.msra.mxu0 0.0
        %5448 = vmatpush.msra.mxu0 0.0
        %5449 = vmatpush.msra.mxu0 0.0
        %5450 = vmatpush.msra.mxu0 0.0
        %5451 = vmatpush.msra.mxu0 0.0
        %5452 = vmatpush.msra.mxu0 0.0
        %5453 = vmatpush.msra.mxu0 0.0
        %5454 = vmatpush.msra.mxu0 %v5442
        %5455 = vmatpush.msra.mxu0 %v5441
        %5456 = vmatpush.msra.mxu0 %v5440
        %5457 = vmatpush.msra.mxu0 %v5439
        %5458 = vmatpush.msra.mxu0 %v5438
        %5459 = vmatpush.msra.mxu0 %v5437
        %5460 = vmatpush.msra.mxu0 %v5436
        %5461 = vmatpush.msra.mxu0 %v5435
        %5462 = vmatmul.f32.gmra.mxu0 %v5444
        %v5463 = vpop.f32.mrf.mxu0
        %v5464 = vadd.f32 0.0, %v5463
        %5465 = vdwg.mxu0
        %v5466 = vadd.f32 %v5432, %v5464
        %v5467 = vld [vmem:[#allocation7 + $0xa] sm:$0xff]
        %s5468 = scalar_lea.vmem [#allocation27], 256
        %v5469 = vld [vmem:[%s5468] sm:$0xff]
        %v5470 = vld [vmem:[%s5468 + $0x8] sm:$0xff]
        %v5471 = vld [vmem:[%s5468 + $0x10] sm:$0xff]
        %v5472 = vld [vmem:[%s5468 + $0x18] sm:$0xff]
        %v5473 = vld [vmem:[%s5468 + $0x20] sm:$0xff]
        %v5474 = vld [vmem:[%s5468 + $0x28] sm:$0xff]
        %v5475 = vld [vmem:[%s5468 + $0x30] sm:$0xff]
        %v5476 = vld [vmem:[%s5468 + $0x38] sm:$0xff]
        %v5478 = vsel %vm4639, %v5467, 0
        %5480 = vmatpush.msra.mxu0 0.0
        %5481 = vmatpush.msra.mxu0 0.0
        %5482 = vmatpush.msra.mxu0 0.0
        %5483 = vmatpush.msra.mxu0 0.0
        %5484 = vmatpush.msra.mxu0 0.0
        %5485 = vmatpush.msra.mxu0 0.0
        %5486 = vmatpush.msra.mxu0 0.0
        %5487 = vmatpush.msra.mxu0 0.0
        %5488 = vmatpush.msra.mxu0 %v5476
        %5489 = vmatpush.msra.mxu0 %v5475
        %5490 = vmatpush.msra.mxu0 %v5474
        %5491 = vmatpush.msra.mxu0 %v5473
        %5492 = vmatpush.msra.mxu0 %v5472
        %5493 = vmatpush.msra.mxu0 %v5471
        %5494 = vmatpush.msra.mxu0 %v5470
        %5495 = vmatpush.msra.mxu0 %v5469
        %5496 = vmatmul.f32.gmra.mxu0 %v5478
        %v5497 = vpop.f32.mrf.mxu0
        %v5498 = vadd.f32 0.0, %v5497
        %5499 = vdwg.mxu0
        %v5500 = vadd.f32 %v5466, %v5498
        %v5501 = vld [vmem:[#allocation28] sm:$0x1]
        %v5503 = vperm.slane %v5501, 0
        %v5505 = vadd.f32 %v5500, %v5503
        %v5506 = vmax.f32 %v5505, 0.0
        %v5507 = vsel %vm3334, %v2946, 0
        %5509 = vmatpush.msra.mxu0 0.0
        %5510 = vmatpush.msra.mxu0 0.0
        %5511 = vmatpush.msra.mxu0 0.0
        %5512 = vmatpush.msra.mxu0 0.0
        %5513 = vmatpush.msra.mxu0 0.0
        %5514 = vmatpush.msra.mxu0 0.0
        %5515 = vmatpush.msra.mxu0 0.0
        %5516 = vmatpush.msra.mxu0 0.0
        %5517 = vmatpush.msra.mxu0 0.0
        %5518 = vmatpush.msra.mxu0 0.0
        %5519 = vmatpush.msra.mxu0 0.0
        %5520 = vmatpush.msra.mxu0 0.0
        %5521 = vmatpush.msra.mxu0 0.0
        %5522 = vmatpush.msra.mxu0 0.0
        %5523 = vmatpush.msra.mxu0 0.0
        %5524 = vmatpush.msra.mxu0 %v5506
        %5525 = vmatmul.f32.gmra.mxu0 %v5507
        %v5526 = vpop.f32.mrf.mxu0
        %v5527 = vadd.f32 0.0, %v5526
        %5528 = vdwg.mxu0
        %v5529 = vsel %vm3334, %v3026, 0
        %5531 = vmatpush.msra.mxu0 0.0
        %5532 = vmatpush.msra.mxu0 0.0
        %5533 = vmatpush.msra.mxu0 0.0
        %5534 = vmatpush.msra.mxu0 0.0
        %5535 = vmatpush.msra.mxu0 0.0
        %5536 = vmatpush.msra.mxu0 0.0
        %5537 = vmatpush.msra.mxu0 0.0
        %5538 = vmatpush.msra.mxu0 0.0
        %5539 = vmatpush.msra.mxu0 0.0
        %5540 = vmatpush.msra.mxu0 0.0
        %5541 = vmatpush.msra.mxu0 0.0
        %5542 = vmatpush.msra.mxu0 0.0
        %5543 = vmatpush.msra.mxu0 0.0
        %5544 = vmatpush.msra.mxu0 0.0
        %5545 = vmatpush.msra.mxu0 0.0
        %5546 = vmatpush.msra.mxu0 %v5506
        %5547 = vmatmul.f32.gmra.mxu0 %v5529
        %v5548 = vpop.f32.mrf.mxu0
        %v5549 = vadd.f32 0.0, %v5548
        %5550 = vdwg.mxu0
        %v5551 = vmax.f32 %v5527, %v5549
        %5552 = vst [vmem:[#allocation8] sm:$0xff] 0.0
        %5553 = vst [vmem:[#allocation8 + $0x8] sm:$0xff] 0.0
        %5554 = vst [vmem:[#allocation8 + $0x10] sm:$0xf] 0.0
        %5555 = vst [vmem:[#allocation8 + $0x8] sm:$0xf] %v5551
        %v5556 = vld [vmem:[#allocation8 + $0x6] sm:$0xf]
        %v5557 = vld [vmem:[#allocation30] sm:$0xff]
        %v5558 = vld [vmem:[#allocation30 + $0x8] sm:$0xff]
        %v5559 = vld [vmem:[#allocation30 + $0x10] sm:$0xff]
        %v5560 = vld [vmem:[#allocation30 + $0x18] sm:$0xff]
        %v5561 = vld [vmem:[#allocation30 + $0x20] sm:$0xff]
        %v5562 = vld [vmem:[#allocation30 + $0x28] sm:$0xff]
        %v5563 = vld [vmem:[#allocation30 + $0x30] sm:$0xff]
        %v5564 = vld [vmem:[#allocation30 + $0x38] sm:$0xff]
        %v5565 = vld [vmem:[#allocation30 + $0x40] sm:$0xff]
        %v5566 = vld [vmem:[#allocation30 + $0x48] sm:$0xff]
        %v5567 = vld [vmem:[#allocation30 + $0x50] sm:$0xff]
        %v5568 = vld [vmem:[#allocation30 + $0x58] sm:$0xff]
        %v5569 = vld [vmem:[#allocation30 + $0x60] sm:$0xff]
        %v5570 = vld [vmem:[#allocation30 + $0x68] sm:$0xff]
        %v5571 = vld [vmem:[#allocation30 + $0x70] sm:$0xff]
        %v5572 = vld [vmem:[#allocation30 + $0x78] sm:$0xff]
        %v5573 = vld [vmem:[#allocation30 + $0x80] sm:$0xff]
        %v5574 = vld [vmem:[#allocation30 + $0x88] sm:$0xff]
        %v5575 = vld [vmem:[#allocation30 + $0x90] sm:$0xff]
        %v5576 = vld [vmem:[#allocation30 + $0x98] sm:$0xff]
        %v5577 = vld [vmem:[#allocation30 + $0xa0] sm:$0xff]
        %v5578 = vld [vmem:[#allocation30 + $0xa8] sm:$0xff]
        %v5579 = vld [vmem:[#allocation30 + $0xb0] sm:$0xff]
        %v5580 = vld [vmem:[#allocation30 + $0xb8] sm:$0xff]
        %v5581 = vld [vmem:[#allocation30 + $0xc0] sm:$0xff]
        %v5582 = vld [vmem:[#allocation30 + $0xc8] sm:$0xff]
        %v5583 = vld [vmem:[#allocation30 + $0xd0] sm:$0xff]
        %v5584 = vld [vmem:[#allocation30 + $0xd8] sm:$0xff]
        %v5585 = vld [vmem:[#allocation30 + $0xe0] sm:$0xff]
        %v5586 = vld [vmem:[#allocation30 + $0xe8] sm:$0xff]
        %v5587 = vld [vmem:[#allocation30 + $0xf0] sm:$0xff]
        %v5588 = vld [vmem:[#allocation30 + $0xf8] sm:$0xff]
        %v5589 = vld [vmem:[#allocation8 + $0x7] sm:$0xf]
        %s5590 = scalar_lea.vmem [#allocation30], 256
        %v5591 = vld [vmem:[%s5590] sm:$0xff]
        %v5592 = vld [vmem:[%s5590 + $0x8] sm:$0xff]
        %v5593 = vld [vmem:[%s5590 + $0x10] sm:$0xff]
        %v5594 = vld [vmem:[%s5590 + $0x18] sm:$0xff]
        %v5595 = vld [vmem:[%s5590 + $0x20] sm:$0xff]
        %v5596 = vld [vmem:[%s5590 + $0x28] sm:$0xff]
        %v5597 = vld [vmem:[%s5590 + $0x30] sm:$0xff]
        %v5598 = vld [vmem:[%s5590 + $0x38] sm:$0xff]
        %v5599 = vld [vmem:[%s5590 + $0x40] sm:$0xff]
        %v5600 = vld [vmem:[%s5590 + $0x48] sm:$0xff]
        %v5601 = vld [vmem:[%s5590 + $0x50] sm:$0xff]
        %v5602 = vld [vmem:[%s5590 + $0x58] sm:$0xff]
        %v5603 = vld [vmem:[%s5590 + $0x60] sm:$0xff]
        %v5604 = vld [vmem:[%s5590 + $0x68] sm:$0xff]
        %v5605 = vld [vmem:[%s5590 + $0x70] sm:$0xff]
        %v5606 = vld [vmem:[%s5590 + $0x78] sm:$0xff]
        %v5607 = vld [vmem:[%s5590 + $0x80] sm:$0xff]
        %v5608 = vld [vmem:[%s5590 + $0x88] sm:$0xff]
        %v5609 = vld [vmem:[%s5590 + $0x90] sm:$0xff]
        %v5610 = vld [vmem:[%s5590 + $0x98] sm:$0xff]
        %v5611 = vld [vmem:[%s5590 + $0xa0] sm:$0xff]
        %v5612 = vld [vmem:[%s5590 + $0xa8] sm:$0xff]
        %v5613 = vld [vmem:[%s5590 + $0xb0] sm:$0xff]
        %v5614 = vld [vmem:[%s5590 + $0xb8] sm:$0xff]
        %v5615 = vld [vmem:[%s5590 + $0xc0] sm:$0xff]
        %v5616 = vld [vmem:[%s5590 + $0xc8] sm:$0xff]
        %v5617 = vld [vmem:[%s5590 + $0xd0] sm:$0xff]
        %v5618 = vld [vmem:[%s5590 + $0xd8] sm:$0xff]
        %v5619 = vld [vmem:[%s5590 + $0xe0] sm:$0xff]
        %v5620 = vld [vmem:[%s5590 + $0xe8] sm:$0xff]
        %v5621 = vld [vmem:[%s5590 + $0xf0] sm:$0xff]
        %v5622 = vld [vmem:[%s5590 + $0xf8] sm:$0xff]
        %5623 = vmatpush.msra.mxu0 %v5621
        %5624 = vmatpush.msra.mxu0 %v5619
        %5625 = vmatpush.msra.mxu0 %v5617
        %5626 = vmatpush.msra.mxu0 %v5615
        %5627 = vmatpush.msra.mxu0 %v5613
        %5628 = vmatpush.msra.mxu0 %v5611
        %5629 = vmatpush.msra.mxu0 %v5609
        %5630 = vmatpush.msra.mxu0 %v5607
        %5631 = vmatpush.msra.mxu0 %v5605
        %5632 = vmatpush.msra.mxu0 %v5603
        %5633 = vmatpush.msra.mxu0 %v5601
        %5634 = vmatpush.msra.mxu0 %v5599
        %5635 = vmatpush.msra.mxu0 %v5597
        %5636 = vmatpush.msra.mxu0 %v5595
        %5637 = vmatpush.msra.mxu0 %v5593
        %5638 = vmatpush.msra.mxu0 %v5591
        %5639 = vmatmul.f32.gmra.mxu0 %v5589
        %v5640 = vpop.f32.mrf.mxu0
        %v5641 = vadd.f32 0.0, %v5640
        %5642 = vdwg.mxu0
        %5643 = vmatpush.msra.mxu0 %v5622
        %5644 = vmatpush.msra.mxu0 %v5620
        %5645 = vmatpush.msra.mxu0 %v5618
        %5646 = vmatpush.msra.mxu0 %v5616
        %5647 = vmatpush.msra.mxu0 %v5614
        %5648 = vmatpush.msra.mxu0 %v5612
        %5649 = vmatpush.msra.mxu0 %v5610
        %5650 = vmatpush.msra.mxu0 %v5608
        %5651 = vmatpush.msra.mxu0 %v5606
        %5652 = vmatpush.msra.mxu0 %v5604
        %5653 = vmatpush.msra.mxu0 %v5602
        %5654 = vmatpush.msra.mxu0 %v5600
        %5655 = vmatpush.msra.mxu0 %v5598
        %5656 = vmatpush.msra.mxu0 %v5596
        %5657 = vmatpush.msra.mxu0 %v5594
        %5658 = vmatpush.msra.mxu0 %v5592
        %5659 = vmatmul.f32.gmra.mxu0 %v5589
        %v5660 = vpop.f32.mrf.mxu0
        %v5661 = vadd.f32 0.0, %v5660
        %5662 = vdwg.mxu0
        %5663 = vmatpush.msra.mxu0 %v5587
        %5664 = vmatpush.msra.mxu0 %v5585
        %5665 = vmatpush.msra.mxu0 %v5583
        %5666 = vmatpush.msra.mxu0 %v5581
        %5667 = vmatpush.msra.mxu0 %v5579
        %5668 = vmatpush.msra.mxu0 %v5577
        %5669 = vmatpush.msra.mxu0 %v5575
        %5670 = vmatpush.msra.mxu0 %v5573
        %5671 = vmatpush.msra.mxu0 %v5571
        %5672 = vmatpush.msra.mxu0 %v5569
        %5673 = vmatpush.msra.mxu0 %v5567
        %5674 = vmatpush.msra.mxu0 %v5565
        %5675 = vmatpush.msra.mxu0 %v5563
        %5676 = vmatpush.msra.mxu0 %v5561
        %5677 = vmatpush.msra.mxu0 %v5559
        %5678 = vmatpush.msra.mxu0 %v5557
        %5679 = vmatmul.f32.gmra.mxu0 %v5556
        %v5680 = vpop.f32.mrf.mxu0
        %v5681 = vadd.f32 %v5641, %v5680
        %5682 = vdwg.mxu0
        %5683 = vmatpush.msra.mxu0 %v5588
        %5684 = vmatpush.msra.mxu0 %v5586
        %5685 = vmatpush.msra.mxu0 %v5584
        %5686 = vmatpush.msra.mxu0 %v5582
        %5687 = vmatpush.msra.mxu0 %v5580
        %5688 = vmatpush.msra.mxu0 %v5578
        %5689 = vmatpush.msra.mxu0 %v5576
        %5690 = vmatpush.msra.mxu0 %v5574
        %5691 = vmatpush.msra.mxu0 %v5572
        %5692 = vmatpush.msra.mxu0 %v5570
        %5693 = vmatpush.msra.mxu0 %v5568
        %5694 = vmatpush.msra.mxu0 %v5566
        %5695 = vmatpush.msra.mxu0 %v5564
        %5696 = vmatpush.msra.mxu0 %v5562
        %5697 = vmatpush.msra.mxu0 %v5560
        %5698 = vmatpush.msra.mxu0 %v5558
        %5699 = vmatmul.f32.gmra.mxu0 %v5556
        %v5700 = vpop.f32.mrf.mxu0
        %v5701 = vadd.f32 %v5661, %v5700
        %5702 = vdwg.mxu0
        %v5703 = vld [vmem:[#allocation8 + $0x8] sm:$0xf]
        %s5704 = scalar_lea.vmem [#allocation30], 512
        %v5705 = vld [vmem:[%s5704] sm:$0xff]
        %v5706 = vld [vmem:[%s5704 + $0x8] sm:$0xff]
        %v5707 = vld [vmem:[%s5704 + $0x10] sm:$0xff]
        %v5708 = vld [vmem:[%s5704 + $0x18] sm:$0xff]
        %v5709 = vld [vmem:[%s5704 + $0x20] sm:$0xff]
        %v5710 = vld [vmem:[%s5704 + $0x28] sm:$0xff]
        %v5711 = vld [vmem:[%s5704 + $0x30] sm:$0xff]
        %v5712 = vld [vmem:[%s5704 + $0x38] sm:$0xff]
        %v5713 = vld [vmem:[%s5704 + $0x40] sm:$0xff]
        %v5714 = vld [vmem:[%s5704 + $0x48] sm:$0xff]
        %v5715 = vld [vmem:[%s5704 + $0x50] sm:$0xff]
        %v5716 = vld [vmem:[%s5704 + $0x58] sm:$0xff]
        %v5717 = vld [vmem:[%s5704 + $0x60] sm:$0xff]
        %v5718 = vld [vmem:[%s5704 + $0x68] sm:$0xff]
        %v5719 = vld [vmem:[%s5704 + $0x70] sm:$0xff]
        %v5720 = vld [vmem:[%s5704 + $0x78] sm:$0xff]
        %v5721 = vld [vmem:[%s5704 + $0x80] sm:$0xff]
        %v5722 = vld [vmem:[%s5704 + $0x88] sm:$0xff]
        %v5723 = vld [vmem:[%s5704 + $0x90] sm:$0xff]
        %v5724 = vld [vmem:[%s5704 + $0x98] sm:$0xff]
        %v5725 = vld [vmem:[%s5704 + $0xa0] sm:$0xff]
        %v5726 = vld [vmem:[%s5704 + $0xa8] sm:$0xff]
        %v5727 = vld [vmem:[%s5704 + $0xb0] sm:$0xff]
        %v5728 = vld [vmem:[%s5704 + $0xb8] sm:$0xff]
        %v5729 = vld [vmem:[%s5704 + $0xc0] sm:$0xff]
        %v5730 = vld [vmem:[%s5704 + $0xc8] sm:$0xff]
        %v5731 = vld [vmem:[%s5704 + $0xd0] sm:$0xff]
        %v5732 = vld [vmem:[%s5704 + $0xd8] sm:$0xff]
        %v5733 = vld [vmem:[%s5704 + $0xe0] sm:$0xff]
        %v5734 = vld [vmem:[%s5704 + $0xe8] sm:$0xff]
        %v5735 = vld [vmem:[%s5704 + $0xf0] sm:$0xff]
        %v5736 = vld [vmem:[%s5704 + $0xf8] sm:$0xff]
        %5737 = vmatpush.msra.mxu0 %v5735
        %5738 = vmatpush.msra.mxu0 %v5733
        %5739 = vmatpush.msra.mxu0 %v5731
        %5740 = vmatpush.msra.mxu0 %v5729
        %5741 = vmatpush.msra.mxu0 %v5727
        %5742 = vmatpush.msra.mxu0 %v5725
        %5743 = vmatpush.msra.mxu0 %v5723
        %5744 = vmatpush.msra.mxu0 %v5721
        %5745 = vmatpush.msra.mxu0 %v5719
        %5746 = vmatpush.msra.mxu0 %v5717
        %5747 = vmatpush.msra.mxu0 %v5715
        %5748 = vmatpush.msra.mxu0 %v5713
        %5749 = vmatpush.msra.mxu0 %v5711
        %5750 = vmatpush.msra.mxu0 %v5709
        %5751 = vmatpush.msra.mxu0 %v5707
        %5752 = vmatpush.msra.mxu0 %v5705
        %5753 = vmatmul.f32.gmra.mxu0 %v5703
        %v5754 = vpop.f32.mrf.mxu0
        %v5755 = vadd.f32 0.0, %v5754
        %5756 = vdwg.mxu0
        %5757 = vmatpush.msra.mxu0 %v5736
        %5758 = vmatpush.msra.mxu0 %v5734
        %5759 = vmatpush.msra.mxu0 %v5732
        %5760 = vmatpush.msra.mxu0 %v5730
        %5761 = vmatpush.msra.mxu0 %v5728
        %5762 = vmatpush.msra.mxu0 %v5726
        %5763 = vmatpush.msra.mxu0 %v5724
        %5764 = vmatpush.msra.mxu0 %v5722
        %5765 = vmatpush.msra.mxu0 %v5720
        %5766 = vmatpush.msra.mxu0 %v5718
        %5767 = vmatpush.msra.mxu0 %v5716
        %5768 = vmatpush.msra.mxu0 %v5714
        %5769 = vmatpush.msra.mxu0 %v5712
        %5770 = vmatpush.msra.mxu0 %v5710
        %5771 = vmatpush.msra.mxu0 %v5708
        %5772 = vmatpush.msra.mxu0 %v5706
        %5773 = vmatmul.f32.gmra.mxu0 %v5703
        %v5774 = vpop.f32.mrf.mxu0
        %v5775 = vadd.f32 0.0, %v5774
        %5776 = vdwg.mxu0
        %v5777 = vadd.f32 %v5681, %v5755
        %v5778 = vadd.f32 %v5701, %v5775
        %v5779 = vld [vmem:[#allocation8 + $0x9] sm:$0xf]
        %s5780 = scalar_lea.vmem [#allocation30], 768
        %v5781 = vld [vmem:[%s5780] sm:$0xff]
        %v5782 = vld [vmem:[%s5780 + $0x8] sm:$0xff]
        %v5783 = vld [vmem:[%s5780 + $0x10] sm:$0xff]
        %v5784 = vld [vmem:[%s5780 + $0x18] sm:$0xff]
        %v5785 = vld [vmem:[%s5780 + $0x20] sm:$0xff]
        %v5786 = vld [vmem:[%s5780 + $0x28] sm:$0xff]
        %v5787 = vld [vmem:[%s5780 + $0x30] sm:$0xff]
        %v5788 = vld [vmem:[%s5780 + $0x38] sm:$0xff]
        %v5789 = vld [vmem:[%s5780 + $0x40] sm:$0xff]
        %v5790 = vld [vmem:[%s5780 + $0x48] sm:$0xff]
        %v5791 = vld [vmem:[%s5780 + $0x50] sm:$0xff]
        %v5792 = vld [vmem:[%s5780 + $0x58] sm:$0xff]
        %v5793 = vld [vmem:[%s5780 + $0x60] sm:$0xff]
        %v5794 = vld [vmem:[%s5780 + $0x68] sm:$0xff]
        %v5795 = vld [vmem:[%s5780 + $0x70] sm:$0xff]
        %v5796 = vld [vmem:[%s5780 + $0x78] sm:$0xff]
        %v5797 = vld [vmem:[%s5780 + $0x80] sm:$0xff]
        %v5798 = vld [vmem:[%s5780 + $0x88] sm:$0xff]
        %v5799 = vld [vmem:[%s5780 + $0x90] sm:$0xff]
        %v5800 = vld [vmem:[%s5780 + $0x98] sm:$0xff]
        %v5801 = vld [vmem:[%s5780 + $0xa0] sm:$0xff]
        %v5802 = vld [vmem:[%s5780 + $0xa8] sm:$0xff]
        %v5803 = vld [vmem:[%s5780 + $0xb0] sm:$0xff]
        %v5804 = vld [vmem:[%s5780 + $0xb8] sm:$0xff]
        %v5805 = vld [vmem:[%s5780 + $0xc0] sm:$0xff]
        %v5806 = vld [vmem:[%s5780 + $0xc8] sm:$0xff]
        %v5807 = vld [vmem:[%s5780 + $0xd0] sm:$0xff]
        %v5808 = vld [vmem:[%s5780 + $0xd8] sm:$0xff]
        %v5809 = vld [vmem:[%s5780 + $0xe0] sm:$0xff]
        %v5810 = vld [vmem:[%s5780 + $0xe8] sm:$0xff]
        %v5811 = vld [vmem:[%s5780 + $0xf0] sm:$0xff]
        %v5812 = vld [vmem:[%s5780 + $0xf8] sm:$0xff]
        %5813 = vmatpush.msra.mxu0 %v5811
        %5814 = vmatpush.msra.mxu0 %v5809
        %5815 = vmatpush.msra.mxu0 %v5807
        %5816 = vmatpush.msra.mxu0 %v5805
        %5817 = vmatpush.msra.mxu0 %v5803
        %5818 = vmatpush.msra.mxu0 %v5801
        %5819 = vmatpush.msra.mxu0 %v5799
        %5820 = vmatpush.msra.mxu0 %v5797
        %5821 = vmatpush.msra.mxu0 %v5795
        %5822 = vmatpush.msra.mxu0 %v5793
        %5823 = vmatpush.msra.mxu0 %v5791
        %5824 = vmatpush.msra.mxu0 %v5789
        %5825 = vmatpush.msra.mxu0 %v5787
        %5826 = vmatpush.msra.mxu0 %v5785
        %5827 = vmatpush.msra.mxu0 %v5783
        %5828 = vmatpush.msra.mxu0 %v5781
        %5829 = vmatmul.f32.gmra.mxu0 %v5779
        %v5830 = vpop.f32.mrf.mxu0
        %v5831 = vadd.f32 0.0, %v5830
        %5832 = vdwg.mxu0
        %5833 = vmatpush.msra.mxu0 %v5812
        %5834 = vmatpush.msra.mxu0 %v5810
        %5835 = vmatpush.msra.mxu0 %v5808
        %5836 = vmatpush.msra.mxu0 %v5806
        %5837 = vmatpush.msra.mxu0 %v5804
        %5838 = vmatpush.msra.mxu0 %v5802
        %5839 = vmatpush.msra.mxu0 %v5800
        %5840 = vmatpush.msra.mxu0 %v5798
        %5841 = vmatpush.msra.mxu0 %v5796
        %5842 = vmatpush.msra.mxu0 %v5794
        %5843 = vmatpush.msra.mxu0 %v5792
        %5844 = vmatpush.msra.mxu0 %v5790
        %5845 = vmatpush.msra.mxu0 %v5788
        %5846 = vmatpush.msra.mxu0 %v5786
        %5847 = vmatpush.msra.mxu0 %v5784
        %5848 = vmatpush.msra.mxu0 %v5782
        %5849 = vmatmul.f32.gmra.mxu0 %v5779
        %v5850 = vpop.f32.mrf.mxu0
        %v5851 = vadd.f32 0.0, %v5850
        %5852 = vdwg.mxu0
        %v5853 = vadd.f32 %v5777, %v5831
        %v5854 = vadd.f32 %v5778, %v5851
        %v5855 = vld [vmem:[#allocation8 + $0xa] sm:$0xf]
        %s5856 = scalar_lea.vmem [#allocation30], 1024
        %v5857 = vld [vmem:[%s5856] sm:$0xff]
        %v5858 = vld [vmem:[%s5856 + $0x8] sm:$0xff]
        %v5859 = vld [vmem:[%s5856 + $0x10] sm:$0xff]
        %v5860 = vld [vmem:[%s5856 + $0x18] sm:$0xff]
        %v5861 = vld [vmem:[%s5856 + $0x20] sm:$0xff]
        %v5862 = vld [vmem:[%s5856 + $0x28] sm:$0xff]
        %v5863 = vld [vmem:[%s5856 + $0x30] sm:$0xff]
        %v5864 = vld [vmem:[%s5856 + $0x38] sm:$0xff]
        %v5865 = vld [vmem:[%s5856 + $0x40] sm:$0xff]
        %v5866 = vld [vmem:[%s5856 + $0x48] sm:$0xff]
        %v5867 = vld [vmem:[%s5856 + $0x50] sm:$0xff]
        %v5868 = vld [vmem:[%s5856 + $0x58] sm:$0xff]
        %v5869 = vld [vmem:[%s5856 + $0x60] sm:$0xff]
        %v5870 = vld [vmem:[%s5856 + $0x68] sm:$0xff]
        %v5871 = vld [vmem:[%s5856 + $0x70] sm:$0xff]
        %v5872 = vld [vmem:[%s5856 + $0x78] sm:$0xff]
        %v5873 = vld [vmem:[%s5856 + $0x80] sm:$0xff]
        %v5874 = vld [vmem:[%s5856 + $0x88] sm:$0xff]
        %v5875 = vld [vmem:[%s5856 + $0x90] sm:$0xff]
        %v5876 = vld [vmem:[%s5856 + $0x98] sm:$0xff]
        %v5877 = vld [vmem:[%s5856 + $0xa0] sm:$0xff]
        %v5878 = vld [vmem:[%s5856 + $0xa8] sm:$0xff]
        %v5879 = vld [vmem:[%s5856 + $0xb0] sm:$0xff]
        %v5880 = vld [vmem:[%s5856 + $0xb8] sm:$0xff]
        %v5881 = vld [vmem:[%s5856 + $0xc0] sm:$0xff]
        %v5882 = vld [vmem:[%s5856 + $0xc8] sm:$0xff]
        %v5883 = vld [vmem:[%s5856 + $0xd0] sm:$0xff]
        %v5884 = vld [vmem:[%s5856 + $0xd8] sm:$0xff]
        %v5885 = vld [vmem:[%s5856 + $0xe0] sm:$0xff]
        %v5886 = vld [vmem:[%s5856 + $0xe8] sm:$0xff]
        %v5887 = vld [vmem:[%s5856 + $0xf0] sm:$0xff]
        %v5888 = vld [vmem:[%s5856 + $0xf8] sm:$0xff]
        %5889 = vmatpush.msra.mxu0 %v5887
        %5890 = vmatpush.msra.mxu0 %v5885
        %5891 = vmatpush.msra.mxu0 %v5883
        %5892 = vmatpush.msra.mxu0 %v5881
        %5893 = vmatpush.msra.mxu0 %v5879
        %5894 = vmatpush.msra.mxu0 %v5877
        %5895 = vmatpush.msra.mxu0 %v5875
        %5896 = vmatpush.msra.mxu0 %v5873
        %5897 = vmatpush.msra.mxu0 %v5871
        %5898 = vmatpush.msra.mxu0 %v5869
        %5899 = vmatpush.msra.mxu0 %v5867
        %5900 = vmatpush.msra.mxu0 %v5865
        %5901 = vmatpush.msra.mxu0 %v5863
        %5902 = vmatpush.msra.mxu0 %v5861
        %5903 = vmatpush.msra.mxu0 %v5859
        %5904 = vmatpush.msra.mxu0 %v5857
        %5905 = vmatmul.f32.gmra.mxu0 %v5855
        %v5906 = vpop.f32.mrf.mxu0
        %v5907 = vadd.f32 0.0, %v5906
        %5908 = vdwg.mxu0
        %5909 = vmatpush.msra.mxu0 %v5888
        %5910 = vmatpush.msra.mxu0 %v5886
        %5911 = vmatpush.msra.mxu0 %v5884
        %5912 = vmatpush.msra.mxu0 %v5882
        %5913 = vmatpush.msra.mxu0 %v5880
        %5914 = vmatpush.msra.mxu0 %v5878
        %5915 = vmatpush.msra.mxu0 %v5876
        %5916 = vmatpush.msra.mxu0 %v5874
        %5917 = vmatpush.msra.mxu0 %v5872
        %5918 = vmatpush.msra.mxu0 %v5870
        %5919 = vmatpush.msra.mxu0 %v5868
        %5920 = vmatpush.msra.mxu0 %v5866
        %5921 = vmatpush.msra.mxu0 %v5864
        %5922 = vmatpush.msra.mxu0 %v5862
        %5923 = vmatpush.msra.mxu0 %v5860
        %5924 = vmatpush.msra.mxu0 %v5858
        %5925 = vmatmul.f32.gmra.mxu0 %v5855
        %v5926 = vpop.f32.mrf.mxu0
        %v5927 = vadd.f32 0.0, %v5926
        %5928 = vdwg.mxu0
        %v5929 = vadd.f32 %v5853, %v5907
        %v5930 = vadd.f32 %v5854, %v5927
        %v5931 = vld [vmem:[#allocation31] sm:$0x3]
        %v5933 = vperm.slane %v5931, 0
        %v5934 = vperm.slane %v5931, 1
        %v5937 = vadd.f32 %v5929, %v5933
        %v5938 = vadd.f32 %v5930, %v5934
        %v5939 = vmax.f32 %v5937, 0.0
        %v5940 = vmax.f32 %v5938, 0.0
        %vm5941 = vcmask 31744
        %v5942 = vsel %vm5941, %v2946, 0
        %vm5944 = vcmask 1043456
        %v5946 = vsel %vm5944, %v5939, 0
        %v5949 = vsel %vm5944, %v5940, 0
        %5951 = vmatpush.msra.mxu0 0.0
        %5952 = vmatpush.msra.mxu0 0.0
        %5953 = vmatpush.msra.mxu0 0.0
        %5954 = vmatpush.msra.mxu0 0.0
        %5955 = vmatpush.msra.mxu0 0.0
        %5956 = vmatpush.msra.mxu0 0.0
        %5957 = vmatpush.msra.mxu0 0.0
        %5958 = vmatpush.msra.mxu0 0.0
        %5959 = vmatpush.msra.mxu0 0.0
        %5960 = vmatpush.msra.mxu0 0.0
        %5961 = vmatpush.msra.mxu0 0.0
        %5962 = vmatpush.msra.mxu0 0.0
        %5963 = vmatpush.msra.mxu0 0.0
        %5964 = vmatpush.msra.mxu0 0.0
        %5965 = vmatpush.msra.mxu0 0.0
        %5966 = vmatpush.msra.mxu0 %v5946
        %5967 = vmatmul.f32.gmra.mxu0 %v5942
        %v5968 = vpop.f32.mrf.mxu0
        %v5969 = vadd.f32 0.0, %v5968
        %5970 = vdwg.mxu0
        %5971 = vmatpush.msra.mxu0 0.0
        %5972 = vmatpush.msra.mxu0 0.0
        %5973 = vmatpush.msra.mxu0 0.0
        %5974 = vmatpush.msra.mxu0 0.0
        %5975 = vmatpush.msra.mxu0 0.0
        %5976 = vmatpush.msra.mxu0 0.0
        %5977 = vmatpush.msra.mxu0 0.0
        %5978 = vmatpush.msra.mxu0 0.0
        %5979 = vmatpush.msra.mxu0 0.0
        %5980 = vmatpush.msra.mxu0 0.0
        %5981 = vmatpush.msra.mxu0 0.0
        %5982 = vmatpush.msra.mxu0 0.0
        %5983 = vmatpush.msra.mxu0 0.0
        %5984 = vmatpush.msra.mxu0 0.0
        %5985 = vmatpush.msra.mxu0 0.0
        %5986 = vmatpush.msra.mxu0 %v5949
        %5987 = vmatmul.f32.gmra.mxu0 %v5942
        %v5988 = vpop.f32.mrf.mxu0
        %v5989 = vadd.f32 0.0, %v5988
        %5990 = vdwg.mxu0
        %v5991 = vsel %vm5941, %v3026, 0
        %5993 = vmatpush.msra.mxu0 0.0
        %5994 = vmatpush.msra.mxu0 0.0
        %5995 = vmatpush.msra.mxu0 0.0
        %5996 = vmatpush.msra.mxu0 0.0
        %5997 = vmatpush.msra.mxu0 0.0
        %5998 = vmatpush.msra.mxu0 0.0
        %5999 = vmatpush.msra.mxu0 0.0
        %6000 = vmatpush.msra.mxu0 0.0
        %6001 = vmatpush.msra.mxu0 0.0
        %6002 = vmatpush.msra.mxu0 0.0
        %6003 = vmatpush.msra.mxu0 0.0
        %6004 = vmatpush.msra.mxu0 0.0
        %6005 = vmatpush.msra.mxu0 0.0
        %6006 = vmatpush.msra.mxu0 0.0
        %6007 = vmatpush.msra.mxu0 0.0
        %6008 = vmatpush.msra.mxu0 %v5946
        %6009 = vmatmul.f32.gmra.mxu0 %v5991
        %v6010 = vpop.f32.mrf.mxu0
        %v6011 = vadd.f32 0.0, %v6010
        %6012 = vdwg.mxu0
        %6013 = vmatpush.msra.mxu0 0.0
        %6014 = vmatpush.msra.mxu0 0.0
        %6015 = vmatpush.msra.mxu0 0.0
        %6016 = vmatpush.msra.mxu0 0.0
        %6017 = vmatpush.msra.mxu0 0.0
        %6018 = vmatpush.msra.mxu0 0.0
        %6019 = vmatpush.msra.mxu0 0.0
        %6020 = vmatpush.msra.mxu0 0.0
        %6021 = vmatpush.msra.mxu0 0.0
        %6022 = vmatpush.msra.mxu0 0.0
        %6023 = vmatpush.msra.mxu0 0.0
        %6024 = vmatpush.msra.mxu0 0.0
        %6025 = vmatpush.msra.mxu0 0.0
        %6026 = vmatpush.msra.mxu0 0.0
        %6027 = vmatpush.msra.mxu0 0.0
        %6028 = vmatpush.msra.mxu0 %v5949
        %6029 = vmatmul.f32.gmra.mxu0 %v5991
        %v6030 = vpop.f32.mrf.mxu0
        %v6031 = vadd.f32 0.0, %v6030
        %6032 = vdwg.mxu0
        %v6033 = vmax.f32 %v5969, %v6011
        %v6034 = vmax.f32 %v5989, %v6031
        %6035 = vst [vmem:[#allocation9] sm:$0xff] 0.0
        %6036 = vst [vmem:[#allocation9 + $0x8] sm:$0xff] 0.0
        %6037 = vst [vmem:[#allocation9 + $0x10] sm:$0xff] 0.0
        %6038 = vst [vmem:[#allocation9 + $0x18] sm:$0xff] 0.0
        %6039 = vst [vmem:[#allocation9 + $0x20] sm:$0x3] 0.0
        %6040 = vst [vmem:[#allocation9 + $0x28] sm:$0x3] 0.0
        %6041 = vst [vmem:[#allocation9 + $0x10] sm:$0x3] %v6033
        %6042 = vst [vmem:[#allocation9 + $0x18] sm:$0x3] %v6034
        %v6043 = vld [vmem:[#allocation9] sm:$0xc0]
        %v6044 = vld [vmem:[#allocation9 + $0x8] sm:$0xc0]
        %v6045 = vld [vmem:[#allocation33] sm:$0xff]
        %v6046 = vld [vmem:[#allocation33 + $0x8] sm:$0xff]
        %v6047 = vld [vmem:[#allocation33 + $0x10] sm:$0xff]
        %v6048 = vld [vmem:[#allocation33 + $0x18] sm:$0xff]
        %v6049 = vld [vmem:[#allocation33 + $0x20] sm:$0xff]
        %v6050 = vld [vmem:[#allocation33 + $0x28] sm:$0xff]
        %v6051 = vld [vmem:[#allocation33 + $0x30] sm:$0xff]
        %v6052 = vld [vmem:[#allocation33 + $0x38] sm:$0xff]
        %v6053 = vld [vmem:[#allocation33 + $0x40] sm:$0xff]
        %v6054 = vld [vmem:[#allocation33 + $0x48] sm:$0xff]
        %v6055 = vld [vmem:[#allocation33 + $0x50] sm:$0xff]
        %v6056 = vld [vmem:[#allocation33 + $0x58] sm:$0xff]
        %v6057 = vld [vmem:[#allocation33 + $0x60] sm:$0xff]
        %v6058 = vld [vmem:[#allocation33 + $0x68] sm:$0xff]
        %v6059 = vld [vmem:[#allocation33 + $0x70] sm:$0xff]
        %v6060 = vld [vmem:[#allocation33 + $0x78] sm:$0xff]
        %v6061 = vld [vmem:[#allocation33 + $0x80] sm:$0xff]
        %v6062 = vld [vmem:[#allocation33 + $0x88] sm:$0xff]
        %v6063 = vld [vmem:[#allocation33 + $0x90] sm:$0xff]
        %v6064 = vld [vmem:[#allocation33 + $0x98] sm:$0xff]
        %v6065 = vld [vmem:[#allocation33 + $0xa0] sm:$0xff]
        %v6066 = vld [vmem:[#allocation33 + $0xa8] sm:$0xff]
        %v6067 = vld [vmem:[#allocation33 + $0xb0] sm:$0xff]
        %v6068 = vld [vmem:[#allocation33 + $0xb8] sm:$0xff]
        %v6069 = vld [vmem:[#allocation33 + $0xc0] sm:$0xff]
        %v6070 = vld [vmem:[#allocation33 + $0xc8] sm:$0xff]
        %v6071 = vld [vmem:[#allocation33 + $0xd0] sm:$0xff]
        %v6072 = vld [vmem:[#allocation33 + $0xd8] sm:$0xff]
        %v6073 = vld [vmem:[#allocation33 + $0xe0] sm:$0xff]
        %v6074 = vld [vmem:[#allocation33 + $0xe8] sm:$0xff]
        %v6075 = vld [vmem:[#allocation33 + $0xf0] sm:$0xff]
        %v6076 = vld [vmem:[#allocation33 + $0xf8] sm:$0xff]
        %v6077 = vld [vmem:[#allocation33 + $0x100] sm:$0xff]
        %v6078 = vld [vmem:[#allocation33 + $0x108] sm:$0xff]
        %v6079 = vld [vmem:[#allocation33 + $0x110] sm:$0xff]
        %v6080 = vld [vmem:[#allocation33 + $0x118] sm:$0xff]
        %v6081 = vld [vmem:[#allocation33 + $0x120] sm:$0xff]
        %v6082 = vld [vmem:[#allocation33 + $0x128] sm:$0xff]
        %v6083 = vld [vmem:[#allocation33 + $0x130] sm:$0xff]
        %v6084 = vld [vmem:[#allocation33 + $0x138] sm:$0xff]
        %v6085 = vld [vmem:[#allocation33 + $0x140] sm:$0xff]
        %v6086 = vld [vmem:[#allocation33 + $0x148] sm:$0xff]
        %v6087 = vld [vmem:[#allocation33 + $0x150] sm:$0xff]
        %v6088 = vld [vmem:[#allocation33 + $0x158] sm:$0xff]
        %v6089 = vld [vmem:[#allocation33 + $0x160] sm:$0xff]
        %v6090 = vld [vmem:[#allocation33 + $0x168] sm:$0xff]
        %v6091 = vld [vmem:[#allocation33 + $0x170] sm:$0xff]
        %v6092 = vld [vmem:[#allocation33 + $0x178] sm:$0xff]
        %v6093 = vld [vmem:[#allocation33 + $0x180] sm:$0xff]
        %v6094 = vld [vmem:[#allocation33 + $0x188] sm:$0xff]
        %v6095 = vld [vmem:[#allocation33 + $0x190] sm:$0xff]
        %v6096 = vld [vmem:[#allocation33 + $0x198] sm:$0xff]
        %v6097 = vld [vmem:[#allocation33 + $0x1a0] sm:$0xff]
        %v6098 = vld [vmem:[#allocation33 + $0x1a8] sm:$0xff]
        %v6099 = vld [vmem:[#allocation33 + $0x1b0] sm:$0xff]
        %v6100 = vld [vmem:[#allocation33 + $0x1b8] sm:$0xff]
        %v6101 = vld [vmem:[#allocation33 + $0x1c0] sm:$0xff]
        %v6102 = vld [vmem:[#allocation33 + $0x1c8] sm:$0xff]
        %v6103 = vld [vmem:[#allocation33 + $0x1d0] sm:$0xff]
        %v6104 = vld [vmem:[#allocation33 + $0x1d8] sm:$0xff]
        %v6105 = vld [vmem:[#allocation33 + $0x1e0] sm:$0xff]
        %v6106 = vld [vmem:[#allocation33 + $0x1e8] sm:$0xff]
        %v6107 = vld [vmem:[#allocation33 + $0x1f0] sm:$0xff]
        %v6108 = vld [vmem:[#allocation33 + $0x1f8] sm:$0xff]
        %v6109 = vld [vmem:[#allocation33 + $0x200] sm:$0xff]
        %v6110 = vld [vmem:[#allocation33 + $0x208] sm:$0xff]
        %v6111 = vld [vmem:[#allocation33 + $0x210] sm:$0xff]
        %v6112 = vld [vmem:[#allocation33 + $0x218] sm:$0xff]
        %v6113 = vld [vmem:[#allocation33 + $0x220] sm:$0xff]
        %v6114 = vld [vmem:[#allocation33 + $0x228] sm:$0xff]
        %v6115 = vld [vmem:[#allocation33 + $0x230] sm:$0xff]
        %v6116 = vld [vmem:[#allocation33 + $0x238] sm:$0xff]
        %v6117 = vld [vmem:[#allocation33 + $0x240] sm:$0xff]
        %v6118 = vld [vmem:[#allocation33 + $0x248] sm:$0xff]
        %v6119 = vld [vmem:[#allocation33 + $0x250] sm:$0xff]
        %v6120 = vld [vmem:[#allocation33 + $0x258] sm:$0xff]
        %v6121 = vld [vmem:[#allocation33 + $0x260] sm:$0xff]
        %v6122 = vld [vmem:[#allocation33 + $0x268] sm:$0xff]
        %v6123 = vld [vmem:[#allocation33 + $0x270] sm:$0xff]
        %v6124 = vld [vmem:[#allocation33 + $0x278] sm:$0xff]
        %v6125 = vld [vmem:[#allocation33 + $0x280] sm:$0xff]
        %v6126 = vld [vmem:[#allocation33 + $0x288] sm:$0xff]
        %v6127 = vld [vmem:[#allocation33 + $0x290] sm:$0xff]
        %v6128 = vld [vmem:[#allocation33 + $0x298] sm:$0xff]
        %v6129 = vld [vmem:[#allocation33 + $0x2a0] sm:$0xff]
        %v6130 = vld [vmem:[#allocation33 + $0x2a8] sm:$0xff]
        %v6131 = vld [vmem:[#allocation33 + $0x2b0] sm:$0xff]
        %v6132 = vld [vmem:[#allocation33 + $0x2b8] sm:$0xff]
        %v6133 = vld [vmem:[#allocation33 + $0x2c0] sm:$0xff]
        %v6134 = vld [vmem:[#allocation33 + $0x2c8] sm:$0xff]
        %v6135 = vld [vmem:[#allocation33 + $0x2d0] sm:$0xff]
        %v6136 = vld [vmem:[#allocation33 + $0x2d8] sm:$0xff]
        %v6137 = vld [vmem:[#allocation33 + $0x2e0] sm:$0xff]
        %v6138 = vld [vmem:[#allocation33 + $0x2e8] sm:$0xff]
        %v6139 = vld [vmem:[#allocation33 + $0x2f0] sm:$0xff]
        %v6140 = vld [vmem:[#allocation33 + $0x2f8] sm:$0xff]
        %v6141 = vld [vmem:[#allocation33 + $0x300] sm:$0xff]
        %v6142 = vld [vmem:[#allocation33 + $0x308] sm:$0xff]
        %v6143 = vld [vmem:[#allocation33 + $0x310] sm:$0xff]
        %v6144 = vld [vmem:[#allocation33 + $0x318] sm:$0xff]
        %v6145 = vld [vmem:[#allocation33 + $0x320] sm:$0xff]
        %v6146 = vld [vmem:[#allocation33 + $0x328] sm:$0xff]
        %v6147 = vld [vmem:[#allocation33 + $0x330] sm:$0xff]
        %v6148 = vld [vmem:[#allocation33 + $0x338] sm:$0xff]
        %v6149 = vld [vmem:[#allocation33 + $0x340] sm:$0xff]
        %v6150 = vld [vmem:[#allocation33 + $0x348] sm:$0xff]
        %v6151 = vld [vmem:[#allocation33 + $0x350] sm:$0xff]
        %v6152 = vld [vmem:[#allocation33 + $0x358] sm:$0xff]
        %v6153 = vld [vmem:[#allocation33 + $0x360] sm:$0xff]
        %v6154 = vld [vmem:[#allocation33 + $0x368] sm:$0xff]
        %v6155 = vld [vmem:[#allocation33 + $0x370] sm:$0xff]
        %v6156 = vld [vmem:[#allocation33 + $0x378] sm:$0xff]
        %v6157 = vld [vmem:[#allocation33 + $0x380] sm:$0xff]
        %v6158 = vld [vmem:[#allocation33 + $0x388] sm:$0xff]
        %v6159 = vld [vmem:[#allocation33 + $0x390] sm:$0xff]
        %v6160 = vld [vmem:[#allocation33 + $0x398] sm:$0xff]
        %v6161 = vld [vmem:[#allocation33 + $0x3a0] sm:$0xff]
        %v6162 = vld [vmem:[#allocation33 + $0x3a8] sm:$0xff]
        %v6163 = vld [vmem:[#allocation33 + $0x3b0] sm:$0xff]
        %v6164 = vld [vmem:[#allocation33 + $0x3b8] sm:$0xff]
        %v6165 = vld [vmem:[#allocation33 + $0x3c0] sm:$0xff]
        %v6166 = vld [vmem:[#allocation33 + $0x3c8] sm:$0xff]
        %v6167 = vld [vmem:[#allocation33 + $0x3d0] sm:$0xff]
        %v6168 = vld [vmem:[#allocation33 + $0x3d8] sm:$0xff]
        %v6169 = vld [vmem:[#allocation33 + $0x3e0] sm:$0xff]
        %v6170 = vld [vmem:[#allocation33 + $0x3e8] sm:$0xff]
        %v6171 = vld [vmem:[#allocation33 + $0x3f0] sm:$0xff]
        %v6172 = vld [vmem:[#allocation33 + $0x3f8] sm:$0xff]
        %v6173 = vld [vmem:[#allocation9] sm:$0x80]
        %v6174 = vld [vmem:[#allocation9 + $0x8] sm:$0x80]
        %v6175 = vld [vmem:[#allocation9 + $0x10] sm:$0x1]
        %v6176 = vld [vmem:[#allocation9 + $0x18] sm:$0x1]
        %s6177 = scalar_lea.vmem [#allocation33], 1024
        %v6178 = vld [vmem:[%s6177] sm:$0xff]
        %v6179 = vld [vmem:[%s6177 + $0x8] sm:$0xff]
        %v6180 = vld [vmem:[%s6177 + $0x10] sm:$0xff]
        %v6181 = vld [vmem:[%s6177 + $0x18] sm:$0xff]
        %v6182 = vld [vmem:[%s6177 + $0x20] sm:$0xff]
        %v6183 = vld [vmem:[%s6177 + $0x28] sm:$0xff]
        %v6184 = vld [vmem:[%s6177 + $0x30] sm:$0xff]
        %v6185 = vld [vmem:[%s6177 + $0x38] sm:$0xff]
        %v6186 = vld [vmem:[%s6177 + $0x40] sm:$0xff]
        %v6187 = vld [vmem:[%s6177 + $0x48] sm:$0xff]
        %v6188 = vld [vmem:[%s6177 + $0x50] sm:$0xff]
        %v6189 = vld [vmem:[%s6177 + $0x58] sm:$0xff]
        %v6190 = vld [vmem:[%s6177 + $0x60] sm:$0xff]
        %v6191 = vld [vmem:[%s6177 + $0x68] sm:$0xff]
        %v6192 = vld [vmem:[%s6177 + $0x70] sm:$0xff]
        %v6193 = vld [vmem:[%s6177 + $0x78] sm:$0xff]
        %v6194 = vld [vmem:[%s6177 + $0x80] sm:$0xff]
        %v6195 = vld [vmem:[%s6177 + $0x88] sm:$0xff]
        %v6196 = vld [vmem:[%s6177 + $0x90] sm:$0xff]
        %v6197 = vld [vmem:[%s6177 + $0x98] sm:$0xff]
        %v6198 = vld [vmem:[%s6177 + $0xa0] sm:$0xff]
        %v6199 = vld [vmem:[%s6177 + $0xa8] sm:$0xff]
        %v6200 = vld [vmem:[%s6177 + $0xb0] sm:$0xff]
        %v6201 = vld [vmem:[%s6177 + $0xb8] sm:$0xff]
        %v6202 = vld [vmem:[%s6177 + $0xc0] sm:$0xff]
        %v6203 = vld [vmem:[%s6177 + $0xc8] sm:$0xff]
        %v6204 = vld [vmem:[%s6177 + $0xd0] sm:$0xff]
        %v6205 = vld [vmem:[%s6177 + $0xd8] sm:$0xff]
        %v6206 = vld [vmem:[%s6177 + $0xe0] sm:$0xff]
        %v6207 = vld [vmem:[%s6177 + $0xe8] sm:$0xff]
        %v6208 = vld [vmem:[%s6177 + $0xf0] sm:$0xff]
        %v6209 = vld [vmem:[%s6177 + $0xf8] sm:$0xff]
        %v6210 = vld [vmem:[%s6177 + $0x100] sm:$0xff]
        %v6211 = vld [vmem:[%s6177 + $0x108] sm:$0xff]
        %v6212 = vld [vmem:[%s6177 + $0x110] sm:$0xff]
        %v6213 = vld [vmem:[%s6177 + $0x118] sm:$0xff]
        %v6214 = vld [vmem:[%s6177 + $0x120] sm:$0xff]
        %v6215 = vld [vmem:[%s6177 + $0x128] sm:$0xff]
        %v6216 = vld [vmem:[%s6177 + $0x130] sm:$0xff]
        %v6217 = vld [vmem:[%s6177 + $0x138] sm:$0xff]
        %v6218 = vld [vmem:[%s6177 + $0x140] sm:$0xff]
        %v6219 = vld [vmem:[%s6177 + $0x148] sm:$0xff]
        %v6220 = vld [vmem:[%s6177 + $0x150] sm:$0xff]
        %v6221 = vld [vmem:[%s6177 + $0x158] sm:$0xff]
        %v6222 = vld [vmem:[%s6177 + $0x160] sm:$0xff]
        %v6223 = vld [vmem:[%s6177 + $0x168] sm:$0xff]
        %v6224 = vld [vmem:[%s6177 + $0x170] sm:$0xff]
        %v6225 = vld [vmem:[%s6177 + $0x178] sm:$0xff]
        %v6226 = vld [vmem:[%s6177 + $0x180] sm:$0xff]
        %v6227 = vld [vmem:[%s6177 + $0x188] sm:$0xff]
        %v6228 = vld [vmem:[%s6177 + $0x190] sm:$0xff]
        %v6229 = vld [vmem:[%s6177 + $0x198] sm:$0xff]
        %v6230 = vld [vmem:[%s6177 + $0x1a0] sm:$0xff]
        %v6231 = vld [vmem:[%s6177 + $0x1a8] sm:$0xff]
        %v6232 = vld [vmem:[%s6177 + $0x1b0] sm:$0xff]
        %v6233 = vld [vmem:[%s6177 + $0x1b8] sm:$0xff]
        %v6234 = vld [vmem:[%s6177 + $0x1c0] sm:$0xff]
        %v6235 = vld [vmem:[%s6177 + $0x1c8] sm:$0xff]
        %v6236 = vld [vmem:[%s6177 + $0x1d0] sm:$0xff]
        %v6237 = vld [vmem:[%s6177 + $0x1d8] sm:$0xff]
        %v6238 = vld [vmem:[%s6177 + $0x1e0] sm:$0xff]
        %v6239 = vld [vmem:[%s6177 + $0x1e8] sm:$0xff]
        %v6240 = vld [vmem:[%s6177 + $0x1f0] sm:$0xff]
        %v6241 = vld [vmem:[%s6177 + $0x1f8] sm:$0xff]
        %v6242 = vld [vmem:[%s6177 + $0x200] sm:$0xff]
        %v6243 = vld [vmem:[%s6177 + $0x208] sm:$0xff]
        %v6244 = vld [vmem:[%s6177 + $0x210] sm:$0xff]
        %v6245 = vld [vmem:[%s6177 + $0x218] sm:$0xff]
        %v6246 = vld [vmem:[%s6177 + $0x220] sm:$0xff]
        %v6247 = vld [vmem:[%s6177 + $0x228] sm:$0xff]
        %v6248 = vld [vmem:[%s6177 + $0x230] sm:$0xff]
        %v6249 = vld [vmem:[%s6177 + $0x238] sm:$0xff]
        %v6250 = vld [vmem:[%s6177 + $0x240] sm:$0xff]
        %v6251 = vld [vmem:[%s6177 + $0x248] sm:$0xff]
        %v6252 = vld [vmem:[%s6177 + $0x250] sm:$0xff]
        %v6253 = vld [vmem:[%s6177 + $0x258] sm:$0xff]
        %v6254 = vld [vmem:[%s6177 + $0x260] sm:$0xff]
        %v6255 = vld [vmem:[%s6177 + $0x268] sm:$0xff]
        %v6256 = vld [vmem:[%s6177 + $0x270] sm:$0xff]
        %v6257 = vld [vmem:[%s6177 + $0x278] sm:$0xff]
        %v6258 = vld [vmem:[%s6177 + $0x280] sm:$0xff]
        %v6259 = vld [vmem:[%s6177 + $0x288] sm:$0xff]
        %v6260 = vld [vmem:[%s6177 + $0x290] sm:$0xff]
        %v6261 = vld [vmem:[%s6177 + $0x298] sm:$0xff]
        %v6262 = vld [vmem:[%s6177 + $0x2a0] sm:$0xff]
        %v6263 = vld [vmem:[%s6177 + $0x2a8] sm:$0xff]
        %v6264 = vld [vmem:[%s6177 + $0x2b0] sm:$0xff]
        %v6265 = vld [vmem:[%s6177 + $0x2b8] sm:$0xff]
        %v6266 = vld [vmem:[%s6177 + $0x2c0] sm:$0xff]
        %v6267 = vld [vmem:[%s6177 + $0x2c8] sm:$0xff]
        %v6268 = vld [vmem:[%s6177 + $0x2d0] sm:$0xff]
        %v6269 = vld [vmem:[%s6177 + $0x2d8] sm:$0xff]
        %v6270 = vld [vmem:[%s6177 + $0x2e0] sm:$0xff]
        %v6271 = vld [vmem:[%s6177 + $0x2e8] sm:$0xff]
        %v6272 = vld [vmem:[%s6177 + $0x2f0] sm:$0xff]
        %v6273 = vld [vmem:[%s6177 + $0x2f8] sm:$0xff]
        %v6274 = vld [vmem:[%s6177 + $0x300] sm:$0xff]
        %v6275 = vld [vmem:[%s6177 + $0x308] sm:$0xff]
        %v6276 = vld [vmem:[%s6177 + $0x310] sm:$0xff]
        %v6277 = vld [vmem:[%s6177 + $0x318] sm:$0xff]
        %v6278 = vld [vmem:[%s6177 + $0x320] sm:$0xff]
        %v6279 = vld [vmem:[%s6177 + $0x328] sm:$0xff]
        %v6280 = vld [vmem:[%s6177 + $0x330] sm:$0xff]
        %v6281 = vld [vmem:[%s6177 + $0x338] sm:$0xff]
        %v6282 = vld [vmem:[%s6177 + $0x340] sm:$0xff]
        %v6283 = vld [vmem:[%s6177 + $0x348] sm:$0xff]
        %v6284 = vld [vmem:[%s6177 + $0x350] sm:$0xff]
        %v6285 = vld [vmem:[%s6177 + $0x358] sm:$0xff]
        %v6286 = vld [vmem:[%s6177 + $0x360] sm:$0xff]
        %v6287 = vld [vmem:[%s6177 + $0x368] sm:$0xff]
        %v6288 = vld [vmem:[%s6177 + $0x370] sm:$0xff]
        %v6289 = vld [vmem:[%s6177 + $0x378] sm:$0xff]
        %v6290 = vld [vmem:[%s6177 + $0x380] sm:$0xff]
        %v6291 = vld [vmem:[%s6177 + $0x388] sm:$0xff]
        %v6292 = vld [vmem:[%s6177 + $0x390] sm:$0xff]
        %v6293 = vld [vmem:[%s6177 + $0x398] sm:$0xff]
        %v6294 = vld [vmem:[%s6177 + $0x3a0] sm:$0xff]
        %v6295 = vld [vmem:[%s6177 + $0x3a8] sm:$0xff]
        %v6296 = vld [vmem:[%s6177 + $0x3b0] sm:$0xff]
        %v6297 = vld [vmem:[%s6177 + $0x3b8] sm:$0xff]
        %v6298 = vld [vmem:[%s6177 + $0x3c0] sm:$0xff]
        %v6299 = vld [vmem:[%s6177 + $0x3c8] sm:$0xff]
        %v6300 = vld [vmem:[%s6177 + $0x3d0] sm:$0xff]
        %v6301 = vld [vmem:[%s6177 + $0x3d8] sm:$0xff]
        %v6302 = vld [vmem:[%s6177 + $0x3e0] sm:$0xff]
        %v6303 = vld [vmem:[%s6177 + $0x3e8] sm:$0xff]
        %v6304 = vld [vmem:[%s6177 + $0x3f0] sm:$0xff]
        %v6305 = vld [vmem:[%s6177 + $0x3f8] sm:$0xff]
        %vm6310 = vcmask 1040384
        %v6311 = vrot.slane %v6173, 7
        %v6312 = vrot.slane %v6175, 7
        %v6313 = vsel %vm6310, %v6311, %v6312
        %v6314 = vrot.slane %v6174, 7
        %v6315 = vrot.slane %v6176, 7
        %v6316 = vsel %vm6310, %v6314, %v6315
        %6319 = vmatpush.msra.mxu0 %v6238
        %6320 = vmatpush.msra.mxu0 %v6234
        %6321 = vmatpush.msra.mxu0 %v6230
        %6322 = vmatpush.msra.mxu0 %v6226
        %6323 = vmatpush.msra.mxu0 %v6222
        %6324 = vmatpush.msra.mxu0 %v6218
        %6325 = vmatpush.msra.mxu0 %v6214
        %6326 = vmatpush.msra.mxu0 %v6210
        %6327 = vmatpush.msra.mxu0 %v6206
        %6328 = vmatpush.msra.mxu0 %v6202
        %6329 = vmatpush.msra.mxu0 %v6198
        %6330 = vmatpush.msra.mxu0 %v6194
        %6331 = vmatpush.msra.mxu0 %v6190
        %6332 = vmatpush.msra.mxu0 %v6186
        %6333 = vmatpush.msra.mxu0 %v6182
        %6334 = vmatpush.msra.mxu0 %v6178
        %6335 = vmatmul.f32.gmra.mxu0 %v6313
        %v6336 = vpop.f32.mrf.mxu0
        %v6337 = vadd.f32 0.0, %v6336
        %6338 = vdwg.mxu0
        %6339 = vmatpush.msra.mxu0 %v6302
        %6340 = vmatpush.msra.mxu0 %v6298
        %6341 = vmatpush.msra.mxu0 %v6294
        %6342 = vmatpush.msra.mxu0 %v6290
        %6343 = vmatpush.msra.mxu0 %v6286
        %6344 = vmatpush.msra.mxu0 %v6282
        %6345 = vmatpush.msra.mxu0 %v6278
        %6346 = vmatpush.msra.mxu0 %v6274
        %6347 = vmatpush.msra.mxu0 %v6270
        %6348 = vmatpush.msra.mxu0 %v6266
        %6349 = vmatpush.msra.mxu0 %v6262
        %6350 = vmatpush.msra.mxu0 %v6258
        %6351 = vmatpush.msra.mxu0 %v6254
        %6352 = vmatpush.msra.mxu0 %v6250
        %6353 = vmatpush.msra.mxu0 %v6246
        %6354 = vmatpush.msra.mxu0 %v6242
        %6355 = vmatmul.f32.gmra.mxu0 %v6316
        %v6356 = vpop.f32.mrf.mxu0
        %v6357 = vadd.f32 %v6337, %v6356
        %6358 = vdwg.mxu0
        %6359 = vmatpush.msra.mxu0 %v6239
        %6360 = vmatpush.msra.mxu0 %v6235
        %6361 = vmatpush.msra.mxu0 %v6231
        %6362 = vmatpush.msra.mxu0 %v6227
        %6363 = vmatpush.msra.mxu0 %v6223
        %6364 = vmatpush.msra.mxu0 %v6219
        %6365 = vmatpush.msra.mxu0 %v6215
        %6366 = vmatpush.msra.mxu0 %v6211
        %6367 = vmatpush.msra.mxu0 %v6207
        %6368 = vmatpush.msra.mxu0 %v6203
        %6369 = vmatpush.msra.mxu0 %v6199
        %6370 = vmatpush.msra.mxu0 %v6195
        %6371 = vmatpush.msra.mxu0 %v6191
        %6372 = vmatpush.msra.mxu0 %v6187
        %6373 = vmatpush.msra.mxu0 %v6183
        %6374 = vmatpush.msra.mxu0 %v6179
        %6375 = vmatmul.f32.gmra.mxu0 %v6313
        %v6376 = vpop.f32.mrf.mxu0
        %v6377 = vadd.f32 0.0, %v6376
        %6378 = vdwg.mxu0
        %6379 = vmatpush.msra.mxu0 %v6303
        %6380 = vmatpush.msra.mxu0 %v6299
        %6381 = vmatpush.msra.mxu0 %v6295
        %6382 = vmatpush.msra.mxu0 %v6291
        %6383 = vmatpush.msra.mxu0 %v6287
        %6384 = vmatpush.msra.mxu0 %v6283
        %6385 = vmatpush.msra.mxu0 %v6279
        %6386 = vmatpush.msra.mxu0 %v6275
        %6387 = vmatpush.msra.mxu0 %v6271
        %6388 = vmatpush.msra.mxu0 %v6267
        %6389 = vmatpush.msra.mxu0 %v6263
        %6390 = vmatpush.msra.mxu0 %v6259
        %6391 = vmatpush.msra.mxu0 %v6255
        %6392 = vmatpush.msra.mxu0 %v6251
        %6393 = vmatpush.msra.mxu0 %v6247
        %6394 = vmatpush.msra.mxu0 %v6243
        %6395 = vmatmul.f32.gmra.mxu0 %v6316
        %v6396 = vpop.f32.mrf.mxu0
        %v6397 = vadd.f32 %v6377, %v6396
        %6398 = vdwg.mxu0
        %6399 = vmatpush.msra.mxu0 %v6240
        %6400 = vmatpush.msra.mxu0 %v6236
        %6401 = vmatpush.msra.mxu0 %v6232
        %6402 = vmatpush.msra.mxu0 %v6228
        %6403 = vmatpush.msra.mxu0 %v6224
        %6404 = vmatpush.msra.mxu0 %v6220
        %6405 = vmatpush.msra.mxu0 %v6216
        %6406 = vmatpush.msra.mxu0 %v6212
        %6407 = vmatpush.msra.mxu0 %v6208
        %6408 = vmatpush.msra.mxu0 %v6204
        %6409 = vmatpush.msra.mxu0 %v6200
        %6410 = vmatpush.msra.mxu0 %v6196
        %6411 = vmatpush.msra.mxu0 %v6192
        %6412 = vmatpush.msra.mxu0 %v6188
        %6413 = vmatpush.msra.mxu0 %v6184
        %6414 = vmatpush.msra.mxu0 %v6180
        %6415 = vmatmul.f32.gmra.mxu0 %v6313
        %v6416 = vpop.f32.mrf.mxu0
        %v6417 = vadd.f32 0.0, %v6416
        %6418 = vdwg.mxu0
        %6419 = vmatpush.msra.mxu0 %v6304
        %6420 = vmatpush.msra.mxu0 %v6300
        %6421 = vmatpush.msra.mxu0 %v6296
        %6422 = vmatpush.msra.mxu0 %v6292
        %6423 = vmatpush.msra.mxu0 %v6288
        %6424 = vmatpush.msra.mxu0 %v6284
        %6425 = vmatpush.msra.mxu0 %v6280
        %6426 = vmatpush.msra.mxu0 %v6276
        %6427 = vmatpush.msra.mxu0 %v6272
        %6428 = vmatpush.msra.mxu0 %v6268
        %6429 = vmatpush.msra.mxu0 %v6264
        %6430 = vmatpush.msra.mxu0 %v6260
        %6431 = vmatpush.msra.mxu0 %v6256
        %6432 = vmatpush.msra.mxu0 %v6252
        %6433 = vmatpush.msra.mxu0 %v6248
        %6434 = vmatpush.msra.mxu0 %v6244
        %6435 = vmatmul.f32.gmra.mxu0 %v6316
        %v6436 = vpop.f32.mrf.mxu0
        %v6437 = vadd.f32 %v6417, %v6436
        %6438 = vdwg.mxu0
        %6439 = vmatpush.msra.mxu0 %v6241
        %6440 = vmatpush.msra.mxu0 %v6237
        %6441 = vmatpush.msra.mxu0 %v6233
        %6442 = vmatpush.msra.mxu0 %v6229
        %6443 = vmatpush.msra.mxu0 %v6225
        %6444 = vmatpush.msra.mxu0 %v6221
        %6445 = vmatpush.msra.mxu0 %v6217
        %6446 = vmatpush.msra.mxu0 %v6213
        %6447 = vmatpush.msra.mxu0 %v6209
        %6448 = vmatpush.msra.mxu0 %v6205
        %6449 = vmatpush.msra.mxu0 %v6201
        %6450 = vmatpush.msra.mxu0 %v6197
        %6451 = vmatpush.msra.mxu0 %v6193
        %6452 = vmatpush.msra.mxu0 %v6189
        %6453 = vmatpush.msra.mxu0 %v6185
        %6454 = vmatpush.msra.mxu0 %v6181
        %6455 = vmatmul.f32.gmra.mxu0 %v6313
        %v6456 = vpop.f32.mrf.mxu0
        %v6457 = vadd.f32 0.0, %v6456
        %6458 = vdwg.mxu0
        %6459 = vmatpush.msra.mxu0 %v6305
        %6460 = vmatpush.msra.mxu0 %v6301
        %6461 = vmatpush.msra.mxu0 %v6297
        %6462 = vmatpush.msra.mxu0 %v6293
        %6463 = vmatpush.msra.mxu0 %v6289
        %6464 = vmatpush.msra.mxu0 %v6285
        %6465 = vmatpush.msra.mxu0 %v6281
        %6466 = vmatpush.msra.mxu0 %v6277
        %6467 = vmatpush.msra.mxu0 %v6273
        %6468 = vmatpush.msra.mxu0 %v6269
        %6469 = vmatpush.msra.mxu0 %v6265
        %6470 = vmatpush.msra.mxu0 %v6261
        %6471 = vmatpush.msra.mxu0 %v6257
        %6472 = vmatpush.msra.mxu0 %v6253
        %6473 = vmatpush.msra.mxu0 %v6249
        %6474 = vmatpush.msra.mxu0 %v6245
        %6475 = vmatmul.f32.gmra.mxu0 %v6316
        %v6476 = vpop.f32.mrf.mxu0
        %v6477 = vadd.f32 %v6457, %v6476
        %6478 = vdwg.mxu0
        %v6481 = vrot.slane %v6043, 6
        %v6482 = vrot.slane %v6044, 6
        %6485 = vmatpush.msra.mxu0 %v6105
        %6486 = vmatpush.msra.mxu0 %v6101
        %6487 = vmatpush.msra.mxu0 %v6097
        %6488 = vmatpush.msra.mxu0 %v6093
        %6489 = vmatpush.msra.mxu0 %v6089
        %6490 = vmatpush.msra.mxu0 %v6085
        %6491 = vmatpush.msra.mxu0 %v6081
        %6492 = vmatpush.msra.mxu0 %v6077
        %6493 = vmatpush.msra.mxu0 %v6073
        %6494 = vmatpush.msra.mxu0 %v6069
        %6495 = vmatpush.msra.mxu0 %v6065
        %6496 = vmatpush.msra.mxu0 %v6061
        %6497 = vmatpush.msra.mxu0 %v6057
        %6498 = vmatpush.msra.mxu0 %v6053
        %6499 = vmatpush.msra.mxu0 %v6049
        %6500 = vmatpush.msra.mxu0 %v6045
        %6501 = vmatmul.f32.gmra.mxu0 %v6481
        %v6502 = vpop.f32.mrf.mxu0
        %v6503 = vadd.f32 %v6357, %v6502
        %6504 = vdwg.mxu0
        %6505 = vmatpush.msra.mxu0 %v6169
        %6506 = vmatpush.msra.mxu0 %v6165
        %6507 = vmatpush.msra.mxu0 %v6161
        %6508 = vmatpush.msra.mxu0 %v6157
        %6509 = vmatpush.msra.mxu0 %v6153
        %6510 = vmatpush.msra.mxu0 %v6149
        %6511 = vmatpush.msra.mxu0 %v6145
        %6512 = vmatpush.msra.mxu0 %v6141
        %6513 = vmatpush.msra.mxu0 %v6137
        %6514 = vmatpush.msra.mxu0 %v6133
        %6515 = vmatpush.msra.mxu0 %v6129
        %6516 = vmatpush.msra.mxu0 %v6125
        %6517 = vmatpush.msra.mxu0 %v6121
        %6518 = vmatpush.msra.mxu0 %v6117
        %6519 = vmatpush.msra.mxu0 %v6113
        %6520 = vmatpush.msra.mxu0 %v6109
        %6521 = vmatmul.f32.gmra.mxu0 %v6482
        %v6522 = vpop.f32.mrf.mxu0
        %v6523 = vadd.f32 %v6503, %v6522
        %6524 = vdwg.mxu0
        %6525 = vmatpush.msra.mxu0 %v6106
        %6526 = vmatpush.msra.mxu0 %v6102
        %6527 = vmatpush.msra.mxu0 %v6098
        %6528 = vmatpush.msra.mxu0 %v6094
        %6529 = vmatpush.msra.mxu0 %v6090
        %6530 = vmatpush.msra.mxu0 %v6086
        %6531 = vmatpush.msra.mxu0 %v6082
        %6532 = vmatpush.msra.mxu0 %v6078
        %6533 = vmatpush.msra.mxu0 %v6074
        %6534 = vmatpush.msra.mxu0 %v6070
        %6535 = vmatpush.msra.mxu0 %v6066
        %6536 = vmatpush.msra.mxu0 %v6062
        %6537 = vmatpush.msra.mxu0 %v6058
        %6538 = vmatpush.msra.mxu0 %v6054
        %6539 = vmatpush.msra.mxu0 %v6050
        %6540 = vmatpush.msra.mxu0 %v6046
        %6541 = vmatmul.f32.gmra.mxu0 %v6481
        %v6542 = vpop.f32.mrf.mxu0
        %v6543 = vadd.f32 %v6397, %v6542
        %6544 = vdwg.mxu0
        %6545 = vmatpush.msra.mxu0 %v6170
        %6546 = vmatpush.msra.mxu0 %v6166
        %6547 = vmatpush.msra.mxu0 %v6162
        %6548 = vmatpush.msra.mxu0 %v6158
        %6549 = vmatpush.msra.mxu0 %v6154
        %6550 = vmatpush.msra.mxu0 %v6150
        %6551 = vmatpush.msra.mxu0 %v6146
        %6552 = vmatpush.msra.mxu0 %v6142
        %6553 = vmatpush.msra.mxu0 %v6138
        %6554 = vmatpush.msra.mxu0 %v6134
        %6555 = vmatpush.msra.mxu0 %v6130
        %6556 = vmatpush.msra.mxu0 %v6126
        %6557 = vmatpush.msra.mxu0 %v6122
        %6558 = vmatpush.msra.mxu0 %v6118
        %6559 = vmatpush.msra.mxu0 %v6114
        %6560 = vmatpush.msra.mxu0 %v6110
        %6561 = vmatmul.f32.gmra.mxu0 %v6482
        %v6562 = vpop.f32.mrf.mxu0
        %v6563 = vadd.f32 %v6543, %v6562
        %6564 = vdwg.mxu0
        %6565 = vmatpush.msra.mxu0 %v6107
        %6566 = vmatpush.msra.mxu0 %v6103
        %6567 = vmatpush.msra.mxu0 %v6099
        %6568 = vmatpush.msra.mxu0 %v6095
        %6569 = vmatpush.msra.mxu0 %v6091
        %6570 = vmatpush.msra.mxu0 %v6087
        %6571 = vmatpush.msra.mxu0 %v6083
        %6572 = vmatpush.msra.mxu0 %v6079
        %6573 = vmatpush.msra.mxu0 %v6075
        %6574 = vmatpush.msra.mxu0 %v6071
        %6575 = vmatpush.msra.mxu0 %v6067
        %6576 = vmatpush.msra.mxu0 %v6063
        %6577 = vmatpush.msra.mxu0 %v6059
        %6578 = vmatpush.msra.mxu0 %v6055
        %6579 = vmatpush.msra.mxu0 %v6051
        %6580 = vmatpush.msra.mxu0 %v6047
        %6581 = vmatmul.f32.gmra.mxu0 %v6481
        %v6582 = vpop.f32.mrf.mxu0
        %v6583 = vadd.f32 %v6437, %v6582
        %6584 = vdwg.mxu0
        %6585 = vmatpush.msra.mxu0 %v6171
        %6586 = vmatpush.msra.mxu0 %v6167
        %6587 = vmatpush.msra.mxu0 %v6163
        %6588 = vmatpush.msra.mxu0 %v6159
        %6589 = vmatpush.msra.mxu0 %v6155
        %6590 = vmatpush.msra.mxu0 %v6151
        %6591 = vmatpush.msra.mxu0 %v6147
        %6592 = vmatpush.msra.mxu0 %v6143
        %6593 = vmatpush.msra.mxu0 %v6139
        %6594 = vmatpush.msra.mxu0 %v6135
        %6595 = vmatpush.msra.mxu0 %v6131
        %6596 = vmatpush.msra.mxu0 %v6127
        %6597 = vmatpush.msra.mxu0 %v6123
        %6598 = vmatpush.msra.mxu0 %v6119
        %6599 = vmatpush.msra.mxu0 %v6115
        %6600 = vmatpush.msra.mxu0 %v6111
        %6601 = vmatmul.f32.gmra.mxu0 %v6482
        %v6602 = vpop.f32.mrf.mxu0
        %v6603 = vadd.f32 %v6583, %v6602
        %6604 = vdwg.mxu0
        %6605 = vmatpush.msra.mxu0 %v6108
        %6606 = vmatpush.msra.mxu0 %v6104
        %6607 = vmatpush.msra.mxu0 %v6100
        %6608 = vmatpush.msra.mxu0 %v6096
        %6609 = vmatpush.msra.mxu0 %v6092
        %6610 = vmatpush.msra.mxu0 %v6088
        %6611 = vmatpush.msra.mxu0 %v6084
        %6612 = vmatpush.msra.mxu0 %v6080
        %6613 = vmatpush.msra.mxu0 %v6076
        %6614 = vmatpush.msra.mxu0 %v6072
        %6615 = vmatpush.msra.mxu0 %v6068
        %6616 = vmatpush.msra.mxu0 %v6064
        %6617 = vmatpush.msra.mxu0 %v6060
        %6618 = vmatpush.msra.mxu0 %v6056
        %6619 = vmatpush.msra.mxu0 %v6052
        %6620 = vmatpush.msra.mxu0 %v6048
        %6621 = vmatmul.f32.gmra.mxu0 %v6481
        %v6622 = vpop.f32.mrf.mxu0
        %v6623 = vadd.f32 %v6477, %v6622
        %6624 = vdwg.mxu0
        %6625 = vmatpush.msra.mxu0 %v6172
        %6626 = vmatpush.msra.mxu0 %v6168
        %6627 = vmatpush.msra.mxu0 %v6164
        %6628 = vmatpush.msra.mxu0 %v6160
        %6629 = vmatpush.msra.mxu0 %v6156
        %6630 = vmatpush.msra.mxu0 %v6152
        %6631 = vmatpush.msra.mxu0 %v6148
        %6632 = vmatpush.msra.mxu0 %v6144
        %6633 = vmatpush.msra.mxu0 %v6140
        %6634 = vmatpush.msra.mxu0 %v6136
        %6635 = vmatpush.msra.mxu0 %v6132
        %6636 = vmatpush.msra.mxu0 %v6128
        %6637 = vmatpush.msra.mxu0 %v6124
        %6638 = vmatpush.msra.mxu0 %v6120
        %6639 = vmatpush.msra.mxu0 %v6116
        %6640 = vmatpush.msra.mxu0 %v6112
        %6641 = vmatmul.f32.gmra.mxu0 %v6482
        %v6642 = vpop.f32.mrf.mxu0
        %v6643 = vadd.f32 %v6623, %v6642
        %6644 = vdwg.mxu0
        %v6645 = vld [vmem:[#allocation9 + $0x10] sm:$0x3]
        %v6646 = vld [vmem:[#allocation9 + $0x18] sm:$0x3]
        %s6647 = scalar_lea.vmem [#allocation33], 2048
        %v6648 = vld [vmem:[%s6647] sm:$0xff]
        %v6649 = vld [vmem:[%s6647 + $0x8] sm:$0xff]
        %v6650 = vld [vmem:[%s6647 + $0x10] sm:$0xff]
        %v6651 = vld [vmem:[%s6647 + $0x18] sm:$0xff]
        %v6652 = vld [vmem:[%s6647 + $0x20] sm:$0xff]
        %v6653 = vld [vmem:[%s6647 + $0x28] sm:$0xff]
        %v6654 = vld [vmem:[%s6647 + $0x30] sm:$0xff]
        %v6655 = vld [vmem:[%s6647 + $0x38] sm:$0xff]
        %v6656 = vld [vmem:[%s6647 + $0x40] sm:$0xff]
        %v6657 = vld [vmem:[%s6647 + $0x48] sm:$0xff]
        %v6658 = vld [vmem:[%s6647 + $0x50] sm:$0xff]
        %v6659 = vld [vmem:[%s6647 + $0x58] sm:$0xff]
        %v6660 = vld [vmem:[%s6647 + $0x60] sm:$0xff]
        %v6661 = vld [vmem:[%s6647 + $0x68] sm:$0xff]
        %v6662 = vld [vmem:[%s6647 + $0x70] sm:$0xff]
        %v6663 = vld [vmem:[%s6647 + $0x78] sm:$0xff]
        %v6664 = vld [vmem:[%s6647 + $0x80] sm:$0xff]
        %v6665 = vld [vmem:[%s6647 + $0x88] sm:$0xff]
        %v6666 = vld [vmem:[%s6647 + $0x90] sm:$0xff]
        %v6667 = vld [vmem:[%s6647 + $0x98] sm:$0xff]
        %v6668 = vld [vmem:[%s6647 + $0xa0] sm:$0xff]
        %v6669 = vld [vmem:[%s6647 + $0xa8] sm:$0xff]
        %v6670 = vld [vmem:[%s6647 + $0xb0] sm:$0xff]
        %v6671 = vld [vmem:[%s6647 + $0xb8] sm:$0xff]
        %v6672 = vld [vmem:[%s6647 + $0xc0] sm:$0xff]
        %v6673 = vld [vmem:[%s6647 + $0xc8] sm:$0xff]
        %v6674 = vld [vmem:[%s6647 + $0xd0] sm:$0xff]
        %v6675 = vld [vmem:[%s6647 + $0xd8] sm:$0xff]
        %v6676 = vld [vmem:[%s6647 + $0xe0] sm:$0xff]
        %v6677 = vld [vmem:[%s6647 + $0xe8] sm:$0xff]
        %v6678 = vld [vmem:[%s6647 + $0xf0] sm:$0xff]
        %v6679 = vld [vmem:[%s6647 + $0xf8] sm:$0xff]
        %v6680 = vld [vmem:[%s6647 + $0x100] sm:$0xff]
        %v6681 = vld [vmem:[%s6647 + $0x108] sm:$0xff]
        %v6682 = vld [vmem:[%s6647 + $0x110] sm:$0xff]
        %v6683 = vld [vmem:[%s6647 + $0x118] sm:$0xff]
        %v6684 = vld [vmem:[%s6647 + $0x120] sm:$0xff]
        %v6685 = vld [vmem:[%s6647 + $0x128] sm:$0xff]
        %v6686 = vld [vmem:[%s6647 + $0x130] sm:$0xff]
        %v6687 = vld [vmem:[%s6647 + $0x138] sm:$0xff]
        %v6688 = vld [vmem:[%s6647 + $0x140] sm:$0xff]
        %v6689 = vld [vmem:[%s6647 + $0x148] sm:$0xff]
        %v6690 = vld [vmem:[%s6647 + $0x150] sm:$0xff]
        %v6691 = vld [vmem:[%s6647 + $0x158] sm:$0xff]
        %v6692 = vld [vmem:[%s6647 + $0x160] sm:$0xff]
        %v6693 = vld [vmem:[%s6647 + $0x168] sm:$0xff]
        %v6694 = vld [vmem:[%s6647 + $0x170] sm:$0xff]
        %v6695 = vld [vmem:[%s6647 + $0x178] sm:$0xff]
        %v6696 = vld [vmem:[%s6647 + $0x180] sm:$0xff]
        %v6697 = vld [vmem:[%s6647 + $0x188] sm:$0xff]
        %v6698 = vld [vmem:[%s6647 + $0x190] sm:$0xff]
        %v6699 = vld [vmem:[%s6647 + $0x198] sm:$0xff]
        %v6700 = vld [vmem:[%s6647 + $0x1a0] sm:$0xff]
        %v6701 = vld [vmem:[%s6647 + $0x1a8] sm:$0xff]
        %v6702 = vld [vmem:[%s6647 + $0x1b0] sm:$0xff]
        %v6703 = vld [vmem:[%s6647 + $0x1b8] sm:$0xff]
        %v6704 = vld [vmem:[%s6647 + $0x1c0] sm:$0xff]
        %v6705 = vld [vmem:[%s6647 + $0x1c8] sm:$0xff]
        %v6706 = vld [vmem:[%s6647 + $0x1d0] sm:$0xff]
        %v6707 = vld [vmem:[%s6647 + $0x1d8] sm:$0xff]
        %v6708 = vld [vmem:[%s6647 + $0x1e0] sm:$0xff]
        %v6709 = vld [vmem:[%s6647 + $0x1e8] sm:$0xff]
        %v6710 = vld [vmem:[%s6647 + $0x1f0] sm:$0xff]
        %v6711 = vld [vmem:[%s6647 + $0x1f8] sm:$0xff]
        %v6712 = vld [vmem:[%s6647 + $0x200] sm:$0xff]
        %v6713 = vld [vmem:[%s6647 + $0x208] sm:$0xff]
        %v6714 = vld [vmem:[%s6647 + $0x210] sm:$0xff]
        %v6715 = vld [vmem:[%s6647 + $0x218] sm:$0xff]
        %v6716 = vld [vmem:[%s6647 + $0x220] sm:$0xff]
        %v6717 = vld [vmem:[%s6647 + $0x228] sm:$0xff]
        %v6718 = vld [vmem:[%s6647 + $0x230] sm:$0xff]
        %v6719 = vld [vmem:[%s6647 + $0x238] sm:$0xff]
        %v6720 = vld [vmem:[%s6647 + $0x240] sm:$0xff]
        %v6721 = vld [vmem:[%s6647 + $0x248] sm:$0xff]
        %v6722 = vld [vmem:[%s6647 + $0x250] sm:$0xff]
        %v6723 = vld [vmem:[%s6647 + $0x258] sm:$0xff]
        %v6724 = vld [vmem:[%s6647 + $0x260] sm:$0xff]
        %v6725 = vld [vmem:[%s6647 + $0x268] sm:$0xff]
        %v6726 = vld [vmem:[%s6647 + $0x270] sm:$0xff]
        %v6727 = vld [vmem:[%s6647 + $0x278] sm:$0xff]
        %v6728 = vld [vmem:[%s6647 + $0x280] sm:$0xff]
        %v6729 = vld [vmem:[%s6647 + $0x288] sm:$0xff]
        %v6730 = vld [vmem:[%s6647 + $0x290] sm:$0xff]
        %v6731 = vld [vmem:[%s6647 + $0x298] sm:$0xff]
        %v6732 = vld [vmem:[%s6647 + $0x2a0] sm:$0xff]
        %v6733 = vld [vmem:[%s6647 + $0x2a8] sm:$0xff]
        %v6734 = vld [vmem:[%s6647 + $0x2b0] sm:$0xff]
        %v6735 = vld [vmem:[%s6647 + $0x2b8] sm:$0xff]
        %v6736 = vld [vmem:[%s6647 + $0x2c0] sm:$0xff]
        %v6737 = vld [vmem:[%s6647 + $0x2c8] sm:$0xff]
        %v6738 = vld [vmem:[%s6647 + $0x2d0] sm:$0xff]
        %v6739 = vld [vmem:[%s6647 + $0x2d8] sm:$0xff]
        %v6740 = vld [vmem:[%s6647 + $0x2e0] sm:$0xff]
        %v6741 = vld [vmem:[%s6647 + $0x2e8] sm:$0xff]
        %v6742 = vld [vmem:[%s6647 + $0x2f0] sm:$0xff]
        %v6743 = vld [vmem:[%s6647 + $0x2f8] sm:$0xff]
        %v6744 = vld [vmem:[%s6647 + $0x300] sm:$0xff]
        %v6745 = vld [vmem:[%s6647 + $0x308] sm:$0xff]
        %v6746 = vld [vmem:[%s6647 + $0x310] sm:$0xff]
        %v6747 = vld [vmem:[%s6647 + $0x318] sm:$0xff]
        %v6748 = vld [vmem:[%s6647 + $0x320] sm:$0xff]
        %v6749 = vld [vmem:[%s6647 + $0x328] sm:$0xff]
        %v6750 = vld [vmem:[%s6647 + $0x330] sm:$0xff]
        %v6751 = vld [vmem:[%s6647 + $0x338] sm:$0xff]
        %v6752 = vld [vmem:[%s6647 + $0x340] sm:$0xff]
        %v6753 = vld [vmem:[%s6647 + $0x348] sm:$0xff]
        %v6754 = vld [vmem:[%s6647 + $0x350] sm:$0xff]
        %v6755 = vld [vmem:[%s6647 + $0x358] sm:$0xff]
        %v6756 = vld [vmem:[%s6647 + $0x360] sm:$0xff]
        %v6757 = vld [vmem:[%s6647 + $0x368] sm:$0xff]
        %v6758 = vld [vmem:[%s6647 + $0x370] sm:$0xff]
        %v6759 = vld [vmem:[%s6647 + $0x378] sm:$0xff]
        %v6760 = vld [vmem:[%s6647 + $0x380] sm:$0xff]
        %v6761 = vld [vmem:[%s6647 + $0x388] sm:$0xff]
        %v6762 = vld [vmem:[%s6647 + $0x390] sm:$0xff]
        %v6763 = vld [vmem:[%s6647 + $0x398] sm:$0xff]
        %v6764 = vld [vmem:[%s6647 + $0x3a0] sm:$0xff]
        %v6765 = vld [vmem:[%s6647 + $0x3a8] sm:$0xff]
        %v6766 = vld [vmem:[%s6647 + $0x3b0] sm:$0xff]
        %v6767 = vld [vmem:[%s6647 + $0x3b8] sm:$0xff]
        %v6768 = vld [vmem:[%s6647 + $0x3c0] sm:$0xff]
        %v6769 = vld [vmem:[%s6647 + $0x3c8] sm:$0xff]
        %v6770 = vld [vmem:[%s6647 + $0x3d0] sm:$0xff]
        %v6771 = vld [vmem:[%s6647 + $0x3d8] sm:$0xff]
        %v6772 = vld [vmem:[%s6647 + $0x3e0] sm:$0xff]
        %v6773 = vld [vmem:[%s6647 + $0x3e8] sm:$0xff]
        %v6774 = vld [vmem:[%s6647 + $0x3f0] sm:$0xff]
        %v6775 = vld [vmem:[%s6647 + $0x3f8] sm:$0xff]
        %6776 = vmatpush.msra.mxu0 %v6708
        %6777 = vmatpush.msra.mxu0 %v6704
        %6778 = vmatpush.msra.mxu0 %v6700
        %6779 = vmatpush.msra.mxu0 %v6696
        %6780 = vmatpush.msra.mxu0 %v6692
        %6781 = vmatpush.msra.mxu0 %v6688
        %6782 = vmatpush.msra.mxu0 %v6684
        %6783 = vmatpush.msra.mxu0 %v6680
        %6784 = vmatpush.msra.mxu0 %v6676
        %6785 = vmatpush.msra.mxu0 %v6672
        %6786 = vmatpush.msra.mxu0 %v6668
        %6787 = vmatpush.msra.mxu0 %v6664
        %6788 = vmatpush.msra.mxu0 %v6660
        %6789 = vmatpush.msra.mxu0 %v6656
        %6790 = vmatpush.msra.mxu0 %v6652
        %6791 = vmatpush.msra.mxu0 %v6648
        %6792 = vmatmul.f32.gmra.mxu0 %v6645
        %v6793 = vpop.f32.mrf.mxu0
        %v6794 = vadd.f32 0.0, %v6793
        %6795 = vdwg.mxu0
        %6796 = vmatpush.msra.mxu0 %v6772
        %6797 = vmatpush.msra.mxu0 %v6768
        %6798 = vmatpush.msra.mxu0 %v6764
        %6799 = vmatpush.msra.mxu0 %v6760
        %6800 = vmatpush.msra.mxu0 %v6756
        %6801 = vmatpush.msra.mxu0 %v6752
        %6802 = vmatpush.msra.mxu0 %v6748
        %6803 = vmatpush.msra.mxu0 %v6744
        %6804 = vmatpush.msra.mxu0 %v6740
        %6805 = vmatpush.msra.mxu0 %v6736
        %6806 = vmatpush.msra.mxu0 %v6732
        %6807 = vmatpush.msra.mxu0 %v6728
        %6808 = vmatpush.msra.mxu0 %v6724
        %6809 = vmatpush.msra.mxu0 %v6720
        %6810 = vmatpush.msra.mxu0 %v6716
        %6811 = vmatpush.msra.mxu0 %v6712
        %6812 = vmatmul.f32.gmra.mxu0 %v6646
        %v6813 = vpop.f32.mrf.mxu0
        %v6814 = vadd.f32 %v6794, %v6813
        %6815 = vdwg.mxu0
        %6816 = vmatpush.msra.mxu0 %v6709
        %6817 = vmatpush.msra.mxu0 %v6705
        %6818 = vmatpush.msra.mxu0 %v6701
        %6819 = vmatpush.msra.mxu0 %v6697
        %6820 = vmatpush.msra.mxu0 %v6693
        %6821 = vmatpush.msra.mxu0 %v6689
        %6822 = vmatpush.msra.mxu0 %v6685
        %6823 = vmatpush.msra.mxu0 %v6681
        %6824 = vmatpush.msra.mxu0 %v6677
        %6825 = vmatpush.msra.mxu0 %v6673
        %6826 = vmatpush.msra.mxu0 %v6669
        %6827 = vmatpush.msra.mxu0 %v6665
        %6828 = vmatpush.msra.mxu0 %v6661
        %6829 = vmatpush.msra.mxu0 %v6657
        %6830 = vmatpush.msra.mxu0 %v6653
        %6831 = vmatpush.msra.mxu0 %v6649
        %6832 = vmatmul.f32.gmra.mxu0 %v6645
        %v6833 = vpop.f32.mrf.mxu0
        %v6834 = vadd.f32 0.0, %v6833
        %6835 = vdwg.mxu0
        %6836 = vmatpush.msra.mxu0 %v6773
        %6837 = vmatpush.msra.mxu0 %v6769
        %6838 = vmatpush.msra.mxu0 %v6765
        %6839 = vmatpush.msra.mxu0 %v6761
        %6840 = vmatpush.msra.mxu0 %v6757
        %6841 = vmatpush.msra.mxu0 %v6753
        %6842 = vmatpush.msra.mxu0 %v6749
        %6843 = vmatpush.msra.mxu0 %v6745
        %6844 = vmatpush.msra.mxu0 %v6741
        %6845 = vmatpush.msra.mxu0 %v6737
        %6846 = vmatpush.msra.mxu0 %v6733
        %6847 = vmatpush.msra.mxu0 %v6729
        %6848 = vmatpush.msra.mxu0 %v6725
        %6849 = vmatpush.msra.mxu0 %v6721
        %6850 = vmatpush.msra.mxu0 %v6717
        %6851 = vmatpush.msra.mxu0 %v6713
        %6852 = vmatmul.f32.gmra.mxu0 %v6646
        %v6853 = vpop.f32.mrf.mxu0
        %v6854 = vadd.f32 %v6834, %v6853
        %6855 = vdwg.mxu0
        %6856 = vmatpush.msra.mxu0 %v6710
        %6857 = vmatpush.msra.mxu0 %v6706
        %6858 = vmatpush.msra.mxu0 %v6702
        %6859 = vmatpush.msra.mxu0 %v6698
        %6860 = vmatpush.msra.mxu0 %v6694
        %6861 = vmatpush.msra.mxu0 %v6690
        %6862 = vmatpush.msra.mxu0 %v6686
        %6863 = vmatpush.msra.mxu0 %v6682
        %6864 = vmatpush.msra.mxu0 %v6678
        %6865 = vmatpush.msra.mxu0 %v6674
        %6866 = vmatpush.msra.mxu0 %v6670
        %6867 = vmatpush.msra.mxu0 %v6666
        %6868 = vmatpush.msra.mxu0 %v6662
        %6869 = vmatpush.msra.mxu0 %v6658
        %6870 = vmatpush.msra.mxu0 %v6654
        %6871 = vmatpush.msra.mxu0 %v6650
        %6872 = vmatmul.f32.gmra.mxu0 %v6645
        %v6873 = vpop.f32.mrf.mxu0
        %v6874 = vadd.f32 0.0, %v6873
        %6875 = vdwg.mxu0
        %6876 = vmatpush.msra.mxu0 %v6774
        %6877 = vmatpush.msra.mxu0 %v6770
        %6878 = vmatpush.msra.mxu0 %v6766
        %6879 = vmatpush.msra.mxu0 %v6762
        %6880 = vmatpush.msra.mxu0 %v6758
        %6881 = vmatpush.msra.mxu0 %v6754
        %6882 = vmatpush.msra.mxu0 %v6750
        %6883 = vmatpush.msra.mxu0 %v6746
        %6884 = vmatpush.msra.mxu0 %v6742
        %6885 = vmatpush.msra.mxu0 %v6738
        %6886 = vmatpush.msra.mxu0 %v6734
        %6887 = vmatpush.msra.mxu0 %v6730
        %6888 = vmatpush.msra.mxu0 %v6726
        %6889 = vmatpush.msra.mxu0 %v6722
        %6890 = vmatpush.msra.mxu0 %v6718
        %6891 = vmatpush.msra.mxu0 %v6714
        %6892 = vmatmul.f32.gmra.mxu0 %v6646
        %v6893 = vpop.f32.mrf.mxu0
        %v6894 = vadd.f32 %v6874, %v6893
        %6895 = vdwg.mxu0
        %6896 = vmatpush.msra.mxu0 %v6711
        %6897 = vmatpush.msra.mxu0 %v6707
        %6898 = vmatpush.msra.mxu0 %v6703
        %6899 = vmatpush.msra.mxu0 %v6699
        %6900 = vmatpush.msra.mxu0 %v6695
        %6901 = vmatpush.msra.mxu0 %v6691
        %6902 = vmatpush.msra.mxu0 %v6687
        %6903 = vmatpush.msra.mxu0 %v6683
        %6904 = vmatpush.msra.mxu0 %v6679
        %6905 = vmatpush.msra.mxu0 %v6675
        %6906 = vmatpush.msra.mxu0 %v6671
        %6907 = vmatpush.msra.mxu0 %v6667
        %6908 = vmatpush.msra.mxu0 %v6663
        %6909 = vmatpush.msra.mxu0 %v6659
        %6910 = vmatpush.msra.mxu0 %v6655
        %6911 = vmatpush.msra.mxu0 %v6651
        %6912 = vmatmul.f32.gmra.mxu0 %v6645
        %v6913 = vpop.f32.mrf.mxu0
        %v6914 = vadd.f32 0.0, %v6913
        %6915 = vdwg.mxu0
        %6916 = vmatpush.msra.mxu0 %v6775
        %6917 = vmatpush.msra.mxu0 %v6771
        %6918 = vmatpush.msra.mxu0 %v6767
        %6919 = vmatpush.msra.mxu0 %v6763
        %6920 = vmatpush.msra.mxu0 %v6759
        %6921 = vmatpush.msra.mxu0 %v6755
        %6922 = vmatpush.msra.mxu0 %v6751
        %6923 = vmatpush.msra.mxu0 %v6747
        %6924 = vmatpush.msra.mxu0 %v6743
        %6925 = vmatpush.msra.mxu0 %v6739
        %6926 = vmatpush.msra.mxu0 %v6735
        %6927 = vmatpush.msra.mxu0 %v6731
        %6928 = vmatpush.msra.mxu0 %v6727
        %6929 = vmatpush.msra.mxu0 %v6723
        %6930 = vmatpush.msra.mxu0 %v6719
        %6931 = vmatpush.msra.mxu0 %v6715
        %6932 = vmatmul.f32.gmra.mxu0 %v6646
        %v6933 = vpop.f32.mrf.mxu0
        %v6934 = vadd.f32 %v6914, %v6933
        %6935 = vdwg.mxu0
        %v6936 = vadd.f32 %v6523, %v6814
        %v6937 = vadd.f32 %v6563, %v6854
        %v6938 = vadd.f32 %v6603, %v6894
        %v6939 = vadd.f32 %v6643, %v6934
        %v6940 = vld [vmem:[#allocation9 + $0x10] sm:$0x6]
        %v6941 = vld [vmem:[#allocation9 + $0x18] sm:$0x6]
        %s6942 = scalar_lea.vmem [#allocation33], 3072
        %v6943 = vld [vmem:[%s6942] sm:$0xff]
        %v6944 = vld [vmem:[%s6942 + $0x8] sm:$0xff]
        %v6945 = vld [vmem:[%s6942 + $0x10] sm:$0xff]
        %v6946 = vld [vmem:[%s6942 + $0x18] sm:$0xff]
        %v6947 = vld [vmem:[%s6942 + $0x20] sm:$0xff]
        %v6948 = vld [vmem:[%s6942 + $0x28] sm:$0xff]
        %v6949 = vld [vmem:[%s6942 + $0x30] sm:$0xff]
        %v6950 = vld [vmem:[%s6942 + $0x38] sm:$0xff]
        %v6951 = vld [vmem:[%s6942 + $0x40] sm:$0xff]
        %v6952 = vld [vmem:[%s6942 + $0x48] sm:$0xff]
        %v6953 = vld [vmem:[%s6942 + $0x50] sm:$0xff]
        %v6954 = vld [vmem:[%s6942 + $0x58] sm:$0xff]
        %v6955 = vld [vmem:[%s6942 + $0x60] sm:$0xff]
        %v6956 = vld [vmem:[%s6942 + $0x68] sm:$0xff]
        %v6957 = vld [vmem:[%s6942 + $0x70] sm:$0xff]
        %v6958 = vld [vmem:[%s6942 + $0x78] sm:$0xff]
        %v6959 = vld [vmem:[%s6942 + $0x80] sm:$0xff]
        %v6960 = vld [vmem:[%s6942 + $0x88] sm:$0xff]
        %v6961 = vld [vmem:[%s6942 + $0x90] sm:$0xff]
        %v6962 = vld [vmem:[%s6942 + $0x98] sm:$0xff]
        %v6963 = vld [vmem:[%s6942 + $0xa0] sm:$0xff]
        %v6964 = vld [vmem:[%s6942 + $0xa8] sm:$0xff]
        %v6965 = vld [vmem:[%s6942 + $0xb0] sm:$0xff]
        %v6966 = vld [vmem:[%s6942 + $0xb8] sm:$0xff]
        %v6967 = vld [vmem:[%s6942 + $0xc0] sm:$0xff]
        %v6968 = vld [vmem:[%s6942 + $0xc8] sm:$0xff]
        %v6969 = vld [vmem:[%s6942 + $0xd0] sm:$0xff]
        %v6970 = vld [vmem:[%s6942 + $0xd8] sm:$0xff]
        %v6971 = vld [vmem:[%s6942 + $0xe0] sm:$0xff]
        %v6972 = vld [vmem:[%s6942 + $0xe8] sm:$0xff]
        %v6973 = vld [vmem:[%s6942 + $0xf0] sm:$0xff]
        %v6974 = vld [vmem:[%s6942 + $0xf8] sm:$0xff]
        %v6975 = vld [vmem:[%s6942 + $0x100] sm:$0xff]
        %v6976 = vld [vmem:[%s6942 + $0x108] sm:$0xff]
        %v6977 = vld [vmem:[%s6942 + $0x110] sm:$0xff]
        %v6978 = vld [vmem:[%s6942 + $0x118] sm:$0xff]
        %v6979 = vld [vmem:[%s6942 + $0x120] sm:$0xff]
        %v6980 = vld [vmem:[%s6942 + $0x128] sm:$0xff]
        %v6981 = vld [vmem:[%s6942 + $0x130] sm:$0xff]
        %v6982 = vld [vmem:[%s6942 + $0x138] sm:$0xff]
        %v6983 = vld [vmem:[%s6942 + $0x140] sm:$0xff]
        %v6984 = vld [vmem:[%s6942 + $0x148] sm:$0xff]
        %v6985 = vld [vmem:[%s6942 + $0x150] sm:$0xff]
        %v6986 = vld [vmem:[%s6942 + $0x158] sm:$0xff]
        %v6987 = vld [vmem:[%s6942 + $0x160] sm:$0xff]
        %v6988 = vld [vmem:[%s6942 + $0x168] sm:$0xff]
        %v6989 = vld [vmem:[%s6942 + $0x170] sm:$0xff]
        %v6990 = vld [vmem:[%s6942 + $0x178] sm:$0xff]
        %v6991 = vld [vmem:[%s6942 + $0x180] sm:$0xff]
        %v6992 = vld [vmem:[%s6942 + $0x188] sm:$0xff]
        %v6993 = vld [vmem:[%s6942 + $0x190] sm:$0xff]
        %v6994 = vld [vmem:[%s6942 + $0x198] sm:$0xff]
        %v6995 = vld [vmem:[%s6942 + $0x1a0] sm:$0xff]
        %v6996 = vld [vmem:[%s6942 + $0x1a8] sm:$0xff]
        %v6997 = vld [vmem:[%s6942 + $0x1b0] sm:$0xff]
        %v6998 = vld [vmem:[%s6942 + $0x1b8] sm:$0xff]
        %v6999 = vld [vmem:[%s6942 + $0x1c0] sm:$0xff]
        %v7000 = vld [vmem:[%s6942 + $0x1c8] sm:$0xff]
        %v7001 = vld [vmem:[%s6942 + $0x1d0] sm:$0xff]
        %v7002 = vld [vmem:[%s6942 + $0x1d8] sm:$0xff]
        %v7003 = vld [vmem:[%s6942 + $0x1e0] sm:$0xff]
        %v7004 = vld [vmem:[%s6942 + $0x1e8] sm:$0xff]
        %v7005 = vld [vmem:[%s6942 + $0x1f0] sm:$0xff]
        %v7006 = vld [vmem:[%s6942 + $0x1f8] sm:$0xff]
        %v7007 = vld [vmem:[%s6942 + $0x200] sm:$0xff]
        %v7008 = vld [vmem:[%s6942 + $0x208] sm:$0xff]
        %v7009 = vld [vmem:[%s6942 + $0x210] sm:$0xff]
        %v7010 = vld [vmem:[%s6942 + $0x218] sm:$0xff]
        %v7011 = vld [vmem:[%s6942 + $0x220] sm:$0xff]
        %v7012 = vld [vmem:[%s6942 + $0x228] sm:$0xff]
        %v7013 = vld [vmem:[%s6942 + $0x230] sm:$0xff]
        %v7014 = vld [vmem:[%s6942 + $0x238] sm:$0xff]
        %v7015 = vld [vmem:[%s6942 + $0x240] sm:$0xff]
        %v7016 = vld [vmem:[%s6942 + $0x248] sm:$0xff]
        %v7017 = vld [vmem:[%s6942 + $0x250] sm:$0xff]
        %v7018 = vld [vmem:[%s6942 + $0x258] sm:$0xff]
        %v7019 = vld [vmem:[%s6942 + $0x260] sm:$0xff]
        %v7020 = vld [vmem:[%s6942 + $0x268] sm:$0xff]
        %v7021 = vld [vmem:[%s6942 + $0x270] sm:$0xff]
        %v7022 = vld [vmem:[%s6942 + $0x278] sm:$0xff]
        %v7023 = vld [vmem:[%s6942 + $0x280] sm:$0xff]
        %v7024 = vld [vmem:[%s6942 + $0x288] sm:$0xff]
        %v7025 = vld [vmem:[%s6942 + $0x290] sm:$0xff]
        %v7026 = vld [vmem:[%s6942 + $0x298] sm:$0xff]
        %v7027 = vld [vmem:[%s6942 + $0x2a0] sm:$0xff]
        %v7028 = vld [vmem:[%s6942 + $0x2a8] sm:$0xff]
        %v7029 = vld [vmem:[%s6942 + $0x2b0] sm:$0xff]
        %v7030 = vld [vmem:[%s6942 + $0x2b8] sm:$0xff]
        %v7031 = vld [vmem:[%s6942 + $0x2c0] sm:$0xff]
        %v7032 = vld [vmem:[%s6942 + $0x2c8] sm:$0xff]
        %v7033 = vld [vmem:[%s6942 + $0x2d0] sm:$0xff]
        %v7034 = vld [vmem:[%s6942 + $0x2d8] sm:$0xff]
        %v7035 = vld [vmem:[%s6942 + $0x2e0] sm:$0xff]
        %v7036 = vld [vmem:[%s6942 + $0x2e8] sm:$0xff]
        %v7037 = vld [vmem:[%s6942 + $0x2f0] sm:$0xff]
        %v7038 = vld [vmem:[%s6942 + $0x2f8] sm:$0xff]
        %v7039 = vld [vmem:[%s6942 + $0x300] sm:$0xff]
        %v7040 = vld [vmem:[%s6942 + $0x308] sm:$0xff]
        %v7041 = vld [vmem:[%s6942 + $0x310] sm:$0xff]
        %v7042 = vld [vmem:[%s6942 + $0x318] sm:$0xff]
        %v7043 = vld [vmem:[%s6942 + $0x320] sm:$0xff]
        %v7044 = vld [vmem:[%s6942 + $0x328] sm:$0xff]
        %v7045 = vld [vmem:[%s6942 + $0x330] sm:$0xff]
        %v7046 = vld [vmem:[%s6942 + $0x338] sm:$0xff]
        %v7047 = vld [vmem:[%s6942 + $0x340] sm:$0xff]
        %v7048 = vld [vmem:[%s6942 + $0x348] sm:$0xff]
        %v7049 = vld [vmem:[%s6942 + $0x350] sm:$0xff]
        %v7050 = vld [vmem:[%s6942 + $0x358] sm:$0xff]
        %v7051 = vld [vmem:[%s6942 + $0x360] sm:$0xff]
        %v7052 = vld [vmem:[%s6942 + $0x368] sm:$0xff]
        %v7053 = vld [vmem:[%s6942 + $0x370] sm:$0xff]
        %v7054 = vld [vmem:[%s6942 + $0x378] sm:$0xff]
        %v7055 = vld [vmem:[%s6942 + $0x380] sm:$0xff]
        %v7056 = vld [vmem:[%s6942 + $0x388] sm:$0xff]
        %v7057 = vld [vmem:[%s6942 + $0x390] sm:$0xff]
        %v7058 = vld [vmem:[%s6942 + $0x398] sm:$0xff]
        %v7059 = vld [vmem:[%s6942 + $0x3a0] sm:$0xff]
        %v7060 = vld [vmem:[%s6942 + $0x3a8] sm:$0xff]
        %v7061 = vld [vmem:[%s6942 + $0x3b0] sm:$0xff]
        %v7062 = vld [vmem:[%s6942 + $0x3b8] sm:$0xff]
        %v7063 = vld [vmem:[%s6942 + $0x3c0] sm:$0xff]
        %v7064 = vld [vmem:[%s6942 + $0x3c8] sm:$0xff]
        %v7065 = vld [vmem:[%s6942 + $0x3d0] sm:$0xff]
        %v7066 = vld [vmem:[%s6942 + $0x3d8] sm:$0xff]
        %v7067 = vld [vmem:[%s6942 + $0x3e0] sm:$0xff]
        %v7068 = vld [vmem:[%s6942 + $0x3e8] sm:$0xff]
        %v7069 = vld [vmem:[%s6942 + $0x3f0] sm:$0xff]
        %v7070 = vld [vmem:[%s6942 + $0x3f8] sm:$0xff]
        %v7073 = vrot.slane %v6940, 1
        %v7074 = vrot.slane %v6941, 1
        %7077 = vmatpush.msra.mxu0 %v7003
        %7078 = vmatpush.msra.mxu0 %v6999
        %7079 = vmatpush.msra.mxu0 %v6995
        %7080 = vmatpush.msra.mxu0 %v6991
        %7081 = vmatpush.msra.mxu0 %v6987
        %7082 = vmatpush.msra.mxu0 %v6983
        %7083 = vmatpush.msra.mxu0 %v6979
        %7084 = vmatpush.msra.mxu0 %v6975
        %7085 = vmatpush.msra.mxu0 %v6971
        %7086 = vmatpush.msra.mxu0 %v6967
        %7087 = vmatpush.msra.mxu0 %v6963
        %7088 = vmatpush.msra.mxu0 %v6959
        %7089 = vmatpush.msra.mxu0 %v6955
        %7090 = vmatpush.msra.mxu0 %v6951
        %7091 = vmatpush.msra.mxu0 %v6947
        %7092 = vmatpush.msra.mxu0 %v6943
        %7093 = vmatmul.f32.gmra.mxu0 %v7073
        %v7094 = vpop.f32.mrf.mxu0
        %v7095 = vadd.f32 0.0, %v7094
        %7096 = vdwg.mxu0
        %7097 = vmatpush.msra.mxu0 %v7067
        %7098 = vmatpush.msra.mxu0 %v7063
        %7099 = vmatpush.msra.mxu0 %v7059
        %7100 = vmatpush.msra.mxu0 %v7055
        %7101 = vmatpush.msra.mxu0 %v7051
        %7102 = vmatpush.msra.mxu0 %v7047
        %7103 = vmatpush.msra.mxu0 %v7043
        %7104 = vmatpush.msra.mxu0 %v7039
        %7105 = vmatpush.msra.mxu0 %v7035
        %7106 = vmatpush.msra.mxu0 %v7031
        %7107 = vmatpush.msra.mxu0 %v7027
        %7108 = vmatpush.msra.mxu0 %v7023
        %7109 = vmatpush.msra.mxu0 %v7019
        %7110 = vmatpush.msra.mxu0 %v7015
        %7111 = vmatpush.msra.mxu0 %v7011
        %7112 = vmatpush.msra.mxu0 %v7007
        %7113 = vmatmul.f32.gmra.mxu0 %v7074
        %v7114 = vpop.f32.mrf.mxu0
        %v7115 = vadd.f32 %v7095, %v7114
        %7116 = vdwg.mxu0
        %7117 = vmatpush.msra.mxu0 %v7004
        %7118 = vmatpush.msra.mxu0 %v7000
        %7119 = vmatpush.msra.mxu0 %v6996
        %7120 = vmatpush.msra.mxu0 %v6992
        %7121 = vmatpush.msra.mxu0 %v6988
        %7122 = vmatpush.msra.mxu0 %v6984
        %7123 = vmatpush.msra.mxu0 %v6980
        %7124 = vmatpush.msra.mxu0 %v6976
        %7125 = vmatpush.msra.mxu0 %v6972
        %7126 = vmatpush.msra.mxu0 %v6968
        %7127 = vmatpush.msra.mxu0 %v6964
        %7128 = vmatpush.msra.mxu0 %v6960
        %7129 = vmatpush.msra.mxu0 %v6956
        %7130 = vmatpush.msra.mxu0 %v6952
        %7131 = vmatpush.msra.mxu0 %v6948
        %7132 = vmatpush.msra.mxu0 %v6944
        %7133 = vmatmul.f32.gmra.mxu0 %v7073
        %v7134 = vpop.f32.mrf.mxu0
        %v7135 = vadd.f32 0.0, %v7134
        %7136 = vdwg.mxu0
        %7137 = vmatpush.msra.mxu0 %v7068
        %7138 = vmatpush.msra.mxu0 %v7064
        %7139 = vmatpush.msra.mxu0 %v7060
        %7140 = vmatpush.msra.mxu0 %v7056
        %7141 = vmatpush.msra.mxu0 %v7052
        %7142 = vmatpush.msra.mxu0 %v7048
        %7143 = vmatpush.msra.mxu0 %v7044
        %7144 = vmatpush.msra.mxu0 %v7040
        %7145 = vmatpush.msra.mxu0 %v7036
        %7146 = vmatpush.msra.mxu0 %v7032
        %7147 = vmatpush.msra.mxu0 %v7028
        %7148 = vmatpush.msra.mxu0 %v7024
        %7149 = vmatpush.msra.mxu0 %v7020
        %7150 = vmatpush.msra.mxu0 %v7016
        %7151 = vmatpush.msra.mxu0 %v7012
        %7152 = vmatpush.msra.mxu0 %v7008
        %7153 = vmatmul.f32.gmra.mxu0 %v7074
        %v7154 = vpop.f32.mrf.mxu0
        %v7155 = vadd.f32 %v7135, %v7154
        %7156 = vdwg.mxu0
        %7157 = vmatpush.msra.mxu0 %v7005
        %7158 = vmatpush.msra.mxu0 %v7001
        %7159 = vmatpush.msra.mxu0 %v6997
        %7160 = vmatpush.msra.mxu0 %v6993
        %7161 = vmatpush.msra.mxu0 %v6989
        %7162 = vmatpush.msra.mxu0 %v6985
        %7163 = vmatpush.msra.mxu0 %v6981
        %7164 = vmatpush.msra.mxu0 %v6977
        %7165 = vmatpush.msra.mxu0 %v6973
        %7166 = vmatpush.msra.mxu0 %v6969
        %7167 = vmatpush.msra.mxu0 %v6965
        %7168 = vmatpush.msra.mxu0 %v6961
        %7169 = vmatpush.msra.mxu0 %v6957
        %7170 = vmatpush.msra.mxu0 %v6953
        %7171 = vmatpush.msra.mxu0 %v6949
        %7172 = vmatpush.msra.mxu0 %v6945
        %7173 = vmatmul.f32.gmra.mxu0 %v7073
        %v7174 = vpop.f32.mrf.mxu0
        %v7175 = vadd.f32 0.0, %v7174
        %7176 = vdwg.mxu0
        %7177 = vmatpush.msra.mxu0 %v7069
        %7178 = vmatpush.msra.mxu0 %v7065
        %7179 = vmatpush.msra.mxu0 %v7061
        %7180 = vmatpush.msra.mxu0 %v7057
        %7181 = vmatpush.msra.mxu0 %v7053
        %7182 = vmatpush.msra.mxu0 %v7049
        %7183 = vmatpush.msra.mxu0 %v7045
        %7184 = vmatpush.msra.mxu0 %v7041
        %7185 = vmatpush.msra.mxu0 %v7037
        %7186 = vmatpush.msra.mxu0 %v7033
        %7187 = vmatpush.msra.mxu0 %v7029
        %7188 = vmatpush.msra.mxu0 %v7025
        %7189 = vmatpush.msra.mxu0 %v7021
        %7190 = vmatpush.msra.mxu0 %v7017
        %7191 = vmatpush.msra.mxu0 %v7013
        %7192 = vmatpush.msra.mxu0 %v7009
        %7193 = vmatmul.f32.gmra.mxu0 %v7074
        %v7194 = vpop.f32.mrf.mxu0
        %v7195 = vadd.f32 %v7175, %v7194
        %7196 = vdwg.mxu0
        %7197 = vmatpush.msra.mxu0 %v7006
        %7198 = vmatpush.msra.mxu0 %v7002
        %7199 = vmatpush.msra.mxu0 %v6998
        %7200 = vmatpush.msra.mxu0 %v6994
        %7201 = vmatpush.msra.mxu0 %v6990
        %7202 = vmatpush.msra.mxu0 %v6986
        %7203 = vmatpush.msra.mxu0 %v6982
        %7204 = vmatpush.msra.mxu0 %v6978
        %7205 = vmatpush.msra.mxu0 %v6974
        %7206 = vmatpush.msra.mxu0 %v6970
        %7207 = vmatpush.msra.mxu0 %v6966
        %7208 = vmatpush.msra.mxu0 %v6962
        %7209 = vmatpush.msra.mxu0 %v6958
        %7210 = vmatpush.msra.mxu0 %v6954
        %7211 = vmatpush.msra.mxu0 %v6950
        %7212 = vmatpush.msra.mxu0 %v6946
        %7213 = vmatmul.f32.gmra.mxu0 %v7073
        %v7214 = vpop.f32.mrf.mxu0
        %v7215 = vadd.f32 0.0, %v7214
        %7216 = vdwg.mxu0
        %7217 = vmatpush.msra.mxu0 %v7070
        %7218 = vmatpush.msra.mxu0 %v7066
        %7219 = vmatpush.msra.mxu0 %v7062
        %7220 = vmatpush.msra.mxu0 %v7058
        %7221 = vmatpush.msra.mxu0 %v7054
        %7222 = vmatpush.msra.mxu0 %v7050
        %7223 = vmatpush.msra.mxu0 %v7046
        %7224 = vmatpush.msra.mxu0 %v7042
        %7225 = vmatpush.msra.mxu0 %v7038
        %7226 = vmatpush.msra.mxu0 %v7034
        %7227 = vmatpush.msra.mxu0 %v7030
        %7228 = vmatpush.msra.mxu0 %v7026
        %7229 = vmatpush.msra.mxu0 %v7022
        %7230 = vmatpush.msra.mxu0 %v7018
        %7231 = vmatpush.msra.mxu0 %v7014
        %7232 = vmatpush.msra.mxu0 %v7010
        %7233 = vmatmul.f32.gmra.mxu0 %v7074
        %v7234 = vpop.f32.mrf.mxu0
        %v7235 = vadd.f32 %v7215, %v7234
        %7236 = vdwg.mxu0
        %v7237 = vadd.f32 %v6936, %v7115
        %v7238 = vadd.f32 %v6937, %v7155
        %v7239 = vadd.f32 %v6938, %v7195
        %v7240 = vadd.f32 %v6939, %v7235
        %v7241 = vld [vmem:[#allocation9 + $0x10] sm:$0xc]
        %v7242 = vld [vmem:[#allocation9 + $0x18] sm:$0xc]
        %s7243 = scalar_lea.vmem [#allocation33], 4096
        %v7244 = vld [vmem:[%s7243] sm:$0xff]
        %v7245 = vld [vmem:[%s7243 + $0x8] sm:$0xff]
        %v7246 = vld [vmem:[%s7243 + $0x10] sm:$0xff]
        %v7247 = vld [vmem:[%s7243 + $0x18] sm:$0xff]
        %v7248 = vld [vmem:[%s7243 + $0x20] sm:$0xff]
        %v7249 = vld [vmem:[%s7243 + $0x28] sm:$0xff]
        %v7250 = vld [vmem:[%s7243 + $0x30] sm:$0xff]
        %v7251 = vld [vmem:[%s7243 + $0x38] sm:$0xff]
        %v7252 = vld [vmem:[%s7243 + $0x40] sm:$0xff]
        %v7253 = vld [vmem:[%s7243 + $0x48] sm:$0xff]
        %v7254 = vld [vmem:[%s7243 + $0x50] sm:$0xff]
        %v7255 = vld [vmem:[%s7243 + $0x58] sm:$0xff]
        %v7256 = vld [vmem:[%s7243 + $0x60] sm:$0xff]
        %v7257 = vld [vmem:[%s7243 + $0x68] sm:$0xff]
        %v7258 = vld [vmem:[%s7243 + $0x70] sm:$0xff]
        %v7259 = vld [vmem:[%s7243 + $0x78] sm:$0xff]
        %v7260 = vld [vmem:[%s7243 + $0x80] sm:$0xff]
        %v7261 = vld [vmem:[%s7243 + $0x88] sm:$0xff]
        %v7262 = vld [vmem:[%s7243 + $0x90] sm:$0xff]
        %v7263 = vld [vmem:[%s7243 + $0x98] sm:$0xff]
        %v7264 = vld [vmem:[%s7243 + $0xa0] sm:$0xff]
        %v7265 = vld [vmem:[%s7243 + $0xa8] sm:$0xff]
        %v7266 = vld [vmem:[%s7243 + $0xb0] sm:$0xff]
        %v7267 = vld [vmem:[%s7243 + $0xb8] sm:$0xff]
        %v7268 = vld [vmem:[%s7243 + $0xc0] sm:$0xff]
        %v7269 = vld [vmem:[%s7243 + $0xc8] sm:$0xff]
        %v7270 = vld [vmem:[%s7243 + $0xd0] sm:$0xff]
        %v7271 = vld [vmem:[%s7243 + $0xd8] sm:$0xff]
        %v7272 = vld [vmem:[%s7243 + $0xe0] sm:$0xff]
        %v7273 = vld [vmem:[%s7243 + $0xe8] sm:$0xff]
        %v7274 = vld [vmem:[%s7243 + $0xf0] sm:$0xff]
        %v7275 = vld [vmem:[%s7243 + $0xf8] sm:$0xff]
        %v7276 = vld [vmem:[%s7243 + $0x100] sm:$0xff]
        %v7277 = vld [vmem:[%s7243 + $0x108] sm:$0xff]
        %v7278 = vld [vmem:[%s7243 + $0x110] sm:$0xff]
        %v7279 = vld [vmem:[%s7243 + $0x118] sm:$0xff]
        %v7280 = vld [vmem:[%s7243 + $0x120] sm:$0xff]
        %v7281 = vld [vmem:[%s7243 + $0x128] sm:$0xff]
        %v7282 = vld [vmem:[%s7243 + $0x130] sm:$0xff]
        %v7283 = vld [vmem:[%s7243 + $0x138] sm:$0xff]
        %v7284 = vld [vmem:[%s7243 + $0x140] sm:$0xff]
        %v7285 = vld [vmem:[%s7243 + $0x148] sm:$0xff]
        %v7286 = vld [vmem:[%s7243 + $0x150] sm:$0xff]
        %v7287 = vld [vmem:[%s7243 + $0x158] sm:$0xff]
        %v7288 = vld [vmem:[%s7243 + $0x160] sm:$0xff]
        %v7289 = vld [vmem:[%s7243 + $0x168] sm:$0xff]
        %v7290 = vld [vmem:[%s7243 + $0x170] sm:$0xff]
        %v7291 = vld [vmem:[%s7243 + $0x178] sm:$0xff]
        %v7292 = vld [vmem:[%s7243 + $0x180] sm:$0xff]
        %v7293 = vld [vmem:[%s7243 + $0x188] sm:$0xff]
        %v7294 = vld [vmem:[%s7243 + $0x190] sm:$0xff]
        %v7295 = vld [vmem:[%s7243 + $0x198] sm:$0xff]
        %v7296 = vld [vmem:[%s7243 + $0x1a0] sm:$0xff]
        %v7297 = vld [vmem:[%s7243 + $0x1a8] sm:$0xff]
        %v7298 = vld [vmem:[%s7243 + $0x1b0] sm:$0xff]
        %v7299 = vld [vmem:[%s7243 + $0x1b8] sm:$0xff]
        %v7300 = vld [vmem:[%s7243 + $0x1c0] sm:$0xff]
        %v7301 = vld [vmem:[%s7243 + $0x1c8] sm:$0xff]
        %v7302 = vld [vmem:[%s7243 + $0x1d0] sm:$0xff]
        %v7303 = vld [vmem:[%s7243 + $0x1d8] sm:$0xff]
        %v7304 = vld [vmem:[%s7243 + $0x1e0] sm:$0xff]
        %v7305 = vld [vmem:[%s7243 + $0x1e8] sm:$0xff]
        %v7306 = vld [vmem:[%s7243 + $0x1f0] sm:$0xff]
        %v7307 = vld [vmem:[%s7243 + $0x1f8] sm:$0xff]
        %v7308 = vld [vmem:[%s7243 + $0x200] sm:$0xff]
        %v7309 = vld [vmem:[%s7243 + $0x208] sm:$0xff]
        %v7310 = vld [vmem:[%s7243 + $0x210] sm:$0xff]
        %v7311 = vld [vmem:[%s7243 + $0x218] sm:$0xff]
        %v7312 = vld [vmem:[%s7243 + $0x220] sm:$0xff]
        %v7313 = vld [vmem:[%s7243 + $0x228] sm:$0xff]
        %v7314 = vld [vmem:[%s7243 + $0x230] sm:$0xff]
        %v7315 = vld [vmem:[%s7243 + $0x238] sm:$0xff]
        %v7316 = vld [vmem:[%s7243 + $0x240] sm:$0xff]
        %v7317 = vld [vmem:[%s7243 + $0x248] sm:$0xff]
        %v7318 = vld [vmem:[%s7243 + $0x250] sm:$0xff]
        %v7319 = vld [vmem:[%s7243 + $0x258] sm:$0xff]
        %v7320 = vld [vmem:[%s7243 + $0x260] sm:$0xff]
        %v7321 = vld [vmem:[%s7243 + $0x268] sm:$0xff]
        %v7322 = vld [vmem:[%s7243 + $0x270] sm:$0xff]
        %v7323 = vld [vmem:[%s7243 + $0x278] sm:$0xff]
        %v7324 = vld [vmem:[%s7243 + $0x280] sm:$0xff]
        %v7325 = vld [vmem:[%s7243 + $0x288] sm:$0xff]
        %v7326 = vld [vmem:[%s7243 + $0x290] sm:$0xff]
        %v7327 = vld [vmem:[%s7243 + $0x298] sm:$0xff]
        %v7328 = vld [vmem:[%s7243 + $0x2a0] sm:$0xff]
        %v7329 = vld [vmem:[%s7243 + $0x2a8] sm:$0xff]
        %v7330 = vld [vmem:[%s7243 + $0x2b0] sm:$0xff]
        %v7331 = vld [vmem:[%s7243 + $0x2b8] sm:$0xff]
        %v7332 = vld [vmem:[%s7243 + $0x2c0] sm:$0xff]
        %v7333 = vld [vmem:[%s7243 + $0x2c8] sm:$0xff]
        %v7334 = vld [vmem:[%s7243 + $0x2d0] sm:$0xff]
        %v7335 = vld [vmem:[%s7243 + $0x2d8] sm:$0xff]
        %v7336 = vld [vmem:[%s7243 + $0x2e0] sm:$0xff]
        %v7337 = vld [vmem:[%s7243 + $0x2e8] sm:$0xff]
        %v7338 = vld [vmem:[%s7243 + $0x2f0] sm:$0xff]
        %v7339 = vld [vmem:[%s7243 + $0x2f8] sm:$0xff]
        %v7340 = vld [vmem:[%s7243 + $0x300] sm:$0xff]
        %v7341 = vld [vmem:[%s7243 + $0x308] sm:$0xff]
        %v7342 = vld [vmem:[%s7243 + $0x310] sm:$0xff]
        %v7343 = vld [vmem:[%s7243 + $0x318] sm:$0xff]
        %v7344 = vld [vmem:[%s7243 + $0x320] sm:$0xff]
        %v7345 = vld [vmem:[%s7243 + $0x328] sm:$0xff]
        %v7346 = vld [vmem:[%s7243 + $0x330] sm:$0xff]
        %v7347 = vld [vmem:[%s7243 + $0x338] sm:$0xff]
        %v7348 = vld [vmem:[%s7243 + $0x340] sm:$0xff]
        %v7349 = vld [vmem:[%s7243 + $0x348] sm:$0xff]
        %v7350 = vld [vmem:[%s7243 + $0x350] sm:$0xff]
        %v7351 = vld [vmem:[%s7243 + $0x358] sm:$0xff]
        %v7352 = vld [vmem:[%s7243 + $0x360] sm:$0xff]
        %v7353 = vld [vmem:[%s7243 + $0x368] sm:$0xff]
        %v7354 = vld [vmem:[%s7243 + $0x370] sm:$0xff]
        %v7355 = vld [vmem:[%s7243 + $0x378] sm:$0xff]
        %v7356 = vld [vmem:[%s7243 + $0x380] sm:$0xff]
        %v7357 = vld [vmem:[%s7243 + $0x388] sm:$0xff]
        %v7358 = vld [vmem:[%s7243 + $0x390] sm:$0xff]
        %v7359 = vld [vmem:[%s7243 + $0x398] sm:$0xff]
        %v7360 = vld [vmem:[%s7243 + $0x3a0] sm:$0xff]
        %v7361 = vld [vmem:[%s7243 + $0x3a8] sm:$0xff]
        %v7362 = vld [vmem:[%s7243 + $0x3b0] sm:$0xff]
        %v7363 = vld [vmem:[%s7243 + $0x3b8] sm:$0xff]
        %v7364 = vld [vmem:[%s7243 + $0x3c0] sm:$0xff]
        %v7365 = vld [vmem:[%s7243 + $0x3c8] sm:$0xff]
        %v7366 = vld [vmem:[%s7243 + $0x3d0] sm:$0xff]
        %v7367 = vld [vmem:[%s7243 + $0x3d8] sm:$0xff]
        %v7368 = vld [vmem:[%s7243 + $0x3e0] sm:$0xff]
        %v7369 = vld [vmem:[%s7243 + $0x3e8] sm:$0xff]
        %v7370 = vld [vmem:[%s7243 + $0x3f0] sm:$0xff]
        %v7371 = vld [vmem:[%s7243 + $0x3f8] sm:$0xff]
        %v7374 = vrot.slane %v7241, 2
        %v7375 = vrot.slane %v7242, 2
        %7378 = vmatpush.msra.mxu0 %v7304
        %7379 = vmatpush.msra.mxu0 %v7300
        %7380 = vmatpush.msra.mxu0 %v7296
        %7381 = vmatpush.msra.mxu0 %v7292
        %7382 = vmatpush.msra.mxu0 %v7288
        %7383 = vmatpush.msra.mxu0 %v7284
        %7384 = vmatpush.msra.mxu0 %v7280
        %7385 = vmatpush.msra.mxu0 %v7276
        %7386 = vmatpush.msra.mxu0 %v7272
        %7387 = vmatpush.msra.mxu0 %v7268
        %7388 = vmatpush.msra.mxu0 %v7264
        %7389 = vmatpush.msra.mxu0 %v7260
        %7390 = vmatpush.msra.mxu0 %v7256
        %7391 = vmatpush.msra.mxu0 %v7252
        %7392 = vmatpush.msra.mxu0 %v7248
        %7393 = vmatpush.msra.mxu0 %v7244
        %7394 = vmatmul.f32.gmra.mxu0 %v7374
        %v7395 = vpop.f32.mrf.mxu0
        %v7396 = vadd.f32 0.0, %v7395
        %7397 = vdwg.mxu0
        %7398 = vmatpush.msra.mxu0 %v7368
        %7399 = vmatpush.msra.mxu0 %v7364
        %7400 = vmatpush.msra.mxu0 %v7360
        %7401 = vmatpush.msra.mxu0 %v7356
        %7402 = vmatpush.msra.mxu0 %v7352
        %7403 = vmatpush.msra.mxu0 %v7348
        %7404 = vmatpush.msra.mxu0 %v7344
        %7405 = vmatpush.msra.mxu0 %v7340
        %7406 = vmatpush.msra.mxu0 %v7336
        %7407 = vmatpush.msra.mxu0 %v7332
        %7408 = vmatpush.msra.mxu0 %v7328
        %7409 = vmatpush.msra.mxu0 %v7324
        %7410 = vmatpush.msra.mxu0 %v7320
        %7411 = vmatpush.msra.mxu0 %v7316
        %7412 = vmatpush.msra.mxu0 %v7312
        %7413 = vmatpush.msra.mxu0 %v7308
        %7414 = vmatmul.f32.gmra.mxu0 %v7375
        %v7415 = vpop.f32.mrf.mxu0
        %v7416 = vadd.f32 %v7396, %v7415
        %7417 = vdwg.mxu0
        %7418 = vmatpush.msra.mxu0 %v7305
        %7419 = vmatpush.msra.mxu0 %v7301
        %7420 = vmatpush.msra.mxu0 %v7297
        %7421 = vmatpush.msra.mxu0 %v7293
        %7422 = vmatpush.msra.mxu0 %v7289
        %7423 = vmatpush.msra.mxu0 %v7285
        %7424 = vmatpush.msra.mxu0 %v7281
        %7425 = vmatpush.msra.mxu0 %v7277
        %7426 = vmatpush.msra.mxu0 %v7273
        %7427 = vmatpush.msra.mxu0 %v7269
        %7428 = vmatpush.msra.mxu0 %v7265
        %7429 = vmatpush.msra.mxu0 %v7261
        %7430 = vmatpush.msra.mxu0 %v7257
        %7431 = vmatpush.msra.mxu0 %v7253
        %7432 = vmatpush.msra.mxu0 %v7249
        %7433 = vmatpush.msra.mxu0 %v7245
        %7434 = vmatmul.f32.gmra.mxu0 %v7374
        %v7435 = vpop.f32.mrf.mxu0
        %v7436 = vadd.f32 0.0, %v7435
        %7437 = vdwg.mxu0
        %7438 = vmatpush.msra.mxu0 %v7369
        %7439 = vmatpush.msra.mxu0 %v7365
        %7440 = vmatpush.msra.mxu0 %v7361
        %7441 = vmatpush.msra.mxu0 %v7357
        %7442 = vmatpush.msra.mxu0 %v7353
        %7443 = vmatpush.msra.mxu0 %v7349
        %7444 = vmatpush.msra.mxu0 %v7345
        %7445 = vmatpush.msra.mxu0 %v7341
        %7446 = vmatpush.msra.mxu0 %v7337
        %7447 = vmatpush.msra.mxu0 %v7333
        %7448 = vmatpush.msra.mxu0 %v7329
        %7449 = vmatpush.msra.mxu0 %v7325
        %7450 = vmatpush.msra.mxu0 %v7321
        %7451 = vmatpush.msra.mxu0 %v7317
        %7452 = vmatpush.msra.mxu0 %v7313
        %7453 = vmatpush.msra.mxu0 %v7309
        %7454 = vmatmul.f32.gmra.mxu0 %v7375
        %v7455 = vpop.f32.mrf.mxu0
        %v7456 = vadd.f32 %v7436, %v7455
        %7457 = vdwg.mxu0
        %7458 = vmatpush.msra.mxu0 %v7306
        %7459 = vmatpush.msra.mxu0 %v7302
        %7460 = vmatpush.msra.mxu0 %v7298
        %7461 = vmatpush.msra.mxu0 %v7294
        %7462 = vmatpush.msra.mxu0 %v7290
        %7463 = vmatpush.msra.mxu0 %v7286
        %7464 = vmatpush.msra.mxu0 %v7282
        %7465 = vmatpush.msra.mxu0 %v7278
        %7466 = vmatpush.msra.mxu0 %v7274
        %7467 = vmatpush.msra.mxu0 %v7270
        %7468 = vmatpush.msra.mxu0 %v7266
        %7469 = vmatpush.msra.mxu0 %v7262
        %7470 = vmatpush.msra.mxu0 %v7258
        %7471 = vmatpush.msra.mxu0 %v7254
        %7472 = vmatpush.msra.mxu0 %v7250
        %7473 = vmatpush.msra.mxu0 %v7246
        %7474 = vmatmul.f32.gmra.mxu0 %v7374
        %v7475 = vpop.f32.mrf.mxu0
        %v7476 = vadd.f32 0.0, %v7475
        %7477 = vdwg.mxu0
        %7478 = vmatpush.msra.mxu0 %v7370
        %7479 = vmatpush.msra.mxu0 %v7366
        %7480 = vmatpush.msra.mxu0 %v7362
        %7481 = vmatpush.msra.mxu0 %v7358
        %7482 = vmatpush.msra.mxu0 %v7354
        %7483 = vmatpush.msra.mxu0 %v7350
        %7484 = vmatpush.msra.mxu0 %v7346
        %7485 = vmatpush.msra.mxu0 %v7342
        %7486 = vmatpush.msra.mxu0 %v7338
        %7487 = vmatpush.msra.mxu0 %v7334
        %7488 = vmatpush.msra.mxu0 %v7330
        %7489 = vmatpush.msra.mxu0 %v7326
        %7490 = vmatpush.msra.mxu0 %v7322
        %7491 = vmatpush.msra.mxu0 %v7318
        %7492 = vmatpush.msra.mxu0 %v7314
        %7493 = vmatpush.msra.mxu0 %v7310
        %7494 = vmatmul.f32.gmra.mxu0 %v7375
        %v7495 = vpop.f32.mrf.mxu0
        %v7496 = vadd.f32 %v7476, %v7495
        %7497 = vdwg.mxu0
        %7498 = vmatpush.msra.mxu0 %v7307
        %7499 = vmatpush.msra.mxu0 %v7303
        %7500 = vmatpush.msra.mxu0 %v7299
        %7501 = vmatpush.msra.mxu0 %v7295
        %7502 = vmatpush.msra.mxu0 %v7291
        %7503 = vmatpush.msra.mxu0 %v7287
        %7504 = vmatpush.msra.mxu0 %v7283
        %7505 = vmatpush.msra.mxu0 %v7279
        %7506 = vmatpush.msra.mxu0 %v7275
        %7507 = vmatpush.msra.mxu0 %v7271
        %7508 = vmatpush.msra.mxu0 %v7267
        %7509 = vmatpush.msra.mxu0 %v7263
        %7510 = vmatpush.msra.mxu0 %v7259
        %7511 = vmatpush.msra.mxu0 %v7255
        %7512 = vmatpush.msra.mxu0 %v7251
        %7513 = vmatpush.msra.mxu0 %v7247
        %7514 = vmatmul.f32.gmra.mxu0 %v7374
        %v7515 = vpop.f32.mrf.mxu0
        %v7516 = vadd.f32 0.0, %v7515
        %7517 = vdwg.mxu0
        %7518 = vmatpush.msra.mxu0 %v7371
        %7519 = vmatpush.msra.mxu0 %v7367
        %7520 = vmatpush.msra.mxu0 %v7363
        %7521 = vmatpush.msra.mxu0 %v7359
        %7522 = vmatpush.msra.mxu0 %v7355
        %7523 = vmatpush.msra.mxu0 %v7351
        %7524 = vmatpush.msra.mxu0 %v7347
        %7525 = vmatpush.msra.mxu0 %v7343
        %7526 = vmatpush.msra.mxu0 %v7339
        %7527 = vmatpush.msra.mxu0 %v7335
        %7528 = vmatpush.msra.mxu0 %v7331
        %7529 = vmatpush.msra.mxu0 %v7327
        %7530 = vmatpush.msra.mxu0 %v7323
        %7531 = vmatpush.msra.mxu0 %v7319
        %7532 = vmatpush.msra.mxu0 %v7315
        %7533 = vmatpush.msra.mxu0 %v7311
        %7534 = vmatmul.f32.gmra.mxu0 %v7375
        %v7535 = vpop.f32.mrf.mxu0
        %v7536 = vadd.f32 %v7516, %v7535
        %7537 = vdwg.mxu0
        %v7538 = vadd.f32 %v7237, %v7416
        %v7539 = vadd.f32 %v7238, %v7456
        %v7540 = vadd.f32 %v7239, %v7496
        %v7541 = vadd.f32 %v7240, %v7536
        %v7542 = vld [vmem:[#allocation34] sm:$0xf]
        %v7544 = vperm.slane %v7542, 0
        %v7545 = vperm.slane %v7542, 1
        %v7546 = vperm.slane %v7542, 2
        %v7547 = vperm.slane %v7542, 3
        %v7552 = vadd.f32 %v7538, %v7544
        %v7553 = vadd.f32 %v7539, %v7545
        %v7554 = vadd.f32 %v7540, %v7546
        %v7555 = vadd.f32 %v7541, %v7547
        %v7556 = vmax.f32 %v7552, 0.0
        %v7557 = vmax.f32 %v7553, 0.0
        %v7558 = vmax.f32 %v7554, 0.0
        %v7559 = vmax.f32 %v7555, 0.0
        %vm7560 = vcmask 1041408
        %v7561 = vsel %vm7560, %v7556, -inf
        %v7562 = vrot.slane %v7561, 4
        %v7563 = vmax.f32 %v7561, %v7562
        %v7564 = vrot.slane %v7563, 2
        %v7565 = vmax.f32 %v7563, %v7564
        %v7566 = vrot.slane %v7565, 1
        %v7567 = vmax.f32 %v7565, %v7566
        %v7568 = vsel %vm7560, %v7557, -inf
        %v7569 = vrot.slane %v7568, 4
        %v7570 = vmax.f32 %v7568, %v7569
        %v7571 = vrot.slane %v7570, 2
        %v7572 = vmax.f32 %v7570, %v7571
        %v7573 = vrot.slane %v7572, 1
        %v7574 = vmax.f32 %v7572, %v7573
        %v7575 = vsel %vm7560, %v7558, -inf
        %v7576 = vrot.slane %v7575, 4
        %v7577 = vmax.f32 %v7575, %v7576
        %v7578 = vrot.slane %v7577, 2
        %v7579 = vmax.f32 %v7577, %v7578
        %v7580 = vrot.slane %v7579, 1
        %v7581 = vmax.f32 %v7579, %v7580
        %v7582 = vsel %vm7560, %v7559, -inf
        %v7583 = vrot.slane %v7582, 4
        %v7584 = vmax.f32 %v7582, %v7583
        %v7585 = vrot.slane %v7584, 2
        %v7586 = vmax.f32 %v7584, %v7585
        %v7587 = vrot.slane %v7586, 1
        %v7588 = vmax.f32 %v7586, %v7587
        %v7589 = vld [vmem:[%s17] sm:$0xff]
        %v7590 = vld [vmem:[%s17 + $0x8] sm:$0xff]
        %v7591 = vld [vmem:[%s17 + $0x10] sm:$0xff]
        %v7592 = vld [vmem:[%s17 + $0x18] sm:$0xff]
        %v7593 = vld [vmem:[%s17 + $0x20] sm:$0xff]
        %v7594 = vld [vmem:[%s17 + $0x28] sm:$0xff]
        %v7595 = vld [vmem:[%s17 + $0x30] sm:$0xff]
        %v7596 = vld [vmem:[%s17 + $0x38] sm:$0xff]
        %v7597 = vld [vmem:[%s17 + $0x40] sm:$0xff]
        %v7598 = vld [vmem:[%s17 + $0x48] sm:$0xff]
        %v7599 = vld [vmem:[%s17 + $0x50] sm:$0xff]
        %v7600 = vld [vmem:[%s17 + $0x58] sm:$0xff]
        %v7601 = vld [vmem:[%s17 + $0x60] sm:$0xff]
        %v7602 = vld [vmem:[%s17 + $0x68] sm:$0xff]
        %v7603 = vld [vmem:[%s17 + $0x70] sm:$0xff]
        %v7604 = vld [vmem:[%s17 + $0x78] sm:$0xff]
        %v7605 = vld [vmem:[%s17 + $0x80] sm:$0xff]
        %v7606 = vld [vmem:[%s17 + $0x88] sm:$0xff]
        %v7607 = vld [vmem:[%s17 + $0x90] sm:$0xff]
        %v7608 = vld [vmem:[%s17 + $0x98] sm:$0xff]
        %v7609 = vld [vmem:[%s17 + $0xa0] sm:$0xff]
        %v7610 = vld [vmem:[%s17 + $0xa8] sm:$0xff]
        %v7611 = vld [vmem:[%s17 + $0xb0] sm:$0xff]
        %v7612 = vld [vmem:[%s17 + $0xb8] sm:$0xff]
        %v7613 = vld [vmem:[%s17 + $0xc0] sm:$0xff]
        %v7614 = vld [vmem:[%s17 + $0xc8] sm:$0xff]
        %v7615 = vld [vmem:[%s17 + $0xd0] sm:$0xff]
        %v7616 = vld [vmem:[%s17 + $0xd8] sm:$0xff]
        %v7617 = vld [vmem:[%s17 + $0xe0] sm:$0xff]
        %v7618 = vld [vmem:[%s17 + $0xe8] sm:$0xff]
        %v7619 = vld [vmem:[%s17 + $0xf0] sm:$0xff]
        %v7620 = vld [vmem:[%s17 + $0xf8] sm:$0xff]
        %v7621 = vld [vmem:[%s17 + $0x100] sm:$0xff]
        %v7622 = vld [vmem:[%s17 + $0x108] sm:$0xff]
        %v7623 = vld [vmem:[%s17 + $0x110] sm:$0xff]
        %v7624 = vld [vmem:[%s17 + $0x118] sm:$0xff]
        %v7625 = vld [vmem:[%s17 + $0x120] sm:$0xff]
        %v7626 = vld [vmem:[%s17 + $0x128] sm:$0xff]
        %v7627 = vld [vmem:[%s17 + $0x130] sm:$0xff]
        %v7628 = vld [vmem:[%s17 + $0x138] sm:$0xff]
        %v7629 = vld [vmem:[%s17 + $0x140] sm:$0xff]
        %v7630 = vld [vmem:[%s17 + $0x148] sm:$0xff]
        %v7631 = vld [vmem:[%s17 + $0x150] sm:$0xff]
        %v7632 = vld [vmem:[%s17 + $0x158] sm:$0xff]
        %v7633 = vld [vmem:[%s17 + $0x160] sm:$0xff]
        %v7634 = vld [vmem:[%s17 + $0x168] sm:$0xff]
        %v7635 = vld [vmem:[%s17 + $0x170] sm:$0xff]
        %v7636 = vld [vmem:[%s17 + $0x178] sm:$0xff]
        %v7637 = vld [vmem:[%s17 + $0x180] sm:$0xff]
        %v7638 = vld [vmem:[%s17 + $0x188] sm:$0xff]
        %v7639 = vld [vmem:[%s17 + $0x190] sm:$0xff]
        %v7640 = vld [vmem:[%s17 + $0x198] sm:$0xff]
        %v7641 = vld [vmem:[%s17 + $0x1a0] sm:$0xff]
        %v7642 = vld [vmem:[%s17 + $0x1a8] sm:$0xff]
        %v7643 = vld [vmem:[%s17 + $0x1b0] sm:$0xff]
        %v7644 = vld [vmem:[%s17 + $0x1b8] sm:$0xff]
        %v7645 = vld [vmem:[%s17 + $0x1c0] sm:$0xff]
        %v7646 = vld [vmem:[%s17 + $0x1c8] sm:$0xff]
        %v7647 = vld [vmem:[%s17 + $0x1d0] sm:$0xff]
        %v7648 = vld [vmem:[%s17 + $0x1d8] sm:$0xff]
        %v7649 = vld [vmem:[%s17 + $0x1e0] sm:$0xff]
        %v7650 = vld [vmem:[%s17 + $0x1e8] sm:$0xff]
        %v7651 = vld [vmem:[%s17 + $0x1f0] sm:$0xff]
        %v7652 = vld [vmem:[%s17 + $0x1f8] sm:$0xff]
        %v7653 = vld [vmem:[#allocation36] sm:$0x1]
        %7654 = vmatpush.msra.mxu0 %v7604
        %7655 = vmatpush.msra.mxu0 %v7603
        %7656 = vmatpush.msra.mxu0 %v7602
        %7657 = vmatpush.msra.mxu0 %v7601
        %7658 = vmatpush.msra.mxu0 %v7600
        %7659 = vmatpush.msra.mxu0 %v7599
        %7660 = vmatpush.msra.mxu0 %v7598
        %7661 = vmatpush.msra.mxu0 %v7597
        %7662 = vmatpush.msra.mxu0 %v7596
        %7663 = vmatpush.msra.mxu0 %v7595
        %7664 = vmatpush.msra.mxu0 %v7594
        %7665 = vmatpush.msra.mxu0 %v7593
        %7666 = vmatpush.msra.mxu0 %v7592
        %7667 = vmatpush.msra.mxu0 %v7591
        %7668 = vmatpush.msra.mxu0 %v7590
        %7669 = vmatpush.msra.mxu0 %v7589
        %7670 = vmatmul.f32.gmra.mxu0 %v7567
        %v7671 = vpop.f32.mrf.mxu0
        %v7672 = vadd.f32 %v7653, %v7671
        %7673 = vdwg.mxu0
        %7674 = vmatpush.msra.mxu0 %v7620
        %7675 = vmatpush.msra.mxu0 %v7619
        %7676 = vmatpush.msra.mxu0 %v7618
        %7677 = vmatpush.msra.mxu0 %v7617
        %7678 = vmatpush.msra.mxu0 %v7616
        %7679 = vmatpush.msra.mxu0 %v7615
        %7680 = vmatpush.msra.mxu0 %v7614
        %7681 = vmatpush.msra.mxu0 %v7613
        %7682 = vmatpush.msra.mxu0 %v7612
        %7683 = vmatpush.msra.mxu0 %v7611
        %7684 = vmatpush.msra.mxu0 %v7610
        %7685 = vmatpush.msra.mxu0 %v7609
        %7686 = vmatpush.msra.mxu0 %v7608
        %7687 = vmatpush.msra.mxu0 %v7607
        %7688 = vmatpush.msra.mxu0 %v7606
        %7689 = vmatpush.msra.mxu0 %v7605
        %7690 = vmatmul.f32.gmra.mxu0 %v7574
        %v7691 = vpop.f32.mrf.mxu0
        %v7692 = vadd.f32 %v7672, %v7691
        %7693 = vdwg.mxu0
        %7694 = vmatpush.msra.mxu0 %v7636
        %7695 = vmatpush.msra.mxu0 %v7635
        %7696 = vmatpush.msra.mxu0 %v7634
        %7697 = vmatpush.msra.mxu0 %v7633
        %7698 = vmatpush.msra.mxu0 %v7632
        %7699 = vmatpush.msra.mxu0 %v7631
        %7700 = vmatpush.msra.mxu0 %v7630
        %7701 = vmatpush.msra.mxu0 %v7629
        %7702 = vmatpush.msra.mxu0 %v7628
        %7703 = vmatpush.msra.mxu0 %v7627
        %7704 = vmatpush.msra.mxu0 %v7626
        %7705 = vmatpush.msra.mxu0 %v7625
        %7706 = vmatpush.msra.mxu0 %v7624
        %7707 = vmatpush.msra.mxu0 %v7623
        %7708 = vmatpush.msra.mxu0 %v7622
        %7709 = vmatpush.msra.mxu0 %v7621
        %7710 = vmatmul.f32.gmra.mxu0 %v7581
        %v7711 = vpop.f32.mrf.mxu0
        %v7712 = vadd.f32 %v7692, %v7711
        %7713 = vdwg.mxu0
        %7714 = vmatpush.msra.mxu0 %v7652
        %7715 = vmatpush.msra.mxu0 %v7651
        %7716 = vmatpush.msra.mxu0 %v7650
        %7717 = vmatpush.msra.mxu0 %v7649
        %7718 = vmatpush.msra.mxu0 %v7648
        %7719 = vmatpush.msra.mxu0 %v7647
        %7720 = vmatpush.msra.mxu0 %v7646
        %7721 = vmatpush.msra.mxu0 %v7645
        %7722 = vmatpush.msra.mxu0 %v7644
        %7723 = vmatpush.msra.mxu0 %v7643
        %7724 = vmatpush.msra.mxu0 %v7642
        %7725 = vmatpush.msra.mxu0 %v7641
        %7726 = vmatpush.msra.mxu0 %v7640
        %7727 = vmatpush.msra.mxu0 %v7639
        %7728 = vmatpush.msra.mxu0 %v7638
        %7729 = vmatpush.msra.mxu0 %v7637
        %7730 = vmatmul.f32.gmra.mxu0 %v7588
        %v7731 = vpop.f32.mrf.mxu0
        %v7732 = vadd.f32 %v7712, %v7731
        %7733 = vdwg.mxu0
        %vm7734 = vcmask 8192
        %7735 = vst.msk [vmem:[%s857] sm:$0x1] %vm7734, %v7732
        %s7736 = sand.u32 %s454, 1
        %s7737 = scalar_lea.sflag [#allocation12], %s7736
        %s7738 = sand.u32 %s454, 1
        %s7739 = scalar_lea.vmem [#allocation37], %s7738
        // Predicated region
        $region165: #{classifier_forward.1} parent=95 // pred_check
          %p7740 = pneg %p464
        $region166: #{classifier_forward.1} parent=95 // pred_check_branch
          %7742 = sbr.rel (%p7740) target = $region168
        $region167: #{classifier_forward.1} parent=95 // pred_region
          %7744 = vsyncadd %s7737, 0
          %s7745 = scalar_lea.hbm %s19, %s42
          %s7747 = sshll.u32 %s7739, 4
          %s7748 = int_to_ptr.vmem [resolvable:$true] %s7747
          %s7749 = sshll.u32 %s7745, 4
          %s7750 = int_to_ptr.hbm [resolvable:$true] %s7749
          %7752 = dma.vmem_to_hbm [thread:$0]  %s7748, 16, %s7750, %s7737
        $region168: #{classifier_forward.1} parent=95 // pred_fallthru
          _
      $region96: #{classifier_forward.1} parent=5 // pred_fallthru
        _
      %p7753 = scmp.le.s32.totalorder 2, %s37
      // Predicated region
      $region169: #{classifier_forward.1} parent=5 // pred_check
        %p7754 = pneg %p7753
      $region170: #{classifier_forward.1} parent=5 // pred_check_branch
        %7756 = sbr.rel (%p7754) target = $region172
      $region171: #{classifier_forward.1} parent=5 // pred_region
        %s7757 = ssub.s32 %s37, 2
        // Predicated region
        $region173: #{classifier_forward.1} parent=171 // pred_check
          %p7758 = pneg %p470
        $region174: #{classifier_forward.1} parent=171 // pred_check_branch
          %7760 = sbr.rel (%p7758) target = $region176
        $region175: #{classifier_forward.1} parent=171 // pred_region
          %s7761 = sand.u32 %s455, 1
          %s7762 = scalar_lea.sflag [#allocation12], %s7761
          %s7763 = sand.u32 %s455, 1
          %s7764 = scalar_lea.vmem [#allocation37], %s7763
          %7766 = dma.done %s7762, 16
        $region176: #{classifier_forward.1} parent=171 // pred_fallthru
          _
      $region172: #{classifier_forward.1} parent=5 // pred_fallthru
        _
    $region6: #{classifier_forward.1} parent=1 // loop_footer
      %s41 = sadd.s32 1, %s37
    $region7: #{classifier_forward.1} parent=1 // loop_footer_branch
      %36 = sbr.rel target = $region3
    $region8: #{classifier_forward.1} parent=1 // loop_exit
      _
    %7767 = vsyncpa [#allocation11], 1
    %s7768 = scalar_lea.sflag [#allocation11], 1
    %7769 = vsyncpa %s7768, 1
    %7770 = vsyncpa [#allocation14], 1
    %7771 = vsyncpa [#allocation17], 1
    %7772 = vsyncpa [#allocation20], 1
    %7773 = vsyncpa [#allocation23], 1
    %7774 = vsyncpa [#allocation26], 1
    %7775 = vsyncpa [#allocation29], 1
    %7776 = vsyncpa [#allocation32], 1
    %7777 = vsyncpa [#allocation35], 1
    %7778 = vsyncpa [#allocation12], 1
    %s7779 = scalar_lea.sflag [#allocation12], 1
    %7780 = vsyncpa %s7779, 1

</llo_original>
